<compile_context>
chip_gen: v6e
topology: v6e:2x2x1
jax: 0.10.0
libtpu: 0.0.40
codegen_flags: <defaults>
</compile_context>

<pallas_src>
import jax
import jax.numpy as jnp
from jax.experimental import pallas as pl
from jax.experimental.pallas import tpu as pltpu

_C3 = 1024      # conv3 output channels
_CHUNK = 256    # conv3 output-column chunk (4 chunks of 256)


# ----------------------------------------------------------------------------
# Kernel 1: point MLP + running max-pool.  grid = (B, num_point_tiles)
# ----------------------------------------------------------------------------
def stn3d_feature_kernel(x_ref, w1_ref, b1_ref, w2_ref, b2_ref, w3_ref,
                         out_ref, acc_ref):
    """acc_ref (8, 1024): running per-sublane max of the conv3 pre-activation
    (conv3 bias + ReLU are hoisted past the max into the head -- exact)."""
    t = pl.program_id(1)

    @pl.when(t == 0)
    def _init():
        acc_ref[...] = jnp.full(acc_ref.shape, -jnp.inf, jnp.float32)

    x = x_ref[0]                                              # (TN, 3) f32
    # conv1: K=3 would waste a full MXU push; do it as 3 broadcast FMAs on the
    # VPU instead (co-issues with the MXU work below).
    h = (x[:, 0:1] * w1_ref[0:1, :]
         + x[:, 1:2] * w1_ref[1:2, :]
         + x[:, 2:3] * w1_ref[2:3, :]
         + b1_ref[...])
    h = jnp.maximum(h, 0.0)                                   # (TN, 64) f32

    # conv2: bf16 operands, f32 accumulation on the MXU.
    h = jnp.dot(h.astype(jnp.bfloat16), w2_ref[...],
                preferred_element_type=jnp.float32) + b2_ref[...]
    h = jnp.maximum(h, 0.0)                                   # (TN, 128)
    h = h.astype(jnp.bfloat16)

    # conv3, chunked over output columns.  Each chunk's (TN, 256) f32 result
    # is reduced TN -> 8 rows with a pure-VPU vmax (reshape splits the sublane
    # dim; no XLU) and folded into the resident accumulator.
    tn = h.shape[0]
    for c in range(_C3 // _CHUNK):
        sl = slice(c * _CHUNK, (c + 1) * _CHUNK)
        h3c = jnp.dot(h, w3_ref[:, sl],
                      preferred_element_type=jnp.float32)     # (TN, 256)
        part = jnp.max(h3c.reshape(tn // 8, 8, _CHUNK), axis=0)  # (8, 256)
        acc_ref[:, sl] = jnp.maximum(acc_ref[:, sl], part)

    @pl.when(t == pl.num_programs(1) - 1)
    def _finish():
        # Emit the 8-row partial max (aligned, unmasked store); the single
        # cross-sublane 8->1 reduce happens once per batch in the head kernel.
        out_ref[0] = acc_ref[...]


# ----------------------------------------------------------------------------
# Kernel 2: FC head, batched over B (no grid -- whole arrays in VMEM)
# ----------------------------------------------------------------------------
def stn3d_head_kernel(pool_ref, b3_ref, fw1_ref, fb1_ref, fw2_ref, fb2_ref,
                      fw3_ref, fb3_ref, out_ref):
    # Finish the max-pool (8 -> 1 rows), then conv3 bias + ReLU (hoisted past
    # the max -- exact), then fc1/fc2/fc3.
    pooled = jnp.max(pool_ref[...], axis=1)                   # (B, 1024)
    feat = jnp.maximum(pooled + b3_ref[...], 0.0)
    g = jnp.dot(feat.astype(jnp.bfloat16), fw1_ref[...],
                preferred_element_type=jnp.float32) + fb1_ref[...]
    g = jnp.maximum(g, 0.0)                                   # (B, 512)
    g = jnp.dot(g.astype(jnp.bfloat16), fw2_ref[...],
                preferred_element_type=jnp.float32) + fb2_ref[...]
    g = jnp.maximum(g, 0.0)                                   # (B, 256)
    # fc3 padded to 128 output lanes; the 3x3 identity is folded into fb3.
    out_ref[...] = jnp.dot(g.astype(jnp.bfloat16), fw3_ref[...],
                           preferred_element_type=jnp.float32) + fb3_ref[...]


# ----------------------------------------------------------------------------
# Wrapper
# ----------------------------------------------------------------------------
def stn3d_forward(x_ncw, params, *, tile_n=1024):
    """x_ncw: (B, 3, N) float32, as in the PyTorch module. Returns (B, 3, 3)."""
    B, C, N = x_ncw.shape
    assert C == 3
    (w1, b1, w2, b2, w3, b3, fw1, fb1, fw2, fb2, fw3, fb3) = params

    # Points-major layout (points -> sublanes, channels -> lanes).
    x = jnp.transpose(x_ncw, (0, 2, 1)).astype(jnp.float32)       # (B, N, 3)

    def round_up(v, m):
        return ((v + m - 1) // m) * m

    # Point tile: multiple of 256 (full MXU row passes on v5e/v6e/v7x).
    tn = min(round_up(tile_n, 256), round_up(N, 256))
    num_tiles = -(-N // tn)
    n_pad = num_tiles * tn - N
    if n_pad:
        # Edge replication: duplicated points do not change the max -> exact.
        x = jnp.pad(x, ((0, 0), (0, n_pad), (0, 0)), mode="edge")

    bf16 = jnp.bfloat16
    w2b, w3b = w2.astype(bf16), w3.astype(bf16)

    conv_inputs = (x, w1, b1, w2b, b2, w3b)

    # Replicated (constant-index) weight specs.  NOTE: pipeline_mode =
    # pl.Buffered(1) would halve their double-buffered VMEM (~0.3 MiB here);
    # omitted since we are far under budget and to keep lowering risk minimal.
    def rep_spec(a):
        nd = a.ndim
        return pl.BlockSpec(a.shape, lambda b, t, _nd=nd: (0,) * _nd)

    in_specs = [pl.BlockSpec((1, tn, 3), lambda b, t: (b, t, 0))]
    in_specs += [rep_spec(a) for a in conv_inputs[1:]]

    conv_flops = 2 * B * num_tiles * tn * (3 * 64 + 64 * 128 + 128 * 1024)
    conv_bytes = (sum(int(a.size) * a.dtype.itemsize for a in conv_inputs)
                  + B * 8 * 1024 * 4)

    # VMEM budget at TN=1024 (worst case, incl. double-buffered weights and a
    # live (TN,256) conv3 chunk): ~6 MiB -- well under the 32 MiB limit on all
    # of v5e/v6e/v7x (v7x physical is 64 MiB per TC).
    pooled8 = pl.pallas_call(
        stn3d_feature_kernel,
        out_shape=jax.ShapeDtypeStruct((B, 8, 1024), jnp.float32),
        grid=(B, num_tiles),
        in_specs=in_specs,
        out_specs=pl.BlockSpec((1, 8, 1024), lambda b, t: (b, 0, 0)),
        scratch_shapes=[pltpu.VMEM((8, 1024), jnp.float32)],
        compiler_params=pltpu.CompilerParams(
            # Batch axis shards across the two v7x TensorCores; on v5e/v6e
            # (1 TC) this is a no-op.
            dimension_semantics=("parallel", "arbitrary"),
            vmem_limit_bytes=32 * 1024 * 1024),
        cost_estimate=pl.CostEstimate(
            flops=conv_flops, transcendentals=0, bytes_accessed=conv_bytes),
    )(*conv_inputs)

    # FC head: one batched call (M=B on the MXU), fc3 padded to 128 lanes with
    # the 3x3 identity folded into its bias.
    fw1b, fw2b = fw1.astype(bf16), fw2.astype(bf16)
    fw3p = jnp.zeros((fw3.shape[0], 128), bf16).at[:, :9].set(fw3.astype(bf16))
    iden = jnp.array([1, 0, 0, 0, 1, 0, 0, 0, 1], jnp.float32)
    fb3p = jnp.zeros((1, 128), jnp.float32).at[0, :9].set(fb3[0] + iden)

    head_inputs = (pooled8, b3, fw1b, fb1, fw2b, fb2, fw3p, fb3p)
    head_flops = 2 * B * (1024 * 512 + 512 * 256 + 256 * 128)
    head_bytes = (sum(int(a.size) * a.dtype.itemsize for a in head_inputs)
                  + B * 128 * 4)

    out = pl.pallas_call(
        stn3d_head_kernel,
        out_shape=jax.ShapeDtypeStruct((B, 128), jnp.float32),
        cost_estimate=pl.CostEstimate(
            flops=head_flops, transcendentals=0, bytes_accessed=head_bytes),
    )(*head_inputs)

    return out[:, :9].reshape(B, 3, 3)


# ----------------------------------------------------------------------------
# Parameters & pure-JAX reference
# ----------------------------------------------------------------------------
def make_params(key):
    """Synthetic parameters matching the PyTorch module's shapes.

    Conv1d weights (Cout, Cin, 1) stored transposed as (Cin, Cout); Linear
    weights (Cout, Cin) stored transposed as (Cin, Cout); biases as (1, Cout).
    """
    ks = jax.random.split(key, 12)

    def w(k, shape, scale=0.05):
        return (scale * jax.random.normal(k, shape)).astype(jnp.float32)

    w1,  b1  = w(ks[0], (3, 64)),     w(ks[1],  (1, 64))
    w2,  b2  = w(ks[2], (64, 128)),   w(ks[3],  (1, 128))
    w3,  b3  = w(ks[4], (128, 1024)), w(ks[5],  (1, 1024))
    fw1, fb1 = w(ks[6], (1024, 512)), w(ks[7],  (1, 512))
    fw2, fb2 = w(ks[8], (512, 256)),  w(ks[9],  (1, 256))
    fw3, fb3 = w(ks[10], (256, 9)),   w(ks[11], (1, 9))
    return (w1, b1, w2, b2, w3, b3, fw1, fb1, fw2, fb2, fw3, fb3)


def stn3d_reference(x_ncw, params):
    """Pure-JAX reference of the PyTorch forward (same bf16/f32 dot precision)."""
    (w1, b1, w2, b2, w3, b3, fw1, fb1, fw2, fb2, fw3, fb3) = params
    x = jnp.transpose(x_ncw, (0, 2, 1)).astype(jnp.float32)

    def mm(a, w):
        return jnp.dot(a.astype(jnp.bfloat16), w.astype(jnp.bfloat16),
                       preferred_element_type=jnp.float32)

    h = jax.nn.relu(jnp.dot(x, w1, preferred_element_type=jnp.float32) + b1)
    h = jax.nn.relu(mm(h, w2) + b2)
    h = jax.nn.relu(mm(h, w3) + b3)
    f = jnp.max(h, axis=1)                                        # (B, 1024)
    h = jax.nn.relu(mm(f, fw1) + fb1)
    h = jax.nn.relu(mm(h, fw2) + fb2)
    y = mm(h, fw3) + fb3
    iden = jnp.array([1, 0, 0, 0, 1, 0, 0, 0, 1], jnp.float32)[None, :]
    return (y + iden).reshape(-1, 3, 3)


if __name__ == "__main__":
    B, N = 2, 2048  # small point count; exercises 2 point tiles of 1024
    key = jax.random.PRNGKey(0)
    kx, kp = jax.random.split(key)
    x = jax.random.normal(kx, (B, 3, N), dtype=jnp.float32)  # NCW, like PyTorch
    params = make_params(kp)

    out = jax.block_until_ready(stn3d_forward(x, params, tile_n=1024))
    ref = jax.block_until_ready(stn3d_reference(x, params))

    assert out.shape == (B, 3, 3), out.shape
    err = float(jnp.max(jnp.abs(out - ref)))
    assert err < 5e-3, err
    print("KERNEL_OK")
</pallas_src>

<mosaic_0001>
module attributes {stable_mosaic.version = 11 : i64} {
  func.func @stn3d_feature_kernel(%arg0: i32, %arg1: i32, %arg2: memref<1x1024x3xf32, #tpu.memory_space<vmem>>, %arg3: memref<3x64xf32, #tpu.memory_space<vmem>>, %arg4: memref<1x64xf32, #tpu.memory_space<vmem>>, %arg5: memref<64x128xbf16, #tpu.memory_space<vmem>>, %arg6: memref<1x128xf32, #tpu.memory_space<vmem>>, %arg7: memref<128x1024xbf16, #tpu.memory_space<vmem>>, %arg8: memref<1x8x1024xf32, #tpu.memory_space<vmem>>, %arg9: memref<8x1024xf32, #tpu.memory_space<vmem>>) attributes {dimension_semantics = [#tpu.dimension_semantics<parallel>, #tpu.dimension_semantics<arbitrary>], iteration_bounds = array<i64: 2, 2>, scalar_prefetch = 0 : i64, scratch_operands = 1 : i64, tpu.core_type = #tpu.core_type<tc>, window_params = [{transform_indices = @transform_0, window_bounds = array<i64: 1, 1024, 3>}, {pipeline_mode = #tpu.pipeline_mode<synchronous>, transform_indices = @transform_1, window_bounds = array<i64: 3, 64>}, {pipeline_mode = #tpu.pipeline_mode<synchronous>, transform_indices = @transform_2, window_bounds = array<i64: 1, 64>}, {pipeline_mode = #tpu.pipeline_mode<synchronous>, transform_indices = @transform_3, window_bounds = array<i64: 64, 128>}, {pipeline_mode = #tpu.pipeline_mode<synchronous>, transform_indices = @transform_4, window_bounds = array<i64: 1, 128>}, {pipeline_mode = #tpu.pipeline_mode<synchronous>, transform_indices = @transform_5, window_bounds = array<i64: 128, 1024>}, {transform_indices = @transform_6, window_bounds = array<i64: 1, 8, 1024>}]} {
    %c0_i32 = arith.constant 0 : i32
    %0 = arith.cmpi eq, %arg1, %c0_i32 : i32
    %1 = arith.extui %0 : i1 to i32
    %c0_i32_0 = arith.constant 0 : i32
    %2 = arith.cmpi ne, %1, %c0_i32_0 : i32
    scf.if %2 {
      %cst_45 = arith.constant 0xFF800000 : f32
      %67 = vector.broadcast %cst_45 : f32 to vector<8x1024xf32>
      %c0_46 = arith.constant 0 : index
      %c0_47 = arith.constant 0 : index
      %68 = vector.load %arg9[%c0_46, %c0_47] : memref<8x1024xf32, #tpu.memory_space<vmem>>, vector<8x1024xf32>
      tpu.vector_store %arg9[%c0_46, %c0_47], %67 {strides = array<i32>} : memref<8x1024xf32, #tpu.memory_space<vmem>>, vector<8x1024xf32>,
    } else {
    }
    %c0 = arith.constant 0 : index
    %c0_1 = arith.constant 0 : index
    %c0_2 = arith.constant 0 : index
    %3 = vector.load %arg2[%c0, %c0_1, %c0_2] : memref<1x1024x3xf32, #tpu.memory_space<vmem>>, vector<1x1024x3xf32>
    %4 = vector.shape_cast %3 : vector<1x1024x3xf32> to vector<1024x3xf32>
    %5 = vector.extract_strided_slice %4 {offsets = [0, 0], sizes = [1024, 1], strides = [1, 1]} : vector<1024x3xf32> to vector<1024x1xf32>
    %c0_3 = arith.constant 0 : index
    %c0_4 = arith.constant 0 : index
    %6 = vector.load %arg3[%c0_3, %c0_4] : memref<3x64xf32, #tpu.memory_space<vmem>>, vector<1x64xf32>
    %7 = vector.broadcast %5 : vector<1024x1xf32> to vector<1024x64xf32>
    %8 = vector.broadcast %6 : vector<1x64xf32> to vector<1024x64xf32>
    %9 = arith.mulf %7, %8 : vector<1024x64xf32>
    %10 = vector.extract_strided_slice %4 {offsets = [0, 1], sizes = [1024, 1], strides = [1, 1]} : vector<1024x3xf32> to vector<1024x1xf32>
    %c1 = arith.constant 1 : index
    %c0_5 = arith.constant 0 : index
    %11 = vector.load %arg3[%c1, %c0_5] : memref<3x64xf32, #tpu.memory_space<vmem>>, vector<1x64xf32>
    %12 = vector.broadcast %10 : vector<1024x1xf32> to vector<1024x64xf32>
    %13 = vector.broadcast %11 : vector<1x64xf32> to vector<1024x64xf32>
    %14 = arith.mulf %12, %13 : vector<1024x64xf32>
    %15 = arith.addf %9, %14 : vector<1024x64xf32>
    %16 = vector.extract_strided_slice %4 {offsets = [0, 2], sizes = [1024, 1], strides = [1, 1]} : vector<1024x3xf32> to vector<1024x1xf32>
    %c2 = arith.constant 2 : index
    %c0_6 = arith.constant 0 : index
    %17 = vector.load %arg3[%c2, %c0_6] : memref<3x64xf32, #tpu.memory_space<vmem>>, vector<1x64xf32>
    %18 = vector.broadcast %16 : vector<1024x1xf32> to vector<1024x64xf32>
    %19 = vector.broadcast %17 : vector<1x64xf32> to vector<1024x64xf32>
    %20 = arith.mulf %18, %19 : vector<1024x64xf32>
    %21 = arith.addf %15, %20 : vector<1024x64xf32>
    %c0_7 = arith.constant 0 : index
    %c0_8 = arith.constant 0 : index
    %22 = vector.load %arg4[%c0_7, %c0_8] : memref<1x64xf32, #tpu.memory_space<vmem>>, vector<1x64xf32>
    %23 = vector.broadcast %22 : vector<1x64xf32> to vector<1024x64xf32>
    %24 = arith.addf %21, %23 : vector<1024x64xf32>
    %cst = arith.constant 0.000000e+00 : f32
    %25 = vector.broadcast %cst : f32 to vector<1024x64xf32>
    %26 = arith.maximumf %24, %25 : vector<1024x64xf32>
    %27 = arith.truncf %26 : vector<1024x64xf32> to vector<1024x64xbf16>
    %c0_9 = arith.constant 0 : index
    %c0_10 = arith.constant 0 : index
    %28 = vector.load %arg5[%c0_9, %c0_10] : memref<64x128xbf16, #tpu.memory_space<vmem>>, vector<64x128xbf16>
    %cst_11 = arith.constant dense<0.000000e+00> : vector<1024x128xf32>
    %29 = tpu.matmul %27, %28, %cst_11 {dimension_numbers = #tpu.dot_dimension_numbers<[1], [0], [0], [1], [0, 0, 1, 1], [], []>} : vector<1024x64xbf16>, vector<64x128xbf16>, vector<1024x128xf32> -> vector<1024x128xf32>
    %c0_12 = arith.constant 0 : index
    %c0_13 = arith.constant 0 : index
    %30 = vector.load %arg6[%c0_12, %c0_13] : memref<1x128xf32, #tpu.memory_space<vmem>>, vector<1x128xf32>
    %31 = vector.broadcast %30 : vector<1x128xf32> to vector<1024x128xf32>
    %32 = arith.addf %29, %31 : vector<1024x128xf32>
    %cst_14 = arith.constant 0.000000e+00 : f32
    %33 = vector.broadcast %cst_14 : f32 to vector<1024x128xf32>
    %34 = arith.maximumf %32, %33 : vector<1024x128xf32>
    %35 = arith.truncf %34 : vector<1024x128xf32> to vector<1024x128xbf16>
    %c0_15 = arith.constant 0 : index
    %c0_16 = arith.constant 0 : index
    %36 = vector.load %arg7[%c0_15, %c0_16] : memref<128x1024xbf16, #tpu.memory_space<vmem>>, vector<128x256xbf16>
    %cst_17 = arith.constant dense<0.000000e+00> : vector<1024x256xf32>
    %37 = tpu.matmul %35, %36, %cst_17 {dimension_numbers = #tpu.dot_dimension_numbers<[1], [0], [0], [1], [0, 0, 1, 1], [], []>} : vector<1024x128xbf16>, vector<128x256xbf16>, vector<1024x256xf32> -> vector<1024x256xf32>
    %38 = vector.shape_cast %37 : vector<1024x256xf32> to vector<128x8x256xf32>
    %cst_18 = arith.constant dense<0xFF800000> : vector<8x256xf32>
    %39 = vector.multi_reduction <maximumf>, %38, %cst_18 [0] : vector<128x8x256xf32> to vector<8x256xf32>
    %c0_19 = arith.constant 0 : index
    %c0_20 = arith.constant 0 : index
    %40 = vector.load %arg9[%c0_19, %c0_20] : memref<8x1024xf32, #tpu.memory_space<vmem>>, vector<8x256xf32>
    %41 = arith.maximumf %40, %39 : vector<8x256xf32>
    %c0_21 = arith.constant 0 : index
    %c0_22 = arith.constant 0 : index
    %42 = vector.load %arg9[%c0_21, %c0_22] : memref<8x1024xf32, #tpu.memory_space<vmem>>, vector<8x256xf32>
    tpu.vector_store %arg9[%c0_21, %c0_22], %41 {strides = array<i32>} : memref<8x1024xf32, #tpu.memory_space<vmem>>, vector<8x256xf32>,
    %c0_23 = arith.constant 0 : index
    %c256 = arith.constant 256 : index
    %43 = vector.load %arg7[%c0_23, %c256] : memref<128x1024xbf16, #tpu.memory_space<vmem>>, vector<128x256xbf16>
    %cst_24 = arith.constant dense<0.000000e+00> : vector<1024x256xf32>
    %44 = tpu.matmul %35, %43, %cst_24 {dimension_numbers = #tpu.dot_dimension_numbers<[1], [0], [0], [1], [0, 0, 1, 1], [], []>} : vector<1024x128xbf16>, vector<128x256xbf16>, vector<1024x256xf32> -> vector<1024x256xf32>
    %45 = vector.shape_cast %44 : vector<1024x256xf32> to vector<128x8x256xf32>
    %cst_25 = arith.constant dense<0xFF800000> : vector<8x256xf32>
    %46 = vector.multi_reduction <maximumf>, %45, %cst_25 [0] : vector<128x8x256xf32> to vector<8x256xf32>
    %c0_26 = arith.constant 0 : index
    %c256_27 = arith.constant 256 : index
    %47 = vector.load %arg9[%c0_26, %c256_27] : memref<8x1024xf32, #tpu.memory_space<vmem>>, vector<8x256xf32>
    %48 = arith.maximumf %47, %46 : vector<8x256xf32>
    %c0_28 = arith.constant 0 : index
    %c256_29 = arith.constant 256 : index
    %49 = vector.load %arg9[%c0_28, %c256_29] : memref<8x1024xf32, #tpu.memory_space<vmem>>, vector<8x256xf32>
    tpu.vector_store %arg9[%c0_28, %c256_29], %48 {strides = array<i32>} : memref<8x1024xf32, #tpu.memory_space<vmem>>, vector<8x256xf32>,
    %c0_30 = arith.constant 0 : index
    %c512 = arith.constant 512 : index
    %50 = vector.load %arg7[%c0_30, %c512] : memref<128x1024xbf16, #tpu.memory_space<vmem>>, vector<128x256xbf16>
    %cst_31 = arith.constant dense<0.000000e+00> : vector<1024x256xf32>
    %51 = tpu.matmul %35, %50, %cst_31 {dimension_numbers = #tpu.dot_dimension_numbers<[1], [0], [0], [1], [0, 0, 1, 1], [], []>} : vector<1024x128xbf16>, vector<128x256xbf16>, vector<1024x256xf32> -> vector<1024x256xf32>
    %52 = vector.shape_cast %51 : vector<1024x256xf32> to vector<128x8x256xf32>
    %cst_32 = arith.constant dense<0xFF800000> : vector<8x256xf32>
    %53 = vector.multi_reduction <maximumf>, %52, %cst_32 [0] : vector<128x8x256xf32> to vector<8x256xf32>
    %c0_33 = arith.constant 0 : index
    %c512_34 = arith.constant 512 : index
    %54 = vector.load %arg9[%c0_33, %c512_34] : memref<8x1024xf32, #tpu.memory_space<vmem>>, vector<8x256xf32>
    %55 = arith.maximumf %54, %53 : vector<8x256xf32>
    %c0_35 = arith.constant 0 : index
    %c512_36 = arith.constant 512 : index
    %56 = vector.load %arg9[%c0_35, %c512_36] : memref<8x1024xf32, #tpu.memory_space<vmem>>, vector<8x256xf32>
    tpu.vector_store %arg9[%c0_35, %c512_36], %55 {strides = array<i32>} : memref<8x1024xf32, #tpu.memory_space<vmem>>, vector<8x256xf32>,
    %c0_37 = arith.constant 0 : index
    %c768 = arith.constant 768 : index
    %57 = vector.load %arg7[%c0_37, %c768] : memref<128x1024xbf16, #tpu.memory_space<vmem>>, vector<128x256xbf16>
    %cst_38 = arith.constant dense<0.000000e+00> : vector<1024x256xf32>
    %58 = tpu.matmul %35, %57, %cst_38 {dimension_numbers = #tpu.dot_dimension_numbers<[1], [0], [0], [1], [0, 0, 1, 1], [], []>} : vector<1024x128xbf16>, vector<128x256xbf16>, vector<1024x256xf32> -> vector<1024x256xf32>
    %59 = vector.shape_cast %58 : vector<1024x256xf32> to vector<128x8x256xf32>
    %cst_39 = arith.constant dense<0xFF800000> : vector<8x256xf32>
    %60 = vector.multi_reduction <maximumf>, %59, %cst_39 [0] : vector<128x8x256xf32> to vector<8x256xf32>
    %c0_40 = arith.constant 0 : index
    %c768_41 = arith.constant 768 : index
    %61 = vector.load %arg9[%c0_40, %c768_41] : memref<8x1024xf32, #tpu.memory_space<vmem>>, vector<8x256xf32>
    %62 = arith.maximumf %61, %60 : vector<8x256xf32>
    %c0_42 = arith.constant 0 : index
    %c768_43 = arith.constant 768 : index
    %63 = vector.load %arg9[%c0_42, %c768_43] : memref<8x1024xf32, #tpu.memory_space<vmem>>, vector<8x256xf32>
    tpu.vector_store %arg9[%c0_42, %c768_43], %62 {strides = array<i32>} : memref<8x1024xf32, #tpu.memory_space<vmem>>, vector<8x256xf32>,
    %c1_i32 = arith.constant 1 : i32
    %64 = arith.cmpi eq, %arg1, %c1_i32 : i32
    %65 = arith.extui %64 : i1 to i32
    %c0_i32_44 = arith.constant 0 : i32
    %66 = arith.cmpi ne, %65, %c0_i32_44 : i32
    scf.if %66 {
      %c0_45 = arith.constant 0 : index
      %c0_46 = arith.constant 0 : index
      %67 = vector.load %arg9[%c0_45, %c0_46] : memref<8x1024xf32, #tpu.memory_space<vmem>>, vector<8x1024xf32>
      %c0_47 = arith.constant 0 : index
      %c0_48 = arith.constant 0 : index
      %c0_49 = arith.constant 0 : index
      %68 = vector.load %arg8[%c0_47, %c0_48, %c0_49] : memref<1x8x1024xf32, #tpu.memory_space<vmem>>, vector<1x8x1024xf32>
      %69 = vector.shape_cast %68 : vector<1x8x1024xf32> to vector<8x1024xf32>
      %70 = vector.shape_cast %67 : vector<8x1024xf32> to vector<1x8x1024xf32>
      tpu.vector_store %arg8[%c0_47, %c0_48, %c0_49], %70 {strides = array<i32>} : memref<1x8x1024xf32, #tpu.memory_space<vmem>>, vector<1x8x1024xf32>,
    } else {
    }
    return
  }
  func.func @transform_0(%arg0: i32, %arg1: i32) -> (i32, i32, i32) {
    %c0_i32 = arith.constant 0 : i32
    %c0_i32_0 = arith.constant 0 : i32
    return %arg0, %arg1, %c0_i32 : i32, i32, i32
  }
  func.func @transform_1(%arg0: i32, %arg1: i32) -> (i32, i32) {
    %c0_i32 = arith.constant 0 : i32
    %c0_i32_0 = arith.constant 0 : i32
    %c0_i32_1 = arith.constant 0 : i32
    return %c0_i32, %c0_i32_0 : i32, i32
  }
  func.func @transform_2(%arg0: i32, %arg1: i32) -> (i32, i32) {
    %c0_i32 = arith.constant 0 : i32
    %c0_i32_0 = arith.constant 0 : i32
    %c0_i32_1 = arith.constant 0 : i32
    return %c0_i32, %c0_i32_0 : i32, i32
  }
  func.func @transform_3(%arg0: i32, %arg1: i32) -> (i32, i32) {
    %c0_i32 = arith.constant 0 : i32
    %c0_i32_0 = arith.constant 0 : i32
    %c0_i32_1 = arith.constant 0 : i32
    return %c0_i32, %c0_i32_0 : i32, i32
  }
  func.func @transform_4(%arg0: i32, %arg1: i32) -> (i32, i32) {
    %c0_i32 = arith.constant 0 : i32
    %c0_i32_0 = arith.constant 0 : i32
    %c0_i32_1 = arith.constant 0 : i32
    return %c0_i32, %c0_i32_0 : i32, i32
  }
  func.func @transform_5(%arg0: i32, %arg1: i32) -> (i32, i32) {
    %c0_i32 = arith.constant 0 : i32
    %c0_i32_0 = arith.constant 0 : i32
    %c0_i32_1 = arith.constant 0 : i32
    return %c0_i32, %c0_i32_0 : i32, i32
  }
  func.func @transform_6(%arg0: i32, %arg1: i32) -> (i32, i32, i32) {
    %c0_i32 = arith.constant 0 : i32
    %c0_i32_0 = arith.constant 0 : i32
    %c0_i32_1 = arith.constant 0 : i32
    return %arg0, %c0_i32, %c0_i32_0 : i32, i32, i32
  }
}

</mosaic_0001>

<llo_original>
// kernel: tpu_custom_call.1
$region0: #{tpu_custom_call.1}
  #allocation0 [shape = 'u32[]', space=smem, size = 0x4, offset = 0x4, fixed_abs, tag = 'smem constant byte address 0x4 - core index']
  #allocation1 [shape = 'u32[144,128]{1,0:T(1,128)}', space=vmem, size = 0x12000, scoped, tag = 'internal scratch']
  #allocation2 [shape = 'f32[8,1024]{1,0:T(8,128)}', space=vmem, size = 0x8000, scoped, tag = 'scratch operand']
  %s0 = inlined_call_operand.vmem [shape: f32[2,2048,3], index: 0, kind: input, shape index: {}]
  %s1 = inlined_call_operand.vmem [shape: f32[3,64], index: 1, kind: input, shape index: {}]
  %s2 = inlined_call_operand.vmem [shape: f32[1,64], index: 2, kind: input, shape index: {}]
  %s3 = inlined_call_operand.vmem [shape: bf16[64,128], index: 3, kind: input, shape index: {}]
  %s4 = inlined_call_operand.vmem [shape: f32[1,128], index: 4, kind: input, shape index: {}]
  %s5 = inlined_call_operand.vmem [shape: bf16[128,1024], index: 5, kind: input, shape index: {}]
  %s6 = inlined_call_operand.hbm [shape: f32[2,8,1024], index: 6, kind: output, shape index: {}]
  %s7 = sld [smem:[#allocation0]]
  $region65: #{tpu_custom_call.1} parent=0
    _
  %s9 = ssub.s32 1, %s7
  %s10 = scalar_select 0, %s9, %s7
  $region1: #{tpu_custom_call.1} parent=0
    #allocation3 [shape = 'u8[65536]{0}', space=vmem, size = 0x10000, scoped, tag = 'output window, operand 0']
    #allocation4 [shape = 's32[2]{0}', space=sflag, size = 0x8, scoped, tag = 'scoped memory for tpu_custom_call.1']
    %11 = vsyncpa [#allocation4], 0
    %s12 = scalar_lea.sflag [#allocation4], 1
    %13 = vsyncpa %s12, 0
    loop: start=0, step=1, limit=6
    $region2: #{tpu_custom_call.1} parent=1 // loop_pre_header
      _
    $region3: #{tpu_custom_call.1} parent=1 // loop_header
      %s15 = sphi 0, %s19
      %p16 = scmp.ge.s32.totalorder %s15, 6
      %s22 = sphi 0, %s34
      %s23 = sphi 0, %s30
      %s24 = sphi 0, %s22
      %s25 = sphi 0, %s23
      %s26 = sphi 0, %s24
      %s27 = sphi 0, %s25
      %s39 = sphi 0, %s41
      %s42 = sphi 0, %s39
      %s43 = sphi 0, %s42
      %s59 = sphi 0, %s43
      %s63 = sphi 0, %s63
      %s65 = sphi 0, %s63
      %s66 = sphi 0, %s65
      %s80 = sphi 0, %s66
      %s84 = sphi 0, %s84
      %s86 = sphi 0, %s84
      %s87 = sphi 0, %s86
      %s101 = sphi 0, %s87
      %s105 = sphi 0, %s105
      %s107 = sphi 0, %s105
      %s108 = sphi 0, %s107
      %s122 = sphi 0, %s108
      %s126 = sphi 0, %s126
      %s128 = sphi 0, %s126
      %s129 = sphi 0, %s128
      %s143 = sphi 0, %s129
      %s147 = sphi 0, %s147
      %s149 = sphi 0, %s147
      %s150 = sphi 0, %s149
      %s164 = sphi 0, %s150
      %s170 = sphi 0, %s172
      %s173 = sphi 0, %s170
      %s174 = sphi 0, %s173
      %s190 = sphi 0, %s174
    $region4: #{tpu_custom_call.1} parent=1 // loop_header_branch
      %18 = sbr.rel (%p16) target = $region8
    $region5: #{tpu_custom_call.1} parent=1 // loop_body
      %s20 = ssub.s32 %s15, 1
      %s21 = ssub.s32 %s15, 2
      %s28 = sadd.s32 1, %s23
      %p29 = scmp.ge.s32.totalorder %s28, 2
      %s30 = scalar_select %p29, 0, %s28
      %s31 = sadd.s32 1, %s22
      %s32 = scalar_select %p29, %s31, %s22
      %p33 = scmp.ge.s32.totalorder %s32, 2
      %s34 = scalar_select %p33, 0, %s32
      %s35 = ssub.s32 %s22, %s34
      %s36 = ssub.s32 %s23, %s30
      %s37 = sor.u32 %s35, %s36
      %p38 = scmp.eq.s32.totalorder %s37, 0
      %s40 = sadd.s32 %s39, 1
      %s41 = scalar_select %p38, %s39, %s40
      %p44 = pneg %p38
      %p45 = scmp.eq.s32.totalorder %s15, 3
      %p46 = por %p44, %p45
      %p47 = scmp.ne.s32.totalorder %s39, %s42
      %p48 = scmp.eq.s32.totalorder %s15, 0
      %p49 = por %p47, %p48
      %p50 = scmp.ne.s32.totalorder %s39, %s42
      %p51 = scmp.eq.s32.totalorder %s20, 3
      %p52 = por %p50, %p51
      %p53 = scmp.ne.s32.totalorder %s42, %s43
      %p54 = scmp.eq.s32.totalorder %s20, 0
      %p55 = por %p53, %p54
      %p56 = scmp.ne.s32.totalorder %s42, %s43
      %p57 = scmp.eq.s32.totalorder %s21, 3
      %p58 = por %p56, %p57
      %p60 = scmp.ne.s32.totalorder %s43, %s59
      %p61 = scmp.eq.s32.totalorder %s21, 0
      %p62 = por %p60, %p61
      %s64 = sadd.s32 %s63, 1
      %p67 = scmp.eq.s32.totalorder %s15, 3
      %p68 = scmp.ne.s32.totalorder %s63, %s65
      %p69 = scmp.eq.s32.totalorder %s15, 0
      %p70 = por %p68, %p69
      %p71 = scmp.ne.s32.totalorder %s63, %s65
      %p72 = scmp.eq.s32.totalorder %s20, 3
      %p73 = por %p71, %p72
      %p74 = scmp.ne.s32.totalorder %s65, %s66
      %p75 = scmp.eq.s32.totalorder %s20, 0
      %p76 = por %p74, %p75
      %p77 = scmp.ne.s32.totalorder %s65, %s66
      %p78 = scmp.eq.s32.totalorder %s21, 3
      %p79 = por %p77, %p78
      %p81 = scmp.ne.s32.totalorder %s66, %s80
      %p82 = scmp.eq.s32.totalorder %s21, 0
      %p83 = por %p81, %p82
      %s85 = sadd.s32 %s84, 1
      %p88 = scmp.eq.s32.totalorder %s15, 3
      %p89 = scmp.ne.s32.totalorder %s84, %s86
      %p90 = scmp.eq.s32.totalorder %s15, 0
      %p91 = por %p89, %p90
      %p92 = scmp.ne.s32.totalorder %s84, %s86
      %p93 = scmp.eq.s32.totalorder %s20, 3
      %p94 = por %p92, %p93
      %p95 = scmp.ne.s32.totalorder %s86, %s87
      %p96 = scmp.eq.s32.totalorder %s20, 0
      %p97 = por %p95, %p96
      %p98 = scmp.ne.s32.totalorder %s86, %s87
      %p99 = scmp.eq.s32.totalorder %s21, 3
      %p100 = por %p98, %p99
      %p102 = scmp.ne.s32.totalorder %s87, %s101
      %p103 = scmp.eq.s32.totalorder %s21, 0
      %p104 = por %p102, %p103
      %s106 = sadd.s32 %s105, 1
      %p109 = scmp.eq.s32.totalorder %s15, 3
      %p110 = scmp.ne.s32.totalorder %s105, %s107
      %p111 = scmp.eq.s32.totalorder %s15, 0
      %p112 = por %p110, %p111
      %p113 = scmp.ne.s32.totalorder %s105, %s107
      %p114 = scmp.eq.s32.totalorder %s20, 3
      %p115 = por %p113, %p114
      %p116 = scmp.ne.s32.totalorder %s107, %s108
      %p117 = scmp.eq.s32.totalorder %s20, 0
      %p118 = por %p116, %p117
      %p119 = scmp.ne.s32.totalorder %s107, %s108
      %p120 = scmp.eq.s32.totalorder %s21, 3
      %p121 = por %p119, %p120
      %p123 = scmp.ne.s32.totalorder %s108, %s122
      %p124 = scmp.eq.s32.totalorder %s21, 0
      %p125 = por %p123, %p124
      %s127 = sadd.s32 %s126, 1
      %p130 = scmp.eq.s32.totalorder %s15, 3
      %p131 = scmp.ne.s32.totalorder %s126, %s128
      %p132 = scmp.eq.s32.totalorder %s15, 0
      %p133 = por %p131, %p132
      %p134 = scmp.ne.s32.totalorder %s126, %s128
      %p135 = scmp.eq.s32.totalorder %s20, 3
      %p136 = por %p134, %p135
      %p137 = scmp.ne.s32.totalorder %s128, %s129
      %p138 = scmp.eq.s32.totalorder %s20, 0
      %p139 = por %p137, %p138
      %p140 = scmp.ne.s32.totalorder %s128, %s129
      %p141 = scmp.eq.s32.totalorder %s21, 3
      %p142 = por %p140, %p141
      %p144 = scmp.ne.s32.totalorder %s129, %s143
      %p145 = scmp.eq.s32.totalorder %s21, 0
      %p146 = por %p144, %p145
      %s148 = sadd.s32 %s147, 1
      %p151 = scmp.eq.s32.totalorder %s15, 3
      %p152 = scmp.ne.s32.totalorder %s147, %s149
      %p153 = scmp.eq.s32.totalorder %s15, 0
      %p154 = por %p152, %p153
      %p155 = scmp.ne.s32.totalorder %s147, %s149
      %p156 = scmp.eq.s32.totalorder %s20, 3
      %p157 = por %p155, %p156
      %p158 = scmp.ne.s32.totalorder %s149, %s150
      %p159 = scmp.eq.s32.totalorder %s20, 0
      %p160 = por %p158, %p159
      %p161 = scmp.ne.s32.totalorder %s149, %s150
      %p162 = scmp.eq.s32.totalorder %s21, 3
      %p163 = por %p161, %p162
      %p165 = scmp.ne.s32.totalorder %s150, %s164
      %p166 = scmp.eq.s32.totalorder %s21, 0
      %p167 = por %p165, %p166
      %s168 = ssub.s32 %s22, %s34
      %p169 = scmp.eq.s32.totalorder %s168, 0
      %s171 = sadd.s32 %s170, 1
      %s172 = scalar_select %p169, %s170, %s171
      %p175 = pneg %p169
      %p176 = scmp.eq.s32.totalorder %s15, 3
      %p177 = por %p175, %p176
      %p178 = scmp.ne.s32.totalorder %s170, %s173
      %p179 = scmp.eq.s32.totalorder %s15, 0
      %p180 = por %p178, %p179
      %p181 = scmp.ne.s32.totalorder %s170, %s173
      %p182 = scmp.eq.s32.totalorder %s20, 3
      %p183 = por %p181, %p182
      %p184 = scmp.ne.s32.totalorder %s173, %s174
      %p185 = scmp.eq.s32.totalorder %s20, 0
      %p186 = por %p184, %p185
      %p187 = scmp.ne.s32.totalorder %s173, %s174
      %p188 = scmp.eq.s32.totalorder %s21, 3
      %p189 = por %p187, %p188
      %p191 = scmp.ne.s32.totalorder %s174, %s190
      %p192 = scmp.eq.s32.totalorder %s21, 0
      %p193 = por %p191, %p192
      %p194 = scmp.le.s32.totalorder 1, %s15
      %p195 = scmp.lt.s32.totalorder %s15, 5
      %p196 = pnand %p194, %p195
      %p197 = pneg %p196
      // Predicated region
      $region9: #{tpu_custom_call.1} parent=5 // pred_check
        _
      $region10: #{tpu_custom_call.1} parent=5 // pred_check_branch
        %199 = sbr.rel (%p196) target = $region12
      $region11: #{tpu_custom_call.1} parent=5 // pred_region
        %s200 = ssub.s32 %s15, 1
        // Predicated region
        $region13: #{tpu_custom_call.1} parent=11 // pred_check
          %p201 = pneg %p76
        $region14: #{tpu_custom_call.1} parent=11 // pred_check_branch
          %203 = sbr.rel (%p201) target = $region16
        $region15: #{tpu_custom_call.1} parent=11 // pred_region
          _
        $region16: #{tpu_custom_call.1} parent=11 // pred_fallthru
          _
        // Predicated region
        $region17: #{tpu_custom_call.1} parent=11 // pred_check
          %p204 = pneg %p97
        $region18: #{tpu_custom_call.1} parent=11 // pred_check_branch
          %206 = sbr.rel (%p204) target = $region20
        $region19: #{tpu_custom_call.1} parent=11 // pred_region
          _
        $region20: #{tpu_custom_call.1} parent=11 // pred_fallthru
          _
        // Predicated region
        $region21: #{tpu_custom_call.1} parent=11 // pred_check
          %p207 = pneg %p118
        $region22: #{tpu_custom_call.1} parent=11 // pred_check_branch
          %209 = sbr.rel (%p207) target = $region24
        $region23: #{tpu_custom_call.1} parent=11 // pred_region
          _
        $region24: #{tpu_custom_call.1} parent=11 // pred_fallthru
          _
        // Predicated region
        $region25: #{tpu_custom_call.1} parent=11 // pred_check
          %p210 = pneg %p139
        $region26: #{tpu_custom_call.1} parent=11 // pred_check_branch
          %212 = sbr.rel (%p210) target = $region28
        $region27: #{tpu_custom_call.1} parent=11 // pred_region
          _
        $region28: #{tpu_custom_call.1} parent=11 // pred_fallthru
          _
        // Predicated region
        $region29: #{tpu_custom_call.1} parent=11 // pred_check
          %p213 = pneg %p160
        $region30: #{tpu_custom_call.1} parent=11 // pred_check_branch
          %215 = sbr.rel (%p213) target = $region32
        $region31: #{tpu_custom_call.1} parent=11 // pred_region
          _
        $region32: #{tpu_custom_call.1} parent=11 // pred_fallthru
          _
      $region12: #{tpu_custom_call.1} parent=5 // pred_fallthru
        _
      %p216 = scmp.lt.s32.totalorder %s15, 4
      // Predicated region
      $region33: #{tpu_custom_call.1} parent=5 // pred_check
        %p217 = pneg %p216
      $region34: #{tpu_custom_call.1} parent=5 // pred_check_branch
        %219 = sbr.rel (%p217) target = $region36
      $region35: #{tpu_custom_call.1} parent=5 // pred_region
        // Predicated region
        $region37: #{tpu_custom_call.1} parent=35 // pred_check
          %p220 = pneg %p49
        $region38: #{tpu_custom_call.1} parent=35 // pred_check_branch
          %222 = sbr.rel (%p220) target = $region40
        $region39: #{tpu_custom_call.1} parent=35 // pred_region
          %s223 = smul.u32 128, %s23
          %p224 = scmp.lt.s32.totalorder %s22, 1
          %s225 = scalar_select %p224, %s22, 1
          %p226 = scmp.lt.s32.totalorder %s223, 255
          %s227 = scalar_select %p226, %s223, 255
          %s228 = smul.addr %s225, 256
          %s229 = sadd.s32 %s227, %s228
          %s230 = smul.addr %s229, 8
          %s231 = scalar_lea.vmem %s0, %s230
          %s232 = smul.u32 128, %s23
        $region40: #{tpu_custom_call.1} parent=35 // pred_fallthru
          _
      $region36: #{tpu_custom_call.1} parent=5 // pred_fallthru
        _
      %p233 = scmp.le.s32.totalorder 1, %s15
      %p234 = scmp.lt.s32.totalorder %s15, 5
      %p235 = pnand %p233, %p234
      %p236 = pneg %p235
      // Predicated region
      $region41: #{tpu_custom_call.1} parent=5 // pred_check
        _
      $region42: #{tpu_custom_call.1} parent=5 // pred_check_branch
        %238 = sbr.rel (%p235) target = $region44
      $region43: #{tpu_custom_call.1} parent=5 // pred_region
        %s239 = ssub.s32 %s15, 1
        %s240 = smul.u32 128, %s25
        %p241 = scmp.lt.s32.totalorder %s24, 1
        %s242 = scalar_select %p241, %s24, 1
        %p243 = scmp.lt.s32.totalorder %s240, 255
        %s244 = scalar_select %p243, %s240, 255
        %s245 = smul.addr %s242, 256
        %s246 = sadd.s32 %s244, %s245
        %s247 = smul.addr %s246, 8
        %s248 = scalar_lea.vmem %s0, %s247
        %p249 = pneg %p55
        %p250 = pneg %p52
        %p251 = pneg %p76
        %p252 = pneg %p73
        %p253 = pneg %p97
        %p254 = pneg %p94
        %p255 = pneg %p118
        %p256 = pneg %p115
        %p257 = pneg %p139
        %p258 = pneg %p136
        %p259 = pneg %p160
        %p260 = pneg %p157
        %p261 = pneg %p186
        %p262 = pneg %p183
        %s263 = sand.u32 %s173, 1
        %s264 = scalar_lea.sflag [#allocation4], %s263
        %s265 = sand.u32 %s173, 1
        %s266 = smul.addr %s265, 64
        %s267 = scalar_lea.vmem [#allocation3], %s266
        %s268 = smul.u32 128, %s25
        %p269 = scmp.lt.s32.totalorder %s24, 1
        %s270 = scalar_select %p269, %s24, 1
        %p271 = scmp.lt.s32.totalorder %s268, 255
        %s272 = scalar_select %p271, %s268, 255
        %s273 = smul.addr %s270, 256
        %s274 = sadd.s32 %s272, %s273
        %s275 = smul.addr %s274, 8
        %s276 = scalar_lea.vmem %s0, %s275
        %s277 = smul.u32 128, %s25
        %p279 = scmp.eq.s32.totalorder %s25, 0
        // Predicated region
        $region45: #{tpu_custom_call.1} parent=43 // pred_check
          %p280 = pneg %p279
        $region46: #{tpu_custom_call.1} parent=43 // pred_check_branch
          %282 = sbr.rel (%p280) target = $region48
        $region47: #{tpu_custom_call.1} parent=43 // pred_region
          %283 = vst [vmem:[#allocation2] sm:$0xff] -inf
          %284 = vst [vmem:[#allocation2 + $0x8] sm:$0xff] -inf
          %285 = vst [vmem:[#allocation2 + $0x10] sm:$0xff] -inf
          %286 = vst [vmem:[#allocation2 + $0x18] sm:$0xff] -inf
          %287 = vst [vmem:[#allocation2 + $0x20] sm:$0xff] -inf
          %288 = vst [vmem:[#allocation2 + $0x28] sm:$0xff] -inf
          %289 = vst [vmem:[#allocation2 + $0x30] sm:$0xff] -inf
          %290 = vst [vmem:[#allocation2 + $0x38] sm:$0xff] -inf
        $region48: #{tpu_custom_call.1} parent=43 // pred_fallthru
          _
        %v291 = vld [vmem:[%s276] sm:$0xff]
        %v292 = vld [vmem:[%s276 + $0x8] sm:$0xff]
        %v293 = vld [vmem:[%s276 + $0x10] sm:$0xff]
        %v294 = vld [vmem:[%s276 + $0x18] sm:$0xff]
        %v295 = vld [vmem:[%s276 + $0x20] sm:$0xff]
        %v296 = vld [vmem:[%s276 + $0x28] sm:$0xff]
        %v297 = vld [vmem:[%s276 + $0x30] sm:$0xff]
        %v298 = vld [vmem:[%s276 + $0x38] sm:$0xff]
        %v299 = vld [vmem:[%s276 + $0x40] sm:$0xff]
        %v300 = vld [vmem:[%s276 + $0x48] sm:$0xff]
        %v301 = vld [vmem:[%s276 + $0x50] sm:$0xff]
        %v302 = vld [vmem:[%s276 + $0x58] sm:$0xff]
        %v303 = vld [vmem:[%s276 + $0x60] sm:$0xff]
        %v304 = vld [vmem:[%s276 + $0x68] sm:$0xff]
        %v305 = vld [vmem:[%s276 + $0x70] sm:$0xff]
        %v306 = vld [vmem:[%s276 + $0x78] sm:$0xff]
        %v307 = vld [vmem:[%s276 + $0x80] sm:$0xff]
        %v308 = vld [vmem:[%s276 + $0x88] sm:$0xff]
        %v309 = vld [vmem:[%s276 + $0x90] sm:$0xff]
        %v310 = vld [vmem:[%s276 + $0x98] sm:$0xff]
        %v311 = vld [vmem:[%s276 + $0xa0] sm:$0xff]
        %v312 = vld [vmem:[%s276 + $0xa8] sm:$0xff]
        %v313 = vld [vmem:[%s276 + $0xb0] sm:$0xff]
        %v314 = vld [vmem:[%s276 + $0xb8] sm:$0xff]
        %v315 = vld [vmem:[%s276 + $0xc0] sm:$0xff]
        %v316 = vld [vmem:[%s276 + $0xc8] sm:$0xff]
        %v317 = vld [vmem:[%s276 + $0xd0] sm:$0xff]
        %v318 = vld [vmem:[%s276 + $0xd8] sm:$0xff]
        %v319 = vld [vmem:[%s276 + $0xe0] sm:$0xff]
        %v320 = vld [vmem:[%s276 + $0xe8] sm:$0xff]
        %v321 = vld [vmem:[%s276 + $0xf0] sm:$0xff]
        %v322 = vld [vmem:[%s276 + $0xf8] sm:$0xff]
        %v323 = vld [vmem:[%s276 + $0x100] sm:$0xff]
        %v324 = vld [vmem:[%s276 + $0x108] sm:$0xff]
        %v325 = vld [vmem:[%s276 + $0x110] sm:$0xff]
        %v326 = vld [vmem:[%s276 + $0x118] sm:$0xff]
        %v327 = vld [vmem:[%s276 + $0x120] sm:$0xff]
        %v328 = vld [vmem:[%s276 + $0x128] sm:$0xff]
        %v329 = vld [vmem:[%s276 + $0x130] sm:$0xff]
        %v330 = vld [vmem:[%s276 + $0x138] sm:$0xff]
        %v331 = vld [vmem:[%s276 + $0x140] sm:$0xff]
        %v332 = vld [vmem:[%s276 + $0x148] sm:$0xff]
        %v333 = vld [vmem:[%s276 + $0x150] sm:$0xff]
        %v334 = vld [vmem:[%s276 + $0x158] sm:$0xff]
        %v335 = vld [vmem:[%s276 + $0x160] sm:$0xff]
        %v336 = vld [vmem:[%s276 + $0x168] sm:$0xff]
        %v337 = vld [vmem:[%s276 + $0x170] sm:$0xff]
        %v338 = vld [vmem:[%s276 + $0x178] sm:$0xff]
        %v339 = vld [vmem:[%s276 + $0x180] sm:$0xff]
        %v340 = vld [vmem:[%s276 + $0x188] sm:$0xff]
        %v341 = vld [vmem:[%s276 + $0x190] sm:$0xff]
        %v342 = vld [vmem:[%s276 + $0x198] sm:$0xff]
        %v343 = vld [vmem:[%s276 + $0x1a0] sm:$0xff]
        %v344 = vld [vmem:[%s276 + $0x1a8] sm:$0xff]
        %v345 = vld [vmem:[%s276 + $0x1b0] sm:$0xff]
        %v346 = vld [vmem:[%s276 + $0x1b8] sm:$0xff]
        %v347 = vld [vmem:[%s276 + $0x1c0] sm:$0xff]
        %v348 = vld [vmem:[%s276 + $0x1c8] sm:$0xff]
        %v349 = vld [vmem:[%s276 + $0x1d0] sm:$0xff]
        %v350 = vld [vmem:[%s276 + $0x1d8] sm:$0xff]
        %v351 = vld [vmem:[%s276 + $0x1e0] sm:$0xff]
        %v352 = vld [vmem:[%s276 + $0x1e8] sm:$0xff]
        %v353 = vld [vmem:[%s276 + $0x1f0] sm:$0xff]
        %v354 = vld [vmem:[%s276 + $0x1f8] sm:$0xff]
        %v355 = vld [vmem:[%s276 + $0x200] sm:$0xff]
        %v356 = vld [vmem:[%s276 + $0x208] sm:$0xff]
        %v357 = vld [vmem:[%s276 + $0x210] sm:$0xff]
        %v358 = vld [vmem:[%s276 + $0x218] sm:$0xff]
        %v359 = vld [vmem:[%s276 + $0x220] sm:$0xff]
        %v360 = vld [vmem:[%s276 + $0x228] sm:$0xff]
        %v361 = vld [vmem:[%s276 + $0x230] sm:$0xff]
        %v362 = vld [vmem:[%s276 + $0x238] sm:$0xff]
        %v363 = vld [vmem:[%s276 + $0x240] sm:$0xff]
        %v364 = vld [vmem:[%s276 + $0x248] sm:$0xff]
        %v365 = vld [vmem:[%s276 + $0x250] sm:$0xff]
        %v366 = vld [vmem:[%s276 + $0x258] sm:$0xff]
        %v367 = vld [vmem:[%s276 + $0x260] sm:$0xff]
        %v368 = vld [vmem:[%s276 + $0x268] sm:$0xff]
        %v369 = vld [vmem:[%s276 + $0x270] sm:$0xff]
        %v370 = vld [vmem:[%s276 + $0x278] sm:$0xff]
        %v371 = vld [vmem:[%s276 + $0x280] sm:$0xff]
        %v372 = vld [vmem:[%s276 + $0x288] sm:$0xff]
        %v373 = vld [vmem:[%s276 + $0x290] sm:$0xff]
        %v374 = vld [vmem:[%s276 + $0x298] sm:$0xff]
        %v375 = vld [vmem:[%s276 + $0x2a0] sm:$0xff]
        %v376 = vld [vmem:[%s276 + $0x2a8] sm:$0xff]
        %v377 = vld [vmem:[%s276 + $0x2b0] sm:$0xff]
        %v378 = vld [vmem:[%s276 + $0x2b8] sm:$0xff]
        %v379 = vld [vmem:[%s276 + $0x2c0] sm:$0xff]
        %v380 = vld [vmem:[%s276 + $0x2c8] sm:$0xff]
        %v381 = vld [vmem:[%s276 + $0x2d0] sm:$0xff]
        %v382 = vld [vmem:[%s276 + $0x2d8] sm:$0xff]
        %v383 = vld [vmem:[%s276 + $0x2e0] sm:$0xff]
        %v384 = vld [vmem:[%s276 + $0x2e8] sm:$0xff]
        %v385 = vld [vmem:[%s276 + $0x2f0] sm:$0xff]
        %v386 = vld [vmem:[%s276 + $0x2f8] sm:$0xff]
        %v387 = vld [vmem:[%s276 + $0x300] sm:$0xff]
        %v388 = vld [vmem:[%s276 + $0x308] sm:$0xff]
        %v389 = vld [vmem:[%s276 + $0x310] sm:$0xff]
        %v390 = vld [vmem:[%s276 + $0x318] sm:$0xff]
        %v391 = vld [vmem:[%s276 + $0x320] sm:$0xff]
        %v392 = vld [vmem:[%s276 + $0x328] sm:$0xff]
        %v393 = vld [vmem:[%s276 + $0x330] sm:$0xff]
        %v394 = vld [vmem:[%s276 + $0x338] sm:$0xff]
        %v395 = vld [vmem:[%s276 + $0x340] sm:$0xff]
        %v396 = vld [vmem:[%s276 + $0x348] sm:$0xff]
        %v397 = vld [vmem:[%s276 + $0x350] sm:$0xff]
        %v398 = vld [vmem:[%s276 + $0x358] sm:$0xff]
        %v399 = vld [vmem:[%s276 + $0x360] sm:$0xff]
        %v400 = vld [vmem:[%s276 + $0x368] sm:$0xff]
        %v401 = vld [vmem:[%s276 + $0x370] sm:$0xff]
        %v402 = vld [vmem:[%s276 + $0x378] sm:$0xff]
        %v403 = vld [vmem:[%s276 + $0x380] sm:$0xff]
        %v404 = vld [vmem:[%s276 + $0x388] sm:$0xff]
        %v405 = vld [vmem:[%s276 + $0x390] sm:$0xff]
        %v406 = vld [vmem:[%s276 + $0x398] sm:$0xff]
        %v407 = vld [vmem:[%s276 + $0x3a0] sm:$0xff]
        %v408 = vld [vmem:[%s276 + $0x3a8] sm:$0xff]
        %v409 = vld [vmem:[%s276 + $0x3b0] sm:$0xff]
        %v410 = vld [vmem:[%s276 + $0x3b8] sm:$0xff]
        %v411 = vld [vmem:[%s276 + $0x3c0] sm:$0xff]
        %v412 = vld [vmem:[%s276 + $0x3c8] sm:$0xff]
        %v413 = vld [vmem:[%s276 + $0x3d0] sm:$0xff]
        %v414 = vld [vmem:[%s276 + $0x3d8] sm:$0xff]
        %v415 = vld [vmem:[%s276 + $0x3e0] sm:$0xff]
        %v416 = vld [vmem:[%s276 + $0x3e8] sm:$0xff]
        %v417 = vld [vmem:[%s276 + $0x3f0] sm:$0xff]
        %v418 = vld [vmem:[%s276 + $0x3f8] sm:$0xff]
        %v419 = vld [vmem:[%s1] sm:$0x1]
        %421 = vset.pattern.permute.xlu0 0
        %422 = vperm.xlu0 %421, %v291
        %v423 = vpop.permute.xlu0 %422
        %426 = vset.pattern.permute.xlu0 0
        %427 = vperm.xlu0 %426, %v292
        %v428 = vpop.permute.xlu0 %427
        %431 = vset.pattern.permute.xlu0 0
        %432 = vperm.xlu0 %431, %v293
        %v433 = vpop.permute.xlu0 %432
        %436 = vset.pattern.permute.xlu0 0
        %437 = vperm.xlu0 %436, %v294
        %v438 = vpop.permute.xlu0 %437
        %441 = vset.pattern.permute.xlu0 0
        %442 = vperm.xlu0 %441, %v295
        %v443 = vpop.permute.xlu0 %442
        %446 = vset.pattern.permute.xlu0 0
        %447 = vperm.xlu0 %446, %v296
        %v448 = vpop.permute.xlu0 %447
        %451 = vset.pattern.permute.xlu0 0
        %452 = vperm.xlu0 %451, %v297
        %v453 = vpop.permute.xlu0 %452
        %456 = vset.pattern.permute.xlu0 0
        %457 = vperm.xlu0 %456, %v298
        %v458 = vpop.permute.xlu0 %457
        %461 = vset.pattern.permute.xlu0 0
        %462 = vperm.xlu0 %461, %v299
        %v463 = vpop.permute.xlu0 %462
        %466 = vset.pattern.permute.xlu0 0
        %467 = vperm.xlu0 %466, %v300
        %v468 = vpop.permute.xlu0 %467
        %471 = vset.pattern.permute.xlu0 0
        %472 = vperm.xlu0 %471, %v301
        %v473 = vpop.permute.xlu0 %472
        %476 = vset.pattern.permute.xlu0 0
        %477 = vperm.xlu0 %476, %v302
        %v478 = vpop.permute.xlu0 %477
        %481 = vset.pattern.permute.xlu0 0
        %482 = vperm.xlu0 %481, %v303
        %v483 = vpop.permute.xlu0 %482
        %486 = vset.pattern.permute.xlu0 0
        %487 = vperm.xlu0 %486, %v304
        %v488 = vpop.permute.xlu0 %487
        %491 = vset.pattern.permute.xlu0 0
        %492 = vperm.xlu0 %491, %v305
        %v493 = vpop.permute.xlu0 %492
        %496 = vset.pattern.permute.xlu0 0
        %497 = vperm.xlu0 %496, %v306
        %v498 = vpop.permute.xlu0 %497
        %501 = vset.pattern.permute.xlu0 0
        %502 = vperm.xlu0 %501, %v307
        %v503 = vpop.permute.xlu0 %502
        %506 = vset.pattern.permute.xlu0 0
        %507 = vperm.xlu0 %506, %v308
        %v508 = vpop.permute.xlu0 %507
        %511 = vset.pattern.permute.xlu0 0
        %512 = vperm.xlu0 %511, %v309
        %v513 = vpop.permute.xlu0 %512
        %516 = vset.pattern.permute.xlu0 0
        %517 = vperm.xlu0 %516, %v310
        %v518 = vpop.permute.xlu0 %517
        %521 = vset.pattern.permute.xlu0 0
        %522 = vperm.xlu0 %521, %v311
        %v523 = vpop.permute.xlu0 %522
        %526 = vset.pattern.permute.xlu0 0
        %527 = vperm.xlu0 %526, %v312
        %v528 = vpop.permute.xlu0 %527
        %531 = vset.pattern.permute.xlu0 0
        %532 = vperm.xlu0 %531, %v313
        %v533 = vpop.permute.xlu0 %532
        %536 = vset.pattern.permute.xlu0 0
        %537 = vperm.xlu0 %536, %v314
        %v538 = vpop.permute.xlu0 %537
        %541 = vset.pattern.permute.xlu0 0
        %542 = vperm.xlu0 %541, %v315
        %v543 = vpop.permute.xlu0 %542
        %546 = vset.pattern.permute.xlu0 0
        %547 = vperm.xlu0 %546, %v316
        %v548 = vpop.permute.xlu0 %547
        %551 = vset.pattern.permute.xlu0 0
        %552 = vperm.xlu0 %551, %v317
        %v553 = vpop.permute.xlu0 %552
        %556 = vset.pattern.permute.xlu0 0
        %557 = vperm.xlu0 %556, %v318
        %v558 = vpop.permute.xlu0 %557
        %561 = vset.pattern.permute.xlu0 0
        %562 = vperm.xlu0 %561, %v319
        %v563 = vpop.permute.xlu0 %562
        %566 = vset.pattern.permute.xlu0 0
        %567 = vperm.xlu0 %566, %v320
        %v568 = vpop.permute.xlu0 %567
        %571 = vset.pattern.permute.xlu0 0
        %572 = vperm.xlu0 %571, %v321
        %v573 = vpop.permute.xlu0 %572
        %576 = vset.pattern.permute.xlu0 0
        %577 = vperm.xlu0 %576, %v322
        %v578 = vpop.permute.xlu0 %577
        %581 = vset.pattern.permute.xlu0 0
        %582 = vperm.xlu0 %581, %v323
        %v583 = vpop.permute.xlu0 %582
        %586 = vset.pattern.permute.xlu0 0
        %587 = vperm.xlu0 %586, %v324
        %v588 = vpop.permute.xlu0 %587
        %591 = vset.pattern.permute.xlu0 0
        %592 = vperm.xlu0 %591, %v325
        %v593 = vpop.permute.xlu0 %592
        %596 = vset.pattern.permute.xlu0 0
        %597 = vperm.xlu0 %596, %v326
        %v598 = vpop.permute.xlu0 %597
        %601 = vset.pattern.permute.xlu0 0
        %602 = vperm.xlu0 %601, %v327
        %v603 = vpop.permute.xlu0 %602
        %606 = vset.pattern.permute.xlu0 0
        %607 = vperm.xlu0 %606, %v328
        %v608 = vpop.permute.xlu0 %607
        %611 = vset.pattern.permute.xlu0 0
        %612 = vperm.xlu0 %611, %v329
        %v613 = vpop.permute.xlu0 %612
        %616 = vset.pattern.permute.xlu0 0
        %617 = vperm.xlu0 %616, %v330
        %v618 = vpop.permute.xlu0 %617
        %621 = vset.pattern.permute.xlu0 0
        %622 = vperm.xlu0 %621, %v331
        %v623 = vpop.permute.xlu0 %622
        %626 = vset.pattern.permute.xlu0 0
        %627 = vperm.xlu0 %626, %v332
        %v628 = vpop.permute.xlu0 %627
        %631 = vset.pattern.permute.xlu0 0
        %632 = vperm.xlu0 %631, %v333
        %v633 = vpop.permute.xlu0 %632
        %636 = vset.pattern.permute.xlu0 0
        %637 = vperm.xlu0 %636, %v334
        %v638 = vpop.permute.xlu0 %637
        %641 = vset.pattern.permute.xlu0 0
        %642 = vperm.xlu0 %641, %v335
        %v643 = vpop.permute.xlu0 %642
        %646 = vset.pattern.permute.xlu0 0
        %647 = vperm.xlu0 %646, %v336
        %v648 = vpop.permute.xlu0 %647
        %651 = vset.pattern.permute.xlu0 0
        %652 = vperm.xlu0 %651, %v337
        %v653 = vpop.permute.xlu0 %652
        %656 = vset.pattern.permute.xlu0 0
        %657 = vperm.xlu0 %656, %v338
        %v658 = vpop.permute.xlu0 %657
        %661 = vset.pattern.permute.xlu0 0
        %662 = vperm.xlu0 %661, %v339
        %v663 = vpop.permute.xlu0 %662
        %666 = vset.pattern.permute.xlu0 0
        %667 = vperm.xlu0 %666, %v340
        %v668 = vpop.permute.xlu0 %667
        %671 = vset.pattern.permute.xlu0 0
        %672 = vperm.xlu0 %671, %v341
        %v673 = vpop.permute.xlu0 %672
        %676 = vset.pattern.permute.xlu0 0
        %677 = vperm.xlu0 %676, %v342
        %v678 = vpop.permute.xlu0 %677
        %681 = vset.pattern.permute.xlu0 0
        %682 = vperm.xlu0 %681, %v343
        %v683 = vpop.permute.xlu0 %682
        %686 = vset.pattern.permute.xlu0 0
        %687 = vperm.xlu0 %686, %v344
        %v688 = vpop.permute.xlu0 %687
        %691 = vset.pattern.permute.xlu0 0
        %692 = vperm.xlu0 %691, %v345
        %v693 = vpop.permute.xlu0 %692
        %696 = vset.pattern.permute.xlu0 0
        %697 = vperm.xlu0 %696, %v346
        %v698 = vpop.permute.xlu0 %697
        %701 = vset.pattern.permute.xlu0 0
        %702 = vperm.xlu0 %701, %v347
        %v703 = vpop.permute.xlu0 %702
        %706 = vset.pattern.permute.xlu0 0
        %707 = vperm.xlu0 %706, %v348
        %v708 = vpop.permute.xlu0 %707
        %711 = vset.pattern.permute.xlu0 0
        %712 = vperm.xlu0 %711, %v349
        %v713 = vpop.permute.xlu0 %712
        %716 = vset.pattern.permute.xlu0 0
        %717 = vperm.xlu0 %716, %v350
        %v718 = vpop.permute.xlu0 %717
        %721 = vset.pattern.permute.xlu0 0
        %722 = vperm.xlu0 %721, %v351
        %v723 = vpop.permute.xlu0 %722
        %726 = vset.pattern.permute.xlu0 0
        %727 = vperm.xlu0 %726, %v352
        %v728 = vpop.permute.xlu0 %727
        %731 = vset.pattern.permute.xlu0 0
        %732 = vperm.xlu0 %731, %v353
        %v733 = vpop.permute.xlu0 %732
        %736 = vset.pattern.permute.xlu0 0
        %737 = vperm.xlu0 %736, %v354
        %v738 = vpop.permute.xlu0 %737
        %741 = vset.pattern.permute.xlu0 0
        %742 = vperm.xlu0 %741, %v355
        %v743 = vpop.permute.xlu0 %742
        %746 = vset.pattern.permute.xlu0 0
        %747 = vperm.xlu0 %746, %v356
        %v748 = vpop.permute.xlu0 %747
        %751 = vset.pattern.permute.xlu0 0
        %752 = vperm.xlu0 %751, %v357
        %v753 = vpop.permute.xlu0 %752
        %756 = vset.pattern.permute.xlu0 0
        %757 = vperm.xlu0 %756, %v358
        %v758 = vpop.permute.xlu0 %757
        %761 = vset.pattern.permute.xlu0 0
        %762 = vperm.xlu0 %761, %v359
        %v763 = vpop.permute.xlu0 %762
        %766 = vset.pattern.permute.xlu0 0
        %767 = vperm.xlu0 %766, %v360
        %v768 = vpop.permute.xlu0 %767
        %771 = vset.pattern.permute.xlu0 0
        %772 = vperm.xlu0 %771, %v361
        %v773 = vpop.permute.xlu0 %772
        %776 = vset.pattern.permute.xlu0 0
        %777 = vperm.xlu0 %776, %v362
        %v778 = vpop.permute.xlu0 %777
        %781 = vset.pattern.permute.xlu0 0
        %782 = vperm.xlu0 %781, %v363
        %v783 = vpop.permute.xlu0 %782
        %786 = vset.pattern.permute.xlu0 0
        %787 = vperm.xlu0 %786, %v364
        %v788 = vpop.permute.xlu0 %787
        %791 = vset.pattern.permute.xlu0 0
        %792 = vperm.xlu0 %791, %v365
        %v793 = vpop.permute.xlu0 %792
        %796 = vset.pattern.permute.xlu0 0
        %797 = vperm.xlu0 %796, %v366
        %v798 = vpop.permute.xlu0 %797
        %801 = vset.pattern.permute.xlu0 0
        %802 = vperm.xlu0 %801, %v367
        %v803 = vpop.permute.xlu0 %802
        %806 = vset.pattern.permute.xlu0 0
        %807 = vperm.xlu0 %806, %v368
        %v808 = vpop.permute.xlu0 %807
        %811 = vset.pattern.permute.xlu0 0
        %812 = vperm.xlu0 %811, %v369
        %v813 = vpop.permute.xlu0 %812
        %816 = vset.pattern.permute.xlu0 0
        %817 = vperm.xlu0 %816, %v370
        %v818 = vpop.permute.xlu0 %817
        %821 = vset.pattern.permute.xlu0 0
        %822 = vperm.xlu0 %821, %v371
        %v823 = vpop.permute.xlu0 %822
        %826 = vset.pattern.permute.xlu0 0
        %827 = vperm.xlu0 %826, %v372
        %v828 = vpop.permute.xlu0 %827
        %831 = vset.pattern.permute.xlu0 0
        %832 = vperm.xlu0 %831, %v373
        %v833 = vpop.permute.xlu0 %832
        %836 = vset.pattern.permute.xlu0 0
        %837 = vperm.xlu0 %836, %v374
        %v838 = vpop.permute.xlu0 %837
        %841 = vset.pattern.permute.xlu0 0
        %842 = vperm.xlu0 %841, %v375
        %v843 = vpop.permute.xlu0 %842
        %846 = vset.pattern.permute.xlu0 0
        %847 = vperm.xlu0 %846, %v376
        %v848 = vpop.permute.xlu0 %847
        %851 = vset.pattern.permute.xlu0 0
        %852 = vperm.xlu0 %851, %v377
        %v853 = vpop.permute.xlu0 %852
        %856 = vset.pattern.permute.xlu0 0
        %857 = vperm.xlu0 %856, %v378
        %v858 = vpop.permute.xlu0 %857
        %861 = vset.pattern.permute.xlu0 0
        %862 = vperm.xlu0 %861, %v379
        %v863 = vpop.permute.xlu0 %862
        %866 = vset.pattern.permute.xlu0 0
        %867 = vperm.xlu0 %866, %v380
        %v868 = vpop.permute.xlu0 %867
        %871 = vset.pattern.permute.xlu0 0
        %872 = vperm.xlu0 %871, %v381
        %v873 = vpop.permute.xlu0 %872
        %876 = vset.pattern.permute.xlu0 0
        %877 = vperm.xlu0 %876, %v382
        %v878 = vpop.permute.xlu0 %877
        %881 = vset.pattern.permute.xlu0 0
        %882 = vperm.xlu0 %881, %v383
        %v883 = vpop.permute.xlu0 %882
        %886 = vset.pattern.permute.xlu0 0
        %887 = vperm.xlu0 %886, %v384
        %v888 = vpop.permute.xlu0 %887
        %891 = vset.pattern.permute.xlu0 0
        %892 = vperm.xlu0 %891, %v385
        %v893 = vpop.permute.xlu0 %892
        %896 = vset.pattern.permute.xlu0 0
        %897 = vperm.xlu0 %896, %v386
        %v898 = vpop.permute.xlu0 %897
        %901 = vset.pattern.permute.xlu0 0
        %902 = vperm.xlu0 %901, %v387
        %v903 = vpop.permute.xlu0 %902
        %906 = vset.pattern.permute.xlu0 0
        %907 = vperm.xlu0 %906, %v388
        %v908 = vpop.permute.xlu0 %907
        %911 = vset.pattern.permute.xlu0 0
        %912 = vperm.xlu0 %911, %v389
        %v913 = vpop.permute.xlu0 %912
        %916 = vset.pattern.permute.xlu0 0
        %917 = vperm.xlu0 %916, %v390
        %v918 = vpop.permute.xlu0 %917
        %921 = vset.pattern.permute.xlu0 0
        %922 = vperm.xlu0 %921, %v391
        %v923 = vpop.permute.xlu0 %922
        %926 = vset.pattern.permute.xlu0 0
        %927 = vperm.xlu0 %926, %v392
        %v928 = vpop.permute.xlu0 %927
        %931 = vset.pattern.permute.xlu0 0
        %932 = vperm.xlu0 %931, %v393
        %v933 = vpop.permute.xlu0 %932
        %936 = vset.pattern.permute.xlu0 0
        %937 = vperm.xlu0 %936, %v394
        %v938 = vpop.permute.xlu0 %937
        %941 = vset.pattern.permute.xlu0 0
        %942 = vperm.xlu0 %941, %v395
        %v943 = vpop.permute.xlu0 %942
        %946 = vset.pattern.permute.xlu0 0
        %947 = vperm.xlu0 %946, %v396
        %v948 = vpop.permute.xlu0 %947
        %951 = vset.pattern.permute.xlu0 0
        %952 = vperm.xlu0 %951, %v397
        %v953 = vpop.permute.xlu0 %952
        %956 = vset.pattern.permute.xlu0 0
        %957 = vperm.xlu0 %956, %v398
        %v958 = vpop.permute.xlu0 %957
        %961 = vset.pattern.permute.xlu0 0
        %962 = vperm.xlu0 %961, %v399
        %v963 = vpop.permute.xlu0 %962
        %966 = vset.pattern.permute.xlu0 0
        %967 = vperm.xlu0 %966, %v400
        %v968 = vpop.permute.xlu0 %967
        %971 = vset.pattern.permute.xlu0 0
        %972 = vperm.xlu0 %971, %v401
        %v973 = vpop.permute.xlu0 %972
        %976 = vset.pattern.permute.xlu0 0
        %977 = vperm.xlu0 %976, %v402
        %v978 = vpop.permute.xlu0 %977
        %981 = vset.pattern.permute.xlu0 0
        %982 = vperm.xlu0 %981, %v403
        %v983 = vpop.permute.xlu0 %982
        %986 = vset.pattern.permute.xlu0 0
        %987 = vperm.xlu0 %986, %v404
        %v988 = vpop.permute.xlu0 %987
        %991 = vset.pattern.permute.xlu0 0
        %992 = vperm.xlu0 %991, %v405
        %v993 = vpop.permute.xlu0 %992
        %996 = vset.pattern.permute.xlu0 0
        %997 = vperm.xlu0 %996, %v406
        %v998 = vpop.permute.xlu0 %997
        %1001 = vset.pattern.permute.xlu0 0
        %1002 = vperm.xlu0 %1001, %v407
        %v1003 = vpop.permute.xlu0 %1002
        %1006 = vset.pattern.permute.xlu0 0
        %1007 = vperm.xlu0 %1006, %v408
        %v1008 = vpop.permute.xlu0 %1007
        %1011 = vset.pattern.permute.xlu0 0
        %1012 = vperm.xlu0 %1011, %v409
        %v1013 = vpop.permute.xlu0 %1012
        %1016 = vset.pattern.permute.xlu0 0
        %1017 = vperm.xlu0 %1016, %v410
        %v1018 = vpop.permute.xlu0 %1017
        %1021 = vset.pattern.permute.xlu0 0
        %1022 = vperm.xlu0 %1021, %v411
        %v1023 = vpop.permute.xlu0 %1022
        %1026 = vset.pattern.permute.xlu0 0
        %1027 = vperm.xlu0 %1026, %v412
        %v1028 = vpop.permute.xlu0 %1027
        %1031 = vset.pattern.permute.xlu0 0
        %1032 = vperm.xlu0 %1031, %v413
        %v1033 = vpop.permute.xlu0 %1032
        %1036 = vset.pattern.permute.xlu0 0
        %1037 = vperm.xlu0 %1036, %v414
        %v1038 = vpop.permute.xlu0 %1037
        %1041 = vset.pattern.permute.xlu0 0
        %1042 = vperm.xlu0 %1041, %v415
        %v1043 = vpop.permute.xlu0 %1042
        %1046 = vset.pattern.permute.xlu0 0
        %1047 = vperm.xlu0 %1046, %v416
        %v1048 = vpop.permute.xlu0 %1047
        %1051 = vset.pattern.permute.xlu0 0
        %1052 = vperm.xlu0 %1051, %v417
        %v1053 = vpop.permute.xlu0 %1052
        %1056 = vset.pattern.permute.xlu0 0
        %1057 = vperm.xlu0 %1056, %v418
        %v1058 = vpop.permute.xlu0 %1057
        %v1060 = vlaneseq
        %v1061 = vshrl.u32 %v1060, 7
        %v1062 = vsub.s32 0, %v1061
        %v1063 = vrot.slane %v419, %v1062
        %v1064 = vmul.f32 %v423, %v1063
        %v1065 = vmul.f32 %v428, %v1063
        %v1066 = vmul.f32 %v433, %v1063
        %v1067 = vmul.f32 %v438, %v1063
        %v1068 = vmul.f32 %v443, %v1063
        %v1069 = vmul.f32 %v448, %v1063
        %v1070 = vmul.f32 %v453, %v1063
        %v1071 = vmul.f32 %v458, %v1063
        %v1072 = vmul.f32 %v463, %v1063
        %v1073 = vmul.f32 %v468, %v1063
        %v1074 = vmul.f32 %v473, %v1063
        %v1075 = vmul.f32 %v478, %v1063
        %v1076 = vmul.f32 %v483, %v1063
        %v1077 = vmul.f32 %v488, %v1063
        %v1078 = vmul.f32 %v493, %v1063
        %v1079 = vmul.f32 %v498, %v1063
        %v1080 = vmul.f32 %v503, %v1063
        %v1081 = vmul.f32 %v508, %v1063
        %v1082 = vmul.f32 %v513, %v1063
        %v1083 = vmul.f32 %v518, %v1063
        %v1084 = vmul.f32 %v523, %v1063
        %v1085 = vmul.f32 %v528, %v1063
        %v1086 = vmul.f32 %v533, %v1063
        %v1087 = vmul.f32 %v538, %v1063
        %v1088 = vmul.f32 %v543, %v1063
        %v1089 = vmul.f32 %v548, %v1063
        %v1090 = vmul.f32 %v553, %v1063
        %v1091 = vmul.f32 %v558, %v1063
        %v1092 = vmul.f32 %v563, %v1063
        %v1093 = vmul.f32 %v568, %v1063
        %v1094 = vmul.f32 %v573, %v1063
        %v1095 = vmul.f32 %v578, %v1063
        %v1096 = vmul.f32 %v583, %v1063
        %v1097 = vmul.f32 %v588, %v1063
        %v1098 = vmul.f32 %v593, %v1063
        %v1099 = vmul.f32 %v598, %v1063
        %v1100 = vmul.f32 %v603, %v1063
        %v1101 = vmul.f32 %v608, %v1063
        %v1102 = vmul.f32 %v613, %v1063
        %v1103 = vmul.f32 %v618, %v1063
        %v1104 = vmul.f32 %v623, %v1063
        %v1105 = vmul.f32 %v628, %v1063
        %v1106 = vmul.f32 %v633, %v1063
        %v1107 = vmul.f32 %v638, %v1063
        %v1108 = vmul.f32 %v643, %v1063
        %v1109 = vmul.f32 %v648, %v1063
        %v1110 = vmul.f32 %v653, %v1063
        %v1111 = vmul.f32 %v658, %v1063
        %v1112 = vmul.f32 %v663, %v1063
        %v1113 = vmul.f32 %v668, %v1063
        %v1114 = vmul.f32 %v673, %v1063
        %v1115 = vmul.f32 %v678, %v1063
        %v1116 = vmul.f32 %v683, %v1063
        %v1117 = vmul.f32 %v688, %v1063
        %v1118 = vmul.f32 %v693, %v1063
        %v1119 = vmul.f32 %v698, %v1063
        %v1120 = vmul.f32 %v703, %v1063
        %v1121 = vmul.f32 %v708, %v1063
        %v1122 = vmul.f32 %v713, %v1063
        %v1123 = vmul.f32 %v718, %v1063
        %v1124 = vmul.f32 %v723, %v1063
        %v1125 = vmul.f32 %v728, %v1063
        %v1126 = vmul.f32 %v733, %v1063
        %v1127 = vmul.f32 %v738, %v1063
        %v1128 = vmul.f32 %v743, %v1063
        %v1129 = vmul.f32 %v748, %v1063
        %v1130 = vmul.f32 %v753, %v1063
        %v1131 = vmul.f32 %v758, %v1063
        %v1132 = vmul.f32 %v763, %v1063
        %v1133 = vmul.f32 %v768, %v1063
        %v1134 = vmul.f32 %v773, %v1063
        %v1135 = vmul.f32 %v778, %v1063
        %v1136 = vmul.f32 %v783, %v1063
        %v1137 = vmul.f32 %v788, %v1063
        %v1138 = vmul.f32 %v793, %v1063
        %v1139 = vmul.f32 %v798, %v1063
        %v1140 = vmul.f32 %v803, %v1063
        %v1141 = vmul.f32 %v808, %v1063
        %v1142 = vmul.f32 %v813, %v1063
        %v1143 = vmul.f32 %v818, %v1063
        %v1144 = vmul.f32 %v823, %v1063
        %v1145 = vmul.f32 %v828, %v1063
        %v1146 = vmul.f32 %v833, %v1063
        %v1147 = vmul.f32 %v838, %v1063
        %v1148 = vmul.f32 %v843, %v1063
        %v1149 = vmul.f32 %v848, %v1063
        %v1150 = vmul.f32 %v853, %v1063
        %v1151 = vmul.f32 %v858, %v1063
        %v1152 = vmul.f32 %v863, %v1063
        %v1153 = vmul.f32 %v868, %v1063
        %v1154 = vmul.f32 %v873, %v1063
        %v1155 = vmul.f32 %v878, %v1063
        %v1156 = vmul.f32 %v883, %v1063
        %v1157 = vmul.f32 %v888, %v1063
        %v1158 = vmul.f32 %v893, %v1063
        %v1159 = vmul.f32 %v898, %v1063
        %v1160 = vmul.f32 %v903, %v1063
        %v1161 = vmul.f32 %v908, %v1063
        %v1162 = vmul.f32 %v913, %v1063
        %v1163 = vmul.f32 %v918, %v1063
        %v1164 = vmul.f32 %v923, %v1063
        %v1165 = vmul.f32 %v928, %v1063
        %v1166 = vmul.f32 %v933, %v1063
        %v1167 = vmul.f32 %v938, %v1063
        %v1168 = vmul.f32 %v943, %v1063
        %v1169 = vmul.f32 %v948, %v1063
        %v1170 = vmul.f32 %v953, %v1063
        %v1171 = vmul.f32 %v958, %v1063
        %v1172 = vmul.f32 %v963, %v1063
        %v1173 = vmul.f32 %v968, %v1063
        %v1174 = vmul.f32 %v973, %v1063
        %v1175 = vmul.f32 %v978, %v1063
        %v1176 = vmul.f32 %v983, %v1063
        %v1177 = vmul.f32 %v988, %v1063
        %v1178 = vmul.f32 %v993, %v1063
        %v1179 = vmul.f32 %v998, %v1063
        %v1180 = vmul.f32 %v1003, %v1063
        %v1181 = vmul.f32 %v1008, %v1063
        %v1182 = vmul.f32 %v1013, %v1063
        %v1183 = vmul.f32 %v1018, %v1063
        %v1184 = vmul.f32 %v1023, %v1063
        %v1185 = vmul.f32 %v1028, %v1063
        %v1186 = vmul.f32 %v1033, %v1063
        %v1187 = vmul.f32 %v1038, %v1063
        %v1188 = vmul.f32 %v1043, %v1063
        %v1189 = vmul.f32 %v1048, %v1063
        %v1190 = vmul.f32 %v1053, %v1063
        %v1191 = vmul.f32 %v1058, %v1063
        %v1192 = vld [vmem:[%s1 + $0x1] sm:$0x1]
        %1193 = vset.pattern.permute.xlu0 1
        %1194 = vperm.xlu0 %1193, %v291
        %v1195 = vpop.permute.xlu0 %1194
        %1197 = vset.pattern.permute.xlu0 1
        %1198 = vperm.xlu0 %1197, %v292
        %v1199 = vpop.permute.xlu0 %1198
        %1201 = vset.pattern.permute.xlu0 1
        %1202 = vperm.xlu0 %1201, %v293
        %v1203 = vpop.permute.xlu0 %1202
        %1205 = vset.pattern.permute.xlu0 1
        %1206 = vperm.xlu0 %1205, %v294
        %v1207 = vpop.permute.xlu0 %1206
        %1209 = vset.pattern.permute.xlu0 1
        %1210 = vperm.xlu0 %1209, %v295
        %v1211 = vpop.permute.xlu0 %1210
        %1213 = vset.pattern.permute.xlu0 1
        %1214 = vperm.xlu0 %1213, %v296
        %v1215 = vpop.permute.xlu0 %1214
        %1217 = vset.pattern.permute.xlu0 1
        %1218 = vperm.xlu0 %1217, %v297
        %v1219 = vpop.permute.xlu0 %1218
        %1221 = vset.pattern.permute.xlu0 1
        %1222 = vperm.xlu0 %1221, %v298
        %v1223 = vpop.permute.xlu0 %1222
        %1225 = vset.pattern.permute.xlu0 1
        %1226 = vperm.xlu0 %1225, %v299
        %v1227 = vpop.permute.xlu0 %1226
        %1229 = vset.pattern.permute.xlu0 1
        %1230 = vperm.xlu0 %1229, %v300
        %v1231 = vpop.permute.xlu0 %1230
        %1233 = vset.pattern.permute.xlu0 1
        %1234 = vperm.xlu0 %1233, %v301
        %v1235 = vpop.permute.xlu0 %1234
        %1237 = vset.pattern.permute.xlu0 1
        %1238 = vperm.xlu0 %1237, %v302
        %v1239 = vpop.permute.xlu0 %1238
        %1241 = vset.pattern.permute.xlu0 1
        %1242 = vperm.xlu0 %1241, %v303
        %v1243 = vpop.permute.xlu0 %1242
        %1245 = vset.pattern.permute.xlu0 1
        %1246 = vperm.xlu0 %1245, %v304
        %v1247 = vpop.permute.xlu0 %1246
        %1249 = vset.pattern.permute.xlu0 1
        %1250 = vperm.xlu0 %1249, %v305
        %v1251 = vpop.permute.xlu0 %1250
        %1253 = vset.pattern.permute.xlu0 1
        %1254 = vperm.xlu0 %1253, %v306
        %v1255 = vpop.permute.xlu0 %1254
        %1257 = vset.pattern.permute.xlu0 1
        %1258 = vperm.xlu0 %1257, %v307
        %v1259 = vpop.permute.xlu0 %1258
        %1261 = vset.pattern.permute.xlu0 1
        %1262 = vperm.xlu0 %1261, %v308
        %v1263 = vpop.permute.xlu0 %1262
        %1265 = vset.pattern.permute.xlu0 1
        %1266 = vperm.xlu0 %1265, %v309
        %v1267 = vpop.permute.xlu0 %1266
        %1269 = vset.pattern.permute.xlu0 1
        %1270 = vperm.xlu0 %1269, %v310
        %v1271 = vpop.permute.xlu0 %1270
        %1273 = vset.pattern.permute.xlu0 1
        %1274 = vperm.xlu0 %1273, %v311
        %v1275 = vpop.permute.xlu0 %1274
        %1277 = vset.pattern.permute.xlu0 1
        %1278 = vperm.xlu0 %1277, %v312
        %v1279 = vpop.permute.xlu0 %1278
        %1281 = vset.pattern.permute.xlu0 1
        %1282 = vperm.xlu0 %1281, %v313
        %v1283 = vpop.permute.xlu0 %1282
        %1285 = vset.pattern.permute.xlu0 1
        %1286 = vperm.xlu0 %1285, %v314
        %v1287 = vpop.permute.xlu0 %1286
        %1289 = vset.pattern.permute.xlu0 1
        %1290 = vperm.xlu0 %1289, %v315
        %v1291 = vpop.permute.xlu0 %1290
        %1293 = vset.pattern.permute.xlu0 1
        %1294 = vperm.xlu0 %1293, %v316
        %v1295 = vpop.permute.xlu0 %1294
        %1297 = vset.pattern.permute.xlu0 1
        %1298 = vperm.xlu0 %1297, %v317
        %v1299 = vpop.permute.xlu0 %1298
        %1301 = vset.pattern.permute.xlu0 1
        %1302 = vperm.xlu0 %1301, %v318
        %v1303 = vpop.permute.xlu0 %1302
        %1305 = vset.pattern.permute.xlu0 1
        %1306 = vperm.xlu0 %1305, %v319
        %v1307 = vpop.permute.xlu0 %1306
        %1309 = vset.pattern.permute.xlu0 1
        %1310 = vperm.xlu0 %1309, %v320
        %v1311 = vpop.permute.xlu0 %1310
        %1313 = vset.pattern.permute.xlu0 1
        %1314 = vperm.xlu0 %1313, %v321
        %v1315 = vpop.permute.xlu0 %1314
        %1317 = vset.pattern.permute.xlu0 1
        %1318 = vperm.xlu0 %1317, %v322
        %v1319 = vpop.permute.xlu0 %1318
        %1321 = vset.pattern.permute.xlu0 1
        %1322 = vperm.xlu0 %1321, %v323
        %v1323 = vpop.permute.xlu0 %1322
        %1325 = vset.pattern.permute.xlu0 1
        %1326 = vperm.xlu0 %1325, %v324
        %v1327 = vpop.permute.xlu0 %1326
        %1329 = vset.pattern.permute.xlu0 1
        %1330 = vperm.xlu0 %1329, %v325
        %v1331 = vpop.permute.xlu0 %1330
        %1333 = vset.pattern.permute.xlu0 1
        %1334 = vperm.xlu0 %1333, %v326
        %v1335 = vpop.permute.xlu0 %1334
        %1337 = vset.pattern.permute.xlu0 1
        %1338 = vperm.xlu0 %1337, %v327
        %v1339 = vpop.permute.xlu0 %1338
        %1341 = vset.pattern.permute.xlu0 1
        %1342 = vperm.xlu0 %1341, %v328
        %v1343 = vpop.permute.xlu0 %1342
        %1345 = vset.pattern.permute.xlu0 1
        %1346 = vperm.xlu0 %1345, %v329
        %v1347 = vpop.permute.xlu0 %1346
        %1349 = vset.pattern.permute.xlu0 1
        %1350 = vperm.xlu0 %1349, %v330
        %v1351 = vpop.permute.xlu0 %1350
        %1353 = vset.pattern.permute.xlu0 1
        %1354 = vperm.xlu0 %1353, %v331
        %v1355 = vpop.permute.xlu0 %1354
        %1357 = vset.pattern.permute.xlu0 1
        %1358 = vperm.xlu0 %1357, %v332
        %v1359 = vpop.permute.xlu0 %1358
        %1361 = vset.pattern.permute.xlu0 1
        %1362 = vperm.xlu0 %1361, %v333
        %v1363 = vpop.permute.xlu0 %1362
        %1365 = vset.pattern.permute.xlu0 1
        %1366 = vperm.xlu0 %1365, %v334
        %v1367 = vpop.permute.xlu0 %1366
        %1369 = vset.pattern.permute.xlu0 1
        %1370 = vperm.xlu0 %1369, %v335
        %v1371 = vpop.permute.xlu0 %1370
        %1373 = vset.pattern.permute.xlu0 1
        %1374 = vperm.xlu0 %1373, %v336
        %v1375 = vpop.permute.xlu0 %1374
        %1377 = vset.pattern.permute.xlu0 1
        %1378 = vperm.xlu0 %1377, %v337
        %v1379 = vpop.permute.xlu0 %1378
        %1381 = vset.pattern.permute.xlu0 1
        %1382 = vperm.xlu0 %1381, %v338
        %v1383 = vpop.permute.xlu0 %1382
        %1385 = vset.pattern.permute.xlu0 1
        %1386 = vperm.xlu0 %1385, %v339
        %v1387 = vpop.permute.xlu0 %1386
        %1389 = vset.pattern.permute.xlu0 1
        %1390 = vperm.xlu0 %1389, %v340
        %v1391 = vpop.permute.xlu0 %1390
        %1393 = vset.pattern.permute.xlu0 1
        %1394 = vperm.xlu0 %1393, %v341
        %v1395 = vpop.permute.xlu0 %1394
        %1397 = vset.pattern.permute.xlu0 1
        %1398 = vperm.xlu0 %1397, %v342
        %v1399 = vpop.permute.xlu0 %1398
        %1401 = vset.pattern.permute.xlu0 1
        %1402 = vperm.xlu0 %1401, %v343
        %v1403 = vpop.permute.xlu0 %1402
        %1405 = vset.pattern.permute.xlu0 1
        %1406 = vperm.xlu0 %1405, %v344
        %v1407 = vpop.permute.xlu0 %1406
        %1409 = vset.pattern.permute.xlu0 1
        %1410 = vperm.xlu0 %1409, %v345
        %v1411 = vpop.permute.xlu0 %1410
        %1413 = vset.pattern.permute.xlu0 1
        %1414 = vperm.xlu0 %1413, %v346
        %v1415 = vpop.permute.xlu0 %1414
        %1417 = vset.pattern.permute.xlu0 1
        %1418 = vperm.xlu0 %1417, %v347
        %v1419 = vpop.permute.xlu0 %1418
        %1421 = vset.pattern.permute.xlu0 1
        %1422 = vperm.xlu0 %1421, %v348
        %v1423 = vpop.permute.xlu0 %1422
        %1425 = vset.pattern.permute.xlu0 1
        %1426 = vperm.xlu0 %1425, %v349
        %v1427 = vpop.permute.xlu0 %1426
        %1429 = vset.pattern.permute.xlu0 1
        %1430 = vperm.xlu0 %1429, %v350
        %v1431 = vpop.permute.xlu0 %1430
        %1433 = vset.pattern.permute.xlu0 1
        %1434 = vperm.xlu0 %1433, %v351
        %v1435 = vpop.permute.xlu0 %1434
        %1437 = vset.pattern.permute.xlu0 1
        %1438 = vperm.xlu0 %1437, %v352
        %v1439 = vpop.permute.xlu0 %1438
        %1441 = vset.pattern.permute.xlu0 1
        %1442 = vperm.xlu0 %1441, %v353
        %v1443 = vpop.permute.xlu0 %1442
        %1445 = vset.pattern.permute.xlu0 1
        %1446 = vperm.xlu0 %1445, %v354
        %v1447 = vpop.permute.xlu0 %1446
        %1449 = vset.pattern.permute.xlu0 1
        %1450 = vperm.xlu0 %1449, %v355
        %v1451 = vpop.permute.xlu0 %1450
        %1453 = vset.pattern.permute.xlu0 1
        %1454 = vperm.xlu0 %1453, %v356
        %v1455 = vpop.permute.xlu0 %1454
        %1457 = vset.pattern.permute.xlu0 1
        %1458 = vperm.xlu0 %1457, %v357
        %v1459 = vpop.permute.xlu0 %1458
        %1461 = vset.pattern.permute.xlu0 1
        %1462 = vperm.xlu0 %1461, %v358
        %v1463 = vpop.permute.xlu0 %1462
        %1465 = vset.pattern.permute.xlu0 1
        %1466 = vperm.xlu0 %1465, %v359
        %v1467 = vpop.permute.xlu0 %1466
        %1469 = vset.pattern.permute.xlu0 1
        %1470 = vperm.xlu0 %1469, %v360
        %v1471 = vpop.permute.xlu0 %1470
        %1473 = vset.pattern.permute.xlu0 1
        %1474 = vperm.xlu0 %1473, %v361
        %v1475 = vpop.permute.xlu0 %1474
        %1477 = vset.pattern.permute.xlu0 1
        %1478 = vperm.xlu0 %1477, %v362
        %v1479 = vpop.permute.xlu0 %1478
        %1481 = vset.pattern.permute.xlu0 1
        %1482 = vperm.xlu0 %1481, %v363
        %v1483 = vpop.permute.xlu0 %1482
        %1485 = vset.pattern.permute.xlu0 1
        %1486 = vperm.xlu0 %1485, %v364
        %v1487 = vpop.permute.xlu0 %1486
        %1489 = vset.pattern.permute.xlu0 1
        %1490 = vperm.xlu0 %1489, %v365
        %v1491 = vpop.permute.xlu0 %1490
        %1493 = vset.pattern.permute.xlu0 1
        %1494 = vperm.xlu0 %1493, %v366
        %v1495 = vpop.permute.xlu0 %1494
        %1497 = vset.pattern.permute.xlu0 1
        %1498 = vperm.xlu0 %1497, %v367
        %v1499 = vpop.permute.xlu0 %1498
        %1501 = vset.pattern.permute.xlu0 1
        %1502 = vperm.xlu0 %1501, %v368
        %v1503 = vpop.permute.xlu0 %1502
        %1505 = vset.pattern.permute.xlu0 1
        %1506 = vperm.xlu0 %1505, %v369
        %v1507 = vpop.permute.xlu0 %1506
        %1509 = vset.pattern.permute.xlu0 1
        %1510 = vperm.xlu0 %1509, %v370
        %v1511 = vpop.permute.xlu0 %1510
        %1513 = vset.pattern.permute.xlu0 1
        %1514 = vperm.xlu0 %1513, %v371
        %v1515 = vpop.permute.xlu0 %1514
        %1517 = vset.pattern.permute.xlu0 1
        %1518 = vperm.xlu0 %1517, %v372
        %v1519 = vpop.permute.xlu0 %1518
        %1521 = vset.pattern.permute.xlu0 1
        %1522 = vperm.xlu0 %1521, %v373
        %v1523 = vpop.permute.xlu0 %1522
        %1525 = vset.pattern.permute.xlu0 1
        %1526 = vperm.xlu0 %1525, %v374
        %v1527 = vpop.permute.xlu0 %1526
        %1529 = vset.pattern.permute.xlu0 1
        %1530 = vperm.xlu0 %1529, %v375
        %v1531 = vpop.permute.xlu0 %1530
        %1533 = vset.pattern.permute.xlu0 1
        %1534 = vperm.xlu0 %1533, %v376
        %v1535 = vpop.permute.xlu0 %1534
        %1537 = vset.pattern.permute.xlu0 1
        %1538 = vperm.xlu0 %1537, %v377
        %v1539 = vpop.permute.xlu0 %1538
        %1541 = vset.pattern.permute.xlu0 1
        %1542 = vperm.xlu0 %1541, %v378
        %v1543 = vpop.permute.xlu0 %1542
        %1545 = vset.pattern.permute.xlu0 1
        %1546 = vperm.xlu0 %1545, %v379
        %v1547 = vpop.permute.xlu0 %1546
        %1549 = vset.pattern.permute.xlu0 1
        %1550 = vperm.xlu0 %1549, %v380
        %v1551 = vpop.permute.xlu0 %1550
        %1553 = vset.pattern.permute.xlu0 1
        %1554 = vperm.xlu0 %1553, %v381
        %v1555 = vpop.permute.xlu0 %1554
        %1557 = vset.pattern.permute.xlu0 1
        %1558 = vperm.xlu0 %1557, %v382
        %v1559 = vpop.permute.xlu0 %1558
        %1561 = vset.pattern.permute.xlu0 1
        %1562 = vperm.xlu0 %1561, %v383
        %v1563 = vpop.permute.xlu0 %1562
        %1565 = vset.pattern.permute.xlu0 1
        %1566 = vperm.xlu0 %1565, %v384
        %v1567 = vpop.permute.xlu0 %1566
        %1569 = vset.pattern.permute.xlu0 1
        %1570 = vperm.xlu0 %1569, %v385
        %v1571 = vpop.permute.xlu0 %1570
        %1573 = vset.pattern.permute.xlu0 1
        %1574 = vperm.xlu0 %1573, %v386
        %v1575 = vpop.permute.xlu0 %1574
        %1577 = vset.pattern.permute.xlu0 1
        %1578 = vperm.xlu0 %1577, %v387
        %v1579 = vpop.permute.xlu0 %1578
        %1581 = vset.pattern.permute.xlu0 1
        %1582 = vperm.xlu0 %1581, %v388
        %v1583 = vpop.permute.xlu0 %1582
        %1585 = vset.pattern.permute.xlu0 1
        %1586 = vperm.xlu0 %1585, %v389
        %v1587 = vpop.permute.xlu0 %1586
        %1589 = vset.pattern.permute.xlu0 1
        %1590 = vperm.xlu0 %1589, %v390
        %v1591 = vpop.permute.xlu0 %1590
        %1593 = vset.pattern.permute.xlu0 1
        %1594 = vperm.xlu0 %1593, %v391
        %v1595 = vpop.permute.xlu0 %1594
        %1597 = vset.pattern.permute.xlu0 1
        %1598 = vperm.xlu0 %1597, %v392
        %v1599 = vpop.permute.xlu0 %1598
        %1601 = vset.pattern.permute.xlu0 1
        %1602 = vperm.xlu0 %1601, %v393
        %v1603 = vpop.permute.xlu0 %1602
        %1605 = vset.pattern.permute.xlu0 1
        %1606 = vperm.xlu0 %1605, %v394
        %v1607 = vpop.permute.xlu0 %1606
        %1609 = vset.pattern.permute.xlu0 1
        %1610 = vperm.xlu0 %1609, %v395
        %v1611 = vpop.permute.xlu0 %1610
        %1613 = vset.pattern.permute.xlu0 1
        %1614 = vperm.xlu0 %1613, %v396
        %v1615 = vpop.permute.xlu0 %1614
        %1617 = vset.pattern.permute.xlu0 1
        %1618 = vperm.xlu0 %1617, %v397
        %v1619 = vpop.permute.xlu0 %1618
        %1621 = vset.pattern.permute.xlu0 1
        %1622 = vperm.xlu0 %1621, %v398
        %v1623 = vpop.permute.xlu0 %1622
        %1625 = vset.pattern.permute.xlu0 1
        %1626 = vperm.xlu0 %1625, %v399
        %v1627 = vpop.permute.xlu0 %1626
        %1629 = vset.pattern.permute.xlu0 1
        %1630 = vperm.xlu0 %1629, %v400
        %v1631 = vpop.permute.xlu0 %1630
        %1633 = vset.pattern.permute.xlu0 1
        %1634 = vperm.xlu0 %1633, %v401
        %v1635 = vpop.permute.xlu0 %1634
        %1637 = vset.pattern.permute.xlu0 1
        %1638 = vperm.xlu0 %1637, %v402
        %v1639 = vpop.permute.xlu0 %1638
        %1641 = vset.pattern.permute.xlu0 1
        %1642 = vperm.xlu0 %1641, %v403
        %v1643 = vpop.permute.xlu0 %1642
        %1645 = vset.pattern.permute.xlu0 1
        %1646 = vperm.xlu0 %1645, %v404
        %v1647 = vpop.permute.xlu0 %1646
        %1649 = vset.pattern.permute.xlu0 1
        %1650 = vperm.xlu0 %1649, %v405
        %v1651 = vpop.permute.xlu0 %1650
        %1653 = vset.pattern.permute.xlu0 1
        %1654 = vperm.xlu0 %1653, %v406
        %v1655 = vpop.permute.xlu0 %1654
        %1657 = vset.pattern.permute.xlu0 1
        %1658 = vperm.xlu0 %1657, %v407
        %v1659 = vpop.permute.xlu0 %1658
        %1661 = vset.pattern.permute.xlu0 1
        %1662 = vperm.xlu0 %1661, %v408
        %v1663 = vpop.permute.xlu0 %1662
        %1665 = vset.pattern.permute.xlu0 1
        %1666 = vperm.xlu0 %1665, %v409
        %v1667 = vpop.permute.xlu0 %1666
        %1669 = vset.pattern.permute.xlu0 1
        %1670 = vperm.xlu0 %1669, %v410
        %v1671 = vpop.permute.xlu0 %1670
        %1673 = vset.pattern.permute.xlu0 1
        %1674 = vperm.xlu0 %1673, %v411
        %v1675 = vpop.permute.xlu0 %1674
        %1677 = vset.pattern.permute.xlu0 1
        %1678 = vperm.xlu0 %1677, %v412
        %v1679 = vpop.permute.xlu0 %1678
        %1681 = vset.pattern.permute.xlu0 1
        %1682 = vperm.xlu0 %1681, %v413
        %v1683 = vpop.permute.xlu0 %1682
        %1685 = vset.pattern.permute.xlu0 1
        %1686 = vperm.xlu0 %1685, %v414
        %v1687 = vpop.permute.xlu0 %1686
        %1689 = vset.pattern.permute.xlu0 1
        %1690 = vperm.xlu0 %1689, %v415
        %v1691 = vpop.permute.xlu0 %1690
        %1693 = vset.pattern.permute.xlu0 1
        %1694 = vperm.xlu0 %1693, %v416
        %v1695 = vpop.permute.xlu0 %1694
        %1697 = vset.pattern.permute.xlu0 1
        %1698 = vperm.xlu0 %1697, %v417
        %v1699 = vpop.permute.xlu0 %1698
        %1701 = vset.pattern.permute.xlu0 1
        %1702 = vperm.xlu0 %1701, %v418
        %v1703 = vpop.permute.xlu0 %1702
        %v1705 = vlaneseq
        %v1706 = vshrl.u32 %v1705, 7
        %v1707 = vsub.s32 0, %v1706
        %v1708 = vrot.slane %v1192, %v1707
        %v1709 = vmul.f32 %v1195, %v1708
        %v1710 = vmul.f32 %v1199, %v1708
        %v1711 = vmul.f32 %v1203, %v1708
        %v1712 = vmul.f32 %v1207, %v1708
        %v1713 = vmul.f32 %v1211, %v1708
        %v1714 = vmul.f32 %v1215, %v1708
        %v1715 = vmul.f32 %v1219, %v1708
        %v1716 = vmul.f32 %v1223, %v1708
        %v1717 = vmul.f32 %v1227, %v1708
        %v1718 = vmul.f32 %v1231, %v1708
        %v1719 = vmul.f32 %v1235, %v1708
        %v1720 = vmul.f32 %v1239, %v1708
        %v1721 = vmul.f32 %v1243, %v1708
        %v1722 = vmul.f32 %v1247, %v1708
        %v1723 = vmul.f32 %v1251, %v1708
        %v1724 = vmul.f32 %v1255, %v1708
        %v1725 = vmul.f32 %v1259, %v1708
        %v1726 = vmul.f32 %v1263, %v1708
        %v1727 = vmul.f32 %v1267, %v1708
        %v1728 = vmul.f32 %v1271, %v1708
        %v1729 = vmul.f32 %v1275, %v1708
        %v1730 = vmul.f32 %v1279, %v1708
        %v1731 = vmul.f32 %v1283, %v1708
        %v1732 = vmul.f32 %v1287, %v1708
        %v1733 = vmul.f32 %v1291, %v1708
        %v1734 = vmul.f32 %v1295, %v1708
        %v1735 = vmul.f32 %v1299, %v1708
        %v1736 = vmul.f32 %v1303, %v1708
        %v1737 = vmul.f32 %v1307, %v1708
        %v1738 = vmul.f32 %v1311, %v1708
        %v1739 = vmul.f32 %v1315, %v1708
        %v1740 = vmul.f32 %v1319, %v1708
        %v1741 = vmul.f32 %v1323, %v1708
        %v1742 = vmul.f32 %v1327, %v1708
        %v1743 = vmul.f32 %v1331, %v1708
        %v1744 = vmul.f32 %v1335, %v1708
        %v1745 = vmul.f32 %v1339, %v1708
        %v1746 = vmul.f32 %v1343, %v1708
        %v1747 = vmul.f32 %v1347, %v1708
        %v1748 = vmul.f32 %v1351, %v1708
        %v1749 = vmul.f32 %v1355, %v1708
        %v1750 = vmul.f32 %v1359, %v1708
        %v1751 = vmul.f32 %v1363, %v1708
        %v1752 = vmul.f32 %v1367, %v1708
        %v1753 = vmul.f32 %v1371, %v1708
        %v1754 = vmul.f32 %v1375, %v1708
        %v1755 = vmul.f32 %v1379, %v1708
        %v1756 = vmul.f32 %v1383, %v1708
        %v1757 = vmul.f32 %v1387, %v1708
        %v1758 = vmul.f32 %v1391, %v1708
        %v1759 = vmul.f32 %v1395, %v1708
        %v1760 = vmul.f32 %v1399, %v1708
        %v1761 = vmul.f32 %v1403, %v1708
        %v1762 = vmul.f32 %v1407, %v1708
        %v1763 = vmul.f32 %v1411, %v1708
        %v1764 = vmul.f32 %v1415, %v1708
        %v1765 = vmul.f32 %v1419, %v1708
        %v1766 = vmul.f32 %v1423, %v1708
        %v1767 = vmul.f32 %v1427, %v1708
        %v1768 = vmul.f32 %v1431, %v1708
        %v1769 = vmul.f32 %v1435, %v1708
        %v1770 = vmul.f32 %v1439, %v1708
        %v1771 = vmul.f32 %v1443, %v1708
        %v1772 = vmul.f32 %v1447, %v1708
        %v1773 = vmul.f32 %v1451, %v1708
        %v1774 = vmul.f32 %v1455, %v1708
        %v1775 = vmul.f32 %v1459, %v1708
        %v1776 = vmul.f32 %v1463, %v1708
        %v1777 = vmul.f32 %v1467, %v1708
        %v1778 = vmul.f32 %v1471, %v1708
        %v1779 = vmul.f32 %v1475, %v1708
        %v1780 = vmul.f32 %v1479, %v1708
        %v1781 = vmul.f32 %v1483, %v1708
        %v1782 = vmul.f32 %v1487, %v1708
        %v1783 = vmul.f32 %v1491, %v1708
        %v1784 = vmul.f32 %v1495, %v1708
        %v1785 = vmul.f32 %v1499, %v1708
        %v1786 = vmul.f32 %v1503, %v1708
        %v1787 = vmul.f32 %v1507, %v1708
        %v1788 = vmul.f32 %v1511, %v1708
        %v1789 = vmul.f32 %v1515, %v1708
        %v1790 = vmul.f32 %v1519, %v1708
        %v1791 = vmul.f32 %v1523, %v1708
        %v1792 = vmul.f32 %v1527, %v1708
        %v1793 = vmul.f32 %v1531, %v1708
        %v1794 = vmul.f32 %v1535, %v1708
        %v1795 = vmul.f32 %v1539, %v1708
        %v1796 = vmul.f32 %v1543, %v1708
        %v1797 = vmul.f32 %v1547, %v1708
        %v1798 = vmul.f32 %v1551, %v1708
        %v1799 = vmul.f32 %v1555, %v1708
        %v1800 = vmul.f32 %v1559, %v1708
        %v1801 = vmul.f32 %v1563, %v1708
        %v1802 = vmul.f32 %v1567, %v1708
        %v1803 = vmul.f32 %v1571, %v1708
        %v1804 = vmul.f32 %v1575, %v1708
        %v1805 = vmul.f32 %v1579, %v1708
        %v1806 = vmul.f32 %v1583, %v1708
        %v1807 = vmul.f32 %v1587, %v1708
        %v1808 = vmul.f32 %v1591, %v1708
        %v1809 = vmul.f32 %v1595, %v1708
        %v1810 = vmul.f32 %v1599, %v1708
        %v1811 = vmul.f32 %v1603, %v1708
        %v1812 = vmul.f32 %v1607, %v1708
        %v1813 = vmul.f32 %v1611, %v1708
        %v1814 = vmul.f32 %v1615, %v1708
        %v1815 = vmul.f32 %v1619, %v1708
        %v1816 = vmul.f32 %v1623, %v1708
        %v1817 = vmul.f32 %v1627, %v1708
        %v1818 = vmul.f32 %v1631, %v1708
        %v1819 = vmul.f32 %v1635, %v1708
        %v1820 = vmul.f32 %v1639, %v1708
        %v1821 = vmul.f32 %v1643, %v1708
        %v1822 = vmul.f32 %v1647, %v1708
        %v1823 = vmul.f32 %v1651, %v1708
        %v1824 = vmul.f32 %v1655, %v1708
        %v1825 = vmul.f32 %v1659, %v1708
        %v1826 = vmul.f32 %v1663, %v1708
        %v1827 = vmul.f32 %v1667, %v1708
        %v1828 = vmul.f32 %v1671, %v1708
        %v1829 = vmul.f32 %v1675, %v1708
        %v1830 = vmul.f32 %v1679, %v1708
        %v1831 = vmul.f32 %v1683, %v1708
        %v1832 = vmul.f32 %v1687, %v1708
        %v1833 = vmul.f32 %v1691, %v1708
        %v1834 = vmul.f32 %v1695, %v1708
        %v1835 = vmul.f32 %v1699, %v1708
        %v1836 = vmul.f32 %v1703, %v1708
        %v1837 = vadd.f32 %v1064, %v1709
        %v1838 = vadd.f32 %v1065, %v1710
        %v1839 = vadd.f32 %v1066, %v1711
        %v1840 = vadd.f32 %v1067, %v1712
        %v1841 = vadd.f32 %v1068, %v1713
        %v1842 = vadd.f32 %v1069, %v1714
        %v1843 = vadd.f32 %v1070, %v1715
        %v1844 = vadd.f32 %v1071, %v1716
        %v1845 = vadd.f32 %v1072, %v1717
        %v1846 = vadd.f32 %v1073, %v1718
        %v1847 = vadd.f32 %v1074, %v1719
        %v1848 = vadd.f32 %v1075, %v1720
        %v1849 = vadd.f32 %v1076, %v1721
        %v1850 = vadd.f32 %v1077, %v1722
        %v1851 = vadd.f32 %v1078, %v1723
        %v1852 = vadd.f32 %v1079, %v1724
        %v1853 = vadd.f32 %v1080, %v1725
        %v1854 = vadd.f32 %v1081, %v1726
        %v1855 = vadd.f32 %v1082, %v1727
        %v1856 = vadd.f32 %v1083, %v1728
        %v1857 = vadd.f32 %v1084, %v1729
        %v1858 = vadd.f32 %v1085, %v1730
        %v1859 = vadd.f32 %v1086, %v1731
        %v1860 = vadd.f32 %v1087, %v1732
        %v1861 = vadd.f32 %v1088, %v1733
        %v1862 = vadd.f32 %v1089, %v1734
        %v1863 = vadd.f32 %v1090, %v1735
        %v1864 = vadd.f32 %v1091, %v1736
        %v1865 = vadd.f32 %v1092, %v1737
        %v1866 = vadd.f32 %v1093, %v1738
        %v1867 = vadd.f32 %v1094, %v1739
        %v1868 = vadd.f32 %v1095, %v1740
        %v1869 = vadd.f32 %v1096, %v1741
        %v1870 = vadd.f32 %v1097, %v1742
        %v1871 = vadd.f32 %v1098, %v1743
        %v1872 = vadd.f32 %v1099, %v1744
        %v1873 = vadd.f32 %v1100, %v1745
        %v1874 = vadd.f32 %v1101, %v1746
        %v1875 = vadd.f32 %v1102, %v1747
        %v1876 = vadd.f32 %v1103, %v1748
        %v1877 = vadd.f32 %v1104, %v1749
        %v1878 = vadd.f32 %v1105, %v1750
        %v1879 = vadd.f32 %v1106, %v1751
        %v1880 = vadd.f32 %v1107, %v1752
        %v1881 = vadd.f32 %v1108, %v1753
        %v1882 = vadd.f32 %v1109, %v1754
        %v1883 = vadd.f32 %v1110, %v1755
        %v1884 = vadd.f32 %v1111, %v1756
        %v1885 = vadd.f32 %v1112, %v1757
        %v1886 = vadd.f32 %v1113, %v1758
        %v1887 = vadd.f32 %v1114, %v1759
        %v1888 = vadd.f32 %v1115, %v1760
        %v1889 = vadd.f32 %v1116, %v1761
        %v1890 = vadd.f32 %v1117, %v1762
        %v1891 = vadd.f32 %v1118, %v1763
        %v1892 = vadd.f32 %v1119, %v1764
        %v1893 = vadd.f32 %v1120, %v1765
        %v1894 = vadd.f32 %v1121, %v1766
        %v1895 = vadd.f32 %v1122, %v1767
        %v1896 = vadd.f32 %v1123, %v1768
        %v1897 = vadd.f32 %v1124, %v1769
        %v1898 = vadd.f32 %v1125, %v1770
        %v1899 = vadd.f32 %v1126, %v1771
        %v1900 = vadd.f32 %v1127, %v1772
        %v1901 = vadd.f32 %v1128, %v1773
        %v1902 = vadd.f32 %v1129, %v1774
        %v1903 = vadd.f32 %v1130, %v1775
        %v1904 = vadd.f32 %v1131, %v1776
        %v1905 = vadd.f32 %v1132, %v1777
        %v1906 = vadd.f32 %v1133, %v1778
        %v1907 = vadd.f32 %v1134, %v1779
        %v1908 = vadd.f32 %v1135, %v1780
        %v1909 = vadd.f32 %v1136, %v1781
        %v1910 = vadd.f32 %v1137, %v1782
        %v1911 = vadd.f32 %v1138, %v1783
        %v1912 = vadd.f32 %v1139, %v1784
        %v1913 = vadd.f32 %v1140, %v1785
        %v1914 = vadd.f32 %v1141, %v1786
        %v1915 = vadd.f32 %v1142, %v1787
        %v1916 = vadd.f32 %v1143, %v1788
        %v1917 = vadd.f32 %v1144, %v1789
        %v1918 = vadd.f32 %v1145, %v1790
        %v1919 = vadd.f32 %v1146, %v1791
        %v1920 = vadd.f32 %v1147, %v1792
        %v1921 = vadd.f32 %v1148, %v1793
        %v1922 = vadd.f32 %v1149, %v1794
        %v1923 = vadd.f32 %v1150, %v1795
        %v1924 = vadd.f32 %v1151, %v1796
        %v1925 = vadd.f32 %v1152, %v1797
        %v1926 = vadd.f32 %v1153, %v1798
        %v1927 = vadd.f32 %v1154, %v1799
        %v1928 = vadd.f32 %v1155, %v1800
        %v1929 = vadd.f32 %v1156, %v1801
        %v1930 = vadd.f32 %v1157, %v1802
        %v1931 = vadd.f32 %v1158, %v1803
        %v1932 = vadd.f32 %v1159, %v1804
        %v1933 = vadd.f32 %v1160, %v1805
        %v1934 = vadd.f32 %v1161, %v1806
        %v1935 = vadd.f32 %v1162, %v1807
        %v1936 = vadd.f32 %v1163, %v1808
        %v1937 = vadd.f32 %v1164, %v1809
        %v1938 = vadd.f32 %v1165, %v1810
        %v1939 = vadd.f32 %v1166, %v1811
        %v1940 = vadd.f32 %v1167, %v1812
        %v1941 = vadd.f32 %v1168, %v1813
        %v1942 = vadd.f32 %v1169, %v1814
        %v1943 = vadd.f32 %v1170, %v1815
        %v1944 = vadd.f32 %v1171, %v1816
        %v1945 = vadd.f32 %v1172, %v1817
        %v1946 = vadd.f32 %v1173, %v1818
        %v1947 = vadd.f32 %v1174, %v1819
        %v1948 = vadd.f32 %v1175, %v1820
        %v1949 = vadd.f32 %v1176, %v1821
        %v1950 = vadd.f32 %v1177, %v1822
        %v1951 = vadd.f32 %v1178, %v1823
        %v1952 = vadd.f32 %v1179, %v1824
        %v1953 = vadd.f32 %v1180, %v1825
        %v1954 = vadd.f32 %v1181, %v1826
        %v1955 = vadd.f32 %v1182, %v1827
        %v1956 = vadd.f32 %v1183, %v1828
        %v1957 = vadd.f32 %v1184, %v1829
        %v1958 = vadd.f32 %v1185, %v1830
        %v1959 = vadd.f32 %v1186, %v1831
        %v1960 = vadd.f32 %v1187, %v1832
        %v1961 = vadd.f32 %v1188, %v1833
        %v1962 = vadd.f32 %v1189, %v1834
        %v1963 = vadd.f32 %v1190, %v1835
        %v1964 = vadd.f32 %v1191, %v1836
        %v1965 = vld [vmem:[%s1 + $0x2] sm:$0x1]
        %1966 = vset.pattern.permute.xlu0 2
        %1967 = vperm.xlu0 %1966, %v291
        %v1968 = vpop.permute.xlu0 %1967
        %1970 = vset.pattern.permute.xlu0 2
        %1971 = vperm.xlu0 %1970, %v292
        %v1972 = vpop.permute.xlu0 %1971
        %1974 = vset.pattern.permute.xlu0 2
        %1975 = vperm.xlu0 %1974, %v293
        %v1976 = vpop.permute.xlu0 %1975
        %1978 = vset.pattern.permute.xlu0 2
        %1979 = vperm.xlu0 %1978, %v294
        %v1980 = vpop.permute.xlu0 %1979
        %1982 = vset.pattern.permute.xlu0 2
        %1983 = vperm.xlu0 %1982, %v295
        %v1984 = vpop.permute.xlu0 %1983
        %1986 = vset.pattern.permute.xlu0 2
        %1987 = vperm.xlu0 %1986, %v296
        %v1988 = vpop.permute.xlu0 %1987
        %1990 = vset.pattern.permute.xlu0 2
        %1991 = vperm.xlu0 %1990, %v297
        %v1992 = vpop.permute.xlu0 %1991
        %1994 = vset.pattern.permute.xlu0 2
        %1995 = vperm.xlu0 %1994, %v298
        %v1996 = vpop.permute.xlu0 %1995
        %1998 = vset.pattern.permute.xlu0 2
        %1999 = vperm.xlu0 %1998, %v299
        %v2000 = vpop.permute.xlu0 %1999
        %2002 = vset.pattern.permute.xlu0 2
        %2003 = vperm.xlu0 %2002, %v300
        %v2004 = vpop.permute.xlu0 %2003
        %2006 = vset.pattern.permute.xlu0 2
        %2007 = vperm.xlu0 %2006, %v301
        %v2008 = vpop.permute.xlu0 %2007
        %2010 = vset.pattern.permute.xlu0 2
        %2011 = vperm.xlu0 %2010, %v302
        %v2012 = vpop.permute.xlu0 %2011
        %2014 = vset.pattern.permute.xlu0 2
        %2015 = vperm.xlu0 %2014, %v303
        %v2016 = vpop.permute.xlu0 %2015
        %2018 = vset.pattern.permute.xlu0 2
        %2019 = vperm.xlu0 %2018, %v304
        %v2020 = vpop.permute.xlu0 %2019
        %2022 = vset.pattern.permute.xlu0 2
        %2023 = vperm.xlu0 %2022, %v305
        %v2024 = vpop.permute.xlu0 %2023
        %2026 = vset.pattern.permute.xlu0 2
        %2027 = vperm.xlu0 %2026, %v306
        %v2028 = vpop.permute.xlu0 %2027
        %2030 = vset.pattern.permute.xlu0 2
        %2031 = vperm.xlu0 %2030, %v307
        %v2032 = vpop.permute.xlu0 %2031
        %2034 = vset.pattern.permute.xlu0 2
        %2035 = vperm.xlu0 %2034, %v308
        %v2036 = vpop.permute.xlu0 %2035
        %2038 = vset.pattern.permute.xlu0 2
        %2039 = vperm.xlu0 %2038, %v309
        %v2040 = vpop.permute.xlu0 %2039
        %2042 = vset.pattern.permute.xlu0 2
        %2043 = vperm.xlu0 %2042, %v310
        %v2044 = vpop.permute.xlu0 %2043
        %2046 = vset.pattern.permute.xlu0 2
        %2047 = vperm.xlu0 %2046, %v311
        %v2048 = vpop.permute.xlu0 %2047
        %2050 = vset.pattern.permute.xlu0 2
        %2051 = vperm.xlu0 %2050, %v312
        %v2052 = vpop.permute.xlu0 %2051
        %2054 = vset.pattern.permute.xlu0 2
        %2055 = vperm.xlu0 %2054, %v313
        %v2056 = vpop.permute.xlu0 %2055
        %2058 = vset.pattern.permute.xlu0 2
        %2059 = vperm.xlu0 %2058, %v314
        %v2060 = vpop.permute.xlu0 %2059
        %2062 = vset.pattern.permute.xlu0 2
        %2063 = vperm.xlu0 %2062, %v315
        %v2064 = vpop.permute.xlu0 %2063
        %2066 = vset.pattern.permute.xlu0 2
        %2067 = vperm.xlu0 %2066, %v316
        %v2068 = vpop.permute.xlu0 %2067
        %2070 = vset.pattern.permute.xlu0 2
        %2071 = vperm.xlu0 %2070, %v317
        %v2072 = vpop.permute.xlu0 %2071
        %2074 = vset.pattern.permute.xlu0 2
        %2075 = vperm.xlu0 %2074, %v318
        %v2076 = vpop.permute.xlu0 %2075
        %2078 = vset.pattern.permute.xlu0 2
        %2079 = vperm.xlu0 %2078, %v319
        %v2080 = vpop.permute.xlu0 %2079
        %2082 = vset.pattern.permute.xlu0 2
        %2083 = vperm.xlu0 %2082, %v320
        %v2084 = vpop.permute.xlu0 %2083
        %2086 = vset.pattern.permute.xlu0 2
        %2087 = vperm.xlu0 %2086, %v321
        %v2088 = vpop.permute.xlu0 %2087
        %2090 = vset.pattern.permute.xlu0 2
        %2091 = vperm.xlu0 %2090, %v322
        %v2092 = vpop.permute.xlu0 %2091
        %2094 = vset.pattern.permute.xlu0 2
        %2095 = vperm.xlu0 %2094, %v323
        %v2096 = vpop.permute.xlu0 %2095
        %2098 = vset.pattern.permute.xlu0 2
        %2099 = vperm.xlu0 %2098, %v324
        %v2100 = vpop.permute.xlu0 %2099
        %2102 = vset.pattern.permute.xlu0 2
        %2103 = vperm.xlu0 %2102, %v325
        %v2104 = vpop.permute.xlu0 %2103
        %2106 = vset.pattern.permute.xlu0 2
        %2107 = vperm.xlu0 %2106, %v326
        %v2108 = vpop.permute.xlu0 %2107
        %2110 = vset.pattern.permute.xlu0 2
        %2111 = vperm.xlu0 %2110, %v327
        %v2112 = vpop.permute.xlu0 %2111
        %2114 = vset.pattern.permute.xlu0 2
        %2115 = vperm.xlu0 %2114, %v328
        %v2116 = vpop.permute.xlu0 %2115
        %2118 = vset.pattern.permute.xlu0 2
        %2119 = vperm.xlu0 %2118, %v329
        %v2120 = vpop.permute.xlu0 %2119
        %2122 = vset.pattern.permute.xlu0 2
        %2123 = vperm.xlu0 %2122, %v330
        %v2124 = vpop.permute.xlu0 %2123
        %2126 = vset.pattern.permute.xlu0 2
        %2127 = vperm.xlu0 %2126, %v331
        %v2128 = vpop.permute.xlu0 %2127
        %2130 = vset.pattern.permute.xlu0 2
        %2131 = vperm.xlu0 %2130, %v332
        %v2132 = vpop.permute.xlu0 %2131
        %2134 = vset.pattern.permute.xlu0 2
        %2135 = vperm.xlu0 %2134, %v333
        %v2136 = vpop.permute.xlu0 %2135
        %2138 = vset.pattern.permute.xlu0 2
        %2139 = vperm.xlu0 %2138, %v334
        %v2140 = vpop.permute.xlu0 %2139
        %2142 = vset.pattern.permute.xlu0 2
        %2143 = vperm.xlu0 %2142, %v335
        %v2144 = vpop.permute.xlu0 %2143
        %2146 = vset.pattern.permute.xlu0 2
        %2147 = vperm.xlu0 %2146, %v336
        %v2148 = vpop.permute.xlu0 %2147
        %2150 = vset.pattern.permute.xlu0 2
        %2151 = vperm.xlu0 %2150, %v337
        %v2152 = vpop.permute.xlu0 %2151
        %2154 = vset.pattern.permute.xlu0 2
        %2155 = vperm.xlu0 %2154, %v338
        %v2156 = vpop.permute.xlu0 %2155
        %2158 = vset.pattern.permute.xlu0 2
        %2159 = vperm.xlu0 %2158, %v339
        %v2160 = vpop.permute.xlu0 %2159
        %2162 = vset.pattern.permute.xlu0 2
        %2163 = vperm.xlu0 %2162, %v340
        %v2164 = vpop.permute.xlu0 %2163
        %2166 = vset.pattern.permute.xlu0 2
        %2167 = vperm.xlu0 %2166, %v341
        %v2168 = vpop.permute.xlu0 %2167
        %2170 = vset.pattern.permute.xlu0 2
        %2171 = vperm.xlu0 %2170, %v342
        %v2172 = vpop.permute.xlu0 %2171
        %2174 = vset.pattern.permute.xlu0 2
        %2175 = vperm.xlu0 %2174, %v343
        %v2176 = vpop.permute.xlu0 %2175
        %2178 = vset.pattern.permute.xlu0 2
        %2179 = vperm.xlu0 %2178, %v344
        %v2180 = vpop.permute.xlu0 %2179
        %2182 = vset.pattern.permute.xlu0 2
        %2183 = vperm.xlu0 %2182, %v345
        %v2184 = vpop.permute.xlu0 %2183
        %2186 = vset.pattern.permute.xlu0 2
        %2187 = vperm.xlu0 %2186, %v346
        %v2188 = vpop.permute.xlu0 %2187
        %2190 = vset.pattern.permute.xlu0 2
        %2191 = vperm.xlu0 %2190, %v347
        %v2192 = vpop.permute.xlu0 %2191
        %2194 = vset.pattern.permute.xlu0 2
        %2195 = vperm.xlu0 %2194, %v348
        %v2196 = vpop.permute.xlu0 %2195
        %2198 = vset.pattern.permute.xlu0 2
        %2199 = vperm.xlu0 %2198, %v349
        %v2200 = vpop.permute.xlu0 %2199
        %2202 = vset.pattern.permute.xlu0 2
        %2203 = vperm.xlu0 %2202, %v350
        %v2204 = vpop.permute.xlu0 %2203
        %2206 = vset.pattern.permute.xlu0 2
        %2207 = vperm.xlu0 %2206, %v351
        %v2208 = vpop.permute.xlu0 %2207
        %2210 = vset.pattern.permute.xlu0 2
        %2211 = vperm.xlu0 %2210, %v352
        %v2212 = vpop.permute.xlu0 %2211
        %2214 = vset.pattern.permute.xlu0 2
        %2215 = vperm.xlu0 %2214, %v353
        %v2216 = vpop.permute.xlu0 %2215
        %2218 = vset.pattern.permute.xlu0 2
        %2219 = vperm.xlu0 %2218, %v354
        %v2220 = vpop.permute.xlu0 %2219
        %2222 = vset.pattern.permute.xlu0 2
        %2223 = vperm.xlu0 %2222, %v355
        %v2224 = vpop.permute.xlu0 %2223
        %2226 = vset.pattern.permute.xlu0 2
        %2227 = vperm.xlu0 %2226, %v356
        %v2228 = vpop.permute.xlu0 %2227
        %2230 = vset.pattern.permute.xlu0 2
        %2231 = vperm.xlu0 %2230, %v357
        %v2232 = vpop.permute.xlu0 %2231
        %2234 = vset.pattern.permute.xlu0 2
        %2235 = vperm.xlu0 %2234, %v358
        %v2236 = vpop.permute.xlu0 %2235
        %2238 = vset.pattern.permute.xlu0 2
        %2239 = vperm.xlu0 %2238, %v359
        %v2240 = vpop.permute.xlu0 %2239
        %2242 = vset.pattern.permute.xlu0 2
        %2243 = vperm.xlu0 %2242, %v360
        %v2244 = vpop.permute.xlu0 %2243
        %2246 = vset.pattern.permute.xlu0 2
        %2247 = vperm.xlu0 %2246, %v361
        %v2248 = vpop.permute.xlu0 %2247
        %2250 = vset.pattern.permute.xlu0 2
        %2251 = vperm.xlu0 %2250, %v362
        %v2252 = vpop.permute.xlu0 %2251
        %2254 = vset.pattern.permute.xlu0 2
        %2255 = vperm.xlu0 %2254, %v363
        %v2256 = vpop.permute.xlu0 %2255
        %2258 = vset.pattern.permute.xlu0 2
        %2259 = vperm.xlu0 %2258, %v364
        %v2260 = vpop.permute.xlu0 %2259
        %2262 = vset.pattern.permute.xlu0 2
        %2263 = vperm.xlu0 %2262, %v365
        %v2264 = vpop.permute.xlu0 %2263
        %2266 = vset.pattern.permute.xlu0 2
        %2267 = vperm.xlu0 %2266, %v366
        %v2268 = vpop.permute.xlu0 %2267
        %2270 = vset.pattern.permute.xlu0 2
        %2271 = vperm.xlu0 %2270, %v367
        %v2272 = vpop.permute.xlu0 %2271
        %2274 = vset.pattern.permute.xlu0 2
        %2275 = vperm.xlu0 %2274, %v368
        %v2276 = vpop.permute.xlu0 %2275
        %2278 = vset.pattern.permute.xlu0 2
        %2279 = vperm.xlu0 %2278, %v369
        %v2280 = vpop.permute.xlu0 %2279
        %2282 = vset.pattern.permute.xlu0 2
        %2283 = vperm.xlu0 %2282, %v370
        %v2284 = vpop.permute.xlu0 %2283
        %2286 = vset.pattern.permute.xlu0 2
        %2287 = vperm.xlu0 %2286, %v371
        %v2288 = vpop.permute.xlu0 %2287
        %2290 = vset.pattern.permute.xlu0 2
        %2291 = vperm.xlu0 %2290, %v372
        %v2292 = vpop.permute.xlu0 %2291
        %2294 = vset.pattern.permute.xlu0 2
        %2295 = vperm.xlu0 %2294, %v373
        %v2296 = vpop.permute.xlu0 %2295
        %2298 = vset.pattern.permute.xlu0 2
        %2299 = vperm.xlu0 %2298, %v374
        %v2300 = vpop.permute.xlu0 %2299
        %2302 = vset.pattern.permute.xlu0 2
        %2303 = vperm.xlu0 %2302, %v375
        %v2304 = vpop.permute.xlu0 %2303
        %2306 = vset.pattern.permute.xlu0 2
        %2307 = vperm.xlu0 %2306, %v376
        %v2308 = vpop.permute.xlu0 %2307
        %2310 = vset.pattern.permute.xlu0 2
        %2311 = vperm.xlu0 %2310, %v377
        %v2312 = vpop.permute.xlu0 %2311
        %2314 = vset.pattern.permute.xlu0 2
        %2315 = vperm.xlu0 %2314, %v378
        %v2316 = vpop.permute.xlu0 %2315
        %2318 = vset.pattern.permute.xlu0 2
        %2319 = vperm.xlu0 %2318, %v379
        %v2320 = vpop.permute.xlu0 %2319
        %2322 = vset.pattern.permute.xlu0 2
        %2323 = vperm.xlu0 %2322, %v380
        %v2324 = vpop.permute.xlu0 %2323
        %2326 = vset.pattern.permute.xlu0 2
        %2327 = vperm.xlu0 %2326, %v381
        %v2328 = vpop.permute.xlu0 %2327
        %2330 = vset.pattern.permute.xlu0 2
        %2331 = vperm.xlu0 %2330, %v382
        %v2332 = vpop.permute.xlu0 %2331
        %2334 = vset.pattern.permute.xlu0 2
        %2335 = vperm.xlu0 %2334, %v383
        %v2336 = vpop.permute.xlu0 %2335
        %2338 = vset.pattern.permute.xlu0 2
        %2339 = vperm.xlu0 %2338, %v384
        %v2340 = vpop.permute.xlu0 %2339
        %2342 = vset.pattern.permute.xlu0 2
        %2343 = vperm.xlu0 %2342, %v385
        %v2344 = vpop.permute.xlu0 %2343
        %2346 = vset.pattern.permute.xlu0 2
        %2347 = vperm.xlu0 %2346, %v386
        %v2348 = vpop.permute.xlu0 %2347
        %2350 = vset.pattern.permute.xlu0 2
        %2351 = vperm.xlu0 %2350, %v387
        %v2352 = vpop.permute.xlu0 %2351
        %2354 = vset.pattern.permute.xlu0 2
        %2355 = vperm.xlu0 %2354, %v388
        %v2356 = vpop.permute.xlu0 %2355
        %2358 = vset.pattern.permute.xlu0 2
        %2359 = vperm.xlu0 %2358, %v389
        %v2360 = vpop.permute.xlu0 %2359
        %2362 = vset.pattern.permute.xlu0 2
        %2363 = vperm.xlu0 %2362, %v390
        %v2364 = vpop.permute.xlu0 %2363
        %2366 = vset.pattern.permute.xlu0 2
        %2367 = vperm.xlu0 %2366, %v391
        %v2368 = vpop.permute.xlu0 %2367
        %2370 = vset.pattern.permute.xlu0 2
        %2371 = vperm.xlu0 %2370, %v392
        %v2372 = vpop.permute.xlu0 %2371
        %2374 = vset.pattern.permute.xlu0 2
        %2375 = vperm.xlu0 %2374, %v393
        %v2376 = vpop.permute.xlu0 %2375
        %2378 = vset.pattern.permute.xlu0 2
        %2379 = vperm.xlu0 %2378, %v394
        %v2380 = vpop.permute.xlu0 %2379
        %2382 = vset.pattern.permute.xlu0 2
        %2383 = vperm.xlu0 %2382, %v395
        %v2384 = vpop.permute.xlu0 %2383
        %2386 = vset.pattern.permute.xlu0 2
        %2387 = vperm.xlu0 %2386, %v396
        %v2388 = vpop.permute.xlu0 %2387
        %2390 = vset.pattern.permute.xlu0 2
        %2391 = vperm.xlu0 %2390, %v397
        %v2392 = vpop.permute.xlu0 %2391
        %2394 = vset.pattern.permute.xlu0 2
        %2395 = vperm.xlu0 %2394, %v398
        %v2396 = vpop.permute.xlu0 %2395
        %2398 = vset.pattern.permute.xlu0 2
        %2399 = vperm.xlu0 %2398, %v399
        %v2400 = vpop.permute.xlu0 %2399
        %2402 = vset.pattern.permute.xlu0 2
        %2403 = vperm.xlu0 %2402, %v400
        %v2404 = vpop.permute.xlu0 %2403
        %2406 = vset.pattern.permute.xlu0 2
        %2407 = vperm.xlu0 %2406, %v401
        %v2408 = vpop.permute.xlu0 %2407
        %2410 = vset.pattern.permute.xlu0 2
        %2411 = vperm.xlu0 %2410, %v402
        %v2412 = vpop.permute.xlu0 %2411
        %2414 = vset.pattern.permute.xlu0 2
        %2415 = vperm.xlu0 %2414, %v403
        %v2416 = vpop.permute.xlu0 %2415
        %2418 = vset.pattern.permute.xlu0 2
        %2419 = vperm.xlu0 %2418, %v404
        %v2420 = vpop.permute.xlu0 %2419
        %2422 = vset.pattern.permute.xlu0 2
        %2423 = vperm.xlu0 %2422, %v405
        %v2424 = vpop.permute.xlu0 %2423
        %2426 = vset.pattern.permute.xlu0 2
        %2427 = vperm.xlu0 %2426, %v406
        %v2428 = vpop.permute.xlu0 %2427
        %2430 = vset.pattern.permute.xlu0 2
        %2431 = vperm.xlu0 %2430, %v407
        %v2432 = vpop.permute.xlu0 %2431
        %2434 = vset.pattern.permute.xlu0 2
        %2435 = vperm.xlu0 %2434, %v408
        %v2436 = vpop.permute.xlu0 %2435
        %2438 = vset.pattern.permute.xlu0 2
        %2439 = vperm.xlu0 %2438, %v409
        %v2440 = vpop.permute.xlu0 %2439
        %2442 = vset.pattern.permute.xlu0 2
        %2443 = vperm.xlu0 %2442, %v410
        %v2444 = vpop.permute.xlu0 %2443
        %2446 = vset.pattern.permute.xlu0 2
        %2447 = vperm.xlu0 %2446, %v411
        %v2448 = vpop.permute.xlu0 %2447
        %2450 = vset.pattern.permute.xlu0 2
        %2451 = vperm.xlu0 %2450, %v412
        %v2452 = vpop.permute.xlu0 %2451
        %2454 = vset.pattern.permute.xlu0 2
        %2455 = vperm.xlu0 %2454, %v413
        %v2456 = vpop.permute.xlu0 %2455
        %2458 = vset.pattern.permute.xlu0 2
        %2459 = vperm.xlu0 %2458, %v414
        %v2460 = vpop.permute.xlu0 %2459
        %2462 = vset.pattern.permute.xlu0 2
        %2463 = vperm.xlu0 %2462, %v415
        %v2464 = vpop.permute.xlu0 %2463
        %2466 = vset.pattern.permute.xlu0 2
        %2467 = vperm.xlu0 %2466, %v416
        %v2468 = vpop.permute.xlu0 %2467
        %2470 = vset.pattern.permute.xlu0 2
        %2471 = vperm.xlu0 %2470, %v417
        %v2472 = vpop.permute.xlu0 %2471
        %2474 = vset.pattern.permute.xlu0 2
        %2475 = vperm.xlu0 %2474, %v418
        %v2476 = vpop.permute.xlu0 %2475
        %v2478 = vlaneseq
        %v2479 = vshrl.u32 %v2478, 7
        %v2480 = vsub.s32 0, %v2479
        %v2481 = vrot.slane %v1965, %v2480
        %v2482 = vmul.f32 %v1968, %v2481
        %v2483 = vmul.f32 %v1972, %v2481
        %v2484 = vmul.f32 %v1976, %v2481
        %v2485 = vmul.f32 %v1980, %v2481
        %v2486 = vmul.f32 %v1984, %v2481
        %v2487 = vmul.f32 %v1988, %v2481
        %v2488 = vmul.f32 %v1992, %v2481
        %v2489 = vmul.f32 %v1996, %v2481
        %v2490 = vmul.f32 %v2000, %v2481
        %v2491 = vmul.f32 %v2004, %v2481
        %v2492 = vmul.f32 %v2008, %v2481
        %v2493 = vmul.f32 %v2012, %v2481
        %v2494 = vmul.f32 %v2016, %v2481
        %v2495 = vmul.f32 %v2020, %v2481
        %v2496 = vmul.f32 %v2024, %v2481
        %v2497 = vmul.f32 %v2028, %v2481
        %v2498 = vmul.f32 %v2032, %v2481
        %v2499 = vmul.f32 %v2036, %v2481
        %v2500 = vmul.f32 %v2040, %v2481
        %v2501 = vmul.f32 %v2044, %v2481
        %v2502 = vmul.f32 %v2048, %v2481
        %v2503 = vmul.f32 %v2052, %v2481
        %v2504 = vmul.f32 %v2056, %v2481
        %v2505 = vmul.f32 %v2060, %v2481
        %v2506 = vmul.f32 %v2064, %v2481
        %v2507 = vmul.f32 %v2068, %v2481
        %v2508 = vmul.f32 %v2072, %v2481
        %v2509 = vmul.f32 %v2076, %v2481
        %v2510 = vmul.f32 %v2080, %v2481
        %v2511 = vmul.f32 %v2084, %v2481
        %v2512 = vmul.f32 %v2088, %v2481
        %v2513 = vmul.f32 %v2092, %v2481
        %v2514 = vmul.f32 %v2096, %v2481
        %v2515 = vmul.f32 %v2100, %v2481
        %v2516 = vmul.f32 %v2104, %v2481
        %v2517 = vmul.f32 %v2108, %v2481
        %v2518 = vmul.f32 %v2112, %v2481
        %v2519 = vmul.f32 %v2116, %v2481
        %v2520 = vmul.f32 %v2120, %v2481
        %v2521 = vmul.f32 %v2124, %v2481
        %v2522 = vmul.f32 %v2128, %v2481
        %v2523 = vmul.f32 %v2132, %v2481
        %v2524 = vmul.f32 %v2136, %v2481
        %v2525 = vmul.f32 %v2140, %v2481
        %v2526 = vmul.f32 %v2144, %v2481
        %v2527 = vmul.f32 %v2148, %v2481
        %v2528 = vmul.f32 %v2152, %v2481
        %v2529 = vmul.f32 %v2156, %v2481
        %v2530 = vmul.f32 %v2160, %v2481
        %v2531 = vmul.f32 %v2164, %v2481
        %v2532 = vmul.f32 %v2168, %v2481
        %v2533 = vmul.f32 %v2172, %v2481
        %v2534 = vmul.f32 %v2176, %v2481
        %v2535 = vmul.f32 %v2180, %v2481
        %v2536 = vmul.f32 %v2184, %v2481
        %v2537 = vmul.f32 %v2188, %v2481
        %v2538 = vmul.f32 %v2192, %v2481
        %v2539 = vmul.f32 %v2196, %v2481
        %v2540 = vmul.f32 %v2200, %v2481
        %v2541 = vmul.f32 %v2204, %v2481
        %v2542 = vmul.f32 %v2208, %v2481
        %v2543 = vmul.f32 %v2212, %v2481
        %v2544 = vmul.f32 %v2216, %v2481
        %v2545 = vmul.f32 %v2220, %v2481
        %v2546 = vmul.f32 %v2224, %v2481
        %v2547 = vmul.f32 %v2228, %v2481
        %v2548 = vmul.f32 %v2232, %v2481
        %v2549 = vmul.f32 %v2236, %v2481
        %v2550 = vmul.f32 %v2240, %v2481
        %v2551 = vmul.f32 %v2244, %v2481
        %v2552 = vmul.f32 %v2248, %v2481
        %v2553 = vmul.f32 %v2252, %v2481
        %v2554 = vmul.f32 %v2256, %v2481
        %v2555 = vmul.f32 %v2260, %v2481
        %v2556 = vmul.f32 %v2264, %v2481
        %v2557 = vmul.f32 %v2268, %v2481
        %v2558 = vmul.f32 %v2272, %v2481
        %v2559 = vmul.f32 %v2276, %v2481
        %v2560 = vmul.f32 %v2280, %v2481
        %v2561 = vmul.f32 %v2284, %v2481
        %v2562 = vmul.f32 %v2288, %v2481
        %v2563 = vmul.f32 %v2292, %v2481
        %v2564 = vmul.f32 %v2296, %v2481
        %v2565 = vmul.f32 %v2300, %v2481
        %v2566 = vmul.f32 %v2304, %v2481
        %v2567 = vmul.f32 %v2308, %v2481
        %v2568 = vmul.f32 %v2312, %v2481
        %v2569 = vmul.f32 %v2316, %v2481
        %v2570 = vmul.f32 %v2320, %v2481
        %v2571 = vmul.f32 %v2324, %v2481
        %v2572 = vmul.f32 %v2328, %v2481
        %v2573 = vmul.f32 %v2332, %v2481
        %v2574 = vmul.f32 %v2336, %v2481
        %v2575 = vmul.f32 %v2340, %v2481
        %v2576 = vmul.f32 %v2344, %v2481
        %v2577 = vmul.f32 %v2348, %v2481
        %v2578 = vmul.f32 %v2352, %v2481
        %v2579 = vmul.f32 %v2356, %v2481
        %v2580 = vmul.f32 %v2360, %v2481
        %v2581 = vmul.f32 %v2364, %v2481
        %v2582 = vmul.f32 %v2368, %v2481
        %v2583 = vmul.f32 %v2372, %v2481
        %v2584 = vmul.f32 %v2376, %v2481
        %v2585 = vmul.f32 %v2380, %v2481
        %v2586 = vmul.f32 %v2384, %v2481
        %v2587 = vmul.f32 %v2388, %v2481
        %v2588 = vmul.f32 %v2392, %v2481
        %v2589 = vmul.f32 %v2396, %v2481
        %v2590 = vmul.f32 %v2400, %v2481
        %v2591 = vmul.f32 %v2404, %v2481
        %v2592 = vmul.f32 %v2408, %v2481
        %v2593 = vmul.f32 %v2412, %v2481
        %v2594 = vmul.f32 %v2416, %v2481
        %v2595 = vmul.f32 %v2420, %v2481
        %v2596 = vmul.f32 %v2424, %v2481
        %v2597 = vmul.f32 %v2428, %v2481
        %v2598 = vmul.f32 %v2432, %v2481
        %v2599 = vmul.f32 %v2436, %v2481
        %v2600 = vmul.f32 %v2440, %v2481
        %v2601 = vmul.f32 %v2444, %v2481
        %v2602 = vmul.f32 %v2448, %v2481
        %v2603 = vmul.f32 %v2452, %v2481
        %v2604 = vmul.f32 %v2456, %v2481
        %v2605 = vmul.f32 %v2460, %v2481
        %v2606 = vmul.f32 %v2464, %v2481
        %v2607 = vmul.f32 %v2468, %v2481
        %v2608 = vmul.f32 %v2472, %v2481
        %v2609 = vmul.f32 %v2476, %v2481
        %v2610 = vadd.f32 %v1837, %v2482
        %v2611 = vadd.f32 %v1838, %v2483
        %v2612 = vadd.f32 %v1839, %v2484
        %v2613 = vadd.f32 %v1840, %v2485
        %v2614 = vadd.f32 %v1841, %v2486
        %v2615 = vadd.f32 %v1842, %v2487
        %v2616 = vadd.f32 %v1843, %v2488
        %v2617 = vadd.f32 %v1844, %v2489
        %v2618 = vadd.f32 %v1845, %v2490
        %v2619 = vadd.f32 %v1846, %v2491
        %v2620 = vadd.f32 %v1847, %v2492
        %v2621 = vadd.f32 %v1848, %v2493
        %v2622 = vadd.f32 %v1849, %v2494
        %v2623 = vadd.f32 %v1850, %v2495
        %v2624 = vadd.f32 %v1851, %v2496
        %v2625 = vadd.f32 %v1852, %v2497
        %v2626 = vadd.f32 %v1853, %v2498
        %v2627 = vadd.f32 %v1854, %v2499
        %v2628 = vadd.f32 %v1855, %v2500
        %v2629 = vadd.f32 %v1856, %v2501
        %v2630 = vadd.f32 %v1857, %v2502
        %v2631 = vadd.f32 %v1858, %v2503
        %v2632 = vadd.f32 %v1859, %v2504
        %v2633 = vadd.f32 %v1860, %v2505
        %v2634 = vadd.f32 %v1861, %v2506
        %v2635 = vadd.f32 %v1862, %v2507
        %v2636 = vadd.f32 %v1863, %v2508
        %v2637 = vadd.f32 %v1864, %v2509
        %v2638 = vadd.f32 %v1865, %v2510
        %v2639 = vadd.f32 %v1866, %v2511
        %v2640 = vadd.f32 %v1867, %v2512
        %v2641 = vadd.f32 %v1868, %v2513
        %v2642 = vadd.f32 %v1869, %v2514
        %v2643 = vadd.f32 %v1870, %v2515
        %v2644 = vadd.f32 %v1871, %v2516
        %v2645 = vadd.f32 %v1872, %v2517
        %v2646 = vadd.f32 %v1873, %v2518
        %v2647 = vadd.f32 %v1874, %v2519
        %v2648 = vadd.f32 %v1875, %v2520
        %v2649 = vadd.f32 %v1876, %v2521
        %v2650 = vadd.f32 %v1877, %v2522
        %v2651 = vadd.f32 %v1878, %v2523
        %v2652 = vadd.f32 %v1879, %v2524
        %v2653 = vadd.f32 %v1880, %v2525
        %v2654 = vadd.f32 %v1881, %v2526
        %v2655 = vadd.f32 %v1882, %v2527
        %v2656 = vadd.f32 %v1883, %v2528
        %v2657 = vadd.f32 %v1884, %v2529
        %v2658 = vadd.f32 %v1885, %v2530
        %v2659 = vadd.f32 %v1886, %v2531
        %v2660 = vadd.f32 %v1887, %v2532
        %v2661 = vadd.f32 %v1888, %v2533
        %v2662 = vadd.f32 %v1889, %v2534
        %v2663 = vadd.f32 %v1890, %v2535
        %v2664 = vadd.f32 %v1891, %v2536
        %v2665 = vadd.f32 %v1892, %v2537
        %v2666 = vadd.f32 %v1893, %v2538
        %v2667 = vadd.f32 %v1894, %v2539
        %v2668 = vadd.f32 %v1895, %v2540
        %v2669 = vadd.f32 %v1896, %v2541
        %v2670 = vadd.f32 %v1897, %v2542
        %v2671 = vadd.f32 %v1898, %v2543
        %v2672 = vadd.f32 %v1899, %v2544
        %v2673 = vadd.f32 %v1900, %v2545
        %v2674 = vadd.f32 %v1901, %v2546
        %v2675 = vadd.f32 %v1902, %v2547
        %v2676 = vadd.f32 %v1903, %v2548
        %v2677 = vadd.f32 %v1904, %v2549
        %v2678 = vadd.f32 %v1905, %v2550
        %v2679 = vadd.f32 %v1906, %v2551
        %v2680 = vadd.f32 %v1907, %v2552
        %v2681 = vadd.f32 %v1908, %v2553
        %v2682 = vadd.f32 %v1909, %v2554
        %v2683 = vadd.f32 %v1910, %v2555
        %v2684 = vadd.f32 %v1911, %v2556
        %v2685 = vadd.f32 %v1912, %v2557
        %v2686 = vadd.f32 %v1913, %v2558
        %v2687 = vadd.f32 %v1914, %v2559
        %v2688 = vadd.f32 %v1915, %v2560
        %v2689 = vadd.f32 %v1916, %v2561
        %v2690 = vadd.f32 %v1917, %v2562
        %v2691 = vadd.f32 %v1918, %v2563
        %v2692 = vadd.f32 %v1919, %v2564
        %v2693 = vadd.f32 %v1920, %v2565
        %v2694 = vadd.f32 %v1921, %v2566
        %v2695 = vadd.f32 %v1922, %v2567
        %v2696 = vadd.f32 %v1923, %v2568
        %v2697 = vadd.f32 %v1924, %v2569
        %v2698 = vadd.f32 %v1925, %v2570
        %v2699 = vadd.f32 %v1926, %v2571
        %v2700 = vadd.f32 %v1927, %v2572
        %v2701 = vadd.f32 %v1928, %v2573
        %v2702 = vadd.f32 %v1929, %v2574
        %v2703 = vadd.f32 %v1930, %v2575
        %v2704 = vadd.f32 %v1931, %v2576
        %v2705 = vadd.f32 %v1932, %v2577
        %v2706 = vadd.f32 %v1933, %v2578
        %v2707 = vadd.f32 %v1934, %v2579
        %v2708 = vadd.f32 %v1935, %v2580
        %v2709 = vadd.f32 %v1936, %v2581
        %v2710 = vadd.f32 %v1937, %v2582
        %v2711 = vadd.f32 %v1938, %v2583
        %v2712 = vadd.f32 %v1939, %v2584
        %v2713 = vadd.f32 %v1940, %v2585
        %v2714 = vadd.f32 %v1941, %v2586
        %v2715 = vadd.f32 %v1942, %v2587
        %v2716 = vadd.f32 %v1943, %v2588
        %v2717 = vadd.f32 %v1944, %v2589
        %v2718 = vadd.f32 %v1945, %v2590
        %v2719 = vadd.f32 %v1946, %v2591
        %v2720 = vadd.f32 %v1947, %v2592
        %v2721 = vadd.f32 %v1948, %v2593
        %v2722 = vadd.f32 %v1949, %v2594
        %v2723 = vadd.f32 %v1950, %v2595
        %v2724 = vadd.f32 %v1951, %v2596
        %v2725 = vadd.f32 %v1952, %v2597
        %v2726 = vadd.f32 %v1953, %v2598
        %v2727 = vadd.f32 %v1954, %v2599
        %v2728 = vadd.f32 %v1955, %v2600
        %v2729 = vadd.f32 %v1956, %v2601
        %v2730 = vadd.f32 %v1957, %v2602
        %v2731 = vadd.f32 %v1958, %v2603
        %v2732 = vadd.f32 %v1959, %v2604
        %v2733 = vadd.f32 %v1960, %v2605
        %v2734 = vadd.f32 %v1961, %v2606
        %v2735 = vadd.f32 %v1962, %v2607
        %v2736 = vadd.f32 %v1963, %v2608
        %v2737 = vadd.f32 %v1964, %v2609
        %v2738 = vld [vmem:[%s2] sm:$0x1]
        %v2740 = vlaneseq
        %v2741 = vshrl.u32 %v2740, 7
        %v2742 = vsub.s32 0, %v2741
        %v2743 = vrot.slane %v2738, %v2742
        %v2745 = vadd.f32 %v2610, %v2743
        %v2746 = vadd.f32 %v2611, %v2743
        %v2747 = vadd.f32 %v2612, %v2743
        %v2748 = vadd.f32 %v2613, %v2743
        %v2749 = vadd.f32 %v2614, %v2743
        %v2750 = vadd.f32 %v2615, %v2743
        %v2751 = vadd.f32 %v2616, %v2743
        %v2752 = vadd.f32 %v2617, %v2743
        %v2753 = vadd.f32 %v2618, %v2743
        %v2754 = vadd.f32 %v2619, %v2743
        %v2755 = vadd.f32 %v2620, %v2743
        %v2756 = vadd.f32 %v2621, %v2743
        %v2757 = vadd.f32 %v2622, %v2743
        %v2758 = vadd.f32 %v2623, %v2743
        %v2759 = vadd.f32 %v2624, %v2743
        %v2760 = vadd.f32 %v2625, %v2743
        %v2761 = vadd.f32 %v2626, %v2743
        %v2762 = vadd.f32 %v2627, %v2743
        %v2763 = vadd.f32 %v2628, %v2743
        %v2764 = vadd.f32 %v2629, %v2743
        %v2765 = vadd.f32 %v2630, %v2743
        %v2766 = vadd.f32 %v2631, %v2743
        %v2767 = vadd.f32 %v2632, %v2743
        %v2768 = vadd.f32 %v2633, %v2743
        %v2769 = vadd.f32 %v2634, %v2743
        %v2770 = vadd.f32 %v2635, %v2743
        %v2771 = vadd.f32 %v2636, %v2743
        %v2772 = vadd.f32 %v2637, %v2743
        %v2773 = vadd.f32 %v2638, %v2743
        %v2774 = vadd.f32 %v2639, %v2743
        %v2775 = vadd.f32 %v2640, %v2743
        %v2776 = vadd.f32 %v2641, %v2743
        %v2777 = vadd.f32 %v2642, %v2743
        %v2778 = vadd.f32 %v2643, %v2743
        %v2779 = vadd.f32 %v2644, %v2743
        %v2780 = vadd.f32 %v2645, %v2743
        %v2781 = vadd.f32 %v2646, %v2743
        %v2782 = vadd.f32 %v2647, %v2743
        %v2783 = vadd.f32 %v2648, %v2743
        %v2784 = vadd.f32 %v2649, %v2743
        %v2785 = vadd.f32 %v2650, %v2743
        %v2786 = vadd.f32 %v2651, %v2743
        %v2787 = vadd.f32 %v2652, %v2743
        %v2788 = vadd.f32 %v2653, %v2743
        %v2789 = vadd.f32 %v2654, %v2743
        %v2790 = vadd.f32 %v2655, %v2743
        %v2791 = vadd.f32 %v2656, %v2743
        %v2792 = vadd.f32 %v2657, %v2743
        %v2793 = vadd.f32 %v2658, %v2743
        %v2794 = vadd.f32 %v2659, %v2743
        %v2795 = vadd.f32 %v2660, %v2743
        %v2796 = vadd.f32 %v2661, %v2743
        %v2797 = vadd.f32 %v2662, %v2743
        %v2798 = vadd.f32 %v2663, %v2743
        %v2799 = vadd.f32 %v2664, %v2743
        %v2800 = vadd.f32 %v2665, %v2743
        %v2801 = vadd.f32 %v2666, %v2743
        %v2802 = vadd.f32 %v2667, %v2743
        %v2803 = vadd.f32 %v2668, %v2743
        %v2804 = vadd.f32 %v2669, %v2743
        %v2805 = vadd.f32 %v2670, %v2743
        %v2806 = vadd.f32 %v2671, %v2743
        %v2807 = vadd.f32 %v2672, %v2743
        %v2808 = vadd.f32 %v2673, %v2743
        %v2809 = vadd.f32 %v2674, %v2743
        %v2810 = vadd.f32 %v2675, %v2743
        %v2811 = vadd.f32 %v2676, %v2743
        %v2812 = vadd.f32 %v2677, %v2743
        %v2813 = vadd.f32 %v2678, %v2743
        %v2814 = vadd.f32 %v2679, %v2743
        %v2815 = vadd.f32 %v2680, %v2743
        %v2816 = vadd.f32 %v2681, %v2743
        %v2817 = vadd.f32 %v2682, %v2743
        %v2818 = vadd.f32 %v2683, %v2743
        %v2819 = vadd.f32 %v2684, %v2743
        %v2820 = vadd.f32 %v2685, %v2743
        %v2821 = vadd.f32 %v2686, %v2743
        %v2822 = vadd.f32 %v2687, %v2743
        %v2823 = vadd.f32 %v2688, %v2743
        %v2824 = vadd.f32 %v2689, %v2743
        %v2825 = vadd.f32 %v2690, %v2743
        %v2826 = vadd.f32 %v2691, %v2743
        %v2827 = vadd.f32 %v2692, %v2743
        %v2828 = vadd.f32 %v2693, %v2743
        %v2829 = vadd.f32 %v2694, %v2743
        %v2830 = vadd.f32 %v2695, %v2743
        %v2831 = vadd.f32 %v2696, %v2743
        %v2832 = vadd.f32 %v2697, %v2743
        %v2833 = vadd.f32 %v2698, %v2743
        %v2834 = vadd.f32 %v2699, %v2743
        %v2835 = vadd.f32 %v2700, %v2743
        %v2836 = vadd.f32 %v2701, %v2743
        %v2837 = vadd.f32 %v2702, %v2743
        %v2838 = vadd.f32 %v2703, %v2743
        %v2839 = vadd.f32 %v2704, %v2743
        %v2840 = vadd.f32 %v2705, %v2743
        %v2841 = vadd.f32 %v2706, %v2743
        %v2842 = vadd.f32 %v2707, %v2743
        %v2843 = vadd.f32 %v2708, %v2743
        %v2844 = vadd.f32 %v2709, %v2743
        %v2845 = vadd.f32 %v2710, %v2743
        %v2846 = vadd.f32 %v2711, %v2743
        %v2847 = vadd.f32 %v2712, %v2743
        %v2848 = vadd.f32 %v2713, %v2743
        %v2849 = vadd.f32 %v2714, %v2743
        %v2850 = vadd.f32 %v2715, %v2743
        %v2851 = vadd.f32 %v2716, %v2743
        %v2852 = vadd.f32 %v2717, %v2743
        %v2853 = vadd.f32 %v2718, %v2743
        %v2854 = vadd.f32 %v2719, %v2743
        %v2855 = vadd.f32 %v2720, %v2743
        %v2856 = vadd.f32 %v2721, %v2743
        %v2857 = vadd.f32 %v2722, %v2743
        %v2858 = vadd.f32 %v2723, %v2743
        %v2859 = vadd.f32 %v2724, %v2743
        %v2860 = vadd.f32 %v2725, %v2743
        %v2861 = vadd.f32 %v2726, %v2743
        %v2862 = vadd.f32 %v2727, %v2743
        %v2863 = vadd.f32 %v2728, %v2743
        %v2864 = vadd.f32 %v2729, %v2743
        %v2865 = vadd.f32 %v2730, %v2743
        %v2866 = vadd.f32 %v2731, %v2743
        %v2867 = vadd.f32 %v2732, %v2743
        %v2868 = vadd.f32 %v2733, %v2743
        %v2869 = vadd.f32 %v2734, %v2743
        %v2870 = vadd.f32 %v2735, %v2743
        %v2871 = vadd.f32 %v2736, %v2743
        %v2872 = vadd.f32 %v2737, %v2743
        %v2873 = vmax.f32 %v2745, 0.0
        %v2874 = vmax.f32 %v2746, 0.0
        %v2875 = vmax.f32 %v2747, 0.0
        %v2876 = vmax.f32 %v2748, 0.0
        %v2877 = vmax.f32 %v2749, 0.0
        %v2878 = vmax.f32 %v2750, 0.0
        %v2879 = vmax.f32 %v2751, 0.0
        %v2880 = vmax.f32 %v2752, 0.0
        %v2881 = vmax.f32 %v2753, 0.0
        %v2882 = vmax.f32 %v2754, 0.0
        %v2883 = vmax.f32 %v2755, 0.0
        %v2884 = vmax.f32 %v2756, 0.0
        %v2885 = vmax.f32 %v2757, 0.0
        %v2886 = vmax.f32 %v2758, 0.0
        %v2887 = vmax.f32 %v2759, 0.0
        %v2888 = vmax.f32 %v2760, 0.0
        %v2889 = vmax.f32 %v2761, 0.0
        %v2890 = vmax.f32 %v2762, 0.0
        %v2891 = vmax.f32 %v2763, 0.0
        %v2892 = vmax.f32 %v2764, 0.0
        %v2893 = vmax.f32 %v2765, 0.0
        %v2894 = vmax.f32 %v2766, 0.0
        %v2895 = vmax.f32 %v2767, 0.0
        %v2896 = vmax.f32 %v2768, 0.0
        %v2897 = vmax.f32 %v2769, 0.0
        %v2898 = vmax.f32 %v2770, 0.0
        %v2899 = vmax.f32 %v2771, 0.0
        %v2900 = vmax.f32 %v2772, 0.0
        %v2901 = vmax.f32 %v2773, 0.0
        %v2902 = vmax.f32 %v2774, 0.0
        %v2903 = vmax.f32 %v2775, 0.0
        %v2904 = vmax.f32 %v2776, 0.0
        %v2905 = vmax.f32 %v2777, 0.0
        %v2906 = vmax.f32 %v2778, 0.0
        %v2907 = vmax.f32 %v2779, 0.0
        %v2908 = vmax.f32 %v2780, 0.0
        %v2909 = vmax.f32 %v2781, 0.0
        %v2910 = vmax.f32 %v2782, 0.0
        %v2911 = vmax.f32 %v2783, 0.0
        %v2912 = vmax.f32 %v2784, 0.0
        %v2913 = vmax.f32 %v2785, 0.0
        %v2914 = vmax.f32 %v2786, 0.0
        %v2915 = vmax.f32 %v2787, 0.0
        %v2916 = vmax.f32 %v2788, 0.0
        %v2917 = vmax.f32 %v2789, 0.0
        %v2918 = vmax.f32 %v2790, 0.0
        %v2919 = vmax.f32 %v2791, 0.0
        %v2920 = vmax.f32 %v2792, 0.0
        %v2921 = vmax.f32 %v2793, 0.0
        %v2922 = vmax.f32 %v2794, 0.0
        %v2923 = vmax.f32 %v2795, 0.0
        %v2924 = vmax.f32 %v2796, 0.0
        %v2925 = vmax.f32 %v2797, 0.0
        %v2926 = vmax.f32 %v2798, 0.0
        %v2927 = vmax.f32 %v2799, 0.0
        %v2928 = vmax.f32 %v2800, 0.0
        %v2929 = vmax.f32 %v2801, 0.0
        %v2930 = vmax.f32 %v2802, 0.0
        %v2931 = vmax.f32 %v2803, 0.0
        %v2932 = vmax.f32 %v2804, 0.0
        %v2933 = vmax.f32 %v2805, 0.0
        %v2934 = vmax.f32 %v2806, 0.0
        %v2935 = vmax.f32 %v2807, 0.0
        %v2936 = vmax.f32 %v2808, 0.0
        %v2937 = vmax.f32 %v2809, 0.0
        %v2938 = vmax.f32 %v2810, 0.0
        %v2939 = vmax.f32 %v2811, 0.0
        %v2940 = vmax.f32 %v2812, 0.0
        %v2941 = vmax.f32 %v2813, 0.0
        %v2942 = vmax.f32 %v2814, 0.0
        %v2943 = vmax.f32 %v2815, 0.0
        %v2944 = vmax.f32 %v2816, 0.0
        %v2945 = vmax.f32 %v2817, 0.0
        %v2946 = vmax.f32 %v2818, 0.0
        %v2947 = vmax.f32 %v2819, 0.0
        %v2948 = vmax.f32 %v2820, 0.0
        %v2949 = vmax.f32 %v2821, 0.0
        %v2950 = vmax.f32 %v2822, 0.0
        %v2951 = vmax.f32 %v2823, 0.0
        %v2952 = vmax.f32 %v2824, 0.0
        %v2953 = vmax.f32 %v2825, 0.0
        %v2954 = vmax.f32 %v2826, 0.0
        %v2955 = vmax.f32 %v2827, 0.0
        %v2956 = vmax.f32 %v2828, 0.0
        %v2957 = vmax.f32 %v2829, 0.0
        %v2958 = vmax.f32 %v2830, 0.0
        %v2959 = vmax.f32 %v2831, 0.0
        %v2960 = vmax.f32 %v2832, 0.0
        %v2961 = vmax.f32 %v2833, 0.0
        %v2962 = vmax.f32 %v2834, 0.0
        %v2963 = vmax.f32 %v2835, 0.0
        %v2964 = vmax.f32 %v2836, 0.0
        %v2965 = vmax.f32 %v2837, 0.0
        %v2966 = vmax.f32 %v2838, 0.0
        %v2967 = vmax.f32 %v2839, 0.0
        %v2968 = vmax.f32 %v2840, 0.0
        %v2969 = vmax.f32 %v2841, 0.0
        %v2970 = vmax.f32 %v2842, 0.0
        %v2971 = vmax.f32 %v2843, 0.0
        %v2972 = vmax.f32 %v2844, 0.0
        %v2973 = vmax.f32 %v2845, 0.0
        %v2974 = vmax.f32 %v2846, 0.0
        %v2975 = vmax.f32 %v2847, 0.0
        %v2976 = vmax.f32 %v2848, 0.0
        %v2977 = vmax.f32 %v2849, 0.0
        %v2978 = vmax.f32 %v2850, 0.0
        %v2979 = vmax.f32 %v2851, 0.0
        %v2980 = vmax.f32 %v2852, 0.0
        %v2981 = vmax.f32 %v2853, 0.0
        %v2982 = vmax.f32 %v2854, 0.0
        %v2983 = vmax.f32 %v2855, 0.0
        %v2984 = vmax.f32 %v2856, 0.0
        %v2985 = vmax.f32 %v2857, 0.0
        %v2986 = vmax.f32 %v2858, 0.0
        %v2987 = vmax.f32 %v2859, 0.0
        %v2988 = vmax.f32 %v2860, 0.0
        %v2989 = vmax.f32 %v2861, 0.0
        %v2990 = vmax.f32 %v2862, 0.0
        %v2991 = vmax.f32 %v2863, 0.0
        %v2992 = vmax.f32 %v2864, 0.0
        %v2993 = vmax.f32 %v2865, 0.0
        %v2994 = vmax.f32 %v2866, 0.0
        %v2995 = vmax.f32 %v2867, 0.0
        %v2996 = vmax.f32 %v2868, 0.0
        %v2997 = vmax.f32 %v2869, 0.0
        %v2998 = vmax.f32 %v2870, 0.0
        %v2999 = vmax.f32 %v2871, 0.0
        %v3000 = vmax.f32 %v2872, 0.0
        %v3001 = vpack.c.bf16 %v2874, %v2873
        %v3002 = vpack.c.bf16 %v2876, %v2875
        %v3003 = vpack.c.bf16 %v2878, %v2877
        %v3004 = vpack.c.bf16 %v2880, %v2879
        %v3005 = vpack.c.bf16 %v2882, %v2881
        %v3006 = vpack.c.bf16 %v2884, %v2883
        %v3007 = vpack.c.bf16 %v2886, %v2885
        %v3008 = vpack.c.bf16 %v2888, %v2887
        %v3009 = vpack.c.bf16 %v2890, %v2889
        %v3010 = vpack.c.bf16 %v2892, %v2891
        %v3011 = vpack.c.bf16 %v2894, %v2893
        %v3012 = vpack.c.bf16 %v2896, %v2895
        %v3013 = vpack.c.bf16 %v2898, %v2897
        %v3014 = vpack.c.bf16 %v2900, %v2899
        %v3015 = vpack.c.bf16 %v2902, %v2901
        %v3016 = vpack.c.bf16 %v2904, %v2903
        %v3017 = vpack.c.bf16 %v2906, %v2905
        %v3018 = vpack.c.bf16 %v2908, %v2907
        %v3019 = vpack.c.bf16 %v2910, %v2909
        %v3020 = vpack.c.bf16 %v2912, %v2911
        %v3021 = vpack.c.bf16 %v2914, %v2913
        %v3022 = vpack.c.bf16 %v2916, %v2915
        %v3023 = vpack.c.bf16 %v2918, %v2917
        %v3024 = vpack.c.bf16 %v2920, %v2919
        %v3025 = vpack.c.bf16 %v2922, %v2921
        %v3026 = vpack.c.bf16 %v2924, %v2923
        %v3027 = vpack.c.bf16 %v2926, %v2925
        %v3028 = vpack.c.bf16 %v2928, %v2927
        %v3029 = vpack.c.bf16 %v2930, %v2929
        %v3030 = vpack.c.bf16 %v2932, %v2931
        %v3031 = vpack.c.bf16 %v2934, %v2933
        %v3032 = vpack.c.bf16 %v2936, %v2935
        %v3033 = vpack.c.bf16 %v2938, %v2937
        %v3034 = vpack.c.bf16 %v2940, %v2939
        %v3035 = vpack.c.bf16 %v2942, %v2941
        %v3036 = vpack.c.bf16 %v2944, %v2943
        %v3037 = vpack.c.bf16 %v2946, %v2945
        %v3038 = vpack.c.bf16 %v2948, %v2947
        %v3039 = vpack.c.bf16 %v2950, %v2949
        %v3040 = vpack.c.bf16 %v2952, %v2951
        %v3041 = vpack.c.bf16 %v2954, %v2953
        %v3042 = vpack.c.bf16 %v2956, %v2955
        %v3043 = vpack.c.bf16 %v2958, %v2957
        %v3044 = vpack.c.bf16 %v2960, %v2959
        %v3045 = vpack.c.bf16 %v2962, %v2961
        %v3046 = vpack.c.bf16 %v2964, %v2963
        %v3047 = vpack.c.bf16 %v2966, %v2965
        %v3048 = vpack.c.bf16 %v2968, %v2967
        %v3049 = vpack.c.bf16 %v2970, %v2969
        %v3050 = vpack.c.bf16 %v2972, %v2971
        %v3051 = vpack.c.bf16 %v2974, %v2973
        %v3052 = vpack.c.bf16 %v2976, %v2975
        %v3053 = vpack.c.bf16 %v2978, %v2977
        %v3054 = vpack.c.bf16 %v2980, %v2979
        %v3055 = vpack.c.bf16 %v2982, %v2981
        %v3056 = vpack.c.bf16 %v2984, %v2983
        %v3057 = vpack.c.bf16 %v2986, %v2985
        %v3058 = vpack.c.bf16 %v2988, %v2987
        %v3059 = vpack.c.bf16 %v2990, %v2989
        %v3060 = vpack.c.bf16 %v2992, %v2991
        %v3061 = vpack.c.bf16 %v2994, %v2993
        %v3062 = vpack.c.bf16 %v2996, %v2995
        %v3063 = vpack.c.bf16 %v2998, %v2997
        %v3064 = vpack.c.bf16 %v3000, %v2999
        %v3065 = vld [vmem:[%s3] sm:$0xf]
        %v3066 = vld [vmem:[%s3 + $0x4] sm:$0xf]
        %v3067 = vld [vmem:[%s3 + $0x8] sm:$0xf]
        %v3068 = vld [vmem:[%s3 + $0xc] sm:$0xf]
        %v3069 = vld [vmem:[%s3 + $0x10] sm:$0xf]
        %v3070 = vld [vmem:[%s3 + $0x14] sm:$0xf]
        %v3071 = vld [vmem:[%s3 + $0x18] sm:$0xf]
        %v3072 = vld [vmem:[%s3 + $0x1c] sm:$0xf]
        %v3073 = vld [vmem:[%s4] sm:$0x1]
        %v3075 = vlaneseq
        %v3076 = vshrl.u32 %v3075, 7
        %v3077 = vsub.s32 0, %v3076
        %v3078 = vrot.slane %v3073, %v3077
        %v3088 = vunpack.c.l.b16 %v3065
        %v3089 = vunpack.c.l.b16 %v3066
        %v3090 = vunpack.c.l.b16 %v3067
        %v3091 = vunpack.c.l.b16 %v3068
        %v3092 = vunpack.c.l.b16 %v3069
        %v3093 = vunpack.c.l.b16 %v3070
        %v3094 = vunpack.c.l.b16 %v3071
        %v3095 = vunpack.c.l.b16 %v3072
        %v3096 = vpack.c.b16 %v3089, %v3088
        %v3097 = vpack.c.b16 %v3091, %v3090
        %v3098 = vpack.c.b16 %v3093, %v3092
        %v3099 = vpack.c.b16 %v3095, %v3094
        %vm3104 = vcmask 523264
        %v3106 = vsel %vm3104, %v3001, 0
        %v3109 = vsel %vm3104, %v3002, 0
        %v3112 = vsel %vm3104, %v3003, 0
        %v3115 = vsel %vm3104, %v3004, 0
        %v3118 = vsel %vm3104, %v3005, 0
        %v3121 = vsel %vm3104, %v3006, 0
        %v3124 = vsel %vm3104, %v3007, 0
        %v3127 = vsel %vm3104, %v3008, 0
        %v3130 = vsel %vm3104, %v3009, 0
        %v3133 = vsel %vm3104, %v3010, 0
        %v3136 = vsel %vm3104, %v3011, 0
        %v3139 = vsel %vm3104, %v3012, 0
        %v3142 = vsel %vm3104, %v3013, 0
        %v3145 = vsel %vm3104, %v3014, 0
        %v3148 = vsel %vm3104, %v3015, 0
        %v3151 = vsel %vm3104, %v3016, 0
        %v3154 = vsel %vm3104, %v3017, 0
        %v3157 = vsel %vm3104, %v3018, 0
        %v3160 = vsel %vm3104, %v3019, 0
        %v3163 = vsel %vm3104, %v3020, 0
        %v3166 = vsel %vm3104, %v3021, 0
        %v3169 = vsel %vm3104, %v3022, 0
        %v3172 = vsel %vm3104, %v3023, 0
        %v3175 = vsel %vm3104, %v3024, 0
        %v3178 = vsel %vm3104, %v3025, 0
        %v3181 = vsel %vm3104, %v3026, 0
        %v3184 = vsel %vm3104, %v3027, 0
        %v3187 = vsel %vm3104, %v3028, 0
        %v3190 = vsel %vm3104, %v3029, 0
        %v3193 = vsel %vm3104, %v3030, 0
        %v3196 = vsel %vm3104, %v3031, 0
        %v3199 = vsel %vm3104, %v3032, 0
        %v3202 = vsel %vm3104, %v3033, 0
        %v3205 = vsel %vm3104, %v3034, 0
        %v3208 = vsel %vm3104, %v3035, 0
        %v3211 = vsel %vm3104, %v3036, 0
        %v3214 = vsel %vm3104, %v3037, 0
        %v3217 = vsel %vm3104, %v3038, 0
        %v3220 = vsel %vm3104, %v3039, 0
        %v3223 = vsel %vm3104, %v3040, 0
        %v3226 = vsel %vm3104, %v3041, 0
        %v3229 = vsel %vm3104, %v3042, 0
        %v3232 = vsel %vm3104, %v3043, 0
        %v3235 = vsel %vm3104, %v3044, 0
        %v3238 = vsel %vm3104, %v3045, 0
        %v3241 = vsel %vm3104, %v3046, 0
        %v3244 = vsel %vm3104, %v3047, 0
        %v3247 = vsel %vm3104, %v3048, 0
        %v3250 = vsel %vm3104, %v3049, 0
        %v3253 = vsel %vm3104, %v3050, 0
        %v3256 = vsel %vm3104, %v3051, 0
        %v3259 = vsel %vm3104, %v3052, 0
        %v3262 = vsel %vm3104, %v3053, 0
        %v3265 = vsel %vm3104, %v3054, 0
        %v3268 = vsel %vm3104, %v3055, 0
        %v3271 = vsel %vm3104, %v3056, 0
        %v3274 = vsel %vm3104, %v3057, 0
        %v3277 = vsel %vm3104, %v3058, 0
        %v3280 = vsel %vm3104, %v3059, 0
        %v3283 = vsel %vm3104, %v3060, 0
        %v3286 = vsel %vm3104, %v3061, 0
        %v3289 = vsel %vm3104, %v3062, 0
        %v3292 = vsel %vm3104, %v3063, 0
        %v3295 = vsel %vm3104, %v3064, 0
        %3297 = vmatprep.subr.bf16.mxu0 0
        %3298 = vmatpush1.bf16.msra.mxu0 0
        %3299 = vmatprep.subr.bf16.mxu0 0
        %3300 = vmatpush1.bf16.msra.mxu0 0
        %3301 = vmatprep.subr.bf16.mxu0 0
        %3302 = vmatpush1.bf16.msra.mxu0 0
        %3303 = vmatprep.subr.bf16.mxu0 0
        %3304 = vmatpush1.bf16.msra.mxu0 0
        %3305 = vmatprep.subr.bf16.mxu0 0
        %3306 = vmatpush1.bf16.msra.mxu0 %v3099
        %3307 = vmatprep.subr.bf16.mxu0 0
        %3308 = vmatpush1.bf16.msra.mxu0 %v3098
        %3309 = vmatprep.subr.bf16.mxu0 0
        %3310 = vmatpush1.bf16.msra.mxu0 %v3097
        %3311 = vmatprep.subr.bf16.mxu0 0
        %3312 = vmatpush1.bf16.msra.mxu0 %v3096
        %3313 = vmatprep.subr.bf16.mxu0 0
        %3314 = vmatpush2.bf16.msra.mxu0 0
        %3315 = vmatprep.subr.bf16.mxu0 0
        %3316 = vmatpush2.bf16.msra.mxu0 0
        %3317 = vmatprep.subr.bf16.mxu0 0
        %3318 = vmatpush2.bf16.msra.mxu0 0
        %3319 = vmatprep.subr.bf16.mxu0 0
        %3320 = vmatpush2.bf16.msra.mxu0 0
        %3321 = vmatprep.subr.bf16.mxu0 0
        %3322 = vmatpush2.bf16.msra.mxu0 0
        %3323 = vmatprep.subr.bf16.mxu0 0
        %3324 = vmatpush2.bf16.msra.mxu0 0
        %3325 = vmatprep.subr.bf16.mxu0 0
        %3326 = vmatpush2.bf16.msra.mxu0 0
        %3327 = vmatprep.subr.bf16.mxu0 0
        %3328 = vmatpush2.bf16.msra.mxu0 0
        %3329 = vmatprep.mubr.bf16.mxu0 0
        %3330 = vmatmul.mubr.bf16.gmra.mxu0 %v3106
        %v3331 = vpop.f32.mrf.mxu0
        %v3332 = vadd.f32 %v3078, %v3331
        %v3333 = vpop.f32.mrf.mxu0
        %v3334 = vpop.f32.mrf.mxu0
        %v3335 = vadd.f32 %v3078, %v3334
        %v3336 = vpop.f32.mrf.mxu0
        %3337 = vmatprep.mubr.bf16.mxu0 0
        %3338 = vmatmul.mubr.bf16.gmra.mxu0 %v3109
        %v3339 = vpop.f32.mrf.mxu0
        %v3340 = vadd.f32 %v3078, %v3339
        %v3341 = vpop.f32.mrf.mxu0
        %v3342 = vpop.f32.mrf.mxu0
        %v3343 = vadd.f32 %v3078, %v3342
        %v3344 = vpop.f32.mrf.mxu0
        %3345 = vmatprep.mubr.bf16.mxu0 0
        %3346 = vmatmul.mubr.bf16.gmra.mxu0 %v3112
        %v3347 = vpop.f32.mrf.mxu0
        %v3348 = vadd.f32 %v3078, %v3347
        %v3349 = vpop.f32.mrf.mxu0
        %v3350 = vpop.f32.mrf.mxu0
        %v3351 = vadd.f32 %v3078, %v3350
        %v3352 = vpop.f32.mrf.mxu0
        %3353 = vmatprep.mubr.bf16.mxu0 0
        %3354 = vmatmul.mubr.bf16.gmra.mxu0 %v3115
        %v3355 = vpop.f32.mrf.mxu0
        %v3356 = vadd.f32 %v3078, %v3355
        %v3357 = vpop.f32.mrf.mxu0
        %v3358 = vpop.f32.mrf.mxu0
        %v3359 = vadd.f32 %v3078, %v3358
        %v3360 = vpop.f32.mrf.mxu0
        %3361 = vmatprep.mubr.bf16.mxu0 0
        %3362 = vmatmul.mubr.bf16.gmra.mxu0 %v3118
        %v3363 = vpop.f32.mrf.mxu0
        %v3364 = vadd.f32 %v3078, %v3363
        %v3365 = vpop.f32.mrf.mxu0
        %v3366 = vpop.f32.mrf.mxu0
        %v3367 = vadd.f32 %v3078, %v3366
        %v3368 = vpop.f32.mrf.mxu0
        %3369 = vmatprep.mubr.bf16.mxu0 0
        %3370 = vmatmul.mubr.bf16.gmra.mxu0 %v3121
        %v3371 = vpop.f32.mrf.mxu0
        %v3372 = vadd.f32 %v3078, %v3371
        %v3373 = vpop.f32.mrf.mxu0
        %v3374 = vpop.f32.mrf.mxu0
        %v3375 = vadd.f32 %v3078, %v3374
        %v3376 = vpop.f32.mrf.mxu0
        %3377 = vmatprep.mubr.bf16.mxu0 0
        %3378 = vmatmul.mubr.bf16.gmra.mxu0 %v3124
        %v3379 = vpop.f32.mrf.mxu0
        %v3380 = vadd.f32 %v3078, %v3379
        %v3381 = vpop.f32.mrf.mxu0
        %v3382 = vpop.f32.mrf.mxu0
        %v3383 = vadd.f32 %v3078, %v3382
        %v3384 = vpop.f32.mrf.mxu0
        %3385 = vmatprep.mubr.bf16.mxu0 0
        %3386 = vmatmul.mubr.bf16.gmra.mxu0 %v3127
        %v3387 = vpop.f32.mrf.mxu0
        %v3388 = vadd.f32 %v3078, %v3387
        %v3389 = vpop.f32.mrf.mxu0
        %v3390 = vpop.f32.mrf.mxu0
        %v3391 = vadd.f32 %v3078, %v3390
        %v3392 = vpop.f32.mrf.mxu0
        %3393 = vmatprep.mubr.bf16.mxu0 0
        %3394 = vmatmul.mubr.bf16.gmra.mxu0 %v3130
        %v3395 = vpop.f32.mrf.mxu0
        %v3396 = vadd.f32 %v3078, %v3395
        %v3397 = vpop.f32.mrf.mxu0
        %v3398 = vpop.f32.mrf.mxu0
        %v3399 = vadd.f32 %v3078, %v3398
        %v3400 = vpop.f32.mrf.mxu0
        %3401 = vmatprep.mubr.bf16.mxu0 0
        %3402 = vmatmul.mubr.bf16.gmra.mxu0 %v3133
        %v3403 = vpop.f32.mrf.mxu0
        %v3404 = vadd.f32 %v3078, %v3403
        %v3405 = vpop.f32.mrf.mxu0
        %v3406 = vpop.f32.mrf.mxu0
        %v3407 = vadd.f32 %v3078, %v3406
        %v3408 = vpop.f32.mrf.mxu0
        %3409 = vmatprep.mubr.bf16.mxu0 0
        %3410 = vmatmul.mubr.bf16.gmra.mxu0 %v3136
        %v3411 = vpop.f32.mrf.mxu0
        %v3412 = vadd.f32 %v3078, %v3411
        %v3413 = vpop.f32.mrf.mxu0
        %v3414 = vpop.f32.mrf.mxu0
        %v3415 = vadd.f32 %v3078, %v3414
        %v3416 = vpop.f32.mrf.mxu0
        %3417 = vmatprep.mubr.bf16.mxu0 0
        %3418 = vmatmul.mubr.bf16.gmra.mxu0 %v3139
        %v3419 = vpop.f32.mrf.mxu0
        %v3420 = vadd.f32 %v3078, %v3419
        %v3421 = vpop.f32.mrf.mxu0
        %v3422 = vpop.f32.mrf.mxu0
        %v3423 = vadd.f32 %v3078, %v3422
        %v3424 = vpop.f32.mrf.mxu0
        %3425 = vmatprep.mubr.bf16.mxu0 0
        %3426 = vmatmul.mubr.bf16.gmra.mxu0 %v3142
        %v3427 = vpop.f32.mrf.mxu0
        %v3428 = vadd.f32 %v3078, %v3427
        %v3429 = vpop.f32.mrf.mxu0
        %v3430 = vpop.f32.mrf.mxu0
        %v3431 = vadd.f32 %v3078, %v3430
        %v3432 = vpop.f32.mrf.mxu0
        %3433 = vmatprep.mubr.bf16.mxu0 0
        %3434 = vmatmul.mubr.bf16.gmra.mxu0 %v3145
        %v3435 = vpop.f32.mrf.mxu0
        %v3436 = vadd.f32 %v3078, %v3435
        %v3437 = vpop.f32.mrf.mxu0
        %v3438 = vpop.f32.mrf.mxu0
        %v3439 = vadd.f32 %v3078, %v3438
        %v3440 = vpop.f32.mrf.mxu0
        %3441 = vmatprep.mubr.bf16.mxu0 0
        %3442 = vmatmul.mubr.bf16.gmra.mxu0 %v3148
        %v3443 = vpop.f32.mrf.mxu0
        %v3444 = vadd.f32 %v3078, %v3443
        %v3445 = vpop.f32.mrf.mxu0
        %v3446 = vpop.f32.mrf.mxu0
        %v3447 = vadd.f32 %v3078, %v3446
        %v3448 = vpop.f32.mrf.mxu0
        %3449 = vmatprep.mubr.bf16.mxu0 0
        %3450 = vmatmul.mubr.bf16.gmra.mxu0 %v3151
        %v3451 = vpop.f32.mrf.mxu0
        %v3452 = vadd.f32 %v3078, %v3451
        %v3453 = vpop.f32.mrf.mxu0
        %v3454 = vpop.f32.mrf.mxu0
        %v3455 = vadd.f32 %v3078, %v3454
        %v3456 = vpop.f32.mrf.mxu0
        %3457 = vmatprep.mubr.bf16.mxu0 0
        %3458 = vmatmul.mubr.bf16.gmra.mxu0 %v3154
        %v3459 = vpop.f32.mrf.mxu0
        %v3460 = vadd.f32 %v3078, %v3459
        %v3461 = vpop.f32.mrf.mxu0
        %v3462 = vpop.f32.mrf.mxu0
        %v3463 = vadd.f32 %v3078, %v3462
        %v3464 = vpop.f32.mrf.mxu0
        %3465 = vmatprep.mubr.bf16.mxu0 0
        %3466 = vmatmul.mubr.bf16.gmra.mxu0 %v3157
        %v3467 = vpop.f32.mrf.mxu0
        %v3468 = vadd.f32 %v3078, %v3467
        %v3469 = vpop.f32.mrf.mxu0
        %v3470 = vpop.f32.mrf.mxu0
        %v3471 = vadd.f32 %v3078, %v3470
        %v3472 = vpop.f32.mrf.mxu0
        %3473 = vmatprep.mubr.bf16.mxu0 0
        %3474 = vmatmul.mubr.bf16.gmra.mxu0 %v3160
        %v3475 = vpop.f32.mrf.mxu0
        %v3476 = vadd.f32 %v3078, %v3475
        %v3477 = vpop.f32.mrf.mxu0
        %v3478 = vpop.f32.mrf.mxu0
        %v3479 = vadd.f32 %v3078, %v3478
        %v3480 = vpop.f32.mrf.mxu0
        %3481 = vmatprep.mubr.bf16.mxu0 0
        %3482 = vmatmul.mubr.bf16.gmra.mxu0 %v3163
        %v3483 = vpop.f32.mrf.mxu0
        %v3484 = vadd.f32 %v3078, %v3483
        %v3485 = vpop.f32.mrf.mxu0
        %v3486 = vpop.f32.mrf.mxu0
        %v3487 = vadd.f32 %v3078, %v3486
        %v3488 = vpop.f32.mrf.mxu0
        %3489 = vmatprep.mubr.bf16.mxu0 0
        %3490 = vmatmul.mubr.bf16.gmra.mxu0 %v3166
        %v3491 = vpop.f32.mrf.mxu0
        %v3492 = vadd.f32 %v3078, %v3491
        %v3493 = vpop.f32.mrf.mxu0
        %v3494 = vpop.f32.mrf.mxu0
        %v3495 = vadd.f32 %v3078, %v3494
        %v3496 = vpop.f32.mrf.mxu0
        %3497 = vmatprep.mubr.bf16.mxu0 0
        %3498 = vmatmul.mubr.bf16.gmra.mxu0 %v3169
        %v3499 = vpop.f32.mrf.mxu0
        %v3500 = vadd.f32 %v3078, %v3499
        %v3501 = vpop.f32.mrf.mxu0
        %v3502 = vpop.f32.mrf.mxu0
        %v3503 = vadd.f32 %v3078, %v3502
        %v3504 = vpop.f32.mrf.mxu0
        %3505 = vmatprep.mubr.bf16.mxu0 0
        %3506 = vmatmul.mubr.bf16.gmra.mxu0 %v3172
        %v3507 = vpop.f32.mrf.mxu0
        %v3508 = vadd.f32 %v3078, %v3507
        %v3509 = vpop.f32.mrf.mxu0
        %v3510 = vpop.f32.mrf.mxu0
        %v3511 = vadd.f32 %v3078, %v3510
        %v3512 = vpop.f32.mrf.mxu0
        %3513 = vmatprep.mubr.bf16.mxu0 0
        %3514 = vmatmul.mubr.bf16.gmra.mxu0 %v3175
        %v3515 = vpop.f32.mrf.mxu0
        %v3516 = vadd.f32 %v3078, %v3515
        %v3517 = vpop.f32.mrf.mxu0
        %v3518 = vpop.f32.mrf.mxu0
        %v3519 = vadd.f32 %v3078, %v3518
        %v3520 = vpop.f32.mrf.mxu0
        %3521 = vmatprep.mubr.bf16.mxu0 0
        %3522 = vmatmul.mubr.bf16.gmra.mxu0 %v3178
        %v3523 = vpop.f32.mrf.mxu0
        %v3524 = vadd.f32 %v3078, %v3523
        %v3525 = vpop.f32.mrf.mxu0
        %v3526 = vpop.f32.mrf.mxu0
        %v3527 = vadd.f32 %v3078, %v3526
        %v3528 = vpop.f32.mrf.mxu0
        %3529 = vmatprep.mubr.bf16.mxu0 0
        %3530 = vmatmul.mubr.bf16.gmra.mxu0 %v3181
        %v3531 = vpop.f32.mrf.mxu0
        %v3532 = vadd.f32 %v3078, %v3531
        %v3533 = vpop.f32.mrf.mxu0
        %v3534 = vpop.f32.mrf.mxu0
        %v3535 = vadd.f32 %v3078, %v3534
        %v3536 = vpop.f32.mrf.mxu0
        %3537 = vmatprep.mubr.bf16.mxu0 0
        %3538 = vmatmul.mubr.bf16.gmra.mxu0 %v3184
        %v3539 = vpop.f32.mrf.mxu0
        %v3540 = vadd.f32 %v3078, %v3539
        %v3541 = vpop.f32.mrf.mxu0
        %v3542 = vpop.f32.mrf.mxu0
        %v3543 = vadd.f32 %v3078, %v3542
        %v3544 = vpop.f32.mrf.mxu0
        %3545 = vmatprep.mubr.bf16.mxu0 0
        %3546 = vmatmul.mubr.bf16.gmra.mxu0 %v3187
        %v3547 = vpop.f32.mrf.mxu0
        %v3548 = vadd.f32 %v3078, %v3547
        %v3549 = vpop.f32.mrf.mxu0
        %v3550 = vpop.f32.mrf.mxu0
        %v3551 = vadd.f32 %v3078, %v3550
        %v3552 = vpop.f32.mrf.mxu0
        %3553 = vmatprep.mubr.bf16.mxu0 0
        %3554 = vmatmul.mubr.bf16.gmra.mxu0 %v3190
        %v3555 = vpop.f32.mrf.mxu0
        %v3556 = vadd.f32 %v3078, %v3555
        %v3557 = vpop.f32.mrf.mxu0
        %v3558 = vpop.f32.mrf.mxu0
        %v3559 = vadd.f32 %v3078, %v3558
        %v3560 = vpop.f32.mrf.mxu0
        %3561 = vmatprep.mubr.bf16.mxu0 0
        %3562 = vmatmul.mubr.bf16.gmra.mxu0 %v3193
        %v3563 = vpop.f32.mrf.mxu0
        %v3564 = vadd.f32 %v3078, %v3563
        %v3565 = vpop.f32.mrf.mxu0
        %v3566 = vpop.f32.mrf.mxu0
        %v3567 = vadd.f32 %v3078, %v3566
        %v3568 = vpop.f32.mrf.mxu0
        %3569 = vmatprep.mubr.bf16.mxu0 0
        %3570 = vmatmul.mubr.bf16.gmra.mxu0 %v3196
        %v3571 = vpop.f32.mrf.mxu0
        %v3572 = vadd.f32 %v3078, %v3571
        %v3573 = vpop.f32.mrf.mxu0
        %v3574 = vpop.f32.mrf.mxu0
        %v3575 = vadd.f32 %v3078, %v3574
        %v3576 = vpop.f32.mrf.mxu0
        %3577 = vmatprep.mubr.bf16.mxu0 0
        %3578 = vmatmul.mubr.bf16.gmra.mxu0 %v3199
        %v3579 = vpop.f32.mrf.mxu0
        %v3580 = vadd.f32 %v3078, %v3579
        %v3581 = vpop.f32.mrf.mxu0
        %v3582 = vpop.f32.mrf.mxu0
        %v3583 = vadd.f32 %v3078, %v3582
        %v3584 = vpop.f32.mrf.mxu0
        %3585 = vmatprep.mubr.bf16.mxu0 0
        %3586 = vmatmul.mubr.bf16.gmra.mxu0 %v3202
        %v3587 = vpop.f32.mrf.mxu0
        %v3588 = vadd.f32 %v3078, %v3587
        %v3589 = vpop.f32.mrf.mxu0
        %v3590 = vpop.f32.mrf.mxu0
        %v3591 = vadd.f32 %v3078, %v3590
        %v3592 = vpop.f32.mrf.mxu0
        %3593 = vmatprep.mubr.bf16.mxu0 0
        %3594 = vmatmul.mubr.bf16.gmra.mxu0 %v3205
        %v3595 = vpop.f32.mrf.mxu0
        %v3596 = vadd.f32 %v3078, %v3595
        %v3597 = vpop.f32.mrf.mxu0
        %v3598 = vpop.f32.mrf.mxu0
        %v3599 = vadd.f32 %v3078, %v3598
        %v3600 = vpop.f32.mrf.mxu0
        %3601 = vmatprep.mubr.bf16.mxu0 0
        %3602 = vmatmul.mubr.bf16.gmra.mxu0 %v3208
        %v3603 = vpop.f32.mrf.mxu0
        %v3604 = vadd.f32 %v3078, %v3603
        %v3605 = vpop.f32.mrf.mxu0
        %v3606 = vpop.f32.mrf.mxu0
        %v3607 = vadd.f32 %v3078, %v3606
        %v3608 = vpop.f32.mrf.mxu0
        %3609 = vmatprep.mubr.bf16.mxu0 0
        %3610 = vmatmul.mubr.bf16.gmra.mxu0 %v3211
        %v3611 = vpop.f32.mrf.mxu0
        %v3612 = vadd.f32 %v3078, %v3611
        %v3613 = vpop.f32.mrf.mxu0
        %v3614 = vpop.f32.mrf.mxu0
        %v3615 = vadd.f32 %v3078, %v3614
        %v3616 = vpop.f32.mrf.mxu0
        %3617 = vmatprep.mubr.bf16.mxu0 0
        %3618 = vmatmul.mubr.bf16.gmra.mxu0 %v3214
        %v3619 = vpop.f32.mrf.mxu0
        %v3620 = vadd.f32 %v3078, %v3619
        %v3621 = vpop.f32.mrf.mxu0
        %v3622 = vpop.f32.mrf.mxu0
        %v3623 = vadd.f32 %v3078, %v3622
        %v3624 = vpop.f32.mrf.mxu0
        %3625 = vmatprep.mubr.bf16.mxu0 0
        %3626 = vmatmul.mubr.bf16.gmra.mxu0 %v3217
        %v3627 = vpop.f32.mrf.mxu0
        %v3628 = vadd.f32 %v3078, %v3627
        %v3629 = vpop.f32.mrf.mxu0
        %v3630 = vpop.f32.mrf.mxu0
        %v3631 = vadd.f32 %v3078, %v3630
        %v3632 = vpop.f32.mrf.mxu0
        %3633 = vmatprep.mubr.bf16.mxu0 0
        %3634 = vmatmul.mubr.bf16.gmra.mxu0 %v3220
        %v3635 = vpop.f32.mrf.mxu0
        %v3636 = vadd.f32 %v3078, %v3635
        %v3637 = vpop.f32.mrf.mxu0
        %v3638 = vpop.f32.mrf.mxu0
        %v3639 = vadd.f32 %v3078, %v3638
        %v3640 = vpop.f32.mrf.mxu0
        %3641 = vmatprep.mubr.bf16.mxu0 0
        %3642 = vmatmul.mubr.bf16.gmra.mxu0 %v3223
        %v3643 = vpop.f32.mrf.mxu0
        %v3644 = vadd.f32 %v3078, %v3643
        %v3645 = vpop.f32.mrf.mxu0
        %v3646 = vpop.f32.mrf.mxu0
        %v3647 = vadd.f32 %v3078, %v3646
        %v3648 = vpop.f32.mrf.mxu0
        %3649 = vmatprep.mubr.bf16.mxu0 0
        %3650 = vmatmul.mubr.bf16.gmra.mxu0 %v3226
        %v3651 = vpop.f32.mrf.mxu0
        %v3652 = vadd.f32 %v3078, %v3651
        %v3653 = vpop.f32.mrf.mxu0
        %v3654 = vpop.f32.mrf.mxu0
        %v3655 = vadd.f32 %v3078, %v3654
        %v3656 = vpop.f32.mrf.mxu0
        %3657 = vmatprep.mubr.bf16.mxu0 0
        %3658 = vmatmul.mubr.bf16.gmra.mxu0 %v3229
        %v3659 = vpop.f32.mrf.mxu0
        %v3660 = vadd.f32 %v3078, %v3659
        %v3661 = vpop.f32.mrf.mxu0
        %v3662 = vpop.f32.mrf.mxu0
        %v3663 = vadd.f32 %v3078, %v3662
        %v3664 = vpop.f32.mrf.mxu0
        %3665 = vmatprep.mubr.bf16.mxu0 0
        %3666 = vmatmul.mubr.bf16.gmra.mxu0 %v3232
        %v3667 = vpop.f32.mrf.mxu0
        %v3668 = vadd.f32 %v3078, %v3667
        %v3669 = vpop.f32.mrf.mxu0
        %v3670 = vpop.f32.mrf.mxu0
        %v3671 = vadd.f32 %v3078, %v3670
        %v3672 = vpop.f32.mrf.mxu0
        %3673 = vmatprep.mubr.bf16.mxu0 0
        %3674 = vmatmul.mubr.bf16.gmra.mxu0 %v3235
        %v3675 = vpop.f32.mrf.mxu0
        %v3676 = vadd.f32 %v3078, %v3675
        %v3677 = vpop.f32.mrf.mxu0
        %v3678 = vpop.f32.mrf.mxu0
        %v3679 = vadd.f32 %v3078, %v3678
        %v3680 = vpop.f32.mrf.mxu0
        %3681 = vmatprep.mubr.bf16.mxu0 0
        %3682 = vmatmul.mubr.bf16.gmra.mxu0 %v3238
        %v3683 = vpop.f32.mrf.mxu0
        %v3684 = vadd.f32 %v3078, %v3683
        %v3685 = vpop.f32.mrf.mxu0
        %v3686 = vpop.f32.mrf.mxu0
        %v3687 = vadd.f32 %v3078, %v3686
        %v3688 = vpop.f32.mrf.mxu0
        %3689 = vmatprep.mubr.bf16.mxu0 0
        %3690 = vmatmul.mubr.bf16.gmra.mxu0 %v3241
        %v3691 = vpop.f32.mrf.mxu0
        %v3692 = vadd.f32 %v3078, %v3691
        %v3693 = vpop.f32.mrf.mxu0
        %v3694 = vpop.f32.mrf.mxu0
        %v3695 = vadd.f32 %v3078, %v3694
        %v3696 = vpop.f32.mrf.mxu0
        %3697 = vmatprep.mubr.bf16.mxu0 0
        %3698 = vmatmul.mubr.bf16.gmra.mxu0 %v3244
        %v3699 = vpop.f32.mrf.mxu0
        %v3700 = vadd.f32 %v3078, %v3699
        %v3701 = vpop.f32.mrf.mxu0
        %v3702 = vpop.f32.mrf.mxu0
        %v3703 = vadd.f32 %v3078, %v3702
        %v3704 = vpop.f32.mrf.mxu0
        %3705 = vmatprep.mubr.bf16.mxu0 0
        %3706 = vmatmul.mubr.bf16.gmra.mxu0 %v3247
        %v3707 = vpop.f32.mrf.mxu0
        %v3708 = vadd.f32 %v3078, %v3707
        %v3709 = vpop.f32.mrf.mxu0
        %v3710 = vpop.f32.mrf.mxu0
        %v3711 = vadd.f32 %v3078, %v3710
        %v3712 = vpop.f32.mrf.mxu0
        %3713 = vmatprep.mubr.bf16.mxu0 0
        %3714 = vmatmul.mubr.bf16.gmra.mxu0 %v3250
        %v3715 = vpop.f32.mrf.mxu0
        %v3716 = vadd.f32 %v3078, %v3715
        %v3717 = vpop.f32.mrf.mxu0
        %v3718 = vpop.f32.mrf.mxu0
        %v3719 = vadd.f32 %v3078, %v3718
        %v3720 = vpop.f32.mrf.mxu0
        %3721 = vmatprep.mubr.bf16.mxu0 0
        %3722 = vmatmul.mubr.bf16.gmra.mxu0 %v3253
        %v3723 = vpop.f32.mrf.mxu0
        %v3724 = vadd.f32 %v3078, %v3723
        %v3725 = vpop.f32.mrf.mxu0
        %v3726 = vpop.f32.mrf.mxu0
        %v3727 = vadd.f32 %v3078, %v3726
        %v3728 = vpop.f32.mrf.mxu0
        %3729 = vmatprep.mubr.bf16.mxu0 0
        %3730 = vmatmul.mubr.bf16.gmra.mxu0 %v3256
        %v3731 = vpop.f32.mrf.mxu0
        %v3732 = vadd.f32 %v3078, %v3731
        %v3733 = vpop.f32.mrf.mxu0
        %v3734 = vpop.f32.mrf.mxu0
        %v3735 = vadd.f32 %v3078, %v3734
        %v3736 = vpop.f32.mrf.mxu0
        %3737 = vmatprep.mubr.bf16.mxu0 0
        %3738 = vmatmul.mubr.bf16.gmra.mxu0 %v3259
        %v3739 = vpop.f32.mrf.mxu0
        %v3740 = vadd.f32 %v3078, %v3739
        %v3741 = vpop.f32.mrf.mxu0
        %v3742 = vpop.f32.mrf.mxu0
        %v3743 = vadd.f32 %v3078, %v3742
        %v3744 = vpop.f32.mrf.mxu0
        %3745 = vmatprep.mubr.bf16.mxu0 0
        %3746 = vmatmul.mubr.bf16.gmra.mxu0 %v3262
        %v3747 = vpop.f32.mrf.mxu0
        %v3748 = vadd.f32 %v3078, %v3747
        %v3749 = vpop.f32.mrf.mxu0
        %v3750 = vpop.f32.mrf.mxu0
        %v3751 = vadd.f32 %v3078, %v3750
        %v3752 = vpop.f32.mrf.mxu0
        %3753 = vmatprep.mubr.bf16.mxu0 0
        %3754 = vmatmul.mubr.bf16.gmra.mxu0 %v3265
        %v3755 = vpop.f32.mrf.mxu0
        %v3756 = vadd.f32 %v3078, %v3755
        %v3757 = vpop.f32.mrf.mxu0
        %v3758 = vpop.f32.mrf.mxu0
        %v3759 = vadd.f32 %v3078, %v3758
        %v3760 = vpop.f32.mrf.mxu0
        %3761 = vmatprep.mubr.bf16.mxu0 0
        %3762 = vmatmul.mubr.bf16.gmra.mxu0 %v3268
        %v3763 = vpop.f32.mrf.mxu0
        %v3764 = vadd.f32 %v3078, %v3763
        %v3765 = vpop.f32.mrf.mxu0
        %v3766 = vpop.f32.mrf.mxu0
        %v3767 = vadd.f32 %v3078, %v3766
        %v3768 = vpop.f32.mrf.mxu0
        %3769 = vmatprep.mubr.bf16.mxu0 0
        %3770 = vmatmul.mubr.bf16.gmra.mxu0 %v3271
        %v3771 = vpop.f32.mrf.mxu0
        %v3772 = vadd.f32 %v3078, %v3771
        %v3773 = vpop.f32.mrf.mxu0
        %v3774 = vpop.f32.mrf.mxu0
        %v3775 = vadd.f32 %v3078, %v3774
        %v3776 = vpop.f32.mrf.mxu0
        %3777 = vmatprep.mubr.bf16.mxu0 0
        %3778 = vmatmul.mubr.bf16.gmra.mxu0 %v3274
        %v3779 = vpop.f32.mrf.mxu0
        %v3780 = vadd.f32 %v3078, %v3779
        %v3781 = vpop.f32.mrf.mxu0
        %v3782 = vpop.f32.mrf.mxu0
        %v3783 = vadd.f32 %v3078, %v3782
        %v3784 = vpop.f32.mrf.mxu0
        %3785 = vmatprep.mubr.bf16.mxu0 0
        %3786 = vmatmul.mubr.bf16.gmra.mxu0 %v3277
        %v3787 = vpop.f32.mrf.mxu0
        %v3788 = vadd.f32 %v3078, %v3787
        %v3789 = vpop.f32.mrf.mxu0
        %v3790 = vpop.f32.mrf.mxu0
        %v3791 = vadd.f32 %v3078, %v3790
        %v3792 = vpop.f32.mrf.mxu0
        %3793 = vmatprep.mubr.bf16.mxu0 0
        %3794 = vmatmul.mubr.bf16.gmra.mxu0 %v3280
        %v3795 = vpop.f32.mrf.mxu0
        %v3796 = vadd.f32 %v3078, %v3795
        %v3797 = vpop.f32.mrf.mxu0
        %v3798 = vpop.f32.mrf.mxu0
        %v3799 = vadd.f32 %v3078, %v3798
        %v3800 = vpop.f32.mrf.mxu0
        %3801 = vmatprep.mubr.bf16.mxu0 0
        %3802 = vmatmul.mubr.bf16.gmra.mxu0 %v3283
        %v3803 = vpop.f32.mrf.mxu0
        %v3804 = vadd.f32 %v3078, %v3803
        %v3805 = vpop.f32.mrf.mxu0
        %v3806 = vpop.f32.mrf.mxu0
        %v3807 = vadd.f32 %v3078, %v3806
        %v3808 = vpop.f32.mrf.mxu0
        %3809 = vmatprep.mubr.bf16.mxu0 0
        %3810 = vmatmul.mubr.bf16.gmra.mxu0 %v3286
        %v3811 = vpop.f32.mrf.mxu0
        %v3812 = vadd.f32 %v3078, %v3811
        %v3813 = vpop.f32.mrf.mxu0
        %v3814 = vpop.f32.mrf.mxu0
        %v3815 = vadd.f32 %v3078, %v3814
        %v3816 = vpop.f32.mrf.mxu0
        %3817 = vmatprep.mubr.bf16.mxu0 0
        %3818 = vmatmul.mubr.bf16.gmra.mxu0 %v3289
        %v3819 = vpop.f32.mrf.mxu0
        %v3820 = vadd.f32 %v3078, %v3819
        %v3821 = vpop.f32.mrf.mxu0
        %v3822 = vpop.f32.mrf.mxu0
        %v3823 = vadd.f32 %v3078, %v3822
        %v3824 = vpop.f32.mrf.mxu0
        %3825 = vmatprep.mubr.bf16.mxu0 0
        %3826 = vmatmul.mubr.bf16.gmra.mxu0 %v3292
        %v3827 = vpop.f32.mrf.mxu0
        %v3828 = vadd.f32 %v3078, %v3827
        %v3829 = vpop.f32.mrf.mxu0
        %v3830 = vpop.f32.mrf.mxu0
        %v3831 = vadd.f32 %v3078, %v3830
        %v3832 = vpop.f32.mrf.mxu0
        %3833 = vmatprep.mubr.bf16.mxu0 0
        %3834 = vmatmul.mubr.bf16.gmra.mxu0 %v3295
        %v3835 = vpop.f32.mrf.mxu0
        %v3836 = vadd.f32 %v3078, %v3835
        %v3837 = vpop.f32.mrf.mxu0
        %v3838 = vpop.f32.mrf.mxu0
        %v3839 = vadd.f32 %v3078, %v3838
        %v3840 = vpop.f32.mrf.mxu0
        %3841 = vdwg.mxu0
        %v3842 = vmax.f32 %v3332, 0.0
        %v3843 = vmax.f32 %v3335, 0.0
        %v3844 = vmax.f32 %v3340, 0.0
        %v3845 = vmax.f32 %v3343, 0.0
        %v3846 = vmax.f32 %v3348, 0.0
        %v3847 = vmax.f32 %v3351, 0.0
        %v3848 = vmax.f32 %v3356, 0.0
        %v3849 = vmax.f32 %v3359, 0.0
        %v3850 = vmax.f32 %v3364, 0.0
        %v3851 = vmax.f32 %v3367, 0.0
        %v3852 = vmax.f32 %v3372, 0.0
        %v3853 = vmax.f32 %v3375, 0.0
        %v3854 = vmax.f32 %v3380, 0.0
        %v3855 = vmax.f32 %v3383, 0.0
        %v3856 = vmax.f32 %v3388, 0.0
        %v3857 = vmax.f32 %v3391, 0.0
        %v3858 = vmax.f32 %v3396, 0.0
        %v3859 = vmax.f32 %v3399, 0.0
        %v3860 = vmax.f32 %v3404, 0.0
        %v3861 = vmax.f32 %v3407, 0.0
        %v3862 = vmax.f32 %v3412, 0.0
        %v3863 = vmax.f32 %v3415, 0.0
        %v3864 = vmax.f32 %v3420, 0.0
        %v3865 = vmax.f32 %v3423, 0.0
        %v3866 = vmax.f32 %v3428, 0.0
        %v3867 = vmax.f32 %v3431, 0.0
        %v3868 = vmax.f32 %v3436, 0.0
        %v3869 = vmax.f32 %v3439, 0.0
        %v3870 = vmax.f32 %v3444, 0.0
        %v3871 = vmax.f32 %v3447, 0.0
        %v3872 = vmax.f32 %v3452, 0.0
        %v3873 = vmax.f32 %v3455, 0.0
        %v3874 = vmax.f32 %v3460, 0.0
        %v3875 = vmax.f32 %v3463, 0.0
        %v3876 = vmax.f32 %v3468, 0.0
        %v3877 = vmax.f32 %v3471, 0.0
        %v3878 = vmax.f32 %v3476, 0.0
        %v3879 = vmax.f32 %v3479, 0.0
        %v3880 = vmax.f32 %v3484, 0.0
        %v3881 = vmax.f32 %v3487, 0.0
        %v3882 = vmax.f32 %v3492, 0.0
        %v3883 = vmax.f32 %v3495, 0.0
        %v3884 = vmax.f32 %v3500, 0.0
        %v3885 = vmax.f32 %v3503, 0.0
        %v3886 = vmax.f32 %v3508, 0.0
        %v3887 = vmax.f32 %v3511, 0.0
        %v3888 = vmax.f32 %v3516, 0.0
        %v3889 = vmax.f32 %v3519, 0.0
        %v3890 = vmax.f32 %v3524, 0.0
        %v3891 = vmax.f32 %v3527, 0.0
        %v3892 = vmax.f32 %v3532, 0.0
        %v3893 = vmax.f32 %v3535, 0.0
        %v3894 = vmax.f32 %v3540, 0.0
        %v3895 = vmax.f32 %v3543, 0.0
        %v3896 = vmax.f32 %v3548, 0.0
        %v3897 = vmax.f32 %v3551, 0.0
        %v3898 = vmax.f32 %v3556, 0.0
        %v3899 = vmax.f32 %v3559, 0.0
        %v3900 = vmax.f32 %v3564, 0.0
        %v3901 = vmax.f32 %v3567, 0.0
        %v3902 = vmax.f32 %v3572, 0.0
        %v3903 = vmax.f32 %v3575, 0.0
        %v3904 = vmax.f32 %v3580, 0.0
        %v3905 = vmax.f32 %v3583, 0.0
        %v3906 = vmax.f32 %v3588, 0.0
        %v3907 = vmax.f32 %v3591, 0.0
        %v3908 = vmax.f32 %v3596, 0.0
        %v3909 = vmax.f32 %v3599, 0.0
        %v3910 = vmax.f32 %v3604, 0.0
        %v3911 = vmax.f32 %v3607, 0.0
        %v3912 = vmax.f32 %v3612, 0.0
        %v3913 = vmax.f32 %v3615, 0.0
        %v3914 = vmax.f32 %v3620, 0.0
        %v3915 = vmax.f32 %v3623, 0.0
        %v3916 = vmax.f32 %v3628, 0.0
        %v3917 = vmax.f32 %v3631, 0.0
        %v3918 = vmax.f32 %v3636, 0.0
        %v3919 = vmax.f32 %v3639, 0.0
        %v3920 = vmax.f32 %v3644, 0.0
        %v3921 = vmax.f32 %v3647, 0.0
        %v3922 = vmax.f32 %v3652, 0.0
        %v3923 = vmax.f32 %v3655, 0.0
        %v3924 = vmax.f32 %v3660, 0.0
        %v3925 = vmax.f32 %v3663, 0.0
        %v3926 = vmax.f32 %v3668, 0.0
        %v3927 = vmax.f32 %v3671, 0.0
        %v3928 = vmax.f32 %v3676, 0.0
        %v3929 = vmax.f32 %v3679, 0.0
        %v3930 = vmax.f32 %v3684, 0.0
        %v3931 = vmax.f32 %v3687, 0.0
        %v3932 = vmax.f32 %v3692, 0.0
        %v3933 = vmax.f32 %v3695, 0.0
        %v3934 = vmax.f32 %v3700, 0.0
        %v3935 = vmax.f32 %v3703, 0.0
        %v3936 = vmax.f32 %v3708, 0.0
        %v3937 = vmax.f32 %v3711, 0.0
        %v3938 = vmax.f32 %v3716, 0.0
        %v3939 = vmax.f32 %v3719, 0.0
        %v3940 = vmax.f32 %v3724, 0.0
        %v3941 = vmax.f32 %v3727, 0.0
        %v3942 = vmax.f32 %v3732, 0.0
        %v3943 = vmax.f32 %v3735, 0.0
        %v3944 = vmax.f32 %v3740, 0.0
        %v3945 = vmax.f32 %v3743, 0.0
        %v3946 = vmax.f32 %v3748, 0.0
        %v3947 = vmax.f32 %v3751, 0.0
        %v3948 = vmax.f32 %v3756, 0.0
        %v3949 = vmax.f32 %v3759, 0.0
        %v3950 = vmax.f32 %v3764, 0.0
        %v3951 = vmax.f32 %v3767, 0.0
        %v3952 = vmax.f32 %v3772, 0.0
        %v3953 = vmax.f32 %v3775, 0.0
        %v3954 = vmax.f32 %v3780, 0.0
        %v3955 = vmax.f32 %v3783, 0.0
        %v3956 = vmax.f32 %v3788, 0.0
        %v3957 = vmax.f32 %v3791, 0.0
        %v3958 = vmax.f32 %v3796, 0.0
        %v3959 = vmax.f32 %v3799, 0.0
        %v3960 = vmax.f32 %v3804, 0.0
        %v3961 = vmax.f32 %v3807, 0.0
        %v3962 = vmax.f32 %v3812, 0.0
        %v3963 = vmax.f32 %v3815, 0.0
        %v3964 = vmax.f32 %v3820, 0.0
        %v3965 = vmax.f32 %v3823, 0.0
        %v3966 = vmax.f32 %v3828, 0.0
        %v3967 = vmax.f32 %v3831, 0.0
        %v3968 = vmax.f32 %v3836, 0.0
        %v3969 = vmax.f32 %v3839, 0.0
        %v3970 = vpack.c.bf16 %v3843, %v3842
        %v3971 = vpack.c.bf16 %v3845, %v3844
        %v3972 = vpack.c.bf16 %v3847, %v3846
        %v3973 = vpack.c.bf16 %v3849, %v3848
        %v3974 = vpack.c.bf16 %v3851, %v3850
        %v3975 = vpack.c.bf16 %v3853, %v3852
        %v3976 = vpack.c.bf16 %v3855, %v3854
        %v3977 = vpack.c.bf16 %v3857, %v3856
        %v3978 = vpack.c.bf16 %v3859, %v3858
        %v3979 = vpack.c.bf16 %v3861, %v3860
        %v3980 = vpack.c.bf16 %v3863, %v3862
        %v3981 = vpack.c.bf16 %v3865, %v3864
        %v3982 = vpack.c.bf16 %v3867, %v3866
        %v3983 = vpack.c.bf16 %v3869, %v3868
        %v3984 = vpack.c.bf16 %v3871, %v3870
        %v3985 = vpack.c.bf16 %v3873, %v3872
        %v3986 = vpack.c.bf16 %v3875, %v3874
        %v3987 = vpack.c.bf16 %v3877, %v3876
        %v3988 = vpack.c.bf16 %v3879, %v3878
        %v3989 = vpack.c.bf16 %v3881, %v3880
        %v3990 = vpack.c.bf16 %v3883, %v3882
        %v3991 = vpack.c.bf16 %v3885, %v3884
        %v3992 = vpack.c.bf16 %v3887, %v3886
        %v3993 = vpack.c.bf16 %v3889, %v3888
        %v3994 = vpack.c.bf16 %v3891, %v3890
        %v3995 = vpack.c.bf16 %v3893, %v3892
        %v3996 = vpack.c.bf16 %v3895, %v3894
        %v3997 = vpack.c.bf16 %v3897, %v3896
        %v3998 = vpack.c.bf16 %v3899, %v3898
        %v3999 = vpack.c.bf16 %v3901, %v3900
        %v4000 = vpack.c.bf16 %v3903, %v3902
        %v4001 = vpack.c.bf16 %v3905, %v3904
        %v4002 = vpack.c.bf16 %v3907, %v3906
        %v4003 = vpack.c.bf16 %v3909, %v3908
        %v4004 = vpack.c.bf16 %v3911, %v3910
        %v4005 = vpack.c.bf16 %v3913, %v3912
        %v4006 = vpack.c.bf16 %v3915, %v3914
        %v4007 = vpack.c.bf16 %v3917, %v3916
        %v4008 = vpack.c.bf16 %v3919, %v3918
        %v4009 = vpack.c.bf16 %v3921, %v3920
        %v4010 = vpack.c.bf16 %v3923, %v3922
        %v4011 = vpack.c.bf16 %v3925, %v3924
        %v4012 = vpack.c.bf16 %v3927, %v3926
        %v4013 = vpack.c.bf16 %v3929, %v3928
        %v4014 = vpack.c.bf16 %v3931, %v3930
        %v4015 = vpack.c.bf16 %v3933, %v3932
        %v4016 = vpack.c.bf16 %v3935, %v3934
        %v4017 = vpack.c.bf16 %v3937, %v3936
        %v4018 = vpack.c.bf16 %v3939, %v3938
        %v4019 = vpack.c.bf16 %v3941, %v3940
        %v4020 = vpack.c.bf16 %v3943, %v3942
        %v4021 = vpack.c.bf16 %v3945, %v3944
        %v4022 = vpack.c.bf16 %v3947, %v3946
        %v4023 = vpack.c.bf16 %v3949, %v3948
        %v4024 = vpack.c.bf16 %v3951, %v3950
        %v4025 = vpack.c.bf16 %v3953, %v3952
        %v4026 = vpack.c.bf16 %v3955, %v3954
        %v4027 = vpack.c.bf16 %v3957, %v3956
        %v4028 = vpack.c.bf16 %v3959, %v3958
        %v4029 = vpack.c.bf16 %v3961, %v3960
        %v4030 = vpack.c.bf16 %v3963, %v3962
        %v4031 = vpack.c.bf16 %v3965, %v3964
        %v4032 = vpack.c.bf16 %v3967, %v3966
        %v4033 = vpack.c.bf16 %v3969, %v3968
        %v4034 = vld [vmem:[%s5] sm:$0xff]
        %v4035 = vld [vmem:[%s5 + $0x20] sm:$0xff]
        %v4036 = vld [vmem:[%s5 + $0x40] sm:$0xff]
        %v4037 = vld [vmem:[%s5 + $0x60] sm:$0xff]
        %v4038 = vld [vmem:[%s5 + $0x80] sm:$0xff]
        %v4039 = vld [vmem:[%s5 + $0xa0] sm:$0xff]
        %v4040 = vld [vmem:[%s5 + $0xc0] sm:$0xff]
        %v4041 = vld [vmem:[%s5 + $0xe0] sm:$0xff]
        %v4042 = vld [vmem:[%s5 + $0x100] sm:$0xff]
        %v4043 = vld [vmem:[%s5 + $0x120] sm:$0xff]
        %v4044 = vld [vmem:[%s5 + $0x140] sm:$0xff]
        %v4045 = vld [vmem:[%s5 + $0x160] sm:$0xff]
        %v4046 = vld [vmem:[%s5 + $0x180] sm:$0xff]
        %v4047 = vld [vmem:[%s5 + $0x1a0] sm:$0xff]
        %v4048 = vld [vmem:[%s5 + $0x1c0] sm:$0xff]
        %v4049 = vld [vmem:[%s5 + $0x1e0] sm:$0xff]
        %v4066 = vunpack.c.l.b16 %v4034
        %v4067 = vunpack.c.h.b16 %v4034
        %v4068 = vunpack.c.l.b16 %v4035
        %v4069 = vunpack.c.h.b16 %v4035
        %v4070 = vunpack.c.l.b16 %v4036
        %v4071 = vunpack.c.h.b16 %v4036
        %v4072 = vunpack.c.l.b16 %v4037
        %v4073 = vunpack.c.h.b16 %v4037
        %v4074 = vunpack.c.l.b16 %v4038
        %v4075 = vunpack.c.h.b16 %v4038
        %v4076 = vunpack.c.l.b16 %v4039
        %v4077 = vunpack.c.h.b16 %v4039
        %v4078 = vunpack.c.l.b16 %v4040
        %v4079 = vunpack.c.h.b16 %v4040
        %v4080 = vunpack.c.l.b16 %v4041
        %v4081 = vunpack.c.h.b16 %v4041
        %v4082 = vunpack.c.l.b16 %v4042
        %v4083 = vunpack.c.h.b16 %v4042
        %v4084 = vunpack.c.l.b16 %v4043
        %v4085 = vunpack.c.h.b16 %v4043
        %v4086 = vunpack.c.l.b16 %v4044
        %v4087 = vunpack.c.h.b16 %v4044
        %v4088 = vunpack.c.l.b16 %v4045
        %v4089 = vunpack.c.h.b16 %v4045
        %v4090 = vunpack.c.l.b16 %v4046
        %v4091 = vunpack.c.h.b16 %v4046
        %v4092 = vunpack.c.l.b16 %v4047
        %v4093 = vunpack.c.h.b16 %v4047
        %v4094 = vunpack.c.l.b16 %v4048
        %v4095 = vunpack.c.h.b16 %v4048
        %v4096 = vunpack.c.l.b16 %v4049
        %v4097 = vunpack.c.h.b16 %v4049
        %v4098 = vpack.c.b16 %v4068, %v4066
        %v4099 = vpack.c.b16 %v4069, %v4067
        %v4100 = vpack.c.b16 %v4072, %v4070
        %v4101 = vpack.c.b16 %v4073, %v4071
        %v4102 = vpack.c.b16 %v4076, %v4074
        %v4103 = vpack.c.b16 %v4077, %v4075
        %v4104 = vpack.c.b16 %v4080, %v4078
        %v4105 = vpack.c.b16 %v4081, %v4079
        %v4106 = vpack.c.b16 %v4084, %v4082
        %v4107 = vpack.c.b16 %v4085, %v4083
        %v4108 = vpack.c.b16 %v4088, %v4086
        %v4109 = vpack.c.b16 %v4089, %v4087
        %v4110 = vpack.c.b16 %v4092, %v4090
        %v4111 = vpack.c.b16 %v4093, %v4091
        %v4112 = vpack.c.b16 %v4096, %v4094
        %v4113 = vpack.c.b16 %v4097, %v4095
        %4130 = vmatprep.subr.bf16.mxu0 %v4113
        %4131 = vmatpush1.bf16.msra.mxu0 %v4112
        %4132 = vmatprep.subr.bf16.mxu0 %v4111
        %4133 = vmatpush1.bf16.msra.mxu0 %v4110
        %4134 = vmatprep.subr.bf16.mxu0 %v4109
        %4135 = vmatpush1.bf16.msra.mxu0 %v4108
        %4136 = vmatprep.subr.bf16.mxu0 %v4107
        %4137 = vmatpush1.bf16.msra.mxu0 %v4106
        %4138 = vmatprep.subr.bf16.mxu0 %v4105
        %4139 = vmatpush1.bf16.msra.mxu0 %v4104
        %4140 = vmatprep.subr.bf16.mxu0 %v4103
        %4141 = vmatpush1.bf16.msra.mxu0 %v4102
        %4142 = vmatprep.subr.bf16.mxu0 %v4101
        %4143 = vmatpush1.bf16.msra.mxu0 %v4100
        %4144 = vmatprep.subr.bf16.mxu0 %v4099
        %4145 = vmatpush1.bf16.msra.mxu0 %v4098
        %4146 = vmatprep.subr.bf16.mxu0 0
        %4147 = vmatpush2.bf16.msra.mxu0 0
        %4148 = vmatprep.subr.bf16.mxu0 0
        %4149 = vmatpush2.bf16.msra.mxu0 0
        %4150 = vmatprep.subr.bf16.mxu0 0
        %4151 = vmatpush2.bf16.msra.mxu0 0
        %4152 = vmatprep.subr.bf16.mxu0 0
        %4153 = vmatpush2.bf16.msra.mxu0 0
        %4154 = vmatprep.subr.bf16.mxu0 0
        %4155 = vmatpush2.bf16.msra.mxu0 0
        %4156 = vmatprep.subr.bf16.mxu0 0
        %4157 = vmatpush2.bf16.msra.mxu0 0
        %4158 = vmatprep.subr.bf16.mxu0 0
        %4159 = vmatpush2.bf16.msra.mxu0 0
        %4160 = vmatprep.subr.bf16.mxu0 0
        %4161 = vmatpush2.bf16.msra.mxu0 0
        %4162 = vmatprep.mubr.bf16.mxu0 0
        %4163 = vmatmul.mubr.bf16.gmra.mxu0 %v3970
        %v4164 = vpop.f32.mrf.mxu0
        %v4165 = vadd.f32 0.0, %v4164
        %v4166 = vpop.f32.mrf.mxu0
        %v4167 = vadd.f32 0.0, %v4166
        %v4168 = vpop.f32.mrf.mxu0
        %v4169 = vadd.f32 0.0, %v4168
        %v4170 = vpop.f32.mrf.mxu0
        %v4171 = vadd.f32 0.0, %v4170
        %4172 = vmatprep.mubr.bf16.mxu0 0
        %4173 = vmatmul.mubr.bf16.gmra.mxu0 %v3971
        %v4174 = vpop.f32.mrf.mxu0
        %v4175 = vadd.f32 0.0, %v4174
        %v4176 = vpop.f32.mrf.mxu0
        %v4177 = vadd.f32 0.0, %v4176
        %v4178 = vpop.f32.mrf.mxu0
        %v4179 = vadd.f32 0.0, %v4178
        %v4180 = vpop.f32.mrf.mxu0
        %v4181 = vadd.f32 0.0, %v4180
        %4182 = vmatprep.mubr.bf16.mxu0 0
        %4183 = vmatmul.mubr.bf16.gmra.mxu0 %v3972
        %v4184 = vpop.f32.mrf.mxu0
        %v4185 = vadd.f32 0.0, %v4184
        %v4186 = vpop.f32.mrf.mxu0
        %v4187 = vadd.f32 0.0, %v4186
        %v4188 = vpop.f32.mrf.mxu0
        %v4189 = vadd.f32 0.0, %v4188
        %v4190 = vpop.f32.mrf.mxu0
        %v4191 = vadd.f32 0.0, %v4190
        %4192 = vmatprep.mubr.bf16.mxu0 0
        %4193 = vmatmul.mubr.bf16.gmra.mxu0 %v3973
        %v4194 = vpop.f32.mrf.mxu0
        %v4195 = vadd.f32 0.0, %v4194
        %v4196 = vpop.f32.mrf.mxu0
        %v4197 = vadd.f32 0.0, %v4196
        %v4198 = vpop.f32.mrf.mxu0
        %v4199 = vadd.f32 0.0, %v4198
        %v4200 = vpop.f32.mrf.mxu0
        %v4201 = vadd.f32 0.0, %v4200
        %4202 = vmatprep.mubr.bf16.mxu0 0
        %4203 = vmatmul.mubr.bf16.gmra.mxu0 %v3974
        %v4204 = vpop.f32.mrf.mxu0
        %v4205 = vadd.f32 0.0, %v4204
        %v4206 = vpop.f32.mrf.mxu0
        %v4207 = vadd.f32 0.0, %v4206
        %v4208 = vpop.f32.mrf.mxu0
        %v4209 = vadd.f32 0.0, %v4208
        %v4210 = vpop.f32.mrf.mxu0
        %v4211 = vadd.f32 0.0, %v4210
        %4212 = vmatprep.mubr.bf16.mxu0 0
        %4213 = vmatmul.mubr.bf16.gmra.mxu0 %v3975
        %v4214 = vpop.f32.mrf.mxu0
        %v4215 = vadd.f32 0.0, %v4214
        %v4216 = vpop.f32.mrf.mxu0
        %v4217 = vadd.f32 0.0, %v4216
        %v4218 = vpop.f32.mrf.mxu0
        %v4219 = vadd.f32 0.0, %v4218
        %v4220 = vpop.f32.mrf.mxu0
        %v4221 = vadd.f32 0.0, %v4220
        %4222 = vmatprep.mubr.bf16.mxu0 0
        %4223 = vmatmul.mubr.bf16.gmra.mxu0 %v3976
        %v4224 = vpop.f32.mrf.mxu0
        %v4225 = vadd.f32 0.0, %v4224
        %v4226 = vpop.f32.mrf.mxu0
        %v4227 = vadd.f32 0.0, %v4226
        %v4228 = vpop.f32.mrf.mxu0
        %v4229 = vadd.f32 0.0, %v4228
        %v4230 = vpop.f32.mrf.mxu0
        %v4231 = vadd.f32 0.0, %v4230
        %4232 = vmatprep.mubr.bf16.mxu0 0
        %4233 = vmatmul.mubr.bf16.gmra.mxu0 %v3977
        %v4234 = vpop.f32.mrf.mxu0
        %v4235 = vadd.f32 0.0, %v4234
        %v4236 = vpop.f32.mrf.mxu0
        %v4237 = vadd.f32 0.0, %v4236
        %v4238 = vpop.f32.mrf.mxu0
        %v4239 = vadd.f32 0.0, %v4238
        %v4240 = vpop.f32.mrf.mxu0
        %v4241 = vadd.f32 0.0, %v4240
        %4242 = vmatprep.mubr.bf16.mxu0 0
        %4243 = vmatmul.mubr.bf16.gmra.mxu0 %v3978
        %v4244 = vpop.f32.mrf.mxu0
        %v4245 = vadd.f32 0.0, %v4244
        %v4246 = vpop.f32.mrf.mxu0
        %v4247 = vadd.f32 0.0, %v4246
        %v4248 = vpop.f32.mrf.mxu0
        %v4249 = vadd.f32 0.0, %v4248
        %v4250 = vpop.f32.mrf.mxu0
        %v4251 = vadd.f32 0.0, %v4250
        %4252 = vmatprep.mubr.bf16.mxu0 0
        %4253 = vmatmul.mubr.bf16.gmra.mxu0 %v3979
        %v4254 = vpop.f32.mrf.mxu0
        %v4255 = vadd.f32 0.0, %v4254
        %v4256 = vpop.f32.mrf.mxu0
        %v4257 = vadd.f32 0.0, %v4256
        %v4258 = vpop.f32.mrf.mxu0
        %v4259 = vadd.f32 0.0, %v4258
        %v4260 = vpop.f32.mrf.mxu0
        %v4261 = vadd.f32 0.0, %v4260
        %4262 = vmatprep.mubr.bf16.mxu0 0
        %4263 = vmatmul.mubr.bf16.gmra.mxu0 %v3980
        %v4264 = vpop.f32.mrf.mxu0
        %v4265 = vadd.f32 0.0, %v4264
        %v4266 = vpop.f32.mrf.mxu0
        %v4267 = vadd.f32 0.0, %v4266
        %v4268 = vpop.f32.mrf.mxu0
        %v4269 = vadd.f32 0.0, %v4268
        %v4270 = vpop.f32.mrf.mxu0
        %v4271 = vadd.f32 0.0, %v4270
        %4272 = vmatprep.mubr.bf16.mxu0 0
        %4273 = vmatmul.mubr.bf16.gmra.mxu0 %v3981
        %v4274 = vpop.f32.mrf.mxu0
        %v4275 = vadd.f32 0.0, %v4274
        %v4276 = vpop.f32.mrf.mxu0
        %v4277 = vadd.f32 0.0, %v4276
        %v4278 = vpop.f32.mrf.mxu0
        %v4279 = vadd.f32 0.0, %v4278
        %v4280 = vpop.f32.mrf.mxu0
        %v4281 = vadd.f32 0.0, %v4280
        %4282 = vmatprep.mubr.bf16.mxu0 0
        %4283 = vmatmul.mubr.bf16.gmra.mxu0 %v3982
        %v4284 = vpop.f32.mrf.mxu0
        %v4285 = vadd.f32 0.0, %v4284
        %v4286 = vpop.f32.mrf.mxu0
        %v4287 = vadd.f32 0.0, %v4286
        %v4288 = vpop.f32.mrf.mxu0
        %v4289 = vadd.f32 0.0, %v4288
        %v4290 = vpop.f32.mrf.mxu0
        %v4291 = vadd.f32 0.0, %v4290
        %4292 = vmatprep.mubr.bf16.mxu0 0
        %4293 = vmatmul.mubr.bf16.gmra.mxu0 %v3983
        %v4294 = vpop.f32.mrf.mxu0
        %v4295 = vadd.f32 0.0, %v4294
        %v4296 = vpop.f32.mrf.mxu0
        %v4297 = vadd.f32 0.0, %v4296
        %v4298 = vpop.f32.mrf.mxu0
        %v4299 = vadd.f32 0.0, %v4298
        %v4300 = vpop.f32.mrf.mxu0
        %v4301 = vadd.f32 0.0, %v4300
        %4302 = vmatprep.mubr.bf16.mxu0 0
        %4303 = vmatmul.mubr.bf16.gmra.mxu0 %v3984
        %v4304 = vpop.f32.mrf.mxu0
        %v4305 = vadd.f32 0.0, %v4304
        %v4306 = vpop.f32.mrf.mxu0
        %v4307 = vadd.f32 0.0, %v4306
        %v4308 = vpop.f32.mrf.mxu0
        %v4309 = vadd.f32 0.0, %v4308
        %v4310 = vpop.f32.mrf.mxu0
        %v4311 = vadd.f32 0.0, %v4310
        %4312 = vmatprep.mubr.bf16.mxu0 0
        %4313 = vmatmul.mubr.bf16.gmra.mxu0 %v3985
        %v4314 = vpop.f32.mrf.mxu0
        %v4315 = vadd.f32 0.0, %v4314
        %v4316 = vpop.f32.mrf.mxu0
        %v4317 = vadd.f32 0.0, %v4316
        %v4318 = vpop.f32.mrf.mxu0
        %v4319 = vadd.f32 0.0, %v4318
        %v4320 = vpop.f32.mrf.mxu0
        %v4321 = vadd.f32 0.0, %v4320
        %4322 = vmatprep.mubr.bf16.mxu0 0
        %4323 = vmatmul.mubr.bf16.gmra.mxu0 %v3986
        %v4324 = vpop.f32.mrf.mxu0
        %v4325 = vadd.f32 0.0, %v4324
        %v4326 = vpop.f32.mrf.mxu0
        %v4327 = vadd.f32 0.0, %v4326
        %v4328 = vpop.f32.mrf.mxu0
        %v4329 = vadd.f32 0.0, %v4328
        %v4330 = vpop.f32.mrf.mxu0
        %v4331 = vadd.f32 0.0, %v4330
        %4332 = vmatprep.mubr.bf16.mxu0 0
        %4333 = vmatmul.mubr.bf16.gmra.mxu0 %v3987
        %v4334 = vpop.f32.mrf.mxu0
        %v4335 = vadd.f32 0.0, %v4334
        %v4336 = vpop.f32.mrf.mxu0
        %v4337 = vadd.f32 0.0, %v4336
        %v4338 = vpop.f32.mrf.mxu0
        %v4339 = vadd.f32 0.0, %v4338
        %v4340 = vpop.f32.mrf.mxu0
        %v4341 = vadd.f32 0.0, %v4340
        %4342 = vmatprep.mubr.bf16.mxu0 0
        %4343 = vmatmul.mubr.bf16.gmra.mxu0 %v3988
        %v4344 = vpop.f32.mrf.mxu0
        %v4345 = vadd.f32 0.0, %v4344
        %v4346 = vpop.f32.mrf.mxu0
        %v4347 = vadd.f32 0.0, %v4346
        %v4348 = vpop.f32.mrf.mxu0
        %v4349 = vadd.f32 0.0, %v4348
        %v4350 = vpop.f32.mrf.mxu0
        %v4351 = vadd.f32 0.0, %v4350
        %4352 = vmatprep.mubr.bf16.mxu0 0
        %4353 = vmatmul.mubr.bf16.gmra.mxu0 %v3989
        %v4354 = vpop.f32.mrf.mxu0
        %v4355 = vadd.f32 0.0, %v4354
        %v4356 = vpop.f32.mrf.mxu0
        %v4357 = vadd.f32 0.0, %v4356
        %v4358 = vpop.f32.mrf.mxu0
        %v4359 = vadd.f32 0.0, %v4358
        %v4360 = vpop.f32.mrf.mxu0
        %v4361 = vadd.f32 0.0, %v4360
        %4362 = vmatprep.mubr.bf16.mxu0 0
        %4363 = vmatmul.mubr.bf16.gmra.mxu0 %v3990
        %v4364 = vpop.f32.mrf.mxu0
        %v4365 = vadd.f32 0.0, %v4364
        %v4366 = vpop.f32.mrf.mxu0
        %v4367 = vadd.f32 0.0, %v4366
        %v4368 = vpop.f32.mrf.mxu0
        %v4369 = vadd.f32 0.0, %v4368
        %v4370 = vpop.f32.mrf.mxu0
        %v4371 = vadd.f32 0.0, %v4370
        %4372 = vmatprep.mubr.bf16.mxu0 0
        %4373 = vmatmul.mubr.bf16.gmra.mxu0 %v3991
        %v4374 = vpop.f32.mrf.mxu0
        %v4375 = vadd.f32 0.0, %v4374
        %v4376 = vpop.f32.mrf.mxu0
        %v4377 = vadd.f32 0.0, %v4376
        %v4378 = vpop.f32.mrf.mxu0
        %v4379 = vadd.f32 0.0, %v4378
        %v4380 = vpop.f32.mrf.mxu0
        %v4381 = vadd.f32 0.0, %v4380
        %4382 = vmatprep.mubr.bf16.mxu0 0
        %4383 = vmatmul.mubr.bf16.gmra.mxu0 %v3992
        %v4384 = vpop.f32.mrf.mxu0
        %v4385 = vadd.f32 0.0, %v4384
        %v4386 = vpop.f32.mrf.mxu0
        %v4387 = vadd.f32 0.0, %v4386
        %v4388 = vpop.f32.mrf.mxu0
        %v4389 = vadd.f32 0.0, %v4388
        %v4390 = vpop.f32.mrf.mxu0
        %v4391 = vadd.f32 0.0, %v4390
        %4392 = vmatprep.mubr.bf16.mxu0 0
        %4393 = vmatmul.mubr.bf16.gmra.mxu0 %v3993
        %v4394 = vpop.f32.mrf.mxu0
        %v4395 = vadd.f32 0.0, %v4394
        %v4396 = vpop.f32.mrf.mxu0
        %v4397 = vadd.f32 0.0, %v4396
        %v4398 = vpop.f32.mrf.mxu0
        %v4399 = vadd.f32 0.0, %v4398
        %v4400 = vpop.f32.mrf.mxu0
        %v4401 = vadd.f32 0.0, %v4400
        %4402 = vmatprep.mubr.bf16.mxu0 0
        %4403 = vmatmul.mubr.bf16.gmra.mxu0 %v3994
        %v4404 = vpop.f32.mrf.mxu0
        %v4405 = vadd.f32 0.0, %v4404
        %v4406 = vpop.f32.mrf.mxu0
        %v4407 = vadd.f32 0.0, %v4406
        %v4408 = vpop.f32.mrf.mxu0
        %v4409 = vadd.f32 0.0, %v4408
        %v4410 = vpop.f32.mrf.mxu0
        %v4411 = vadd.f32 0.0, %v4410
        %4412 = vmatprep.mubr.bf16.mxu0 0
        %4413 = vmatmul.mubr.bf16.gmra.mxu0 %v3995
        %v4414 = vpop.f32.mrf.mxu0
        %v4415 = vadd.f32 0.0, %v4414
        %v4416 = vpop.f32.mrf.mxu0
        %v4417 = vadd.f32 0.0, %v4416
        %v4418 = vpop.f32.mrf.mxu0
        %v4419 = vadd.f32 0.0, %v4418
        %v4420 = vpop.f32.mrf.mxu0
        %v4421 = vadd.f32 0.0, %v4420
        %4422 = vmatprep.mubr.bf16.mxu0 0
        %4423 = vmatmul.mubr.bf16.gmra.mxu0 %v3996
        %v4424 = vpop.f32.mrf.mxu0
        %v4425 = vadd.f32 0.0, %v4424
        %v4426 = vpop.f32.mrf.mxu0
        %v4427 = vadd.f32 0.0, %v4426
        %v4428 = vpop.f32.mrf.mxu0
        %v4429 = vadd.f32 0.0, %v4428
        %v4430 = vpop.f32.mrf.mxu0
        %v4431 = vadd.f32 0.0, %v4430
        %4432 = vmatprep.mubr.bf16.mxu0 0
        %4433 = vmatmul.mubr.bf16.gmra.mxu0 %v3997
        %v4434 = vpop.f32.mrf.mxu0
        %v4435 = vadd.f32 0.0, %v4434
        %v4436 = vpop.f32.mrf.mxu0
        %v4437 = vadd.f32 0.0, %v4436
        %v4438 = vpop.f32.mrf.mxu0
        %v4439 = vadd.f32 0.0, %v4438
        %v4440 = vpop.f32.mrf.mxu0
        %v4441 = vadd.f32 0.0, %v4440
        %4442 = vmatprep.mubr.bf16.mxu0 0
        %4443 = vmatmul.mubr.bf16.gmra.mxu0 %v3998
        %v4444 = vpop.f32.mrf.mxu0
        %v4445 = vadd.f32 0.0, %v4444
        %v4446 = vpop.f32.mrf.mxu0
        %v4447 = vadd.f32 0.0, %v4446
        %v4448 = vpop.f32.mrf.mxu0
        %v4449 = vadd.f32 0.0, %v4448
        %v4450 = vpop.f32.mrf.mxu0
        %v4451 = vadd.f32 0.0, %v4450
        %4452 = vmatprep.mubr.bf16.mxu0 0
        %4453 = vmatmul.mubr.bf16.gmra.mxu0 %v3999
        %v4454 = vpop.f32.mrf.mxu0
        %v4455 = vadd.f32 0.0, %v4454
        %v4456 = vpop.f32.mrf.mxu0
        %v4457 = vadd.f32 0.0, %v4456
        %v4458 = vpop.f32.mrf.mxu0
        %v4459 = vadd.f32 0.0, %v4458
        %v4460 = vpop.f32.mrf.mxu0
        %v4461 = vadd.f32 0.0, %v4460
        %4462 = vmatprep.mubr.bf16.mxu0 0
        %4463 = vmatmul.mubr.bf16.gmra.mxu0 %v4000
        %v4464 = vpop.f32.mrf.mxu0
        %v4465 = vadd.f32 0.0, %v4464
        %v4466 = vpop.f32.mrf.mxu0
        %v4467 = vadd.f32 0.0, %v4466
        %v4468 = vpop.f32.mrf.mxu0
        %v4469 = vadd.f32 0.0, %v4468
        %v4470 = vpop.f32.mrf.mxu0
        %v4471 = vadd.f32 0.0, %v4470
        %4472 = vmatprep.mubr.bf16.mxu0 0
        %4473 = vmatmul.mubr.bf16.gmra.mxu0 %v4001
        %v4474 = vpop.f32.mrf.mxu0
        %v4475 = vadd.f32 0.0, %v4474
        %v4476 = vpop.f32.mrf.mxu0
        %v4477 = vadd.f32 0.0, %v4476
        %v4478 = vpop.f32.mrf.mxu0
        %v4479 = vadd.f32 0.0, %v4478
        %v4480 = vpop.f32.mrf.mxu0
        %v4481 = vadd.f32 0.0, %v4480
        %4482 = vmatprep.mubr.bf16.mxu0 0
        %4483 = vmatmul.mubr.bf16.gmra.mxu0 %v4002
        %v4484 = vpop.f32.mrf.mxu0
        %v4485 = vadd.f32 0.0, %v4484
        %v4486 = vpop.f32.mrf.mxu0
        %v4487 = vadd.f32 0.0, %v4486
        %v4488 = vpop.f32.mrf.mxu0
        %v4489 = vadd.f32 0.0, %v4488
        %v4490 = vpop.f32.mrf.mxu0
        %v4491 = vadd.f32 0.0, %v4490
        %4492 = vmatprep.mubr.bf16.mxu0 0
        %4493 = vmatmul.mubr.bf16.gmra.mxu0 %v4003
        %v4494 = vpop.f32.mrf.mxu0
        %v4495 = vadd.f32 0.0, %v4494
        %v4496 = vpop.f32.mrf.mxu0
        %v4497 = vadd.f32 0.0, %v4496
        %v4498 = vpop.f32.mrf.mxu0
        %v4499 = vadd.f32 0.0, %v4498
        %v4500 = vpop.f32.mrf.mxu0
        %v4501 = vadd.f32 0.0, %v4500
        %4502 = vmatprep.mubr.bf16.mxu0 0
        %4503 = vmatmul.mubr.bf16.gmra.mxu0 %v4004
        %v4504 = vpop.f32.mrf.mxu0
        %v4505 = vadd.f32 0.0, %v4504
        %v4506 = vpop.f32.mrf.mxu0
        %v4507 = vadd.f32 0.0, %v4506
        %v4508 = vpop.f32.mrf.mxu0
        %v4509 = vadd.f32 0.0, %v4508
        %v4510 = vpop.f32.mrf.mxu0
        %v4511 = vadd.f32 0.0, %v4510
        %4512 = vmatprep.mubr.bf16.mxu0 0
        %4513 = vmatmul.mubr.bf16.gmra.mxu0 %v4005
        %v4514 = vpop.f32.mrf.mxu0
        %v4515 = vadd.f32 0.0, %v4514
        %v4516 = vpop.f32.mrf.mxu0
        %v4517 = vadd.f32 0.0, %v4516
        %v4518 = vpop.f32.mrf.mxu0
        %v4519 = vadd.f32 0.0, %v4518
        %v4520 = vpop.f32.mrf.mxu0
        %v4521 = vadd.f32 0.0, %v4520
        %4522 = vmatprep.mubr.bf16.mxu0 0
        %4523 = vmatmul.mubr.bf16.gmra.mxu0 %v4006
        %v4524 = vpop.f32.mrf.mxu0
        %v4525 = vadd.f32 0.0, %v4524
        %v4526 = vpop.f32.mrf.mxu0
        %v4527 = vadd.f32 0.0, %v4526
        %v4528 = vpop.f32.mrf.mxu0
        %v4529 = vadd.f32 0.0, %v4528
        %v4530 = vpop.f32.mrf.mxu0
        %v4531 = vadd.f32 0.0, %v4530
        %4532 = vmatprep.mubr.bf16.mxu0 0
        %4533 = vmatmul.mubr.bf16.gmra.mxu0 %v4007
        %v4534 = vpop.f32.mrf.mxu0
        %v4535 = vadd.f32 0.0, %v4534
        %v4536 = vpop.f32.mrf.mxu0
        %v4537 = vadd.f32 0.0, %v4536
        %v4538 = vpop.f32.mrf.mxu0
        %v4539 = vadd.f32 0.0, %v4538
        %v4540 = vpop.f32.mrf.mxu0
        %v4541 = vadd.f32 0.0, %v4540
        %4542 = vmatprep.mubr.bf16.mxu0 0
        %4543 = vmatmul.mubr.bf16.gmra.mxu0 %v4008
        %v4544 = vpop.f32.mrf.mxu0
        %v4545 = vadd.f32 0.0, %v4544
        %v4546 = vpop.f32.mrf.mxu0
        %v4547 = vadd.f32 0.0, %v4546
        %v4548 = vpop.f32.mrf.mxu0
        %v4549 = vadd.f32 0.0, %v4548
        %v4550 = vpop.f32.mrf.mxu0
        %v4551 = vadd.f32 0.0, %v4550
        %4552 = vmatprep.mubr.bf16.mxu0 0
        %4553 = vmatmul.mubr.bf16.gmra.mxu0 %v4009
        %v4554 = vpop.f32.mrf.mxu0
        %v4555 = vadd.f32 0.0, %v4554
        %v4556 = vpop.f32.mrf.mxu0
        %v4557 = vadd.f32 0.0, %v4556
        %v4558 = vpop.f32.mrf.mxu0
        %v4559 = vadd.f32 0.0, %v4558
        %v4560 = vpop.f32.mrf.mxu0
        %v4561 = vadd.f32 0.0, %v4560
        %4562 = vmatprep.mubr.bf16.mxu0 0
        %4563 = vmatmul.mubr.bf16.gmra.mxu0 %v4010
        %v4564 = vpop.f32.mrf.mxu0
        %v4565 = vadd.f32 0.0, %v4564
        %v4566 = vpop.f32.mrf.mxu0
        %v4567 = vadd.f32 0.0, %v4566
        %v4568 = vpop.f32.mrf.mxu0
        %v4569 = vadd.f32 0.0, %v4568
        %v4570 = vpop.f32.mrf.mxu0
        %v4571 = vadd.f32 0.0, %v4570
        %4572 = vmatprep.mubr.bf16.mxu0 0
        %4573 = vmatmul.mubr.bf16.gmra.mxu0 %v4011
        %v4574 = vpop.f32.mrf.mxu0
        %v4575 = vadd.f32 0.0, %v4574
        %v4576 = vpop.f32.mrf.mxu0
        %v4577 = vadd.f32 0.0, %v4576
        %v4578 = vpop.f32.mrf.mxu0
        %v4579 = vadd.f32 0.0, %v4578
        %v4580 = vpop.f32.mrf.mxu0
        %v4581 = vadd.f32 0.0, %v4580
        %4582 = vmatprep.mubr.bf16.mxu0 0
        %4583 = vmatmul.mubr.bf16.gmra.mxu0 %v4012
        %v4584 = vpop.f32.mrf.mxu0
        %v4585 = vadd.f32 0.0, %v4584
        %v4586 = vpop.f32.mrf.mxu0
        %v4587 = vadd.f32 0.0, %v4586
        %v4588 = vpop.f32.mrf.mxu0
        %v4589 = vadd.f32 0.0, %v4588
        %v4590 = vpop.f32.mrf.mxu0
        %v4591 = vadd.f32 0.0, %v4590
        %4592 = vmatprep.mubr.bf16.mxu0 0
        %4593 = vmatmul.mubr.bf16.gmra.mxu0 %v4013
        %v4594 = vpop.f32.mrf.mxu0
        %v4595 = vadd.f32 0.0, %v4594
        %v4596 = vpop.f32.mrf.mxu0
        %v4597 = vadd.f32 0.0, %v4596
        %v4598 = vpop.f32.mrf.mxu0
        %v4599 = vadd.f32 0.0, %v4598
        %v4600 = vpop.f32.mrf.mxu0
        %v4601 = vadd.f32 0.0, %v4600
        %4602 = vmatprep.mubr.bf16.mxu0 0
        %4603 = vmatmul.mubr.bf16.gmra.mxu0 %v4014
        %v4604 = vpop.f32.mrf.mxu0
        %v4605 = vadd.f32 0.0, %v4604
        %v4606 = vpop.f32.mrf.mxu0
        %v4607 = vadd.f32 0.0, %v4606
        %v4608 = vpop.f32.mrf.mxu0
        %v4609 = vadd.f32 0.0, %v4608
        %v4610 = vpop.f32.mrf.mxu0
        %v4611 = vadd.f32 0.0, %v4610
        %4612 = vmatprep.mubr.bf16.mxu0 0
        %4613 = vmatmul.mubr.bf16.gmra.mxu0 %v4015
        %v4614 = vpop.f32.mrf.mxu0
        %v4615 = vadd.f32 0.0, %v4614
        %v4616 = vpop.f32.mrf.mxu0
        %v4617 = vadd.f32 0.0, %v4616
        %v4618 = vpop.f32.mrf.mxu0
        %v4619 = vadd.f32 0.0, %v4618
        %v4620 = vpop.f32.mrf.mxu0
        %v4621 = vadd.f32 0.0, %v4620
        %4622 = vmatprep.mubr.bf16.mxu0 0
        %4623 = vmatmul.mubr.bf16.gmra.mxu0 %v4016
        %v4624 = vpop.f32.mrf.mxu0
        %v4625 = vadd.f32 0.0, %v4624
        %v4626 = vpop.f32.mrf.mxu0
        %v4627 = vadd.f32 0.0, %v4626
        %v4628 = vpop.f32.mrf.mxu0
        %v4629 = vadd.f32 0.0, %v4628
        %v4630 = vpop.f32.mrf.mxu0
        %v4631 = vadd.f32 0.0, %v4630
        %4632 = vmatprep.mubr.bf16.mxu0 0
        %4633 = vmatmul.mubr.bf16.gmra.mxu0 %v4017
        %v4634 = vpop.f32.mrf.mxu0
        %v4635 = vadd.f32 0.0, %v4634
        %v4636 = vpop.f32.mrf.mxu0
        %v4637 = vadd.f32 0.0, %v4636
        %v4638 = vpop.f32.mrf.mxu0
        %v4639 = vadd.f32 0.0, %v4638
        %v4640 = vpop.f32.mrf.mxu0
        %v4641 = vadd.f32 0.0, %v4640
        %4642 = vmatprep.mubr.bf16.mxu0 0
        %4643 = vmatmul.mubr.bf16.gmra.mxu0 %v4018
        %v4644 = vpop.f32.mrf.mxu0
        %v4645 = vadd.f32 0.0, %v4644
        %v4646 = vpop.f32.mrf.mxu0
        %v4647 = vadd.f32 0.0, %v4646
        %v4648 = vpop.f32.mrf.mxu0
        %v4649 = vadd.f32 0.0, %v4648
        %v4650 = vpop.f32.mrf.mxu0
        %v4651 = vadd.f32 0.0, %v4650
        %4652 = vmatprep.mubr.bf16.mxu0 0
        %4653 = vmatmul.mubr.bf16.gmra.mxu0 %v4019
        %v4654 = vpop.f32.mrf.mxu0
        %v4655 = vadd.f32 0.0, %v4654
        %v4656 = vpop.f32.mrf.mxu0
        %v4657 = vadd.f32 0.0, %v4656
        %v4658 = vpop.f32.mrf.mxu0
        %v4659 = vadd.f32 0.0, %v4658
        %v4660 = vpop.f32.mrf.mxu0
        %v4661 = vadd.f32 0.0, %v4660
        %4662 = vmatprep.mubr.bf16.mxu0 0
        %4663 = vmatmul.mubr.bf16.gmra.mxu0 %v4020
        %v4664 = vpop.f32.mrf.mxu0
        %v4665 = vadd.f32 0.0, %v4664
        %v4666 = vpop.f32.mrf.mxu0
        %v4667 = vadd.f32 0.0, %v4666
        %v4668 = vpop.f32.mrf.mxu0
        %v4669 = vadd.f32 0.0, %v4668
        %v4670 = vpop.f32.mrf.mxu0
        %v4671 = vadd.f32 0.0, %v4670
        %4672 = vmatprep.mubr.bf16.mxu0 0
        %4673 = vmatmul.mubr.bf16.gmra.mxu0 %v4021
        %v4674 = vpop.f32.mrf.mxu0
        %v4675 = vadd.f32 0.0, %v4674
        %v4676 = vpop.f32.mrf.mxu0
        %v4677 = vadd.f32 0.0, %v4676
        %v4678 = vpop.f32.mrf.mxu0
        %v4679 = vadd.f32 0.0, %v4678
        %v4680 = vpop.f32.mrf.mxu0
        %v4681 = vadd.f32 0.0, %v4680
        %4682 = vmatprep.mubr.bf16.mxu0 0
        %4683 = vmatmul.mubr.bf16.gmra.mxu0 %v4022
        %v4684 = vpop.f32.mrf.mxu0
        %v4685 = vadd.f32 0.0, %v4684
        %v4686 = vpop.f32.mrf.mxu0
        %v4687 = vadd.f32 0.0, %v4686
        %v4688 = vpop.f32.mrf.mxu0
        %v4689 = vadd.f32 0.0, %v4688
        %v4690 = vpop.f32.mrf.mxu0
        %v4691 = vadd.f32 0.0, %v4690
        %4692 = vmatprep.mubr.bf16.mxu0 0
        %4693 = vmatmul.mubr.bf16.gmra.mxu0 %v4023
        %v4694 = vpop.f32.mrf.mxu0
        %v4695 = vadd.f32 0.0, %v4694
        %v4696 = vpop.f32.mrf.mxu0
        %v4697 = vadd.f32 0.0, %v4696
        %v4698 = vpop.f32.mrf.mxu0
        %v4699 = vadd.f32 0.0, %v4698
        %v4700 = vpop.f32.mrf.mxu0
        %v4701 = vadd.f32 0.0, %v4700
        %4702 = vmatprep.mubr.bf16.mxu0 0
        %4703 = vmatmul.mubr.bf16.gmra.mxu0 %v4024
        %v4704 = vpop.f32.mrf.mxu0
        %v4705 = vadd.f32 0.0, %v4704
        %v4706 = vpop.f32.mrf.mxu0
        %v4707 = vadd.f32 0.0, %v4706
        %v4708 = vpop.f32.mrf.mxu0
        %v4709 = vadd.f32 0.0, %v4708
        %v4710 = vpop.f32.mrf.mxu0
        %v4711 = vadd.f32 0.0, %v4710
        %4712 = vmatprep.mubr.bf16.mxu0 0
        %4713 = vmatmul.mubr.bf16.gmra.mxu0 %v4025
        %v4714 = vpop.f32.mrf.mxu0
        %v4715 = vadd.f32 0.0, %v4714
        %v4716 = vpop.f32.mrf.mxu0
        %v4717 = vadd.f32 0.0, %v4716
        %v4718 = vpop.f32.mrf.mxu0
        %v4719 = vadd.f32 0.0, %v4718
        %v4720 = vpop.f32.mrf.mxu0
        %v4721 = vadd.f32 0.0, %v4720
        %4722 = vmatprep.mubr.bf16.mxu0 0
        %4723 = vmatmul.mubr.bf16.gmra.mxu0 %v4026
        %v4724 = vpop.f32.mrf.mxu0
        %v4725 = vadd.f32 0.0, %v4724
        %v4726 = vpop.f32.mrf.mxu0
        %v4727 = vadd.f32 0.0, %v4726
        %v4728 = vpop.f32.mrf.mxu0
        %v4729 = vadd.f32 0.0, %v4728
        %v4730 = vpop.f32.mrf.mxu0
        %v4731 = vadd.f32 0.0, %v4730
        %4732 = vmatprep.mubr.bf16.mxu0 0
        %4733 = vmatmul.mubr.bf16.gmra.mxu0 %v4027
        %v4734 = vpop.f32.mrf.mxu0
        %v4735 = vadd.f32 0.0, %v4734
        %v4736 = vpop.f32.mrf.mxu0
        %v4737 = vadd.f32 0.0, %v4736
        %v4738 = vpop.f32.mrf.mxu0
        %v4739 = vadd.f32 0.0, %v4738
        %v4740 = vpop.f32.mrf.mxu0
        %v4741 = vadd.f32 0.0, %v4740
        %4742 = vmatprep.mubr.bf16.mxu0 0
        %4743 = vmatmul.mubr.bf16.gmra.mxu0 %v4028
        %v4744 = vpop.f32.mrf.mxu0
        %v4745 = vadd.f32 0.0, %v4744
        %v4746 = vpop.f32.mrf.mxu0
        %v4747 = vadd.f32 0.0, %v4746
        %v4748 = vpop.f32.mrf.mxu0
        %v4749 = vadd.f32 0.0, %v4748
        %v4750 = vpop.f32.mrf.mxu0
        %v4751 = vadd.f32 0.0, %v4750
        %4752 = vmatprep.mubr.bf16.mxu0 0
        %4753 = vmatmul.mubr.bf16.gmra.mxu0 %v4029
        %v4754 = vpop.f32.mrf.mxu0
        %v4755 = vadd.f32 0.0, %v4754
        %v4756 = vpop.f32.mrf.mxu0
        %v4757 = vadd.f32 0.0, %v4756
        %v4758 = vpop.f32.mrf.mxu0
        %v4759 = vadd.f32 0.0, %v4758
        %v4760 = vpop.f32.mrf.mxu0
        %v4761 = vadd.f32 0.0, %v4760
        %4762 = vmatprep.mubr.bf16.mxu0 0
        %4763 = vmatmul.mubr.bf16.gmra.mxu0 %v4030
        %v4764 = vpop.f32.mrf.mxu0
        %v4765 = vadd.f32 0.0, %v4764
        %v4766 = vpop.f32.mrf.mxu0
        %v4767 = vadd.f32 0.0, %v4766
        %v4768 = vpop.f32.mrf.mxu0
        %v4769 = vadd.f32 0.0, %v4768
        %v4770 = vpop.f32.mrf.mxu0
        %v4771 = vadd.f32 0.0, %v4770
        %4772 = vmatprep.mubr.bf16.mxu0 0
        %4773 = vmatmul.mubr.bf16.gmra.mxu0 %v4031
        %v4774 = vpop.f32.mrf.mxu0
        %v4775 = vadd.f32 0.0, %v4774
        %v4776 = vpop.f32.mrf.mxu0
        %v4777 = vadd.f32 0.0, %v4776
        %v4778 = vpop.f32.mrf.mxu0
        %v4779 = vadd.f32 0.0, %v4778
        %v4780 = vpop.f32.mrf.mxu0
        %v4781 = vadd.f32 0.0, %v4780
        %4782 = vmatprep.mubr.bf16.mxu0 0
        %4783 = vmatmul.mubr.bf16.gmra.mxu0 %v4032
        %v4784 = vpop.f32.mrf.mxu0
        %v4785 = vadd.f32 0.0, %v4784
        %v4786 = vpop.f32.mrf.mxu0
        %v4787 = vadd.f32 0.0, %v4786
        %v4788 = vpop.f32.mrf.mxu0
        %v4789 = vadd.f32 0.0, %v4788
        %v4790 = vpop.f32.mrf.mxu0
        %v4791 = vadd.f32 0.0, %v4790
        %4792 = vmatprep.mubr.bf16.mxu0 0
        %4793 = vmatmul.mubr.bf16.gmra.mxu0 %v4033
        %v4794 = vpop.f32.mrf.mxu0
        %v4795 = vadd.f32 0.0, %v4794
        %v4796 = vpop.f32.mrf.mxu0
        %v4797 = vadd.f32 0.0, %v4796
        %v4798 = vpop.f32.mrf.mxu0
        %v4799 = vadd.f32 0.0, %v4798
        %v4800 = vpop.f32.mrf.mxu0
        %v4801 = vadd.f32 0.0, %v4800
        %4802 = vdwg.mxu0
        %v4803 = vmax.f32 %v4165, %v4175
        %v4804 = vmax.f32 %v4169, %v4179
        %v4805 = vmax.f32 %v4803, %v4185
        %v4806 = vmax.f32 %v4804, %v4189
        %v4807 = vmax.f32 %v4805, %v4195
        %v4808 = vmax.f32 %v4806, %v4199
        %v4809 = vmax.f32 %v4807, %v4205
        %v4810 = vmax.f32 %v4808, %v4209
        %v4811 = vmax.f32 %v4809, %v4215
        %v4812 = vmax.f32 %v4810, %v4219
        %v4813 = vmax.f32 %v4811, %v4225
        %v4814 = vmax.f32 %v4812, %v4229
        %v4815 = vmax.f32 %v4813, %v4235
        %v4816 = vmax.f32 %v4814, %v4239
        %v4817 = vmax.f32 %v4815, %v4245
        %v4818 = vmax.f32 %v4816, %v4249
        %v4819 = vmax.f32 %v4817, %v4255
        %v4820 = vmax.f32 %v4818, %v4259
        %v4821 = vmax.f32 %v4819, %v4265
        %v4822 = vmax.f32 %v4820, %v4269
        %v4823 = vmax.f32 %v4821, %v4275
        %v4824 = vmax.f32 %v4822, %v4279
        %v4825 = vmax.f32 %v4823, %v4285
        %v4826 = vmax.f32 %v4824, %v4289
        %v4827 = vmax.f32 %v4825, %v4295
        %v4828 = vmax.f32 %v4826, %v4299
        %v4829 = vmax.f32 %v4827, %v4305
        %v4830 = vmax.f32 %v4828, %v4309
        %v4831 = vmax.f32 %v4829, %v4315
        %v4832 = vmax.f32 %v4830, %v4319
        %v4833 = vmax.f32 %v4831, %v4325
        %v4834 = vmax.f32 %v4832, %v4329
        %v4835 = vmax.f32 %v4833, %v4335
        %v4836 = vmax.f32 %v4834, %v4339
        %v4837 = vmax.f32 %v4835, %v4345
        %v4838 = vmax.f32 %v4836, %v4349
        %v4839 = vmax.f32 %v4837, %v4355
        %v4840 = vmax.f32 %v4838, %v4359
        %v4841 = vmax.f32 %v4839, %v4365
        %v4842 = vmax.f32 %v4840, %v4369
        %v4843 = vmax.f32 %v4841, %v4375
        %v4844 = vmax.f32 %v4842, %v4379
        %v4845 = vmax.f32 %v4843, %v4385
        %v4846 = vmax.f32 %v4844, %v4389
        %v4847 = vmax.f32 %v4845, %v4395
        %v4848 = vmax.f32 %v4846, %v4399
        %v4849 = vmax.f32 %v4847, %v4405
        %v4850 = vmax.f32 %v4848, %v4409
        %v4851 = vmax.f32 %v4849, %v4415
        %v4852 = vmax.f32 %v4850, %v4419
        %v4853 = vmax.f32 %v4851, %v4425
        %v4854 = vmax.f32 %v4852, %v4429
        %v4855 = vmax.f32 %v4853, %v4435
        %v4856 = vmax.f32 %v4854, %v4439
        %v4857 = vmax.f32 %v4855, %v4445
        %v4858 = vmax.f32 %v4856, %v4449
        %v4859 = vmax.f32 %v4857, %v4455
        %v4860 = vmax.f32 %v4858, %v4459
        %v4861 = vmax.f32 %v4859, %v4465
        %v4862 = vmax.f32 %v4860, %v4469
        %v4863 = vmax.f32 %v4861, %v4475
        %v4864 = vmax.f32 %v4862, %v4479
        %v4865 = vmax.f32 %v4863, %v4485
        %v4866 = vmax.f32 %v4864, %v4489
        %v4867 = vmax.f32 %v4865, %v4495
        %v4868 = vmax.f32 %v4866, %v4499
        %v4869 = vmax.f32 %v4867, %v4505
        %v4870 = vmax.f32 %v4868, %v4509
        %v4871 = vmax.f32 %v4869, %v4515
        %v4872 = vmax.f32 %v4870, %v4519
        %v4873 = vmax.f32 %v4871, %v4525
        %v4874 = vmax.f32 %v4872, %v4529
        %v4875 = vmax.f32 %v4873, %v4535
        %v4876 = vmax.f32 %v4874, %v4539
        %v4877 = vmax.f32 %v4875, %v4545
        %v4878 = vmax.f32 %v4876, %v4549
        %v4879 = vmax.f32 %v4877, %v4555
        %v4880 = vmax.f32 %v4878, %v4559
        %v4881 = vmax.f32 %v4879, %v4565
        %v4882 = vmax.f32 %v4880, %v4569
        %v4883 = vmax.f32 %v4881, %v4575
        %v4884 = vmax.f32 %v4882, %v4579
        %v4885 = vmax.f32 %v4883, %v4585
        %v4886 = vmax.f32 %v4884, %v4589
        %v4887 = vmax.f32 %v4885, %v4595
        %v4888 = vmax.f32 %v4886, %v4599
        %v4889 = vmax.f32 %v4887, %v4605
        %v4890 = vmax.f32 %v4888, %v4609
        %v4891 = vmax.f32 %v4889, %v4615
        %v4892 = vmax.f32 %v4890, %v4619
        %v4893 = vmax.f32 %v4891, %v4625
        %v4894 = vmax.f32 %v4892, %v4629
        %v4895 = vmax.f32 %v4893, %v4635
        %v4896 = vmax.f32 %v4894, %v4639
        %v4897 = vmax.f32 %v4895, %v4645
        %v4898 = vmax.f32 %v4896, %v4649
        %v4899 = vmax.f32 %v4897, %v4655
        %v4900 = vmax.f32 %v4898, %v4659
        %v4901 = vmax.f32 %v4899, %v4665
        %v4902 = vmax.f32 %v4900, %v4669
        %v4903 = vmax.f32 %v4901, %v4675
        %v4904 = vmax.f32 %v4902, %v4679
        %v4905 = vmax.f32 %v4903, %v4685
        %v4906 = vmax.f32 %v4904, %v4689
        %v4907 = vmax.f32 %v4905, %v4695
        %v4908 = vmax.f32 %v4906, %v4699
        %v4909 = vmax.f32 %v4907, %v4705
        %v4910 = vmax.f32 %v4908, %v4709
        %v4911 = vmax.f32 %v4909, %v4715
        %v4912 = vmax.f32 %v4910, %v4719
        %v4913 = vmax.f32 %v4911, %v4725
        %v4914 = vmax.f32 %v4912, %v4729
        %v4915 = vmax.f32 %v4913, %v4735
        %v4916 = vmax.f32 %v4914, %v4739
        %v4917 = vmax.f32 %v4915, %v4745
        %v4918 = vmax.f32 %v4916, %v4749
        %v4919 = vmax.f32 %v4917, %v4755
        %v4920 = vmax.f32 %v4918, %v4759
        %v4921 = vmax.f32 %v4919, %v4765
        %v4922 = vmax.f32 %v4920, %v4769
        %v4923 = vmax.f32 %v4921, %v4775
        %v4924 = vmax.f32 %v4922, %v4779
        %v4925 = vmax.f32 %v4923, %v4785
        %v4926 = vmax.f32 %v4924, %v4789
        %v4927 = vmax.f32 %v4925, %v4795
        %v4928 = vmax.f32 %v4926, %v4799
        %v4929 = vmax.f32 %v4927, %v4928
        %v4930 = vmax.f32 %v4167, %v4177
        %v4931 = vmax.f32 %v4171, %v4181
        %v4932 = vmax.f32 %v4930, %v4187
        %v4933 = vmax.f32 %v4931, %v4191
        %v4934 = vmax.f32 %v4932, %v4197
        %v4935 = vmax.f32 %v4933, %v4201
        %v4936 = vmax.f32 %v4934, %v4207
        %v4937 = vmax.f32 %v4935, %v4211
        %v4938 = vmax.f32 %v4936, %v4217
        %v4939 = vmax.f32 %v4937, %v4221
        %v4940 = vmax.f32 %v4938, %v4227
        %v4941 = vmax.f32 %v4939, %v4231
        %v4942 = vmax.f32 %v4940, %v4237
        %v4943 = vmax.f32 %v4941, %v4241
        %v4944 = vmax.f32 %v4942, %v4247
        %v4945 = vmax.f32 %v4943, %v4251
        %v4946 = vmax.f32 %v4944, %v4257
        %v4947 = vmax.f32 %v4945, %v4261
        %v4948 = vmax.f32 %v4946, %v4267
        %v4949 = vmax.f32 %v4947, %v4271
        %v4950 = vmax.f32 %v4948, %v4277
        %v4951 = vmax.f32 %v4949, %v4281
        %v4952 = vmax.f32 %v4950, %v4287
        %v4953 = vmax.f32 %v4951, %v4291
        %v4954 = vmax.f32 %v4952, %v4297
        %v4955 = vmax.f32 %v4953, %v4301
        %v4956 = vmax.f32 %v4954, %v4307
        %v4957 = vmax.f32 %v4955, %v4311
        %v4958 = vmax.f32 %v4956, %v4317
        %v4959 = vmax.f32 %v4957, %v4321
        %v4960 = vmax.f32 %v4958, %v4327
        %v4961 = vmax.f32 %v4959, %v4331
        %v4962 = vmax.f32 %v4960, %v4337
        %v4963 = vmax.f32 %v4961, %v4341
        %v4964 = vmax.f32 %v4962, %v4347
        %v4965 = vmax.f32 %v4963, %v4351
        %v4966 = vmax.f32 %v4964, %v4357
        %v4967 = vmax.f32 %v4965, %v4361
        %v4968 = vmax.f32 %v4966, %v4367
        %v4969 = vmax.f32 %v4967, %v4371
        %v4970 = vmax.f32 %v4968, %v4377
        %v4971 = vmax.f32 %v4969, %v4381
        %v4972 = vmax.f32 %v4970, %v4387
        %v4973 = vmax.f32 %v4971, %v4391
        %v4974 = vmax.f32 %v4972, %v4397
        %v4975 = vmax.f32 %v4973, %v4401
        %v4976 = vmax.f32 %v4974, %v4407
        %v4977 = vmax.f32 %v4975, %v4411
        %v4978 = vmax.f32 %v4976, %v4417
        %v4979 = vmax.f32 %v4977, %v4421
        %v4980 = vmax.f32 %v4978, %v4427
        %v4981 = vmax.f32 %v4979, %v4431
        %v4982 = vmax.f32 %v4980, %v4437
        %v4983 = vmax.f32 %v4981, %v4441
        %v4984 = vmax.f32 %v4982, %v4447
        %v4985 = vmax.f32 %v4983, %v4451
        %v4986 = vmax.f32 %v4984, %v4457
        %v4987 = vmax.f32 %v4985, %v4461
        %v4988 = vmax.f32 %v4986, %v4467
        %v4989 = vmax.f32 %v4987, %v4471
        %v4990 = vmax.f32 %v4988, %v4477
        %v4991 = vmax.f32 %v4989, %v4481
        %v4992 = vmax.f32 %v4990, %v4487
        %v4993 = vmax.f32 %v4991, %v4491
        %v4994 = vmax.f32 %v4992, %v4497
        %v4995 = vmax.f32 %v4993, %v4501
        %v4996 = vmax.f32 %v4994, %v4507
        %v4997 = vmax.f32 %v4995, %v4511
        %v4998 = vmax.f32 %v4996, %v4517
        %v4999 = vmax.f32 %v4997, %v4521
        %v5000 = vmax.f32 %v4998, %v4527
        %v5001 = vmax.f32 %v4999, %v4531
        %v5002 = vmax.f32 %v5000, %v4537
        %v5003 = vmax.f32 %v5001, %v4541
        %v5004 = vmax.f32 %v5002, %v4547
        %v5005 = vmax.f32 %v5003, %v4551
        %v5006 = vmax.f32 %v5004, %v4557
        %v5007 = vmax.f32 %v5005, %v4561
        %v5008 = vmax.f32 %v5006, %v4567
        %v5009 = vmax.f32 %v5007, %v4571
        %v5010 = vmax.f32 %v5008, %v4577
        %v5011 = vmax.f32 %v5009, %v4581
        %v5012 = vmax.f32 %v5010, %v4587
        %v5013 = vmax.f32 %v5011, %v4591
        %v5014 = vmax.f32 %v5012, %v4597
        %v5015 = vmax.f32 %v5013, %v4601
        %v5016 = vmax.f32 %v5014, %v4607
        %v5017 = vmax.f32 %v5015, %v4611
        %v5018 = vmax.f32 %v5016, %v4617
        %v5019 = vmax.f32 %v5017, %v4621
        %v5020 = vmax.f32 %v5018, %v4627
        %v5021 = vmax.f32 %v5019, %v4631
        %v5022 = vmax.f32 %v5020, %v4637
        %v5023 = vmax.f32 %v5021, %v4641
        %v5024 = vmax.f32 %v5022, %v4647
        %v5025 = vmax.f32 %v5023, %v4651
        %v5026 = vmax.f32 %v5024, %v4657
        %v5027 = vmax.f32 %v5025, %v4661
        %v5028 = vmax.f32 %v5026, %v4667
        %v5029 = vmax.f32 %v5027, %v4671
        %v5030 = vmax.f32 %v5028, %v4677
        %v5031 = vmax.f32 %v5029, %v4681
        %v5032 = vmax.f32 %v5030, %v4687
        %v5033 = vmax.f32 %v5031, %v4691
        %v5034 = vmax.f32 %v5032, %v4697
        %v5035 = vmax.f32 %v5033, %v4701
        %v5036 = vmax.f32 %v5034, %v4707
        %v5037 = vmax.f32 %v5035, %v4711
        %v5038 = vmax.f32 %v5036, %v4717
        %v5039 = vmax.f32 %v5037, %v4721
        %v5040 = vmax.f32 %v5038, %v4727
        %v5041 = vmax.f32 %v5039, %v4731
        %v5042 = vmax.f32 %v5040, %v4737
        %v5043 = vmax.f32 %v5041, %v4741
        %v5044 = vmax.f32 %v5042, %v4747
        %v5045 = vmax.f32 %v5043, %v4751
        %v5046 = vmax.f32 %v5044, %v4757
        %v5047 = vmax.f32 %v5045, %v4761
        %v5048 = vmax.f32 %v5046, %v4767
        %v5049 = vmax.f32 %v5047, %v4771
        %v5050 = vmax.f32 %v5048, %v4777
        %v5051 = vmax.f32 %v5049, %v4781
        %v5052 = vmax.f32 %v5050, %v4787
        %v5053 = vmax.f32 %v5051, %v4791
        %v5054 = vmax.f32 %v5052, %v4797
        %v5055 = vmax.f32 %v5053, %v4801
        %v5056 = vmax.f32 %v5054, %v5055
        %v5057 = vld [vmem:[#allocation2] sm:$0xff]
        %v5058 = vld [vmem:[#allocation2 + $0x8] sm:$0xff]
        %v5059 = vmax.f32 %v5057, %v4929
        %v5060 = vmax.f32 %v5058, %v5056
        %5061 = vst [vmem:[#allocation2] sm:$0xff] %v5059
        %5062 = vst [vmem:[#allocation2 + $0x8] sm:$0xff] %v5060
        %v5063 = vld [vmem:[%s5 + $0x8] sm:$0xff]
        %v5064 = vld [vmem:[%s5 + $0x28] sm:$0xff]
        %v5065 = vld [vmem:[%s5 + $0x48] sm:$0xff]
        %v5066 = vld [vmem:[%s5 + $0x68] sm:$0xff]
        %v5067 = vld [vmem:[%s5 + $0x88] sm:$0xff]
        %v5068 = vld [vmem:[%s5 + $0xa8] sm:$0xff]
        %v5069 = vld [vmem:[%s5 + $0xc8] sm:$0xff]
        %v5070 = vld [vmem:[%s5 + $0xe8] sm:$0xff]
        %v5071 = vld [vmem:[%s5 + $0x108] sm:$0xff]
        %v5072 = vld [vmem:[%s5 + $0x128] sm:$0xff]
        %v5073 = vld [vmem:[%s5 + $0x148] sm:$0xff]
        %v5074 = vld [vmem:[%s5 + $0x168] sm:$0xff]
        %v5075 = vld [vmem:[%s5 + $0x188] sm:$0xff]
        %v5076 = vld [vmem:[%s5 + $0x1a8] sm:$0xff]
        %v5077 = vld [vmem:[%s5 + $0x1c8] sm:$0xff]
        %v5078 = vld [vmem:[%s5 + $0x1e8] sm:$0xff]
        %v5095 = vunpack.c.l.b16 %v5063
        %v5096 = vunpack.c.h.b16 %v5063
        %v5097 = vunpack.c.l.b16 %v5064
        %v5098 = vunpack.c.h.b16 %v5064
        %v5099 = vunpack.c.l.b16 %v5065
        %v5100 = vunpack.c.h.b16 %v5065
        %v5101 = vunpack.c.l.b16 %v5066
        %v5102 = vunpack.c.h.b16 %v5066
        %v5103 = vunpack.c.l.b16 %v5067
        %v5104 = vunpack.c.h.b16 %v5067
        %v5105 = vunpack.c.l.b16 %v5068
        %v5106 = vunpack.c.h.b16 %v5068
        %v5107 = vunpack.c.l.b16 %v5069
        %v5108 = vunpack.c.h.b16 %v5069
        %v5109 = vunpack.c.l.b16 %v5070
        %v5110 = vunpack.c.h.b16 %v5070
        %v5111 = vunpack.c.l.b16 %v5071
        %v5112 = vunpack.c.h.b16 %v5071
        %v5113 = vunpack.c.l.b16 %v5072
        %v5114 = vunpack.c.h.b16 %v5072
        %v5115 = vunpack.c.l.b16 %v5073
        %v5116 = vunpack.c.h.b16 %v5073
        %v5117 = vunpack.c.l.b16 %v5074
        %v5118 = vunpack.c.h.b16 %v5074
        %v5119 = vunpack.c.l.b16 %v5075
        %v5120 = vunpack.c.h.b16 %v5075
        %v5121 = vunpack.c.l.b16 %v5076
        %v5122 = vunpack.c.h.b16 %v5076
        %v5123 = vunpack.c.l.b16 %v5077
        %v5124 = vunpack.c.h.b16 %v5077
        %v5125 = vunpack.c.l.b16 %v5078
        %v5126 = vunpack.c.h.b16 %v5078
        %v5127 = vpack.c.b16 %v5097, %v5095
        %v5128 = vpack.c.b16 %v5098, %v5096
        %v5129 = vpack.c.b16 %v5101, %v5099
        %v5130 = vpack.c.b16 %v5102, %v5100
        %v5131 = vpack.c.b16 %v5105, %v5103
        %v5132 = vpack.c.b16 %v5106, %v5104
        %v5133 = vpack.c.b16 %v5109, %v5107
        %v5134 = vpack.c.b16 %v5110, %v5108
        %v5135 = vpack.c.b16 %v5113, %v5111
        %v5136 = vpack.c.b16 %v5114, %v5112
        %v5137 = vpack.c.b16 %v5117, %v5115
        %v5138 = vpack.c.b16 %v5118, %v5116
        %v5139 = vpack.c.b16 %v5121, %v5119
        %v5140 = vpack.c.b16 %v5122, %v5120
        %v5141 = vpack.c.b16 %v5125, %v5123
        %v5142 = vpack.c.b16 %v5126, %v5124
        %5159 = vmatprep.subr.bf16.mxu0 %v5142
        %5160 = vmatpush1.bf16.msra.mxu0 %v5141
        %5161 = vmatprep.subr.bf16.mxu0 %v5140
        %5162 = vmatpush1.bf16.msra.mxu0 %v5139
        %5163 = vmatprep.subr.bf16.mxu0 %v5138
        %5164 = vmatpush1.bf16.msra.mxu0 %v5137
        %5165 = vmatprep.subr.bf16.mxu0 %v5136
        %5166 = vmatpush1.bf16.msra.mxu0 %v5135
        %5167 = vmatprep.subr.bf16.mxu0 %v5134
        %5168 = vmatpush1.bf16.msra.mxu0 %v5133
        %5169 = vmatprep.subr.bf16.mxu0 %v5132
        %5170 = vmatpush1.bf16.msra.mxu0 %v5131
        %5171 = vmatprep.subr.bf16.mxu0 %v5130
        %5172 = vmatpush1.bf16.msra.mxu0 %v5129
        %5173 = vmatprep.subr.bf16.mxu0 %v5128
        %5174 = vmatpush1.bf16.msra.mxu0 %v5127
        %5175 = vmatprep.subr.bf16.mxu0 0
        %5176 = vmatpush2.bf16.msra.mxu0 0
        %5177 = vmatprep.subr.bf16.mxu0 0
        %5178 = vmatpush2.bf16.msra.mxu0 0
        %5179 = vmatprep.subr.bf16.mxu0 0
        %5180 = vmatpush2.bf16.msra.mxu0 0
        %5181 = vmatprep.subr.bf16.mxu0 0
        %5182 = vmatpush2.bf16.msra.mxu0 0
        %5183 = vmatprep.subr.bf16.mxu0 0
        %5184 = vmatpush2.bf16.msra.mxu0 0
        %5185 = vmatprep.subr.bf16.mxu0 0
        %5186 = vmatpush2.bf16.msra.mxu0 0
        %5187 = vmatprep.subr.bf16.mxu0 0
        %5188 = vmatpush2.bf16.msra.mxu0 0
        %5189 = vmatprep.subr.bf16.mxu0 0
        %5190 = vmatpush2.bf16.msra.mxu0 0
        %5191 = vmatprep.mubr.bf16.mxu0 0
        %5192 = vmatmul.mubr.bf16.gmra.mxu0 %v3970
        %v5193 = vpop.f32.mrf.mxu0
        %v5194 = vadd.f32 0.0, %v5193
        %v5195 = vpop.f32.mrf.mxu0
        %v5196 = vadd.f32 0.0, %v5195
        %v5197 = vpop.f32.mrf.mxu0
        %v5198 = vadd.f32 0.0, %v5197
        %v5199 = vpop.f32.mrf.mxu0
        %v5200 = vadd.f32 0.0, %v5199
        %5201 = vmatprep.mubr.bf16.mxu0 0
        %5202 = vmatmul.mubr.bf16.gmra.mxu0 %v3971
        %v5203 = vpop.f32.mrf.mxu0
        %v5204 = vadd.f32 0.0, %v5203
        %v5205 = vpop.f32.mrf.mxu0
        %v5206 = vadd.f32 0.0, %v5205
        %v5207 = vpop.f32.mrf.mxu0
        %v5208 = vadd.f32 0.0, %v5207
        %v5209 = vpop.f32.mrf.mxu0
        %v5210 = vadd.f32 0.0, %v5209
        %5211 = vmatprep.mubr.bf16.mxu0 0
        %5212 = vmatmul.mubr.bf16.gmra.mxu0 %v3972
        %v5213 = vpop.f32.mrf.mxu0
        %v5214 = vadd.f32 0.0, %v5213
        %v5215 = vpop.f32.mrf.mxu0
        %v5216 = vadd.f32 0.0, %v5215
        %v5217 = vpop.f32.mrf.mxu0
        %v5218 = vadd.f32 0.0, %v5217
        %v5219 = vpop.f32.mrf.mxu0
        %v5220 = vadd.f32 0.0, %v5219
        %5221 = vmatprep.mubr.bf16.mxu0 0
        %5222 = vmatmul.mubr.bf16.gmra.mxu0 %v3973
        %v5223 = vpop.f32.mrf.mxu0
        %v5224 = vadd.f32 0.0, %v5223
        %v5225 = vpop.f32.mrf.mxu0
        %v5226 = vadd.f32 0.0, %v5225
        %v5227 = vpop.f32.mrf.mxu0
        %v5228 = vadd.f32 0.0, %v5227
        %v5229 = vpop.f32.mrf.mxu0
        %v5230 = vadd.f32 0.0, %v5229
        %5231 = vmatprep.mubr.bf16.mxu0 0
        %5232 = vmatmul.mubr.bf16.gmra.mxu0 %v3974
        %v5233 = vpop.f32.mrf.mxu0
        %v5234 = vadd.f32 0.0, %v5233
        %v5235 = vpop.f32.mrf.mxu0
        %v5236 = vadd.f32 0.0, %v5235
        %v5237 = vpop.f32.mrf.mxu0
        %v5238 = vadd.f32 0.0, %v5237
        %v5239 = vpop.f32.mrf.mxu0
        %v5240 = vadd.f32 0.0, %v5239
        %5241 = vmatprep.mubr.bf16.mxu0 0
        %5242 = vmatmul.mubr.bf16.gmra.mxu0 %v3975
        %v5243 = vpop.f32.mrf.mxu0
        %v5244 = vadd.f32 0.0, %v5243
        %v5245 = vpop.f32.mrf.mxu0
        %v5246 = vadd.f32 0.0, %v5245
        %v5247 = vpop.f32.mrf.mxu0
        %v5248 = vadd.f32 0.0, %v5247
        %v5249 = vpop.f32.mrf.mxu0
        %v5250 = vadd.f32 0.0, %v5249
        %5251 = vmatprep.mubr.bf16.mxu0 0
        %5252 = vmatmul.mubr.bf16.gmra.mxu0 %v3976
        %v5253 = vpop.f32.mrf.mxu0
        %v5254 = vadd.f32 0.0, %v5253
        %v5255 = vpop.f32.mrf.mxu0
        %v5256 = vadd.f32 0.0, %v5255
        %v5257 = vpop.f32.mrf.mxu0
        %v5258 = vadd.f32 0.0, %v5257
        %v5259 = vpop.f32.mrf.mxu0
        %v5260 = vadd.f32 0.0, %v5259
        %5261 = vmatprep.mubr.bf16.mxu0 0
        %5262 = vmatmul.mubr.bf16.gmra.mxu0 %v3977
        %v5263 = vpop.f32.mrf.mxu0
        %v5264 = vadd.f32 0.0, %v5263
        %v5265 = vpop.f32.mrf.mxu0
        %v5266 = vadd.f32 0.0, %v5265
        %v5267 = vpop.f32.mrf.mxu0
        %v5268 = vadd.f32 0.0, %v5267
        %v5269 = vpop.f32.mrf.mxu0
        %v5270 = vadd.f32 0.0, %v5269
        %5271 = vmatprep.mubr.bf16.mxu0 0
        %5272 = vmatmul.mubr.bf16.gmra.mxu0 %v3978
        %v5273 = vpop.f32.mrf.mxu0
        %v5274 = vadd.f32 0.0, %v5273
        %v5275 = vpop.f32.mrf.mxu0
        %v5276 = vadd.f32 0.0, %v5275
        %v5277 = vpop.f32.mrf.mxu0
        %v5278 = vadd.f32 0.0, %v5277
        %v5279 = vpop.f32.mrf.mxu0
        %v5280 = vadd.f32 0.0, %v5279
        %5281 = vmatprep.mubr.bf16.mxu0 0
        %5282 = vmatmul.mubr.bf16.gmra.mxu0 %v3979
        %v5283 = vpop.f32.mrf.mxu0
        %v5284 = vadd.f32 0.0, %v5283
        %v5285 = vpop.f32.mrf.mxu0
        %v5286 = vadd.f32 0.0, %v5285
        %v5287 = vpop.f32.mrf.mxu0
        %v5288 = vadd.f32 0.0, %v5287
        %v5289 = vpop.f32.mrf.mxu0
        %v5290 = vadd.f32 0.0, %v5289
        %5291 = vmatprep.mubr.bf16.mxu0 0
        %5292 = vmatmul.mubr.bf16.gmra.mxu0 %v3980
        %v5293 = vpop.f32.mrf.mxu0
        %v5294 = vadd.f32 0.0, %v5293
        %v5295 = vpop.f32.mrf.mxu0
        %v5296 = vadd.f32 0.0, %v5295
        %v5297 = vpop.f32.mrf.mxu0
        %v5298 = vadd.f32 0.0, %v5297
        %v5299 = vpop.f32.mrf.mxu0
        %v5300 = vadd.f32 0.0, %v5299
        %5301 = vmatprep.mubr.bf16.mxu0 0
        %5302 = vmatmul.mubr.bf16.gmra.mxu0 %v3981
        %v5303 = vpop.f32.mrf.mxu0
        %v5304 = vadd.f32 0.0, %v5303
        %v5305 = vpop.f32.mrf.mxu0
        %v5306 = vadd.f32 0.0, %v5305
        %v5307 = vpop.f32.mrf.mxu0
        %v5308 = vadd.f32 0.0, %v5307
        %v5309 = vpop.f32.mrf.mxu0
        %v5310 = vadd.f32 0.0, %v5309
        %5311 = vmatprep.mubr.bf16.mxu0 0
        %5312 = vmatmul.mubr.bf16.gmra.mxu0 %v3982
        %v5313 = vpop.f32.mrf.mxu0
        %v5314 = vadd.f32 0.0, %v5313
        %v5315 = vpop.f32.mrf.mxu0
        %v5316 = vadd.f32 0.0, %v5315
        %v5317 = vpop.f32.mrf.mxu0
        %v5318 = vadd.f32 0.0, %v5317
        %v5319 = vpop.f32.mrf.mxu0
        %v5320 = vadd.f32 0.0, %v5319
        %5321 = vmatprep.mubr.bf16.mxu0 0
        %5322 = vmatmul.mubr.bf16.gmra.mxu0 %v3983
        %v5323 = vpop.f32.mrf.mxu0
        %v5324 = vadd.f32 0.0, %v5323
        %v5325 = vpop.f32.mrf.mxu0
        %v5326 = vadd.f32 0.0, %v5325
        %v5327 = vpop.f32.mrf.mxu0
        %v5328 = vadd.f32 0.0, %v5327
        %v5329 = vpop.f32.mrf.mxu0
        %v5330 = vadd.f32 0.0, %v5329
        %5331 = vmatprep.mubr.bf16.mxu0 0
        %5332 = vmatmul.mubr.bf16.gmra.mxu0 %v3984
        %v5333 = vpop.f32.mrf.mxu0
        %v5334 = vadd.f32 0.0, %v5333
        %v5335 = vpop.f32.mrf.mxu0
        %v5336 = vadd.f32 0.0, %v5335
        %v5337 = vpop.f32.mrf.mxu0
        %v5338 = vadd.f32 0.0, %v5337
        %v5339 = vpop.f32.mrf.mxu0
        %v5340 = vadd.f32 0.0, %v5339
        %5341 = vmatprep.mubr.bf16.mxu0 0
        %5342 = vmatmul.mubr.bf16.gmra.mxu0 %v3985
        %v5343 = vpop.f32.mrf.mxu0
        %v5344 = vadd.f32 0.0, %v5343
        %v5345 = vpop.f32.mrf.mxu0
        %v5346 = vadd.f32 0.0, %v5345
        %v5347 = vpop.f32.mrf.mxu0
        %v5348 = vadd.f32 0.0, %v5347
        %v5349 = vpop.f32.mrf.mxu0
        %v5350 = vadd.f32 0.0, %v5349
        %5351 = vmatprep.mubr.bf16.mxu0 0
        %5352 = vmatmul.mubr.bf16.gmra.mxu0 %v3986
        %v5353 = vpop.f32.mrf.mxu0
        %v5354 = vadd.f32 0.0, %v5353
        %v5355 = vpop.f32.mrf.mxu0
        %v5356 = vadd.f32 0.0, %v5355
        %v5357 = vpop.f32.mrf.mxu0
        %v5358 = vadd.f32 0.0, %v5357
        %v5359 = vpop.f32.mrf.mxu0
        %v5360 = vadd.f32 0.0, %v5359
        %5361 = vmatprep.mubr.bf16.mxu0 0
        %5362 = vmatmul.mubr.bf16.gmra.mxu0 %v3987
        %v5363 = vpop.f32.mrf.mxu0
        %v5364 = vadd.f32 0.0, %v5363
        %v5365 = vpop.f32.mrf.mxu0
        %v5366 = vadd.f32 0.0, %v5365
        %v5367 = vpop.f32.mrf.mxu0
        %v5368 = vadd.f32 0.0, %v5367
        %v5369 = vpop.f32.mrf.mxu0
        %v5370 = vadd.f32 0.0, %v5369
        %5371 = vmatprep.mubr.bf16.mxu0 0
        %5372 = vmatmul.mubr.bf16.gmra.mxu0 %v3988
        %v5373 = vpop.f32.mrf.mxu0
        %v5374 = vadd.f32 0.0, %v5373
        %v5375 = vpop.f32.mrf.mxu0
        %v5376 = vadd.f32 0.0, %v5375
        %v5377 = vpop.f32.mrf.mxu0
        %v5378 = vadd.f32 0.0, %v5377
        %v5379 = vpop.f32.mrf.mxu0
        %v5380 = vadd.f32 0.0, %v5379
        %5381 = vmatprep.mubr.bf16.mxu0 0
        %5382 = vmatmul.mubr.bf16.gmra.mxu0 %v3989
        %v5383 = vpop.f32.mrf.mxu0
        %v5384 = vadd.f32 0.0, %v5383
        %v5385 = vpop.f32.mrf.mxu0
        %v5386 = vadd.f32 0.0, %v5385
        %v5387 = vpop.f32.mrf.mxu0
        %v5388 = vadd.f32 0.0, %v5387
        %v5389 = vpop.f32.mrf.mxu0
        %v5390 = vadd.f32 0.0, %v5389
        %5391 = vmatprep.mubr.bf16.mxu0 0
        %5392 = vmatmul.mubr.bf16.gmra.mxu0 %v3990
        %v5393 = vpop.f32.mrf.mxu0
        %v5394 = vadd.f32 0.0, %v5393
        %v5395 = vpop.f32.mrf.mxu0
        %v5396 = vadd.f32 0.0, %v5395
        %v5397 = vpop.f32.mrf.mxu0
        %v5398 = vadd.f32 0.0, %v5397
        %v5399 = vpop.f32.mrf.mxu0
        %v5400 = vadd.f32 0.0, %v5399
        %5401 = vmatprep.mubr.bf16.mxu0 0
        %5402 = vmatmul.mubr.bf16.gmra.mxu0 %v3991
        %v5403 = vpop.f32.mrf.mxu0
        %v5404 = vadd.f32 0.0, %v5403
        %v5405 = vpop.f32.mrf.mxu0
        %v5406 = vadd.f32 0.0, %v5405
        %v5407 = vpop.f32.mrf.mxu0
        %v5408 = vadd.f32 0.0, %v5407
        %v5409 = vpop.f32.mrf.mxu0
        %v5410 = vadd.f32 0.0, %v5409
        %5411 = vmatprep.mubr.bf16.mxu0 0
        %5412 = vmatmul.mubr.bf16.gmra.mxu0 %v3992
        %v5413 = vpop.f32.mrf.mxu0
        %v5414 = vadd.f32 0.0, %v5413
        %v5415 = vpop.f32.mrf.mxu0
        %v5416 = vadd.f32 0.0, %v5415
        %v5417 = vpop.f32.mrf.mxu0
        %v5418 = vadd.f32 0.0, %v5417
        %v5419 = vpop.f32.mrf.mxu0
        %v5420 = vadd.f32 0.0, %v5419
        %5421 = vmatprep.mubr.bf16.mxu0 0
        %5422 = vmatmul.mubr.bf16.gmra.mxu0 %v3993
        %v5423 = vpop.f32.mrf.mxu0
        %v5424 = vadd.f32 0.0, %v5423
        %v5425 = vpop.f32.mrf.mxu0
        %v5426 = vadd.f32 0.0, %v5425
        %v5427 = vpop.f32.mrf.mxu0
        %v5428 = vadd.f32 0.0, %v5427
        %v5429 = vpop.f32.mrf.mxu0
        %v5430 = vadd.f32 0.0, %v5429
        %5431 = vmatprep.mubr.bf16.mxu0 0
        %5432 = vmatmul.mubr.bf16.gmra.mxu0 %v3994
        %v5433 = vpop.f32.mrf.mxu0
        %v5434 = vadd.f32 0.0, %v5433
        %v5435 = vpop.f32.mrf.mxu0
        %v5436 = vadd.f32 0.0, %v5435
        %v5437 = vpop.f32.mrf.mxu0
        %v5438 = vadd.f32 0.0, %v5437
        %v5439 = vpop.f32.mrf.mxu0
        %v5440 = vadd.f32 0.0, %v5439
        %5441 = vmatprep.mubr.bf16.mxu0 0
        %5442 = vmatmul.mubr.bf16.gmra.mxu0 %v3995
        %v5443 = vpop.f32.mrf.mxu0
        %v5444 = vadd.f32 0.0, %v5443
        %v5445 = vpop.f32.mrf.mxu0
        %v5446 = vadd.f32 0.0, %v5445
        %v5447 = vpop.f32.mrf.mxu0
        %v5448 = vadd.f32 0.0, %v5447
        %v5449 = vpop.f32.mrf.mxu0
        %v5450 = vadd.f32 0.0, %v5449
        %5451 = vmatprep.mubr.bf16.mxu0 0
        %5452 = vmatmul.mubr.bf16.gmra.mxu0 %v3996
        %v5453 = vpop.f32.mrf.mxu0
        %v5454 = vadd.f32 0.0, %v5453
        %v5455 = vpop.f32.mrf.mxu0
        %v5456 = vadd.f32 0.0, %v5455
        %v5457 = vpop.f32.mrf.mxu0
        %v5458 = vadd.f32 0.0, %v5457
        %v5459 = vpop.f32.mrf.mxu0
        %v5460 = vadd.f32 0.0, %v5459
        %5461 = vmatprep.mubr.bf16.mxu0 0
        %5462 = vmatmul.mubr.bf16.gmra.mxu0 %v3997
        %v5463 = vpop.f32.mrf.mxu0
        %v5464 = vadd.f32 0.0, %v5463
        %v5465 = vpop.f32.mrf.mxu0
        %v5466 = vadd.f32 0.0, %v5465
        %v5467 = vpop.f32.mrf.mxu0
        %v5468 = vadd.f32 0.0, %v5467
        %v5469 = vpop.f32.mrf.mxu0
        %v5470 = vadd.f32 0.0, %v5469
        %5471 = vmatprep.mubr.bf16.mxu0 0
        %5472 = vmatmul.mubr.bf16.gmra.mxu0 %v3998
        %v5473 = vpop.f32.mrf.mxu0
        %v5474 = vadd.f32 0.0, %v5473
        %v5475 = vpop.f32.mrf.mxu0
        %v5476 = vadd.f32 0.0, %v5475
        %v5477 = vpop.f32.mrf.mxu0
        %v5478 = vadd.f32 0.0, %v5477
        %v5479 = vpop.f32.mrf.mxu0
        %v5480 = vadd.f32 0.0, %v5479
        %5481 = vmatprep.mubr.bf16.mxu0 0
        %5482 = vmatmul.mubr.bf16.gmra.mxu0 %v3999
        %v5483 = vpop.f32.mrf.mxu0
        %v5484 = vadd.f32 0.0, %v5483
        %v5485 = vpop.f32.mrf.mxu0
        %v5486 = vadd.f32 0.0, %v5485
        %v5487 = vpop.f32.mrf.mxu0
        %v5488 = vadd.f32 0.0, %v5487
        %v5489 = vpop.f32.mrf.mxu0
        %v5490 = vadd.f32 0.0, %v5489
        %5491 = vmatprep.mubr.bf16.mxu0 0
        %5492 = vmatmul.mubr.bf16.gmra.mxu0 %v4000
        %v5493 = vpop.f32.mrf.mxu0
        %v5494 = vadd.f32 0.0, %v5493
        %v5495 = vpop.f32.mrf.mxu0
        %v5496 = vadd.f32 0.0, %v5495
        %v5497 = vpop.f32.mrf.mxu0
        %v5498 = vadd.f32 0.0, %v5497
        %v5499 = vpop.f32.mrf.mxu0
        %v5500 = vadd.f32 0.0, %v5499
        %5501 = vmatprep.mubr.bf16.mxu0 0
        %5502 = vmatmul.mubr.bf16.gmra.mxu0 %v4001
        %v5503 = vpop.f32.mrf.mxu0
        %v5504 = vadd.f32 0.0, %v5503
        %v5505 = vpop.f32.mrf.mxu0
        %v5506 = vadd.f32 0.0, %v5505
        %v5507 = vpop.f32.mrf.mxu0
        %v5508 = vadd.f32 0.0, %v5507
        %v5509 = vpop.f32.mrf.mxu0
        %v5510 = vadd.f32 0.0, %v5509
        %5511 = vmatprep.mubr.bf16.mxu0 0
        %5512 = vmatmul.mubr.bf16.gmra.mxu0 %v4002
        %v5513 = vpop.f32.mrf.mxu0
        %v5514 = vadd.f32 0.0, %v5513
        %v5515 = vpop.f32.mrf.mxu0
        %v5516 = vadd.f32 0.0, %v5515
        %v5517 = vpop.f32.mrf.mxu0
        %v5518 = vadd.f32 0.0, %v5517
        %v5519 = vpop.f32.mrf.mxu0
        %v5520 = vadd.f32 0.0, %v5519
        %5521 = vmatprep.mubr.bf16.mxu0 0
        %5522 = vmatmul.mubr.bf16.gmra.mxu0 %v4003
        %v5523 = vpop.f32.mrf.mxu0
        %v5524 = vadd.f32 0.0, %v5523
        %v5525 = vpop.f32.mrf.mxu0
        %v5526 = vadd.f32 0.0, %v5525
        %v5527 = vpop.f32.mrf.mxu0
        %v5528 = vadd.f32 0.0, %v5527
        %v5529 = vpop.f32.mrf.mxu0
        %v5530 = vadd.f32 0.0, %v5529
        %5531 = vmatprep.mubr.bf16.mxu0 0
        %5532 = vmatmul.mubr.bf16.gmra.mxu0 %v4004
        %v5533 = vpop.f32.mrf.mxu0
        %v5534 = vadd.f32 0.0, %v5533
        %v5535 = vpop.f32.mrf.mxu0
        %v5536 = vadd.f32 0.0, %v5535
        %v5537 = vpop.f32.mrf.mxu0
        %v5538 = vadd.f32 0.0, %v5537
        %v5539 = vpop.f32.mrf.mxu0
        %v5540 = vadd.f32 0.0, %v5539
        %5541 = vmatprep.mubr.bf16.mxu0 0
        %5542 = vmatmul.mubr.bf16.gmra.mxu0 %v4005
        %v5543 = vpop.f32.mrf.mxu0
        %v5544 = vadd.f32 0.0, %v5543
        %v5545 = vpop.f32.mrf.mxu0
        %v5546 = vadd.f32 0.0, %v5545
        %v5547 = vpop.f32.mrf.mxu0
        %v5548 = vadd.f32 0.0, %v5547
        %v5549 = vpop.f32.mrf.mxu0
        %v5550 = vadd.f32 0.0, %v5549
        %5551 = vmatprep.mubr.bf16.mxu0 0
        %5552 = vmatmul.mubr.bf16.gmra.mxu0 %v4006
        %v5553 = vpop.f32.mrf.mxu0
        %v5554 = vadd.f32 0.0, %v5553
        %v5555 = vpop.f32.mrf.mxu0
        %v5556 = vadd.f32 0.0, %v5555
        %v5557 = vpop.f32.mrf.mxu0
        %v5558 = vadd.f32 0.0, %v5557
        %v5559 = vpop.f32.mrf.mxu0
        %v5560 = vadd.f32 0.0, %v5559
        %5561 = vmatprep.mubr.bf16.mxu0 0
        %5562 = vmatmul.mubr.bf16.gmra.mxu0 %v4007
        %v5563 = vpop.f32.mrf.mxu0
        %v5564 = vadd.f32 0.0, %v5563
        %v5565 = vpop.f32.mrf.mxu0
        %v5566 = vadd.f32 0.0, %v5565
        %v5567 = vpop.f32.mrf.mxu0
        %v5568 = vadd.f32 0.0, %v5567
        %v5569 = vpop.f32.mrf.mxu0
        %v5570 = vadd.f32 0.0, %v5569
        %5571 = vmatprep.mubr.bf16.mxu0 0
        %5572 = vmatmul.mubr.bf16.gmra.mxu0 %v4008
        %v5573 = vpop.f32.mrf.mxu0
        %v5574 = vadd.f32 0.0, %v5573
        %v5575 = vpop.f32.mrf.mxu0
        %v5576 = vadd.f32 0.0, %v5575
        %v5577 = vpop.f32.mrf.mxu0
        %v5578 = vadd.f32 0.0, %v5577
        %v5579 = vpop.f32.mrf.mxu0
        %v5580 = vadd.f32 0.0, %v5579
        %5581 = vmatprep.mubr.bf16.mxu0 0
        %5582 = vmatmul.mubr.bf16.gmra.mxu0 %v4009
        %v5583 = vpop.f32.mrf.mxu0
        %v5584 = vadd.f32 0.0, %v5583
        %v5585 = vpop.f32.mrf.mxu0
        %v5586 = vadd.f32 0.0, %v5585
        %v5587 = vpop.f32.mrf.mxu0
        %v5588 = vadd.f32 0.0, %v5587
        %v5589 = vpop.f32.mrf.mxu0
        %v5590 = vadd.f32 0.0, %v5589
        %5591 = vmatprep.mubr.bf16.mxu0 0
        %5592 = vmatmul.mubr.bf16.gmra.mxu0 %v4010
        %v5593 = vpop.f32.mrf.mxu0
        %v5594 = vadd.f32 0.0, %v5593
        %v5595 = vpop.f32.mrf.mxu0
        %v5596 = vadd.f32 0.0, %v5595
        %v5597 = vpop.f32.mrf.mxu0
        %v5598 = vadd.f32 0.0, %v5597
        %v5599 = vpop.f32.mrf.mxu0
        %v5600 = vadd.f32 0.0, %v5599
        %5601 = vmatprep.mubr.bf16.mxu0 0
        %5602 = vmatmul.mubr.bf16.gmra.mxu0 %v4011
        %v5603 = vpop.f32.mrf.mxu0
        %v5604 = vadd.f32 0.0, %v5603
        %v5605 = vpop.f32.mrf.mxu0
        %v5606 = vadd.f32 0.0, %v5605
        %v5607 = vpop.f32.mrf.mxu0
        %v5608 = vadd.f32 0.0, %v5607
        %v5609 = vpop.f32.mrf.mxu0
        %v5610 = vadd.f32 0.0, %v5609
        %5611 = vmatprep.mubr.bf16.mxu0 0
        %5612 = vmatmul.mubr.bf16.gmra.mxu0 %v4012
        %v5613 = vpop.f32.mrf.mxu0
        %v5614 = vadd.f32 0.0, %v5613
        %v5615 = vpop.f32.mrf.mxu0
        %v5616 = vadd.f32 0.0, %v5615
        %v5617 = vpop.f32.mrf.mxu0
        %v5618 = vadd.f32 0.0, %v5617
        %v5619 = vpop.f32.mrf.mxu0
        %v5620 = vadd.f32 0.0, %v5619
        %5621 = vmatprep.mubr.bf16.mxu0 0
        %5622 = vmatmul.mubr.bf16.gmra.mxu0 %v4013
        %v5623 = vpop.f32.mrf.mxu0
        %v5624 = vadd.f32 0.0, %v5623
        %v5625 = vpop.f32.mrf.mxu0
        %v5626 = vadd.f32 0.0, %v5625
        %v5627 = vpop.f32.mrf.mxu0
        %v5628 = vadd.f32 0.0, %v5627
        %v5629 = vpop.f32.mrf.mxu0
        %v5630 = vadd.f32 0.0, %v5629
        %5631 = vmatprep.mubr.bf16.mxu0 0
        %5632 = vmatmul.mubr.bf16.gmra.mxu0 %v4014
        %v5633 = vpop.f32.mrf.mxu0
        %v5634 = vadd.f32 0.0, %v5633
        %v5635 = vpop.f32.mrf.mxu0
        %v5636 = vadd.f32 0.0, %v5635
        %v5637 = vpop.f32.mrf.mxu0
        %v5638 = vadd.f32 0.0, %v5637
        %v5639 = vpop.f32.mrf.mxu0
        %v5640 = vadd.f32 0.0, %v5639
        %5641 = vmatprep.mubr.bf16.mxu0 0
        %5642 = vmatmul.mubr.bf16.gmra.mxu0 %v4015
        %v5643 = vpop.f32.mrf.mxu0
        %v5644 = vadd.f32 0.0, %v5643
        %v5645 = vpop.f32.mrf.mxu0
        %v5646 = vadd.f32 0.0, %v5645
        %v5647 = vpop.f32.mrf.mxu0
        %v5648 = vadd.f32 0.0, %v5647
        %v5649 = vpop.f32.mrf.mxu0
        %v5650 = vadd.f32 0.0, %v5649
        %5651 = vmatprep.mubr.bf16.mxu0 0
        %5652 = vmatmul.mubr.bf16.gmra.mxu0 %v4016
        %v5653 = vpop.f32.mrf.mxu0
        %v5654 = vadd.f32 0.0, %v5653
        %v5655 = vpop.f32.mrf.mxu0
        %v5656 = vadd.f32 0.0, %v5655
        %v5657 = vpop.f32.mrf.mxu0
        %v5658 = vadd.f32 0.0, %v5657
        %v5659 = vpop.f32.mrf.mxu0
        %v5660 = vadd.f32 0.0, %v5659
        %5661 = vmatprep.mubr.bf16.mxu0 0
        %5662 = vmatmul.mubr.bf16.gmra.mxu0 %v4017
        %v5663 = vpop.f32.mrf.mxu0
        %v5664 = vadd.f32 0.0, %v5663
        %v5665 = vpop.f32.mrf.mxu0
        %v5666 = vadd.f32 0.0, %v5665
        %v5667 = vpop.f32.mrf.mxu0
        %v5668 = vadd.f32 0.0, %v5667
        %v5669 = vpop.f32.mrf.mxu0
        %v5670 = vadd.f32 0.0, %v5669
        %5671 = vmatprep.mubr.bf16.mxu0 0
        %5672 = vmatmul.mubr.bf16.gmra.mxu0 %v4018
        %v5673 = vpop.f32.mrf.mxu0
        %v5674 = vadd.f32 0.0, %v5673
        %v5675 = vpop.f32.mrf.mxu0
        %v5676 = vadd.f32 0.0, %v5675
        %v5677 = vpop.f32.mrf.mxu0
        %v5678 = vadd.f32 0.0, %v5677
        %v5679 = vpop.f32.mrf.mxu0
        %v5680 = vadd.f32 0.0, %v5679
        %5681 = vmatprep.mubr.bf16.mxu0 0
        %5682 = vmatmul.mubr.bf16.gmra.mxu0 %v4019
        %v5683 = vpop.f32.mrf.mxu0
        %v5684 = vadd.f32 0.0, %v5683
        %v5685 = vpop.f32.mrf.mxu0
        %v5686 = vadd.f32 0.0, %v5685
        %v5687 = vpop.f32.mrf.mxu0
        %v5688 = vadd.f32 0.0, %v5687
        %v5689 = vpop.f32.mrf.mxu0
        %v5690 = vadd.f32 0.0, %v5689
        %5691 = vmatprep.mubr.bf16.mxu0 0
        %5692 = vmatmul.mubr.bf16.gmra.mxu0 %v4020
        %v5693 = vpop.f32.mrf.mxu0
        %v5694 = vadd.f32 0.0, %v5693
        %v5695 = vpop.f32.mrf.mxu0
        %v5696 = vadd.f32 0.0, %v5695
        %v5697 = vpop.f32.mrf.mxu0
        %v5698 = vadd.f32 0.0, %v5697
        %v5699 = vpop.f32.mrf.mxu0
        %v5700 = vadd.f32 0.0, %v5699
        %5701 = vmatprep.mubr.bf16.mxu0 0
        %5702 = vmatmul.mubr.bf16.gmra.mxu0 %v4021
        %v5703 = vpop.f32.mrf.mxu0
        %v5704 = vadd.f32 0.0, %v5703
        %v5705 = vpop.f32.mrf.mxu0
        %v5706 = vadd.f32 0.0, %v5705
        %v5707 = vpop.f32.mrf.mxu0
        %v5708 = vadd.f32 0.0, %v5707
        %v5709 = vpop.f32.mrf.mxu0
        %v5710 = vadd.f32 0.0, %v5709
        %5711 = vmatprep.mubr.bf16.mxu0 0
        %5712 = vmatmul.mubr.bf16.gmra.mxu0 %v4022
        %v5713 = vpop.f32.mrf.mxu0
        %v5714 = vadd.f32 0.0, %v5713
        %v5715 = vpop.f32.mrf.mxu0
        %v5716 = vadd.f32 0.0, %v5715
        %v5717 = vpop.f32.mrf.mxu0
        %v5718 = vadd.f32 0.0, %v5717
        %v5719 = vpop.f32.mrf.mxu0
        %v5720 = vadd.f32 0.0, %v5719
        %5721 = vmatprep.mubr.bf16.mxu0 0
        %5722 = vmatmul.mubr.bf16.gmra.mxu0 %v4023
        %v5723 = vpop.f32.mrf.mxu0
        %v5724 = vadd.f32 0.0, %v5723
        %v5725 = vpop.f32.mrf.mxu0
        %v5726 = vadd.f32 0.0, %v5725
        %v5727 = vpop.f32.mrf.mxu0
        %v5728 = vadd.f32 0.0, %v5727
        %v5729 = vpop.f32.mrf.mxu0
        %v5730 = vadd.f32 0.0, %v5729
        %5731 = vmatprep.mubr.bf16.mxu0 0
        %5732 = vmatmul.mubr.bf16.gmra.mxu0 %v4024
        %v5733 = vpop.f32.mrf.mxu0
        %v5734 = vadd.f32 0.0, %v5733
        %v5735 = vpop.f32.mrf.mxu0
        %v5736 = vadd.f32 0.0, %v5735
        %v5737 = vpop.f32.mrf.mxu0
        %v5738 = vadd.f32 0.0, %v5737
        %v5739 = vpop.f32.mrf.mxu0
        %v5740 = vadd.f32 0.0, %v5739
        %5741 = vmatprep.mubr.bf16.mxu0 0
        %5742 = vmatmul.mubr.bf16.gmra.mxu0 %v4025
        %v5743 = vpop.f32.mrf.mxu0
        %v5744 = vadd.f32 0.0, %v5743
        %v5745 = vpop.f32.mrf.mxu0
        %v5746 = vadd.f32 0.0, %v5745
        %v5747 = vpop.f32.mrf.mxu0
        %v5748 = vadd.f32 0.0, %v5747
        %v5749 = vpop.f32.mrf.mxu0
        %v5750 = vadd.f32 0.0, %v5749
        %5751 = vmatprep.mubr.bf16.mxu0 0
        %5752 = vmatmul.mubr.bf16.gmra.mxu0 %v4026
        %v5753 = vpop.f32.mrf.mxu0
        %v5754 = vadd.f32 0.0, %v5753
        %v5755 = vpop.f32.mrf.mxu0
        %v5756 = vadd.f32 0.0, %v5755
        %v5757 = vpop.f32.mrf.mxu0
        %v5758 = vadd.f32 0.0, %v5757
        %v5759 = vpop.f32.mrf.mxu0
        %v5760 = vadd.f32 0.0, %v5759
        %5761 = vmatprep.mubr.bf16.mxu0 0
        %5762 = vmatmul.mubr.bf16.gmra.mxu0 %v4027
        %v5763 = vpop.f32.mrf.mxu0
        %v5764 = vadd.f32 0.0, %v5763
        %v5765 = vpop.f32.mrf.mxu0
        %v5766 = vadd.f32 0.0, %v5765
        %v5767 = vpop.f32.mrf.mxu0
        %v5768 = vadd.f32 0.0, %v5767
        %v5769 = vpop.f32.mrf.mxu0
        %v5770 = vadd.f32 0.0, %v5769
        %5771 = vmatprep.mubr.bf16.mxu0 0
        %5772 = vmatmul.mubr.bf16.gmra.mxu0 %v4028
        %v5773 = vpop.f32.mrf.mxu0
        %v5774 = vadd.f32 0.0, %v5773
        %v5775 = vpop.f32.mrf.mxu0
        %v5776 = vadd.f32 0.0, %v5775
        %v5777 = vpop.f32.mrf.mxu0
        %v5778 = vadd.f32 0.0, %v5777
        %v5779 = vpop.f32.mrf.mxu0
        %v5780 = vadd.f32 0.0, %v5779
        %5781 = vmatprep.mubr.bf16.mxu0 0
        %5782 = vmatmul.mubr.bf16.gmra.mxu0 %v4029
        %v5783 = vpop.f32.mrf.mxu0
        %v5784 = vadd.f32 0.0, %v5783
        %v5785 = vpop.f32.mrf.mxu0
        %v5786 = vadd.f32 0.0, %v5785
        %v5787 = vpop.f32.mrf.mxu0
        %v5788 = vadd.f32 0.0, %v5787
        %v5789 = vpop.f32.mrf.mxu0
        %v5790 = vadd.f32 0.0, %v5789
        %5791 = vmatprep.mubr.bf16.mxu0 0
        %5792 = vmatmul.mubr.bf16.gmra.mxu0 %v4030
        %v5793 = vpop.f32.mrf.mxu0
        %v5794 = vadd.f32 0.0, %v5793
        %v5795 = vpop.f32.mrf.mxu0
        %v5796 = vadd.f32 0.0, %v5795
        %v5797 = vpop.f32.mrf.mxu0
        %v5798 = vadd.f32 0.0, %v5797
        %v5799 = vpop.f32.mrf.mxu0
        %v5800 = vadd.f32 0.0, %v5799
        %5801 = vmatprep.mubr.bf16.mxu0 0
        %5802 = vmatmul.mubr.bf16.gmra.mxu0 %v4031
        %v5803 = vpop.f32.mrf.mxu0
        %v5804 = vadd.f32 0.0, %v5803
        %v5805 = vpop.f32.mrf.mxu0
        %v5806 = vadd.f32 0.0, %v5805
        %v5807 = vpop.f32.mrf.mxu0
        %v5808 = vadd.f32 0.0, %v5807
        %v5809 = vpop.f32.mrf.mxu0
        %v5810 = vadd.f32 0.0, %v5809
        %5811 = vmatprep.mubr.bf16.mxu0 0
        %5812 = vmatmul.mubr.bf16.gmra.mxu0 %v4032
        %v5813 = vpop.f32.mrf.mxu0
        %v5814 = vadd.f32 0.0, %v5813
        %v5815 = vpop.f32.mrf.mxu0
        %v5816 = vadd.f32 0.0, %v5815
        %v5817 = vpop.f32.mrf.mxu0
        %v5818 = vadd.f32 0.0, %v5817
        %v5819 = vpop.f32.mrf.mxu0
        %v5820 = vadd.f32 0.0, %v5819
        %5821 = vmatprep.mubr.bf16.mxu0 0
        %5822 = vmatmul.mubr.bf16.gmra.mxu0 %v4033
        %v5823 = vpop.f32.mrf.mxu0
        %v5824 = vadd.f32 0.0, %v5823
        %v5825 = vpop.f32.mrf.mxu0
        %v5826 = vadd.f32 0.0, %v5825
        %v5827 = vpop.f32.mrf.mxu0
        %v5828 = vadd.f32 0.0, %v5827
        %v5829 = vpop.f32.mrf.mxu0
        %v5830 = vadd.f32 0.0, %v5829
        %5831 = vdwg.mxu0
        %v5832 = vmax.f32 %v5194, %v5204
        %v5833 = vmax.f32 %v5198, %v5208
        %v5834 = vmax.f32 %v5832, %v5214
        %v5835 = vmax.f32 %v5833, %v5218
        %v5836 = vmax.f32 %v5834, %v5224
        %v5837 = vmax.f32 %v5835, %v5228
        %v5838 = vmax.f32 %v5836, %v5234
        %v5839 = vmax.f32 %v5837, %v5238
        %v5840 = vmax.f32 %v5838, %v5244
        %v5841 = vmax.f32 %v5839, %v5248
        %v5842 = vmax.f32 %v5840, %v5254
        %v5843 = vmax.f32 %v5841, %v5258
        %v5844 = vmax.f32 %v5842, %v5264
        %v5845 = vmax.f32 %v5843, %v5268
        %v5846 = vmax.f32 %v5844, %v5274
        %v5847 = vmax.f32 %v5845, %v5278
        %v5848 = vmax.f32 %v5846, %v5284
        %v5849 = vmax.f32 %v5847, %v5288
        %v5850 = vmax.f32 %v5848, %v5294
        %v5851 = vmax.f32 %v5849, %v5298
        %v5852 = vmax.f32 %v5850, %v5304
        %v5853 = vmax.f32 %v5851, %v5308
        %v5854 = vmax.f32 %v5852, %v5314
        %v5855 = vmax.f32 %v5853, %v5318
        %v5856 = vmax.f32 %v5854, %v5324
        %v5857 = vmax.f32 %v5855, %v5328
        %v5858 = vmax.f32 %v5856, %v5334
        %v5859 = vmax.f32 %v5857, %v5338
        %v5860 = vmax.f32 %v5858, %v5344
        %v5861 = vmax.f32 %v5859, %v5348
        %v5862 = vmax.f32 %v5860, %v5354
        %v5863 = vmax.f32 %v5861, %v5358
        %v5864 = vmax.f32 %v5862, %v5364
        %v5865 = vmax.f32 %v5863, %v5368
        %v5866 = vmax.f32 %v5864, %v5374
        %v5867 = vmax.f32 %v5865, %v5378
        %v5868 = vmax.f32 %v5866, %v5384
        %v5869 = vmax.f32 %v5867, %v5388
        %v5870 = vmax.f32 %v5868, %v5394
        %v5871 = vmax.f32 %v5869, %v5398
        %v5872 = vmax.f32 %v5870, %v5404
        %v5873 = vmax.f32 %v5871, %v5408
        %v5874 = vmax.f32 %v5872, %v5414
        %v5875 = vmax.f32 %v5873, %v5418
        %v5876 = vmax.f32 %v5874, %v5424
        %v5877 = vmax.f32 %v5875, %v5428
        %v5878 = vmax.f32 %v5876, %v5434
        %v5879 = vmax.f32 %v5877, %v5438
        %v5880 = vmax.f32 %v5878, %v5444
        %v5881 = vmax.f32 %v5879, %v5448
        %v5882 = vmax.f32 %v5880, %v5454
        %v5883 = vmax.f32 %v5881, %v5458
        %v5884 = vmax.f32 %v5882, %v5464
        %v5885 = vmax.f32 %v5883, %v5468
        %v5886 = vmax.f32 %v5884, %v5474
        %v5887 = vmax.f32 %v5885, %v5478
        %v5888 = vmax.f32 %v5886, %v5484
        %v5889 = vmax.f32 %v5887, %v5488
        %v5890 = vmax.f32 %v5888, %v5494
        %v5891 = vmax.f32 %v5889, %v5498
        %v5892 = vmax.f32 %v5890, %v5504
        %v5893 = vmax.f32 %v5891, %v5508
        %v5894 = vmax.f32 %v5892, %v5514
        %v5895 = vmax.f32 %v5893, %v5518
        %v5896 = vmax.f32 %v5894, %v5524
        %v5897 = vmax.f32 %v5895, %v5528
        %v5898 = vmax.f32 %v5896, %v5534
        %v5899 = vmax.f32 %v5897, %v5538
        %v5900 = vmax.f32 %v5898, %v5544
        %v5901 = vmax.f32 %v5899, %v5548
        %v5902 = vmax.f32 %v5900, %v5554
        %v5903 = vmax.f32 %v5901, %v5558
        %v5904 = vmax.f32 %v5902, %v5564
        %v5905 = vmax.f32 %v5903, %v5568
        %v5906 = vmax.f32 %v5904, %v5574
        %v5907 = vmax.f32 %v5905, %v5578
        %v5908 = vmax.f32 %v5906, %v5584
        %v5909 = vmax.f32 %v5907, %v5588
        %v5910 = vmax.f32 %v5908, %v5594
        %v5911 = vmax.f32 %v5909, %v5598
        %v5912 = vmax.f32 %v5910, %v5604
        %v5913 = vmax.f32 %v5911, %v5608
        %v5914 = vmax.f32 %v5912, %v5614
        %v5915 = vmax.f32 %v5913, %v5618
        %v5916 = vmax.f32 %v5914, %v5624
        %v5917 = vmax.f32 %v5915, %v5628
        %v5918 = vmax.f32 %v5916, %v5634
        %v5919 = vmax.f32 %v5917, %v5638
        %v5920 = vmax.f32 %v5918, %v5644
        %v5921 = vmax.f32 %v5919, %v5648
        %v5922 = vmax.f32 %v5920, %v5654
        %v5923 = vmax.f32 %v5921, %v5658
        %v5924 = vmax.f32 %v5922, %v5664
        %v5925 = vmax.f32 %v5923, %v5668
        %v5926 = vmax.f32 %v5924, %v5674
        %v5927 = vmax.f32 %v5925, %v5678
        %v5928 = vmax.f32 %v5926, %v5684
        %v5929 = vmax.f32 %v5927, %v5688
        %v5930 = vmax.f32 %v5928, %v5694
        %v5931 = vmax.f32 %v5929, %v5698
        %v5932 = vmax.f32 %v5930, %v5704
        %v5933 = vmax.f32 %v5931, %v5708
        %v5934 = vmax.f32 %v5932, %v5714
        %v5935 = vmax.f32 %v5933, %v5718
        %v5936 = vmax.f32 %v5934, %v5724
        %v5937 = vmax.f32 %v5935, %v5728
        %v5938 = vmax.f32 %v5936, %v5734
        %v5939 = vmax.f32 %v5937, %v5738
        %v5940 = vmax.f32 %v5938, %v5744
        %v5941 = vmax.f32 %v5939, %v5748
        %v5942 = vmax.f32 %v5940, %v5754
        %v5943 = vmax.f32 %v5941, %v5758
        %v5944 = vmax.f32 %v5942, %v5764
        %v5945 = vmax.f32 %v5943, %v5768
        %v5946 = vmax.f32 %v5944, %v5774
        %v5947 = vmax.f32 %v5945, %v5778
        %v5948 = vmax.f32 %v5946, %v5784
        %v5949 = vmax.f32 %v5947, %v5788
        %v5950 = vmax.f32 %v5948, %v5794
        %v5951 = vmax.f32 %v5949, %v5798
        %v5952 = vmax.f32 %v5950, %v5804
        %v5953 = vmax.f32 %v5951, %v5808
        %v5954 = vmax.f32 %v5952, %v5814
        %v5955 = vmax.f32 %v5953, %v5818
        %v5956 = vmax.f32 %v5954, %v5824
        %v5957 = vmax.f32 %v5955, %v5828
        %v5958 = vmax.f32 %v5956, %v5957
        %v5959 = vmax.f32 %v5196, %v5206
        %v5960 = vmax.f32 %v5200, %v5210
        %v5961 = vmax.f32 %v5959, %v5216
        %v5962 = vmax.f32 %v5960, %v5220
        %v5963 = vmax.f32 %v5961, %v5226
        %v5964 = vmax.f32 %v5962, %v5230
        %v5965 = vmax.f32 %v5963, %v5236
        %v5966 = vmax.f32 %v5964, %v5240
        %v5967 = vmax.f32 %v5965, %v5246
        %v5968 = vmax.f32 %v5966, %v5250
        %v5969 = vmax.f32 %v5967, %v5256
        %v5970 = vmax.f32 %v5968, %v5260
        %v5971 = vmax.f32 %v5969, %v5266
        %v5972 = vmax.f32 %v5970, %v5270
        %v5973 = vmax.f32 %v5971, %v5276
        %v5974 = vmax.f32 %v5972, %v5280
        %v5975 = vmax.f32 %v5973, %v5286
        %v5976 = vmax.f32 %v5974, %v5290
        %v5977 = vmax.f32 %v5975, %v5296
        %v5978 = vmax.f32 %v5976, %v5300
        %v5979 = vmax.f32 %v5977, %v5306
        %v5980 = vmax.f32 %v5978, %v5310
        %v5981 = vmax.f32 %v5979, %v5316
        %v5982 = vmax.f32 %v5980, %v5320
        %v5983 = vmax.f32 %v5981, %v5326
        %v5984 = vmax.f32 %v5982, %v5330
        %v5985 = vmax.f32 %v5983, %v5336
        %v5986 = vmax.f32 %v5984, %v5340
        %v5987 = vmax.f32 %v5985, %v5346
        %v5988 = vmax.f32 %v5986, %v5350
        %v5989 = vmax.f32 %v5987, %v5356
        %v5990 = vmax.f32 %v5988, %v5360
        %v5991 = vmax.f32 %v5989, %v5366
        %v5992 = vmax.f32 %v5990, %v5370
        %v5993 = vmax.f32 %v5991, %v5376
        %v5994 = vmax.f32 %v5992, %v5380
        %v5995 = vmax.f32 %v5993, %v5386
        %v5996 = vmax.f32 %v5994, %v5390
        %v5997 = vmax.f32 %v5995, %v5396
        %v5998 = vmax.f32 %v5996, %v5400
        %v5999 = vmax.f32 %v5997, %v5406
        %v6000 = vmax.f32 %v5998, %v5410
        %v6001 = vmax.f32 %v5999, %v5416
        %v6002 = vmax.f32 %v6000, %v5420
        %v6003 = vmax.f32 %v6001, %v5426
        %v6004 = vmax.f32 %v6002, %v5430
        %v6005 = vmax.f32 %v6003, %v5436
        %v6006 = vmax.f32 %v6004, %v5440
        %v6007 = vmax.f32 %v6005, %v5446
        %v6008 = vmax.f32 %v6006, %v5450
        %v6009 = vmax.f32 %v6007, %v5456
        %v6010 = vmax.f32 %v6008, %v5460
        %v6011 = vmax.f32 %v6009, %v5466
        %v6012 = vmax.f32 %v6010, %v5470
        %v6013 = vmax.f32 %v6011, %v5476
        %v6014 = vmax.f32 %v6012, %v5480
        %v6015 = vmax.f32 %v6013, %v5486
        %v6016 = vmax.f32 %v6014, %v5490
        %v6017 = vmax.f32 %v6015, %v5496
        %v6018 = vmax.f32 %v6016, %v5500
        %v6019 = vmax.f32 %v6017, %v5506
        %v6020 = vmax.f32 %v6018, %v5510
        %v6021 = vmax.f32 %v6019, %v5516
        %v6022 = vmax.f32 %v6020, %v5520
        %v6023 = vmax.f32 %v6021, %v5526
        %v6024 = vmax.f32 %v6022, %v5530
        %v6025 = vmax.f32 %v6023, %v5536
        %v6026 = vmax.f32 %v6024, %v5540
        %v6027 = vmax.f32 %v6025, %v5546
        %v6028 = vmax.f32 %v6026, %v5550
        %v6029 = vmax.f32 %v6027, %v5556
        %v6030 = vmax.f32 %v6028, %v5560
        %v6031 = vmax.f32 %v6029, %v5566
        %v6032 = vmax.f32 %v6030, %v5570
        %v6033 = vmax.f32 %v6031, %v5576
        %v6034 = vmax.f32 %v6032, %v5580
        %v6035 = vmax.f32 %v6033, %v5586
        %v6036 = vmax.f32 %v6034, %v5590
        %v6037 = vmax.f32 %v6035, %v5596
        %v6038 = vmax.f32 %v6036, %v5600
        %v6039 = vmax.f32 %v6037, %v5606
        %v6040 = vmax.f32 %v6038, %v5610
        %v6041 = vmax.f32 %v6039, %v5616
        %v6042 = vmax.f32 %v6040, %v5620
        %v6043 = vmax.f32 %v6041, %v5626
        %v6044 = vmax.f32 %v6042, %v5630
        %v6045 = vmax.f32 %v6043, %v5636
        %v6046 = vmax.f32 %v6044, %v5640
        %v6047 = vmax.f32 %v6045, %v5646
        %v6048 = vmax.f32 %v6046, %v5650
        %v6049 = vmax.f32 %v6047, %v5656
        %v6050 = vmax.f32 %v6048, %v5660
        %v6051 = vmax.f32 %v6049, %v5666
        %v6052 = vmax.f32 %v6050, %v5670
        %v6053 = vmax.f32 %v6051, %v5676
        %v6054 = vmax.f32 %v6052, %v5680
        %v6055 = vmax.f32 %v6053, %v5686
        %v6056 = vmax.f32 %v6054, %v5690
        %v6057 = vmax.f32 %v6055, %v5696
        %v6058 = vmax.f32 %v6056, %v5700
        %v6059 = vmax.f32 %v6057, %v5706
        %v6060 = vmax.f32 %v6058, %v5710
        %v6061 = vmax.f32 %v6059, %v5716
        %v6062 = vmax.f32 %v6060, %v5720
        %v6063 = vmax.f32 %v6061, %v5726
        %v6064 = vmax.f32 %v6062, %v5730
        %v6065 = vmax.f32 %v6063, %v5736
        %v6066 = vmax.f32 %v6064, %v5740
        %v6067 = vmax.f32 %v6065, %v5746
        %v6068 = vmax.f32 %v6066, %v5750
        %v6069 = vmax.f32 %v6067, %v5756
        %v6070 = vmax.f32 %v6068, %v5760
        %v6071 = vmax.f32 %v6069, %v5766
        %v6072 = vmax.f32 %v6070, %v5770
        %v6073 = vmax.f32 %v6071, %v5776
        %v6074 = vmax.f32 %v6072, %v5780
        %v6075 = vmax.f32 %v6073, %v5786
        %v6076 = vmax.f32 %v6074, %v5790
        %v6077 = vmax.f32 %v6075, %v5796
        %v6078 = vmax.f32 %v6076, %v5800
        %v6079 = vmax.f32 %v6077, %v5806
        %v6080 = vmax.f32 %v6078, %v5810
        %v6081 = vmax.f32 %v6079, %v5816
        %v6082 = vmax.f32 %v6080, %v5820
        %v6083 = vmax.f32 %v6081, %v5826
        %v6084 = vmax.f32 %v6082, %v5830
        %v6085 = vmax.f32 %v6083, %v6084
        %v6086 = vld [vmem:[#allocation2 + $0x10] sm:$0xff]
        %v6087 = vld [vmem:[#allocation2 + $0x18] sm:$0xff]
        %v6088 = vmax.f32 %v6086, %v5958
        %v6089 = vmax.f32 %v6087, %v6085
        %6090 = vst [vmem:[#allocation2 + $0x10] sm:$0xff] %v6088
        %6091 = vst [vmem:[#allocation2 + $0x18] sm:$0xff] %v6089
        %v6092 = vld [vmem:[%s5 + $0x10] sm:$0xff]
        %v6093 = vld [vmem:[%s5 + $0x30] sm:$0xff]
        %v6094 = vld [vmem:[%s5 + $0x50] sm:$0xff]
        %v6095 = vld [vmem:[%s5 + $0x70] sm:$0xff]
        %v6096 = vld [vmem:[%s5 + $0x90] sm:$0xff]
        %v6097 = vld [vmem:[%s5 + $0xb0] sm:$0xff]
        %v6098 = vld [vmem:[%s5 + $0xd0] sm:$0xff]
        %v6099 = vld [vmem:[%s5 + $0xf0] sm:$0xff]
        %v6100 = vld [vmem:[%s5 + $0x110] sm:$0xff]
        %v6101 = vld [vmem:[%s5 + $0x130] sm:$0xff]
        %v6102 = vld [vmem:[%s5 + $0x150] sm:$0xff]
        %v6103 = vld [vmem:[%s5 + $0x170] sm:$0xff]
        %v6104 = vld [vmem:[%s5 + $0x190] sm:$0xff]
        %v6105 = vld [vmem:[%s5 + $0x1b0] sm:$0xff]
        %v6106 = vld [vmem:[%s5 + $0x1d0] sm:$0xff]
        %v6107 = vld [vmem:[%s5 + $0x1f0] sm:$0xff]
        %v6124 = vunpack.c.l.b16 %v6092
        %v6125 = vunpack.c.h.b16 %v6092
        %v6126 = vunpack.c.l.b16 %v6093
        %v6127 = vunpack.c.h.b16 %v6093
        %v6128 = vunpack.c.l.b16 %v6094
        %v6129 = vunpack.c.h.b16 %v6094
        %v6130 = vunpack.c.l.b16 %v6095
        %v6131 = vunpack.c.h.b16 %v6095
        %v6132 = vunpack.c.l.b16 %v6096
        %v6133 = vunpack.c.h.b16 %v6096
        %v6134 = vunpack.c.l.b16 %v6097
        %v6135 = vunpack.c.h.b16 %v6097
        %v6136 = vunpack.c.l.b16 %v6098
        %v6137 = vunpack.c.h.b16 %v6098
        %v6138 = vunpack.c.l.b16 %v6099
        %v6139 = vunpack.c.h.b16 %v6099
        %v6140 = vunpack.c.l.b16 %v6100
        %v6141 = vunpack.c.h.b16 %v6100
        %v6142 = vunpack.c.l.b16 %v6101
        %v6143 = vunpack.c.h.b16 %v6101
        %v6144 = vunpack.c.l.b16 %v6102
        %v6145 = vunpack.c.h.b16 %v6102
        %v6146 = vunpack.c.l.b16 %v6103
        %v6147 = vunpack.c.h.b16 %v6103
        %v6148 = vunpack.c.l.b16 %v6104
        %v6149 = vunpack.c.h.b16 %v6104
        %v6150 = vunpack.c.l.b16 %v6105
        %v6151 = vunpack.c.h.b16 %v6105
        %v6152 = vunpack.c.l.b16 %v6106
        %v6153 = vunpack.c.h.b16 %v6106
        %v6154 = vunpack.c.l.b16 %v6107
        %v6155 = vunpack.c.h.b16 %v6107
        %v6156 = vpack.c.b16 %v6126, %v6124
        %v6157 = vpack.c.b16 %v6127, %v6125
        %v6158 = vpack.c.b16 %v6130, %v6128
        %v6159 = vpack.c.b16 %v6131, %v6129
        %v6160 = vpack.c.b16 %v6134, %v6132
        %v6161 = vpack.c.b16 %v6135, %v6133
        %v6162 = vpack.c.b16 %v6138, %v6136
        %v6163 = vpack.c.b16 %v6139, %v6137
        %v6164 = vpack.c.b16 %v6142, %v6140
        %v6165 = vpack.c.b16 %v6143, %v6141
        %v6166 = vpack.c.b16 %v6146, %v6144
        %v6167 = vpack.c.b16 %v6147, %v6145
        %v6168 = vpack.c.b16 %v6150, %v6148
        %v6169 = vpack.c.b16 %v6151, %v6149
        %v6170 = vpack.c.b16 %v6154, %v6152
        %v6171 = vpack.c.b16 %v6155, %v6153
        %6188 = vmatprep.subr.bf16.mxu0 %v6171
        %6189 = vmatpush1.bf16.msra.mxu0 %v6170
        %6190 = vmatprep.subr.bf16.mxu0 %v6169
        %6191 = vmatpush1.bf16.msra.mxu0 %v6168
        %6192 = vmatprep.subr.bf16.mxu0 %v6167
        %6193 = vmatpush1.bf16.msra.mxu0 %v6166
        %6194 = vmatprep.subr.bf16.mxu0 %v6165
        %6195 = vmatpush1.bf16.msra.mxu0 %v6164
        %6196 = vmatprep.subr.bf16.mxu0 %v6163
        %6197 = vmatpush1.bf16.msra.mxu0 %v6162
        %6198 = vmatprep.subr.bf16.mxu0 %v6161
        %6199 = vmatpush1.bf16.msra.mxu0 %v6160
        %6200 = vmatprep.subr.bf16.mxu0 %v6159
        %6201 = vmatpush1.bf16.msra.mxu0 %v6158
        %6202 = vmatprep.subr.bf16.mxu0 %v6157
        %6203 = vmatpush1.bf16.msra.mxu0 %v6156
        %6204 = vmatprep.subr.bf16.mxu0 0
        %6205 = vmatpush2.bf16.msra.mxu0 0
        %6206 = vmatprep.subr.bf16.mxu0 0
        %6207 = vmatpush2.bf16.msra.mxu0 0
        %6208 = vmatprep.subr.bf16.mxu0 0
        %6209 = vmatpush2.bf16.msra.mxu0 0
        %6210 = vmatprep.subr.bf16.mxu0 0
        %6211 = vmatpush2.bf16.msra.mxu0 0
        %6212 = vmatprep.subr.bf16.mxu0 0
        %6213 = vmatpush2.bf16.msra.mxu0 0
        %6214 = vmatprep.subr.bf16.mxu0 0
        %6215 = vmatpush2.bf16.msra.mxu0 0
        %6216 = vmatprep.subr.bf16.mxu0 0
        %6217 = vmatpush2.bf16.msra.mxu0 0
        %6218 = vmatprep.subr.bf16.mxu0 0
        %6219 = vmatpush2.bf16.msra.mxu0 0
        %6220 = vmatprep.mubr.bf16.mxu0 0
        %6221 = vmatmul.mubr.bf16.gmra.mxu0 %v3970
        %v6222 = vpop.f32.mrf.mxu0
        %v6223 = vadd.f32 0.0, %v6222
        %v6224 = vpop.f32.mrf.mxu0
        %v6225 = vadd.f32 0.0, %v6224
        %v6226 = vpop.f32.mrf.mxu0
        %v6227 = vadd.f32 0.0, %v6226
        %v6228 = vpop.f32.mrf.mxu0
        %v6229 = vadd.f32 0.0, %v6228
        %6230 = vmatprep.mubr.bf16.mxu0 0
        %6231 = vmatmul.mubr.bf16.gmra.mxu0 %v3971
        %v6232 = vpop.f32.mrf.mxu0
        %v6233 = vadd.f32 0.0, %v6232
        %v6234 = vpop.f32.mrf.mxu0
        %v6235 = vadd.f32 0.0, %v6234
        %v6236 = vpop.f32.mrf.mxu0
        %v6237 = vadd.f32 0.0, %v6236
        %v6238 = vpop.f32.mrf.mxu0
        %v6239 = vadd.f32 0.0, %v6238
        %6240 = vmatprep.mubr.bf16.mxu0 0
        %6241 = vmatmul.mubr.bf16.gmra.mxu0 %v3972
        %v6242 = vpop.f32.mrf.mxu0
        %v6243 = vadd.f32 0.0, %v6242
        %v6244 = vpop.f32.mrf.mxu0
        %v6245 = vadd.f32 0.0, %v6244
        %v6246 = vpop.f32.mrf.mxu0
        %v6247 = vadd.f32 0.0, %v6246
        %v6248 = vpop.f32.mrf.mxu0
        %v6249 = vadd.f32 0.0, %v6248
        %6250 = vmatprep.mubr.bf16.mxu0 0
        %6251 = vmatmul.mubr.bf16.gmra.mxu0 %v3973
        %v6252 = vpop.f32.mrf.mxu0
        %v6253 = vadd.f32 0.0, %v6252
        %v6254 = vpop.f32.mrf.mxu0
        %v6255 = vadd.f32 0.0, %v6254
        %v6256 = vpop.f32.mrf.mxu0
        %v6257 = vadd.f32 0.0, %v6256
        %v6258 = vpop.f32.mrf.mxu0
        %v6259 = vadd.f32 0.0, %v6258
        %6260 = vmatprep.mubr.bf16.mxu0 0
        %6261 = vmatmul.mubr.bf16.gmra.mxu0 %v3974
        %v6262 = vpop.f32.mrf.mxu0
        %v6263 = vadd.f32 0.0, %v6262
        %v6264 = vpop.f32.mrf.mxu0
        %v6265 = vadd.f32 0.0, %v6264
        %v6266 = vpop.f32.mrf.mxu0
        %v6267 = vadd.f32 0.0, %v6266
        %v6268 = vpop.f32.mrf.mxu0
        %v6269 = vadd.f32 0.0, %v6268
        %6270 = vmatprep.mubr.bf16.mxu0 0
        %6271 = vmatmul.mubr.bf16.gmra.mxu0 %v3975
        %v6272 = vpop.f32.mrf.mxu0
        %v6273 = vadd.f32 0.0, %v6272
        %v6274 = vpop.f32.mrf.mxu0
        %v6275 = vadd.f32 0.0, %v6274
        %v6276 = vpop.f32.mrf.mxu0
        %v6277 = vadd.f32 0.0, %v6276
        %v6278 = vpop.f32.mrf.mxu0
        %v6279 = vadd.f32 0.0, %v6278
        %6280 = vmatprep.mubr.bf16.mxu0 0
        %6281 = vmatmul.mubr.bf16.gmra.mxu0 %v3976
        %v6282 = vpop.f32.mrf.mxu0
        %v6283 = vadd.f32 0.0, %v6282
        %v6284 = vpop.f32.mrf.mxu0
        %v6285 = vadd.f32 0.0, %v6284
        %v6286 = vpop.f32.mrf.mxu0
        %v6287 = vadd.f32 0.0, %v6286
        %v6288 = vpop.f32.mrf.mxu0
        %v6289 = vadd.f32 0.0, %v6288
        %6290 = vmatprep.mubr.bf16.mxu0 0
        %6291 = vmatmul.mubr.bf16.gmra.mxu0 %v3977
        %v6292 = vpop.f32.mrf.mxu0
        %v6293 = vadd.f32 0.0, %v6292
        %v6294 = vpop.f32.mrf.mxu0
        %v6295 = vadd.f32 0.0, %v6294
        %v6296 = vpop.f32.mrf.mxu0
        %v6297 = vadd.f32 0.0, %v6296
        %v6298 = vpop.f32.mrf.mxu0
        %v6299 = vadd.f32 0.0, %v6298
        %6300 = vmatprep.mubr.bf16.mxu0 0
        %6301 = vmatmul.mubr.bf16.gmra.mxu0 %v3978
        %v6302 = vpop.f32.mrf.mxu0
        %v6303 = vadd.f32 0.0, %v6302
        %v6304 = vpop.f32.mrf.mxu0
        %v6305 = vadd.f32 0.0, %v6304
        %v6306 = vpop.f32.mrf.mxu0
        %v6307 = vadd.f32 0.0, %v6306
        %v6308 = vpop.f32.mrf.mxu0
        %v6309 = vadd.f32 0.0, %v6308
        %6310 = vmatprep.mubr.bf16.mxu0 0
        %6311 = vmatmul.mubr.bf16.gmra.mxu0 %v3979
        %v6312 = vpop.f32.mrf.mxu0
        %v6313 = vadd.f32 0.0, %v6312
        %v6314 = vpop.f32.mrf.mxu0
        %v6315 = vadd.f32 0.0, %v6314
        %v6316 = vpop.f32.mrf.mxu0
        %v6317 = vadd.f32 0.0, %v6316
        %v6318 = vpop.f32.mrf.mxu0
        %v6319 = vadd.f32 0.0, %v6318
        %6320 = vmatprep.mubr.bf16.mxu0 0
        %6321 = vmatmul.mubr.bf16.gmra.mxu0 %v3980
        %v6322 = vpop.f32.mrf.mxu0
        %v6323 = vadd.f32 0.0, %v6322
        %v6324 = vpop.f32.mrf.mxu0
        %v6325 = vadd.f32 0.0, %v6324
        %v6326 = vpop.f32.mrf.mxu0
        %v6327 = vadd.f32 0.0, %v6326
        %v6328 = vpop.f32.mrf.mxu0
        %v6329 = vadd.f32 0.0, %v6328
        %6330 = vmatprep.mubr.bf16.mxu0 0
        %6331 = vmatmul.mubr.bf16.gmra.mxu0 %v3981
        %v6332 = vpop.f32.mrf.mxu0
        %v6333 = vadd.f32 0.0, %v6332
        %v6334 = vpop.f32.mrf.mxu0
        %v6335 = vadd.f32 0.0, %v6334
        %v6336 = vpop.f32.mrf.mxu0
        %v6337 = vadd.f32 0.0, %v6336
        %v6338 = vpop.f32.mrf.mxu0
        %v6339 = vadd.f32 0.0, %v6338
        %6340 = vmatprep.mubr.bf16.mxu0 0
        %6341 = vmatmul.mubr.bf16.gmra.mxu0 %v3982
        %v6342 = vpop.f32.mrf.mxu0
        %v6343 = vadd.f32 0.0, %v6342
        %v6344 = vpop.f32.mrf.mxu0
        %v6345 = vadd.f32 0.0, %v6344
        %v6346 = vpop.f32.mrf.mxu0
        %v6347 = vadd.f32 0.0, %v6346
        %v6348 = vpop.f32.mrf.mxu0
        %v6349 = vadd.f32 0.0, %v6348
        %6350 = vmatprep.mubr.bf16.mxu0 0
        %6351 = vmatmul.mubr.bf16.gmra.mxu0 %v3983
        %v6352 = vpop.f32.mrf.mxu0
        %v6353 = vadd.f32 0.0, %v6352
        %v6354 = vpop.f32.mrf.mxu0
        %v6355 = vadd.f32 0.0, %v6354
        %v6356 = vpop.f32.mrf.mxu0
        %v6357 = vadd.f32 0.0, %v6356
        %v6358 = vpop.f32.mrf.mxu0
        %v6359 = vadd.f32 0.0, %v6358
        %6360 = vmatprep.mubr.bf16.mxu0 0
        %6361 = vmatmul.mubr.bf16.gmra.mxu0 %v3984
        %v6362 = vpop.f32.mrf.mxu0
        %v6363 = vadd.f32 0.0, %v6362
        %v6364 = vpop.f32.mrf.mxu0
        %v6365 = vadd.f32 0.0, %v6364
        %v6366 = vpop.f32.mrf.mxu0
        %v6367 = vadd.f32 0.0, %v6366
        %v6368 = vpop.f32.mrf.mxu0
        %v6369 = vadd.f32 0.0, %v6368
        %6370 = vmatprep.mubr.bf16.mxu0 0
        %6371 = vmatmul.mubr.bf16.gmra.mxu0 %v3985
        %v6372 = vpop.f32.mrf.mxu0
        %v6373 = vadd.f32 0.0, %v6372
        %v6374 = vpop.f32.mrf.mxu0
        %v6375 = vadd.f32 0.0, %v6374
        %v6376 = vpop.f32.mrf.mxu0
        %v6377 = vadd.f32 0.0, %v6376
        %v6378 = vpop.f32.mrf.mxu0
        %v6379 = vadd.f32 0.0, %v6378
        %6380 = vmatprep.mubr.bf16.mxu0 0
        %6381 = vmatmul.mubr.bf16.gmra.mxu0 %v3986
        %v6382 = vpop.f32.mrf.mxu0
        %v6383 = vadd.f32 0.0, %v6382
        %v6384 = vpop.f32.mrf.mxu0
        %v6385 = vadd.f32 0.0, %v6384
        %v6386 = vpop.f32.mrf.mxu0
        %v6387 = vadd.f32 0.0, %v6386
        %v6388 = vpop.f32.mrf.mxu0
        %v6389 = vadd.f32 0.0, %v6388
        %6390 = vmatprep.mubr.bf16.mxu0 0
        %6391 = vmatmul.mubr.bf16.gmra.mxu0 %v3987
        %v6392 = vpop.f32.mrf.mxu0
        %v6393 = vadd.f32 0.0, %v6392
        %v6394 = vpop.f32.mrf.mxu0
        %v6395 = vadd.f32 0.0, %v6394
        %v6396 = vpop.f32.mrf.mxu0
        %v6397 = vadd.f32 0.0, %v6396
        %v6398 = vpop.f32.mrf.mxu0
        %v6399 = vadd.f32 0.0, %v6398
        %6400 = vmatprep.mubr.bf16.mxu0 0
        %6401 = vmatmul.mubr.bf16.gmra.mxu0 %v3988
        %v6402 = vpop.f32.mrf.mxu0
        %v6403 = vadd.f32 0.0, %v6402
        %v6404 = vpop.f32.mrf.mxu0
        %v6405 = vadd.f32 0.0, %v6404
        %v6406 = vpop.f32.mrf.mxu0
        %v6407 = vadd.f32 0.0, %v6406
        %v6408 = vpop.f32.mrf.mxu0
        %v6409 = vadd.f32 0.0, %v6408
        %6410 = vmatprep.mubr.bf16.mxu0 0
        %6411 = vmatmul.mubr.bf16.gmra.mxu0 %v3989
        %v6412 = vpop.f32.mrf.mxu0
        %v6413 = vadd.f32 0.0, %v6412
        %v6414 = vpop.f32.mrf.mxu0
        %v6415 = vadd.f32 0.0, %v6414
        %v6416 = vpop.f32.mrf.mxu0
        %v6417 = vadd.f32 0.0, %v6416
        %v6418 = vpop.f32.mrf.mxu0
        %v6419 = vadd.f32 0.0, %v6418
        %6420 = vmatprep.mubr.bf16.mxu0 0
        %6421 = vmatmul.mubr.bf16.gmra.mxu0 %v3990
        %v6422 = vpop.f32.mrf.mxu0
        %v6423 = vadd.f32 0.0, %v6422
        %v6424 = vpop.f32.mrf.mxu0
        %v6425 = vadd.f32 0.0, %v6424
        %v6426 = vpop.f32.mrf.mxu0
        %v6427 = vadd.f32 0.0, %v6426
        %v6428 = vpop.f32.mrf.mxu0
        %v6429 = vadd.f32 0.0, %v6428
        %6430 = vmatprep.mubr.bf16.mxu0 0
        %6431 = vmatmul.mubr.bf16.gmra.mxu0 %v3991
        %v6432 = vpop.f32.mrf.mxu0
        %v6433 = vadd.f32 0.0, %v6432
        %v6434 = vpop.f32.mrf.mxu0
        %v6435 = vadd.f32 0.0, %v6434
        %v6436 = vpop.f32.mrf.mxu0
        %v6437 = vadd.f32 0.0, %v6436
        %v6438 = vpop.f32.mrf.mxu0
        %v6439 = vadd.f32 0.0, %v6438
        %6440 = vmatprep.mubr.bf16.mxu0 0
        %6441 = vmatmul.mubr.bf16.gmra.mxu0 %v3992
        %v6442 = vpop.f32.mrf.mxu0
        %v6443 = vadd.f32 0.0, %v6442
        %v6444 = vpop.f32.mrf.mxu0
        %v6445 = vadd.f32 0.0, %v6444
        %v6446 = vpop.f32.mrf.mxu0
        %v6447 = vadd.f32 0.0, %v6446
        %v6448 = vpop.f32.mrf.mxu0
        %v6449 = vadd.f32 0.0, %v6448
        %6450 = vmatprep.mubr.bf16.mxu0 0
        %6451 = vmatmul.mubr.bf16.gmra.mxu0 %v3993
        %v6452 = vpop.f32.mrf.mxu0
        %v6453 = vadd.f32 0.0, %v6452
        %v6454 = vpop.f32.mrf.mxu0
        %v6455 = vadd.f32 0.0, %v6454
        %v6456 = vpop.f32.mrf.mxu0
        %v6457 = vadd.f32 0.0, %v6456
        %v6458 = vpop.f32.mrf.mxu0
        %v6459 = vadd.f32 0.0, %v6458
        %6460 = vmatprep.mubr.bf16.mxu0 0
        %6461 = vmatmul.mubr.bf16.gmra.mxu0 %v3994
        %v6462 = vpop.f32.mrf.mxu0
        %v6463 = vadd.f32 0.0, %v6462
        %v6464 = vpop.f32.mrf.mxu0
        %v6465 = vadd.f32 0.0, %v6464
        %v6466 = vpop.f32.mrf.mxu0
        %v6467 = vadd.f32 0.0, %v6466
        %v6468 = vpop.f32.mrf.mxu0
        %v6469 = vadd.f32 0.0, %v6468
        %6470 = vmatprep.mubr.bf16.mxu0 0
        %6471 = vmatmul.mubr.bf16.gmra.mxu0 %v3995
        %v6472 = vpop.f32.mrf.mxu0
        %v6473 = vadd.f32 0.0, %v6472
        %v6474 = vpop.f32.mrf.mxu0
        %v6475 = vadd.f32 0.0, %v6474
        %v6476 = vpop.f32.mrf.mxu0
        %v6477 = vadd.f32 0.0, %v6476
        %v6478 = vpop.f32.mrf.mxu0
        %v6479 = vadd.f32 0.0, %v6478
        %6480 = vmatprep.mubr.bf16.mxu0 0
        %6481 = vmatmul.mubr.bf16.gmra.mxu0 %v3996
        %v6482 = vpop.f32.mrf.mxu0
        %v6483 = vadd.f32 0.0, %v6482
        %v6484 = vpop.f32.mrf.mxu0
        %v6485 = vadd.f32 0.0, %v6484
        %v6486 = vpop.f32.mrf.mxu0
        %v6487 = vadd.f32 0.0, %v6486
        %v6488 = vpop.f32.mrf.mxu0
        %v6489 = vadd.f32 0.0, %v6488
        %6490 = vmatprep.mubr.bf16.mxu0 0
        %6491 = vmatmul.mubr.bf16.gmra.mxu0 %v3997
        %v6492 = vpop.f32.mrf.mxu0
        %v6493 = vadd.f32 0.0, %v6492
        %v6494 = vpop.f32.mrf.mxu0
        %v6495 = vadd.f32 0.0, %v6494
        %v6496 = vpop.f32.mrf.mxu0
        %v6497 = vadd.f32 0.0, %v6496
        %v6498 = vpop.f32.mrf.mxu0
        %v6499 = vadd.f32 0.0, %v6498
        %6500 = vmatprep.mubr.bf16.mxu0 0
        %6501 = vmatmul.mubr.bf16.gmra.mxu0 %v3998
        %v6502 = vpop.f32.mrf.mxu0
        %v6503 = vadd.f32 0.0, %v6502
        %v6504 = vpop.f32.mrf.mxu0
        %v6505 = vadd.f32 0.0, %v6504
        %v6506 = vpop.f32.mrf.mxu0
        %v6507 = vadd.f32 0.0, %v6506
        %v6508 = vpop.f32.mrf.mxu0
        %v6509 = vadd.f32 0.0, %v6508
        %6510 = vmatprep.mubr.bf16.mxu0 0
        %6511 = vmatmul.mubr.bf16.gmra.mxu0 %v3999
        %v6512 = vpop.f32.mrf.mxu0
        %v6513 = vadd.f32 0.0, %v6512
        %v6514 = vpop.f32.mrf.mxu0
        %v6515 = vadd.f32 0.0, %v6514
        %v6516 = vpop.f32.mrf.mxu0
        %v6517 = vadd.f32 0.0, %v6516
        %v6518 = vpop.f32.mrf.mxu0
        %v6519 = vadd.f32 0.0, %v6518
        %6520 = vmatprep.mubr.bf16.mxu0 0
        %6521 = vmatmul.mubr.bf16.gmra.mxu0 %v4000
        %v6522 = vpop.f32.mrf.mxu0
        %v6523 = vadd.f32 0.0, %v6522
        %v6524 = vpop.f32.mrf.mxu0
        %v6525 = vadd.f32 0.0, %v6524
        %v6526 = vpop.f32.mrf.mxu0
        %v6527 = vadd.f32 0.0, %v6526
        %v6528 = vpop.f32.mrf.mxu0
        %v6529 = vadd.f32 0.0, %v6528
        %6530 = vmatprep.mubr.bf16.mxu0 0
        %6531 = vmatmul.mubr.bf16.gmra.mxu0 %v4001
        %v6532 = vpop.f32.mrf.mxu0
        %v6533 = vadd.f32 0.0, %v6532
        %v6534 = vpop.f32.mrf.mxu0
        %v6535 = vadd.f32 0.0, %v6534
        %v6536 = vpop.f32.mrf.mxu0
        %v6537 = vadd.f32 0.0, %v6536
        %v6538 = vpop.f32.mrf.mxu0
        %v6539 = vadd.f32 0.0, %v6538
        %6540 = vmatprep.mubr.bf16.mxu0 0
        %6541 = vmatmul.mubr.bf16.gmra.mxu0 %v4002
        %v6542 = vpop.f32.mrf.mxu0
        %v6543 = vadd.f32 0.0, %v6542
        %v6544 = vpop.f32.mrf.mxu0
        %v6545 = vadd.f32 0.0, %v6544
        %v6546 = vpop.f32.mrf.mxu0
        %v6547 = vadd.f32 0.0, %v6546
        %v6548 = vpop.f32.mrf.mxu0
        %v6549 = vadd.f32 0.0, %v6548
        %6550 = vmatprep.mubr.bf16.mxu0 0
        %6551 = vmatmul.mubr.bf16.gmra.mxu0 %v4003
        %v6552 = vpop.f32.mrf.mxu0
        %v6553 = vadd.f32 0.0, %v6552
        %v6554 = vpop.f32.mrf.mxu0
        %v6555 = vadd.f32 0.0, %v6554
        %v6556 = vpop.f32.mrf.mxu0
        %v6557 = vadd.f32 0.0, %v6556
        %v6558 = vpop.f32.mrf.mxu0
        %v6559 = vadd.f32 0.0, %v6558
        %6560 = vmatprep.mubr.bf16.mxu0 0
        %6561 = vmatmul.mubr.bf16.gmra.mxu0 %v4004
        %v6562 = vpop.f32.mrf.mxu0
        %v6563 = vadd.f32 0.0, %v6562
        %v6564 = vpop.f32.mrf.mxu0
        %v6565 = vadd.f32 0.0, %v6564
        %v6566 = vpop.f32.mrf.mxu0
        %v6567 = vadd.f32 0.0, %v6566
        %v6568 = vpop.f32.mrf.mxu0
        %v6569 = vadd.f32 0.0, %v6568
        %6570 = vmatprep.mubr.bf16.mxu0 0
        %6571 = vmatmul.mubr.bf16.gmra.mxu0 %v4005
        %v6572 = vpop.f32.mrf.mxu0
        %v6573 = vadd.f32 0.0, %v6572
        %v6574 = vpop.f32.mrf.mxu0
        %v6575 = vadd.f32 0.0, %v6574
        %v6576 = vpop.f32.mrf.mxu0
        %v6577 = vadd.f32 0.0, %v6576
        %v6578 = vpop.f32.mrf.mxu0
        %v6579 = vadd.f32 0.0, %v6578
        %6580 = vmatprep.mubr.bf16.mxu0 0
        %6581 = vmatmul.mubr.bf16.gmra.mxu0 %v4006
        %v6582 = vpop.f32.mrf.mxu0
        %v6583 = vadd.f32 0.0, %v6582
        %v6584 = vpop.f32.mrf.mxu0
        %v6585 = vadd.f32 0.0, %v6584
        %v6586 = vpop.f32.mrf.mxu0
        %v6587 = vadd.f32 0.0, %v6586
        %v6588 = vpop.f32.mrf.mxu0
        %v6589 = vadd.f32 0.0, %v6588
        %6590 = vmatprep.mubr.bf16.mxu0 0
        %6591 = vmatmul.mubr.bf16.gmra.mxu0 %v4007
        %v6592 = vpop.f32.mrf.mxu0
        %v6593 = vadd.f32 0.0, %v6592
        %v6594 = vpop.f32.mrf.mxu0
        %v6595 = vadd.f32 0.0, %v6594
        %v6596 = vpop.f32.mrf.mxu0
        %v6597 = vadd.f32 0.0, %v6596
        %v6598 = vpop.f32.mrf.mxu0
        %v6599 = vadd.f32 0.0, %v6598
        %6600 = vmatprep.mubr.bf16.mxu0 0
        %6601 = vmatmul.mubr.bf16.gmra.mxu0 %v4008
        %v6602 = vpop.f32.mrf.mxu0
        %v6603 = vadd.f32 0.0, %v6602
        %v6604 = vpop.f32.mrf.mxu0
        %v6605 = vadd.f32 0.0, %v6604
        %v6606 = vpop.f32.mrf.mxu0
        %v6607 = vadd.f32 0.0, %v6606
        %v6608 = vpop.f32.mrf.mxu0
        %v6609 = vadd.f32 0.0, %v6608
        %6610 = vmatprep.mubr.bf16.mxu0 0
        %6611 = vmatmul.mubr.bf16.gmra.mxu0 %v4009
        %v6612 = vpop.f32.mrf.mxu0
        %v6613 = vadd.f32 0.0, %v6612
        %v6614 = vpop.f32.mrf.mxu0
        %v6615 = vadd.f32 0.0, %v6614
        %v6616 = vpop.f32.mrf.mxu0
        %v6617 = vadd.f32 0.0, %v6616
        %v6618 = vpop.f32.mrf.mxu0
        %v6619 = vadd.f32 0.0, %v6618
        %6620 = vmatprep.mubr.bf16.mxu0 0
        %6621 = vmatmul.mubr.bf16.gmra.mxu0 %v4010
        %v6622 = vpop.f32.mrf.mxu0
        %v6623 = vadd.f32 0.0, %v6622
        %v6624 = vpop.f32.mrf.mxu0
        %v6625 = vadd.f32 0.0, %v6624
        %v6626 = vpop.f32.mrf.mxu0
        %v6627 = vadd.f32 0.0, %v6626
        %v6628 = vpop.f32.mrf.mxu0
        %v6629 = vadd.f32 0.0, %v6628
        %6630 = vmatprep.mubr.bf16.mxu0 0
        %6631 = vmatmul.mubr.bf16.gmra.mxu0 %v4011
        %v6632 = vpop.f32.mrf.mxu0
        %v6633 = vadd.f32 0.0, %v6632
        %v6634 = vpop.f32.mrf.mxu0
        %v6635 = vadd.f32 0.0, %v6634
        %v6636 = vpop.f32.mrf.mxu0
        %v6637 = vadd.f32 0.0, %v6636
        %v6638 = vpop.f32.mrf.mxu0
        %v6639 = vadd.f32 0.0, %v6638
        %6640 = vmatprep.mubr.bf16.mxu0 0
        %6641 = vmatmul.mubr.bf16.gmra.mxu0 %v4012
        %v6642 = vpop.f32.mrf.mxu0
        %v6643 = vadd.f32 0.0, %v6642
        %v6644 = vpop.f32.mrf.mxu0
        %v6645 = vadd.f32 0.0, %v6644
        %v6646 = vpop.f32.mrf.mxu0
        %v6647 = vadd.f32 0.0, %v6646
        %v6648 = vpop.f32.mrf.mxu0
        %v6649 = vadd.f32 0.0, %v6648
        %6650 = vmatprep.mubr.bf16.mxu0 0
        %6651 = vmatmul.mubr.bf16.gmra.mxu0 %v4013
        %v6652 = vpop.f32.mrf.mxu0
        %v6653 = vadd.f32 0.0, %v6652
        %v6654 = vpop.f32.mrf.mxu0
        %v6655 = vadd.f32 0.0, %v6654
        %v6656 = vpop.f32.mrf.mxu0
        %v6657 = vadd.f32 0.0, %v6656
        %v6658 = vpop.f32.mrf.mxu0
        %v6659 = vadd.f32 0.0, %v6658
        %6660 = vmatprep.mubr.bf16.mxu0 0
        %6661 = vmatmul.mubr.bf16.gmra.mxu0 %v4014
        %v6662 = vpop.f32.mrf.mxu0
        %v6663 = vadd.f32 0.0, %v6662
        %v6664 = vpop.f32.mrf.mxu0
        %v6665 = vadd.f32 0.0, %v6664
        %v6666 = vpop.f32.mrf.mxu0
        %v6667 = vadd.f32 0.0, %v6666
        %v6668 = vpop.f32.mrf.mxu0
        %v6669 = vadd.f32 0.0, %v6668
        %6670 = vmatprep.mubr.bf16.mxu0 0
        %6671 = vmatmul.mubr.bf16.gmra.mxu0 %v4015
        %v6672 = vpop.f32.mrf.mxu0
        %v6673 = vadd.f32 0.0, %v6672
        %v6674 = vpop.f32.mrf.mxu0
        %v6675 = vadd.f32 0.0, %v6674
        %v6676 = vpop.f32.mrf.mxu0
        %v6677 = vadd.f32 0.0, %v6676
        %v6678 = vpop.f32.mrf.mxu0
        %v6679 = vadd.f32 0.0, %v6678
        %6680 = vmatprep.mubr.bf16.mxu0 0
        %6681 = vmatmul.mubr.bf16.gmra.mxu0 %v4016
        %v6682 = vpop.f32.mrf.mxu0
        %v6683 = vadd.f32 0.0, %v6682
        %v6684 = vpop.f32.mrf.mxu0
        %v6685 = vadd.f32 0.0, %v6684
        %v6686 = vpop.f32.mrf.mxu0
        %v6687 = vadd.f32 0.0, %v6686
        %v6688 = vpop.f32.mrf.mxu0
        %v6689 = vadd.f32 0.0, %v6688
        %6690 = vmatprep.mubr.bf16.mxu0 0
        %6691 = vmatmul.mubr.bf16.gmra.mxu0 %v4017
        %v6692 = vpop.f32.mrf.mxu0
        %v6693 = vadd.f32 0.0, %v6692
        %v6694 = vpop.f32.mrf.mxu0
        %v6695 = vadd.f32 0.0, %v6694
        %v6696 = vpop.f32.mrf.mxu0
        %v6697 = vadd.f32 0.0, %v6696
        %v6698 = vpop.f32.mrf.mxu0
        %v6699 = vadd.f32 0.0, %v6698
        %6700 = vmatprep.mubr.bf16.mxu0 0
        %6701 = vmatmul.mubr.bf16.gmra.mxu0 %v4018
        %v6702 = vpop.f32.mrf.mxu0
        %v6703 = vadd.f32 0.0, %v6702
        %v6704 = vpop.f32.mrf.mxu0
        %v6705 = vadd.f32 0.0, %v6704
        %v6706 = vpop.f32.mrf.mxu0
        %v6707 = vadd.f32 0.0, %v6706
        %v6708 = vpop.f32.mrf.mxu0
        %v6709 = vadd.f32 0.0, %v6708
        %6710 = vmatprep.mubr.bf16.mxu0 0
        %6711 = vmatmul.mubr.bf16.gmra.mxu0 %v4019
        %v6712 = vpop.f32.mrf.mxu0
        %v6713 = vadd.f32 0.0, %v6712
        %v6714 = vpop.f32.mrf.mxu0
        %v6715 = vadd.f32 0.0, %v6714
        %v6716 = vpop.f32.mrf.mxu0
        %v6717 = vadd.f32 0.0, %v6716
        %v6718 = vpop.f32.mrf.mxu0
        %v6719 = vadd.f32 0.0, %v6718
        %6720 = vmatprep.mubr.bf16.mxu0 0
        %6721 = vmatmul.mubr.bf16.gmra.mxu0 %v4020
        %v6722 = vpop.f32.mrf.mxu0
        %v6723 = vadd.f32 0.0, %v6722
        %v6724 = vpop.f32.mrf.mxu0
        %v6725 = vadd.f32 0.0, %v6724
        %v6726 = vpop.f32.mrf.mxu0
        %v6727 = vadd.f32 0.0, %v6726
        %v6728 = vpop.f32.mrf.mxu0
        %v6729 = vadd.f32 0.0, %v6728
        %6730 = vmatprep.mubr.bf16.mxu0 0
        %6731 = vmatmul.mubr.bf16.gmra.mxu0 %v4021
        %v6732 = vpop.f32.mrf.mxu0
        %v6733 = vadd.f32 0.0, %v6732
        %v6734 = vpop.f32.mrf.mxu0
        %v6735 = vadd.f32 0.0, %v6734
        %v6736 = vpop.f32.mrf.mxu0
        %v6737 = vadd.f32 0.0, %v6736
        %v6738 = vpop.f32.mrf.mxu0
        %v6739 = vadd.f32 0.0, %v6738
        %6740 = vmatprep.mubr.bf16.mxu0 0
        %6741 = vmatmul.mubr.bf16.gmra.mxu0 %v4022
        %v6742 = vpop.f32.mrf.mxu0
        %v6743 = vadd.f32 0.0, %v6742
        %v6744 = vpop.f32.mrf.mxu0
        %v6745 = vadd.f32 0.0, %v6744
        %v6746 = vpop.f32.mrf.mxu0
        %v6747 = vadd.f32 0.0, %v6746
        %v6748 = vpop.f32.mrf.mxu0
        %v6749 = vadd.f32 0.0, %v6748
        %6750 = vmatprep.mubr.bf16.mxu0 0
        %6751 = vmatmul.mubr.bf16.gmra.mxu0 %v4023
        %v6752 = vpop.f32.mrf.mxu0
        %v6753 = vadd.f32 0.0, %v6752
        %v6754 = vpop.f32.mrf.mxu0
        %v6755 = vadd.f32 0.0, %v6754
        %v6756 = vpop.f32.mrf.mxu0
        %v6757 = vadd.f32 0.0, %v6756
        %v6758 = vpop.f32.mrf.mxu0
        %v6759 = vadd.f32 0.0, %v6758
        %6760 = vmatprep.mubr.bf16.mxu0 0
        %6761 = vmatmul.mubr.bf16.gmra.mxu0 %v4024
        %v6762 = vpop.f32.mrf.mxu0
        %v6763 = vadd.f32 0.0, %v6762
        %v6764 = vpop.f32.mrf.mxu0
        %v6765 = vadd.f32 0.0, %v6764
        %v6766 = vpop.f32.mrf.mxu0
        %v6767 = vadd.f32 0.0, %v6766
        %v6768 = vpop.f32.mrf.mxu0
        %v6769 = vadd.f32 0.0, %v6768
        %6770 = vmatprep.mubr.bf16.mxu0 0
        %6771 = vmatmul.mubr.bf16.gmra.mxu0 %v4025
        %v6772 = vpop.f32.mrf.mxu0
        %v6773 = vadd.f32 0.0, %v6772
        %v6774 = vpop.f32.mrf.mxu0
        %v6775 = vadd.f32 0.0, %v6774
        %v6776 = vpop.f32.mrf.mxu0
        %v6777 = vadd.f32 0.0, %v6776
        %v6778 = vpop.f32.mrf.mxu0
        %v6779 = vadd.f32 0.0, %v6778
        %6780 = vmatprep.mubr.bf16.mxu0 0
        %6781 = vmatmul.mubr.bf16.gmra.mxu0 %v4026
        %v6782 = vpop.f32.mrf.mxu0
        %v6783 = vadd.f32 0.0, %v6782
        %v6784 = vpop.f32.mrf.mxu0
        %v6785 = vadd.f32 0.0, %v6784
        %v6786 = vpop.f32.mrf.mxu0
        %v6787 = vadd.f32 0.0, %v6786
        %v6788 = vpop.f32.mrf.mxu0
        %v6789 = vadd.f32 0.0, %v6788
        %6790 = vmatprep.mubr.bf16.mxu0 0
        %6791 = vmatmul.mubr.bf16.gmra.mxu0 %v4027
        %v6792 = vpop.f32.mrf.mxu0
        %v6793 = vadd.f32 0.0, %v6792
        %v6794 = vpop.f32.mrf.mxu0
        %v6795 = vadd.f32 0.0, %v6794
        %v6796 = vpop.f32.mrf.mxu0
        %v6797 = vadd.f32 0.0, %v6796
        %v6798 = vpop.f32.mrf.mxu0
        %v6799 = vadd.f32 0.0, %v6798
        %6800 = vmatprep.mubr.bf16.mxu0 0
        %6801 = vmatmul.mubr.bf16.gmra.mxu0 %v4028
        %v6802 = vpop.f32.mrf.mxu0
        %v6803 = vadd.f32 0.0, %v6802
        %v6804 = vpop.f32.mrf.mxu0
        %v6805 = vadd.f32 0.0, %v6804
        %v6806 = vpop.f32.mrf.mxu0
        %v6807 = vadd.f32 0.0, %v6806
        %v6808 = vpop.f32.mrf.mxu0
        %v6809 = vadd.f32 0.0, %v6808
        %6810 = vmatprep.mubr.bf16.mxu0 0
        %6811 = vmatmul.mubr.bf16.gmra.mxu0 %v4029
        %v6812 = vpop.f32.mrf.mxu0
        %v6813 = vadd.f32 0.0, %v6812
        %v6814 = vpop.f32.mrf.mxu0
        %v6815 = vadd.f32 0.0, %v6814
        %v6816 = vpop.f32.mrf.mxu0
        %v6817 = vadd.f32 0.0, %v6816
        %v6818 = vpop.f32.mrf.mxu0
        %v6819 = vadd.f32 0.0, %v6818
        %6820 = vmatprep.mubr.bf16.mxu0 0
        %6821 = vmatmul.mubr.bf16.gmra.mxu0 %v4030
        %v6822 = vpop.f32.mrf.mxu0
        %v6823 = vadd.f32 0.0, %v6822
        %v6824 = vpop.f32.mrf.mxu0
        %v6825 = vadd.f32 0.0, %v6824
        %v6826 = vpop.f32.mrf.mxu0
        %v6827 = vadd.f32 0.0, %v6826
        %v6828 = vpop.f32.mrf.mxu0
        %v6829 = vadd.f32 0.0, %v6828
        %6830 = vmatprep.mubr.bf16.mxu0 0
        %6831 = vmatmul.mubr.bf16.gmra.mxu0 %v4031
        %v6832 = vpop.f32.mrf.mxu0
        %v6833 = vadd.f32 0.0, %v6832
        %v6834 = vpop.f32.mrf.mxu0
        %v6835 = vadd.f32 0.0, %v6834
        %v6836 = vpop.f32.mrf.mxu0
        %v6837 = vadd.f32 0.0, %v6836
        %v6838 = vpop.f32.mrf.mxu0
        %v6839 = vadd.f32 0.0, %v6838
        %6840 = vmatprep.mubr.bf16.mxu0 0
        %6841 = vmatmul.mubr.bf16.gmra.mxu0 %v4032
        %v6842 = vpop.f32.mrf.mxu0
        %v6843 = vadd.f32 0.0, %v6842
        %v6844 = vpop.f32.mrf.mxu0
        %v6845 = vadd.f32 0.0, %v6844
        %v6846 = vpop.f32.mrf.mxu0
        %v6847 = vadd.f32 0.0, %v6846
        %v6848 = vpop.f32.mrf.mxu0
        %v6849 = vadd.f32 0.0, %v6848
        %6850 = vmatprep.mubr.bf16.mxu0 0
        %6851 = vmatmul.mubr.bf16.gmra.mxu0 %v4033
        %v6852 = vpop.f32.mrf.mxu0
        %v6853 = vadd.f32 0.0, %v6852
        %v6854 = vpop.f32.mrf.mxu0
        %v6855 = vadd.f32 0.0, %v6854
        %v6856 = vpop.f32.mrf.mxu0
        %v6857 = vadd.f32 0.0, %v6856
        %v6858 = vpop.f32.mrf.mxu0
        %v6859 = vadd.f32 0.0, %v6858
        %6860 = vdwg.mxu0
        %v6861 = vmax.f32 %v6223, %v6233
        %v6862 = vmax.f32 %v6227, %v6237
        %v6863 = vmax.f32 %v6861, %v6243
        %v6864 = vmax.f32 %v6862, %v6247
        %v6865 = vmax.f32 %v6863, %v6253
        %v6866 = vmax.f32 %v6864, %v6257
        %v6867 = vmax.f32 %v6865, %v6263
        %v6868 = vmax.f32 %v6866, %v6267
        %v6869 = vmax.f32 %v6867, %v6273
        %v6870 = vmax.f32 %v6868, %v6277
        %v6871 = vmax.f32 %v6869, %v6283
        %v6872 = vmax.f32 %v6870, %v6287
        %v6873 = vmax.f32 %v6871, %v6293
        %v6874 = vmax.f32 %v6872, %v6297
        %v6875 = vmax.f32 %v6873, %v6303
        %v6876 = vmax.f32 %v6874, %v6307
        %v6877 = vmax.f32 %v6875, %v6313
        %v6878 = vmax.f32 %v6876, %v6317
        %v6879 = vmax.f32 %v6877, %v6323
        %v6880 = vmax.f32 %v6878, %v6327
        %v6881 = vmax.f32 %v6879, %v6333
        %v6882 = vmax.f32 %v6880, %v6337
        %v6883 = vmax.f32 %v6881, %v6343
        %v6884 = vmax.f32 %v6882, %v6347
        %v6885 = vmax.f32 %v6883, %v6353
        %v6886 = vmax.f32 %v6884, %v6357
        %v6887 = vmax.f32 %v6885, %v6363
        %v6888 = vmax.f32 %v6886, %v6367
        %v6889 = vmax.f32 %v6887, %v6373
        %v6890 = vmax.f32 %v6888, %v6377
        %v6891 = vmax.f32 %v6889, %v6383
        %v6892 = vmax.f32 %v6890, %v6387
        %v6893 = vmax.f32 %v6891, %v6393
        %v6894 = vmax.f32 %v6892, %v6397
        %v6895 = vmax.f32 %v6893, %v6403
        %v6896 = vmax.f32 %v6894, %v6407
        %v6897 = vmax.f32 %v6895, %v6413
        %v6898 = vmax.f32 %v6896, %v6417
        %v6899 = vmax.f32 %v6897, %v6423
        %v6900 = vmax.f32 %v6898, %v6427
        %v6901 = vmax.f32 %v6899, %v6433
        %v6902 = vmax.f32 %v6900, %v6437
        %v6903 = vmax.f32 %v6901, %v6443
        %v6904 = vmax.f32 %v6902, %v6447
        %v6905 = vmax.f32 %v6903, %v6453
        %v6906 = vmax.f32 %v6904, %v6457
        %v6907 = vmax.f32 %v6905, %v6463
        %v6908 = vmax.f32 %v6906, %v6467
        %v6909 = vmax.f32 %v6907, %v6473
        %v6910 = vmax.f32 %v6908, %v6477
        %v6911 = vmax.f32 %v6909, %v6483
        %v6912 = vmax.f32 %v6910, %v6487
        %v6913 = vmax.f32 %v6911, %v6493
        %v6914 = vmax.f32 %v6912, %v6497
        %v6915 = vmax.f32 %v6913, %v6503
        %v6916 = vmax.f32 %v6914, %v6507
        %v6917 = vmax.f32 %v6915, %v6513
        %v6918 = vmax.f32 %v6916, %v6517
        %v6919 = vmax.f32 %v6917, %v6523
        %v6920 = vmax.f32 %v6918, %v6527
        %v6921 = vmax.f32 %v6919, %v6533
        %v6922 = vmax.f32 %v6920, %v6537
        %v6923 = vmax.f32 %v6921, %v6543
        %v6924 = vmax.f32 %v6922, %v6547
        %v6925 = vmax.f32 %v6923, %v6553
        %v6926 = vmax.f32 %v6924, %v6557
        %v6927 = vmax.f32 %v6925, %v6563
        %v6928 = vmax.f32 %v6926, %v6567
        %v6929 = vmax.f32 %v6927, %v6573
        %v6930 = vmax.f32 %v6928, %v6577
        %v6931 = vmax.f32 %v6929, %v6583
        %v6932 = vmax.f32 %v6930, %v6587
        %v6933 = vmax.f32 %v6931, %v6593
        %v6934 = vmax.f32 %v6932, %v6597
        %v6935 = vmax.f32 %v6933, %v6603
        %v6936 = vmax.f32 %v6934, %v6607
        %v6937 = vmax.f32 %v6935, %v6613
        %v6938 = vmax.f32 %v6936, %v6617
        %v6939 = vmax.f32 %v6937, %v6623
        %v6940 = vmax.f32 %v6938, %v6627
        %v6941 = vmax.f32 %v6939, %v6633
        %v6942 = vmax.f32 %v6940, %v6637
        %v6943 = vmax.f32 %v6941, %v6643
        %v6944 = vmax.f32 %v6942, %v6647
        %v6945 = vmax.f32 %v6943, %v6653
        %v6946 = vmax.f32 %v6944, %v6657
        %v6947 = vmax.f32 %v6945, %v6663
        %v6948 = vmax.f32 %v6946, %v6667
        %v6949 = vmax.f32 %v6947, %v6673
        %v6950 = vmax.f32 %v6948, %v6677
        %v6951 = vmax.f32 %v6949, %v6683
        %v6952 = vmax.f32 %v6950, %v6687
        %v6953 = vmax.f32 %v6951, %v6693
        %v6954 = vmax.f32 %v6952, %v6697
        %v6955 = vmax.f32 %v6953, %v6703
        %v6956 = vmax.f32 %v6954, %v6707
        %v6957 = vmax.f32 %v6955, %v6713
        %v6958 = vmax.f32 %v6956, %v6717
        %v6959 = vmax.f32 %v6957, %v6723
        %v6960 = vmax.f32 %v6958, %v6727
        %v6961 = vmax.f32 %v6959, %v6733
        %v6962 = vmax.f32 %v6960, %v6737
        %v6963 = vmax.f32 %v6961, %v6743
        %v6964 = vmax.f32 %v6962, %v6747
        %v6965 = vmax.f32 %v6963, %v6753
        %v6966 = vmax.f32 %v6964, %v6757
        %v6967 = vmax.f32 %v6965, %v6763
        %v6968 = vmax.f32 %v6966, %v6767
        %v6969 = vmax.f32 %v6967, %v6773
        %v6970 = vmax.f32 %v6968, %v6777
        %v6971 = vmax.f32 %v6969, %v6783
        %v6972 = vmax.f32 %v6970, %v6787
        %v6973 = vmax.f32 %v6971, %v6793
        %v6974 = vmax.f32 %v6972, %v6797
        %v6975 = vmax.f32 %v6973, %v6803
        %v6976 = vmax.f32 %v6974, %v6807
        %v6977 = vmax.f32 %v6975, %v6813
        %v6978 = vmax.f32 %v6976, %v6817
        %v6979 = vmax.f32 %v6977, %v6823
        %v6980 = vmax.f32 %v6978, %v6827
        %v6981 = vmax.f32 %v6979, %v6833
        %v6982 = vmax.f32 %v6980, %v6837
        %v6983 = vmax.f32 %v6981, %v6843
        %v6984 = vmax.f32 %v6982, %v6847
        %v6985 = vmax.f32 %v6983, %v6853
        %v6986 = vmax.f32 %v6984, %v6857
        %v6987 = vmax.f32 %v6985, %v6986
        %v6988 = vmax.f32 %v6225, %v6235
        %v6989 = vmax.f32 %v6229, %v6239
        %v6990 = vmax.f32 %v6988, %v6245
        %v6991 = vmax.f32 %v6989, %v6249
        %v6992 = vmax.f32 %v6990, %v6255
        %v6993 = vmax.f32 %v6991, %v6259
        %v6994 = vmax.f32 %v6992, %v6265
        %v6995 = vmax.f32 %v6993, %v6269
        %v6996 = vmax.f32 %v6994, %v6275
        %v6997 = vmax.f32 %v6995, %v6279
        %v6998 = vmax.f32 %v6996, %v6285
        %v6999 = vmax.f32 %v6997, %v6289
        %v7000 = vmax.f32 %v6998, %v6295
        %v7001 = vmax.f32 %v6999, %v6299
        %v7002 = vmax.f32 %v7000, %v6305
        %v7003 = vmax.f32 %v7001, %v6309
        %v7004 = vmax.f32 %v7002, %v6315
        %v7005 = vmax.f32 %v7003, %v6319
        %v7006 = vmax.f32 %v7004, %v6325
        %v7007 = vmax.f32 %v7005, %v6329
        %v7008 = vmax.f32 %v7006, %v6335
        %v7009 = vmax.f32 %v7007, %v6339
        %v7010 = vmax.f32 %v7008, %v6345
        %v7011 = vmax.f32 %v7009, %v6349
        %v7012 = vmax.f32 %v7010, %v6355
        %v7013 = vmax.f32 %v7011, %v6359
        %v7014 = vmax.f32 %v7012, %v6365
        %v7015 = vmax.f32 %v7013, %v6369
        %v7016 = vmax.f32 %v7014, %v6375
        %v7017 = vmax.f32 %v7015, %v6379
        %v7018 = vmax.f32 %v7016, %v6385
        %v7019 = vmax.f32 %v7017, %v6389
        %v7020 = vmax.f32 %v7018, %v6395
        %v7021 = vmax.f32 %v7019, %v6399
        %v7022 = vmax.f32 %v7020, %v6405
        %v7023 = vmax.f32 %v7021, %v6409
        %v7024 = vmax.f32 %v7022, %v6415
        %v7025 = vmax.f32 %v7023, %v6419
        %v7026 = vmax.f32 %v7024, %v6425
        %v7027 = vmax.f32 %v7025, %v6429
        %v7028 = vmax.f32 %v7026, %v6435
        %v7029 = vmax.f32 %v7027, %v6439
        %v7030 = vmax.f32 %v7028, %v6445
        %v7031 = vmax.f32 %v7029, %v6449
        %v7032 = vmax.f32 %v7030, %v6455
        %v7033 = vmax.f32 %v7031, %v6459
        %v7034 = vmax.f32 %v7032, %v6465
        %v7035 = vmax.f32 %v7033, %v6469
        %v7036 = vmax.f32 %v7034, %v6475
        %v7037 = vmax.f32 %v7035, %v6479
        %v7038 = vmax.f32 %v7036, %v6485
        %v7039 = vmax.f32 %v7037, %v6489
        %v7040 = vmax.f32 %v7038, %v6495
        %v7041 = vmax.f32 %v7039, %v6499
        %v7042 = vmax.f32 %v7040, %v6505
        %v7043 = vmax.f32 %v7041, %v6509
        %v7044 = vmax.f32 %v7042, %v6515
        %v7045 = vmax.f32 %v7043, %v6519
        %v7046 = vmax.f32 %v7044, %v6525
        %v7047 = vmax.f32 %v7045, %v6529
        %v7048 = vmax.f32 %v7046, %v6535
        %v7049 = vmax.f32 %v7047, %v6539
        %v7050 = vmax.f32 %v7048, %v6545
        %v7051 = vmax.f32 %v7049, %v6549
        %v7052 = vmax.f32 %v7050, %v6555
        %v7053 = vmax.f32 %v7051, %v6559
        %v7054 = vmax.f32 %v7052, %v6565
        %v7055 = vmax.f32 %v7053, %v6569
        %v7056 = vmax.f32 %v7054, %v6575
        %v7057 = vmax.f32 %v7055, %v6579
        %v7058 = vmax.f32 %v7056, %v6585
        %v7059 = vmax.f32 %v7057, %v6589
        %v7060 = vmax.f32 %v7058, %v6595
        %v7061 = vmax.f32 %v7059, %v6599
        %v7062 = vmax.f32 %v7060, %v6605
        %v7063 = vmax.f32 %v7061, %v6609
        %v7064 = vmax.f32 %v7062, %v6615
        %v7065 = vmax.f32 %v7063, %v6619
        %v7066 = vmax.f32 %v7064, %v6625
        %v7067 = vmax.f32 %v7065, %v6629
        %v7068 = vmax.f32 %v7066, %v6635
        %v7069 = vmax.f32 %v7067, %v6639
        %v7070 = vmax.f32 %v7068, %v6645
        %v7071 = vmax.f32 %v7069, %v6649
        %v7072 = vmax.f32 %v7070, %v6655
        %v7073 = vmax.f32 %v7071, %v6659
        %v7074 = vmax.f32 %v7072, %v6665
        %v7075 = vmax.f32 %v7073, %v6669
        %v7076 = vmax.f32 %v7074, %v6675
        %v7077 = vmax.f32 %v7075, %v6679
        %v7078 = vmax.f32 %v7076, %v6685
        %v7079 = vmax.f32 %v7077, %v6689
        %v7080 = vmax.f32 %v7078, %v6695
        %v7081 = vmax.f32 %v7079, %v6699
        %v7082 = vmax.f32 %v7080, %v6705
        %v7083 = vmax.f32 %v7081, %v6709
        %v7084 = vmax.f32 %v7082, %v6715
        %v7085 = vmax.f32 %v7083, %v6719
        %v7086 = vmax.f32 %v7084, %v6725
        %v7087 = vmax.f32 %v7085, %v6729
        %v7088 = vmax.f32 %v7086, %v6735
        %v7089 = vmax.f32 %v7087, %v6739
        %v7090 = vmax.f32 %v7088, %v6745
        %v7091 = vmax.f32 %v7089, %v6749
        %v7092 = vmax.f32 %v7090, %v6755
        %v7093 = vmax.f32 %v7091, %v6759
        %v7094 = vmax.f32 %v7092, %v6765
        %v7095 = vmax.f32 %v7093, %v6769
        %v7096 = vmax.f32 %v7094, %v6775
        %v7097 = vmax.f32 %v7095, %v6779
        %v7098 = vmax.f32 %v7096, %v6785
        %v7099 = vmax.f32 %v7097, %v6789
        %v7100 = vmax.f32 %v7098, %v6795
        %v7101 = vmax.f32 %v7099, %v6799
        %v7102 = vmax.f32 %v7100, %v6805
        %v7103 = vmax.f32 %v7101, %v6809
        %v7104 = vmax.f32 %v7102, %v6815
        %v7105 = vmax.f32 %v7103, %v6819
        %v7106 = vmax.f32 %v7104, %v6825
        %v7107 = vmax.f32 %v7105, %v6829
        %v7108 = vmax.f32 %v7106, %v6835
        %v7109 = vmax.f32 %v7107, %v6839
        %v7110 = vmax.f32 %v7108, %v6845
        %v7111 = vmax.f32 %v7109, %v6849
        %v7112 = vmax.f32 %v7110, %v6855
        %v7113 = vmax.f32 %v7111, %v6859
        %v7114 = vmax.f32 %v7112, %v7113
        %v7115 = vld [vmem:[#allocation2 + $0x20] sm:$0xff]
        %v7116 = vld [vmem:[#allocation2 + $0x28] sm:$0xff]
        %v7117 = vmax.f32 %v7115, %v6987
        %v7118 = vmax.f32 %v7116, %v7114
        %7119 = vst [vmem:[#allocation2 + $0x20] sm:$0xff] %v7117
        %7120 = vst [vmem:[#allocation2 + $0x28] sm:$0xff] %v7118
        %v7121 = vld [vmem:[%s5 + $0x18] sm:$0xff]
        %v7122 = vld [vmem:[%s5 + $0x38] sm:$0xff]
        %v7123 = vld [vmem:[%s5 + $0x58] sm:$0xff]
        %v7124 = vld [vmem:[%s5 + $0x78] sm:$0xff]
        %v7125 = vld [vmem:[%s5 + $0x98] sm:$0xff]
        %v7126 = vld [vmem:[%s5 + $0xb8] sm:$0xff]
        %v7127 = vld [vmem:[%s5 + $0xd8] sm:$0xff]
        %v7128 = vld [vmem:[%s5 + $0xf8] sm:$0xff]
        %v7129 = vld [vmem:[%s5 + $0x118] sm:$0xff]
        %v7130 = vld [vmem:[%s5 + $0x138] sm:$0xff]
        %v7131 = vld [vmem:[%s5 + $0x158] sm:$0xff]
        %v7132 = vld [vmem:[%s5 + $0x178] sm:$0xff]
        %v7133 = vld [vmem:[%s5 + $0x198] sm:$0xff]
        %v7134 = vld [vmem:[%s5 + $0x1b8] sm:$0xff]
        %v7135 = vld [vmem:[%s5 + $0x1d8] sm:$0xff]
        %v7136 = vld [vmem:[%s5 + $0x1f8] sm:$0xff]
        %v7153 = vunpack.c.l.b16 %v7121
        %v7154 = vunpack.c.h.b16 %v7121
        %v7155 = vunpack.c.l.b16 %v7122
        %v7156 = vunpack.c.h.b16 %v7122
        %v7157 = vunpack.c.l.b16 %v7123
        %v7158 = vunpack.c.h.b16 %v7123
        %v7159 = vunpack.c.l.b16 %v7124
        %v7160 = vunpack.c.h.b16 %v7124
        %v7161 = vunpack.c.l.b16 %v7125
        %v7162 = vunpack.c.h.b16 %v7125
        %v7163 = vunpack.c.l.b16 %v7126
        %v7164 = vunpack.c.h.b16 %v7126
        %v7165 = vunpack.c.l.b16 %v7127
        %v7166 = vunpack.c.h.b16 %v7127
        %v7167 = vunpack.c.l.b16 %v7128
        %v7168 = vunpack.c.h.b16 %v7128
        %v7169 = vunpack.c.l.b16 %v7129
        %v7170 = vunpack.c.h.b16 %v7129
        %v7171 = vunpack.c.l.b16 %v7130
        %v7172 = vunpack.c.h.b16 %v7130
        %v7173 = vunpack.c.l.b16 %v7131
        %v7174 = vunpack.c.h.b16 %v7131
        %v7175 = vunpack.c.l.b16 %v7132
        %v7176 = vunpack.c.h.b16 %v7132
        %v7177 = vunpack.c.l.b16 %v7133
        %v7178 = vunpack.c.h.b16 %v7133
        %v7179 = vunpack.c.l.b16 %v7134
        %v7180 = vunpack.c.h.b16 %v7134
        %v7181 = vunpack.c.l.b16 %v7135
        %v7182 = vunpack.c.h.b16 %v7135
        %v7183 = vunpack.c.l.b16 %v7136
        %v7184 = vunpack.c.h.b16 %v7136
        %v7185 = vpack.c.b16 %v7155, %v7153
        %v7186 = vpack.c.b16 %v7156, %v7154
        %v7187 = vpack.c.b16 %v7159, %v7157
        %v7188 = vpack.c.b16 %v7160, %v7158
        %v7189 = vpack.c.b16 %v7163, %v7161
        %v7190 = vpack.c.b16 %v7164, %v7162
        %v7191 = vpack.c.b16 %v7167, %v7165
        %v7192 = vpack.c.b16 %v7168, %v7166
        %v7193 = vpack.c.b16 %v7171, %v7169
        %v7194 = vpack.c.b16 %v7172, %v7170
        %v7195 = vpack.c.b16 %v7175, %v7173
        %v7196 = vpack.c.b16 %v7176, %v7174
        %v7197 = vpack.c.b16 %v7179, %v7177
        %v7198 = vpack.c.b16 %v7180, %v7178
        %v7199 = vpack.c.b16 %v7183, %v7181
        %v7200 = vpack.c.b16 %v7184, %v7182
        %7217 = vmatprep.subr.bf16.mxu0 %v7200
        %7218 = vmatpush1.bf16.msra.mxu0 %v7199
        %7219 = vmatprep.subr.bf16.mxu0 %v7198
        %7220 = vmatpush1.bf16.msra.mxu0 %v7197
        %7221 = vmatprep.subr.bf16.mxu0 %v7196
        %7222 = vmatpush1.bf16.msra.mxu0 %v7195
        %7223 = vmatprep.subr.bf16.mxu0 %v7194
        %7224 = vmatpush1.bf16.msra.mxu0 %v7193
        %7225 = vmatprep.subr.bf16.mxu0 %v7192
        %7226 = vmatpush1.bf16.msra.mxu0 %v7191
        %7227 = vmatprep.subr.bf16.mxu0 %v7190
        %7228 = vmatpush1.bf16.msra.mxu0 %v7189
        %7229 = vmatprep.subr.bf16.mxu0 %v7188
        %7230 = vmatpush1.bf16.msra.mxu0 %v7187
        %7231 = vmatprep.subr.bf16.mxu0 %v7186
        %7232 = vmatpush1.bf16.msra.mxu0 %v7185
        %7233 = vmatprep.subr.bf16.mxu0 0
        %7234 = vmatpush2.bf16.msra.mxu0 0
        %7235 = vmatprep.subr.bf16.mxu0 0
        %7236 = vmatpush2.bf16.msra.mxu0 0
        %7237 = vmatprep.subr.bf16.mxu0 0
        %7238 = vmatpush2.bf16.msra.mxu0 0
        %7239 = vmatprep.subr.bf16.mxu0 0
        %7240 = vmatpush2.bf16.msra.mxu0 0
        %7241 = vmatprep.subr.bf16.mxu0 0
        %7242 = vmatpush2.bf16.msra.mxu0 0
        %7243 = vmatprep.subr.bf16.mxu0 0
        %7244 = vmatpush2.bf16.msra.mxu0 0
        %7245 = vmatprep.subr.bf16.mxu0 0
        %7246 = vmatpush2.bf16.msra.mxu0 0
        %7247 = vmatprep.subr.bf16.mxu0 0
        %7248 = vmatpush2.bf16.msra.mxu0 0
        %7249 = vmatprep.mubr.bf16.mxu0 0
        %7250 = vmatmul.mubr.bf16.gmra.mxu0 %v3970
        %v7251 = vpop.f32.mrf.mxu0
        %v7252 = vadd.f32 0.0, %v7251
        %v7253 = vpop.f32.mrf.mxu0
        %v7254 = vadd.f32 0.0, %v7253
        %v7255 = vpop.f32.mrf.mxu0
        %v7256 = vadd.f32 0.0, %v7255
        %v7257 = vpop.f32.mrf.mxu0
        %v7258 = vadd.f32 0.0, %v7257
        %7259 = vmatprep.mubr.bf16.mxu0 0
        %7260 = vmatmul.mubr.bf16.gmra.mxu0 %v3971
        %v7261 = vpop.f32.mrf.mxu0
        %v7262 = vadd.f32 0.0, %v7261
        %v7263 = vpop.f32.mrf.mxu0
        %v7264 = vadd.f32 0.0, %v7263
        %v7265 = vpop.f32.mrf.mxu0
        %v7266 = vadd.f32 0.0, %v7265
        %v7267 = vpop.f32.mrf.mxu0
        %v7268 = vadd.f32 0.0, %v7267
        %7269 = vmatprep.mubr.bf16.mxu0 0
        %7270 = vmatmul.mubr.bf16.gmra.mxu0 %v3972
        %v7271 = vpop.f32.mrf.mxu0
        %v7272 = vadd.f32 0.0, %v7271
        %v7273 = vpop.f32.mrf.mxu0
        %v7274 = vadd.f32 0.0, %v7273
        %v7275 = vpop.f32.mrf.mxu0
        %v7276 = vadd.f32 0.0, %v7275
        %v7277 = vpop.f32.mrf.mxu0
        %v7278 = vadd.f32 0.0, %v7277
        %7279 = vmatprep.mubr.bf16.mxu0 0
        %7280 = vmatmul.mubr.bf16.gmra.mxu0 %v3973
        %v7281 = vpop.f32.mrf.mxu0
        %v7282 = vadd.f32 0.0, %v7281
        %v7283 = vpop.f32.mrf.mxu0
        %v7284 = vadd.f32 0.0, %v7283
        %v7285 = vpop.f32.mrf.mxu0
        %v7286 = vadd.f32 0.0, %v7285
        %v7287 = vpop.f32.mrf.mxu0
        %v7288 = vadd.f32 0.0, %v7287
        %7289 = vmatprep.mubr.bf16.mxu0 0
        %7290 = vmatmul.mubr.bf16.gmra.mxu0 %v3974
        %v7291 = vpop.f32.mrf.mxu0
        %v7292 = vadd.f32 0.0, %v7291
        %v7293 = vpop.f32.mrf.mxu0
        %v7294 = vadd.f32 0.0, %v7293
        %v7295 = vpop.f32.mrf.mxu0
        %v7296 = vadd.f32 0.0, %v7295
        %v7297 = vpop.f32.mrf.mxu0
        %v7298 = vadd.f32 0.0, %v7297
        %7299 = vmatprep.mubr.bf16.mxu0 0
        %7300 = vmatmul.mubr.bf16.gmra.mxu0 %v3975
        %v7301 = vpop.f32.mrf.mxu0
        %v7302 = vadd.f32 0.0, %v7301
        %v7303 = vpop.f32.mrf.mxu0
        %v7304 = vadd.f32 0.0, %v7303
        %v7305 = vpop.f32.mrf.mxu0
        %v7306 = vadd.f32 0.0, %v7305
        %v7307 = vpop.f32.mrf.mxu0
        %v7308 = vadd.f32 0.0, %v7307
        %7309 = vmatprep.mubr.bf16.mxu0 0
        %7310 = vmatmul.mubr.bf16.gmra.mxu0 %v3976
        %v7311 = vpop.f32.mrf.mxu0
        %v7312 = vadd.f32 0.0, %v7311
        %v7313 = vpop.f32.mrf.mxu0
        %v7314 = vadd.f32 0.0, %v7313
        %v7315 = vpop.f32.mrf.mxu0
        %v7316 = vadd.f32 0.0, %v7315
        %v7317 = vpop.f32.mrf.mxu0
        %v7318 = vadd.f32 0.0, %v7317
        %7319 = vmatprep.mubr.bf16.mxu0 0
        %7320 = vmatmul.mubr.bf16.gmra.mxu0 %v3977
        %v7321 = vpop.f32.mrf.mxu0
        %v7322 = vadd.f32 0.0, %v7321
        %v7323 = vpop.f32.mrf.mxu0
        %v7324 = vadd.f32 0.0, %v7323
        %v7325 = vpop.f32.mrf.mxu0
        %v7326 = vadd.f32 0.0, %v7325
        %v7327 = vpop.f32.mrf.mxu0
        %v7328 = vadd.f32 0.0, %v7327
        %7329 = vmatprep.mubr.bf16.mxu0 0
        %7330 = vmatmul.mubr.bf16.gmra.mxu0 %v3978
        %v7331 = vpop.f32.mrf.mxu0
        %v7332 = vadd.f32 0.0, %v7331
        %v7333 = vpop.f32.mrf.mxu0
        %v7334 = vadd.f32 0.0, %v7333
        %v7335 = vpop.f32.mrf.mxu0
        %v7336 = vadd.f32 0.0, %v7335
        %v7337 = vpop.f32.mrf.mxu0
        %v7338 = vadd.f32 0.0, %v7337
        %7339 = vmatprep.mubr.bf16.mxu0 0
        %7340 = vmatmul.mubr.bf16.gmra.mxu0 %v3979
        %v7341 = vpop.f32.mrf.mxu0
        %v7342 = vadd.f32 0.0, %v7341
        %v7343 = vpop.f32.mrf.mxu0
        %v7344 = vadd.f32 0.0, %v7343
        %v7345 = vpop.f32.mrf.mxu0
        %v7346 = vadd.f32 0.0, %v7345
        %v7347 = vpop.f32.mrf.mxu0
        %v7348 = vadd.f32 0.0, %v7347
        %7349 = vmatprep.mubr.bf16.mxu0 0
        %7350 = vmatmul.mubr.bf16.gmra.mxu0 %v3980
        %v7351 = vpop.f32.mrf.mxu0
        %v7352 = vadd.f32 0.0, %v7351
        %v7353 = vpop.f32.mrf.mxu0
        %v7354 = vadd.f32 0.0, %v7353
        %v7355 = vpop.f32.mrf.mxu0
        %v7356 = vadd.f32 0.0, %v7355
        %v7357 = vpop.f32.mrf.mxu0
        %v7358 = vadd.f32 0.0, %v7357
        %7359 = vmatprep.mubr.bf16.mxu0 0
        %7360 = vmatmul.mubr.bf16.gmra.mxu0 %v3981
        %v7361 = vpop.f32.mrf.mxu0
        %v7362 = vadd.f32 0.0, %v7361
        %v7363 = vpop.f32.mrf.mxu0
        %v7364 = vadd.f32 0.0, %v7363
        %v7365 = vpop.f32.mrf.mxu0
        %v7366 = vadd.f32 0.0, %v7365
        %v7367 = vpop.f32.mrf.mxu0
        %v7368 = vadd.f32 0.0, %v7367
        %7369 = vmatprep.mubr.bf16.mxu0 0
        %7370 = vmatmul.mubr.bf16.gmra.mxu0 %v3982
        %v7371 = vpop.f32.mrf.mxu0
        %v7372 = vadd.f32 0.0, %v7371
        %v7373 = vpop.f32.mrf.mxu0
        %v7374 = vadd.f32 0.0, %v7373
        %v7375 = vpop.f32.mrf.mxu0
        %v7376 = vadd.f32 0.0, %v7375
        %v7377 = vpop.f32.mrf.mxu0
        %v7378 = vadd.f32 0.0, %v7377
        %7379 = vmatprep.mubr.bf16.mxu0 0
        %7380 = vmatmul.mubr.bf16.gmra.mxu0 %v3983
        %v7381 = vpop.f32.mrf.mxu0
        %v7382 = vadd.f32 0.0, %v7381
        %v7383 = vpop.f32.mrf.mxu0
        %v7384 = vadd.f32 0.0, %v7383
        %v7385 = vpop.f32.mrf.mxu0
        %v7386 = vadd.f32 0.0, %v7385
        %v7387 = vpop.f32.mrf.mxu0
        %v7388 = vadd.f32 0.0, %v7387
        %7389 = vmatprep.mubr.bf16.mxu0 0
        %7390 = vmatmul.mubr.bf16.gmra.mxu0 %v3984
        %v7391 = vpop.f32.mrf.mxu0
        %v7392 = vadd.f32 0.0, %v7391
        %v7393 = vpop.f32.mrf.mxu0
        %v7394 = vadd.f32 0.0, %v7393
        %v7395 = vpop.f32.mrf.mxu0
        %v7396 = vadd.f32 0.0, %v7395
        %v7397 = vpop.f32.mrf.mxu0
        %v7398 = vadd.f32 0.0, %v7397
        %7399 = vmatprep.mubr.bf16.mxu0 0
        %7400 = vmatmul.mubr.bf16.gmra.mxu0 %v3985
        %v7401 = vpop.f32.mrf.mxu0
        %v7402 = vadd.f32 0.0, %v7401
        %v7403 = vpop.f32.mrf.mxu0
        %v7404 = vadd.f32 0.0, %v7403
        %v7405 = vpop.f32.mrf.mxu0
        %v7406 = vadd.f32 0.0, %v7405
        %v7407 = vpop.f32.mrf.mxu0
        %v7408 = vadd.f32 0.0, %v7407
        %7409 = vmatprep.mubr.bf16.mxu0 0
        %7410 = vmatmul.mubr.bf16.gmra.mxu0 %v3986
        %v7411 = vpop.f32.mrf.mxu0
        %v7412 = vadd.f32 0.0, %v7411
        %v7413 = vpop.f32.mrf.mxu0
        %v7414 = vadd.f32 0.0, %v7413
        %v7415 = vpop.f32.mrf.mxu0
        %v7416 = vadd.f32 0.0, %v7415
        %v7417 = vpop.f32.mrf.mxu0
        %v7418 = vadd.f32 0.0, %v7417
        %7419 = vmatprep.mubr.bf16.mxu0 0
        %7420 = vmatmul.mubr.bf16.gmra.mxu0 %v3987
        %v7421 = vpop.f32.mrf.mxu0
        %v7422 = vadd.f32 0.0, %v7421
        %v7423 = vpop.f32.mrf.mxu0
        %v7424 = vadd.f32 0.0, %v7423
        %v7425 = vpop.f32.mrf.mxu0
        %v7426 = vadd.f32 0.0, %v7425
        %v7427 = vpop.f32.mrf.mxu0
        %v7428 = vadd.f32 0.0, %v7427
        %7429 = vmatprep.mubr.bf16.mxu0 0
        %7430 = vmatmul.mubr.bf16.gmra.mxu0 %v3988
        %v7431 = vpop.f32.mrf.mxu0
        %v7432 = vadd.f32 0.0, %v7431
        %v7433 = vpop.f32.mrf.mxu0
        %v7434 = vadd.f32 0.0, %v7433
        %v7435 = vpop.f32.mrf.mxu0
        %v7436 = vadd.f32 0.0, %v7435
        %v7437 = vpop.f32.mrf.mxu0
        %v7438 = vadd.f32 0.0, %v7437
        %7439 = vmatprep.mubr.bf16.mxu0 0
        %7440 = vmatmul.mubr.bf16.gmra.mxu0 %v3989
        %v7441 = vpop.f32.mrf.mxu0
        %v7442 = vadd.f32 0.0, %v7441
        %v7443 = vpop.f32.mrf.mxu0
        %v7444 = vadd.f32 0.0, %v7443
        %v7445 = vpop.f32.mrf.mxu0
        %v7446 = vadd.f32 0.0, %v7445
        %v7447 = vpop.f32.mrf.mxu0
        %v7448 = vadd.f32 0.0, %v7447
        %7449 = vmatprep.mubr.bf16.mxu0 0
        %7450 = vmatmul.mubr.bf16.gmra.mxu0 %v3990
        %v7451 = vpop.f32.mrf.mxu0
        %v7452 = vadd.f32 0.0, %v7451
        %v7453 = vpop.f32.mrf.mxu0
        %v7454 = vadd.f32 0.0, %v7453
        %v7455 = vpop.f32.mrf.mxu0
        %v7456 = vadd.f32 0.0, %v7455
        %v7457 = vpop.f32.mrf.mxu0
        %v7458 = vadd.f32 0.0, %v7457
        %7459 = vmatprep.mubr.bf16.mxu0 0
        %7460 = vmatmul.mubr.bf16.gmra.mxu0 %v3991
        %v7461 = vpop.f32.mrf.mxu0
        %v7462 = vadd.f32 0.0, %v7461
        %v7463 = vpop.f32.mrf.mxu0
        %v7464 = vadd.f32 0.0, %v7463
        %v7465 = vpop.f32.mrf.mxu0
        %v7466 = vadd.f32 0.0, %v7465
        %v7467 = vpop.f32.mrf.mxu0
        %v7468 = vadd.f32 0.0, %v7467
        %7469 = vmatprep.mubr.bf16.mxu0 0
        %7470 = vmatmul.mubr.bf16.gmra.mxu0 %v3992
        %v7471 = vpop.f32.mrf.mxu0
        %v7472 = vadd.f32 0.0, %v7471
        %v7473 = vpop.f32.mrf.mxu0
        %v7474 = vadd.f32 0.0, %v7473
        %v7475 = vpop.f32.mrf.mxu0
        %v7476 = vadd.f32 0.0, %v7475
        %v7477 = vpop.f32.mrf.mxu0
        %v7478 = vadd.f32 0.0, %v7477
        %7479 = vmatprep.mubr.bf16.mxu0 0
        %7480 = vmatmul.mubr.bf16.gmra.mxu0 %v3993
        %v7481 = vpop.f32.mrf.mxu0
        %v7482 = vadd.f32 0.0, %v7481
        %v7483 = vpop.f32.mrf.mxu0
        %v7484 = vadd.f32 0.0, %v7483
        %v7485 = vpop.f32.mrf.mxu0
        %v7486 = vadd.f32 0.0, %v7485
        %v7487 = vpop.f32.mrf.mxu0
        %v7488 = vadd.f32 0.0, %v7487
        %7489 = vmatprep.mubr.bf16.mxu0 0
        %7490 = vmatmul.mubr.bf16.gmra.mxu0 %v3994
        %v7491 = vpop.f32.mrf.mxu0
        %v7492 = vadd.f32 0.0, %v7491
        %v7493 = vpop.f32.mrf.mxu0
        %v7494 = vadd.f32 0.0, %v7493
        %v7495 = vpop.f32.mrf.mxu0
        %v7496 = vadd.f32 0.0, %v7495
        %v7497 = vpop.f32.mrf.mxu0
        %v7498 = vadd.f32 0.0, %v7497
        %7499 = vmatprep.mubr.bf16.mxu0 0
        %7500 = vmatmul.mubr.bf16.gmra.mxu0 %v3995
        %v7501 = vpop.f32.mrf.mxu0
        %v7502 = vadd.f32 0.0, %v7501
        %v7503 = vpop.f32.mrf.mxu0
        %v7504 = vadd.f32 0.0, %v7503
        %v7505 = vpop.f32.mrf.mxu0
        %v7506 = vadd.f32 0.0, %v7505
        %v7507 = vpop.f32.mrf.mxu0
        %v7508 = vadd.f32 0.0, %v7507
        %7509 = vmatprep.mubr.bf16.mxu0 0
        %7510 = vmatmul.mubr.bf16.gmra.mxu0 %v3996
        %v7511 = vpop.f32.mrf.mxu0
        %v7512 = vadd.f32 0.0, %v7511
        %v7513 = vpop.f32.mrf.mxu0
        %v7514 = vadd.f32 0.0, %v7513
        %v7515 = vpop.f32.mrf.mxu0
        %v7516 = vadd.f32 0.0, %v7515
        %v7517 = vpop.f32.mrf.mxu0
        %v7518 = vadd.f32 0.0, %v7517
        %7519 = vmatprep.mubr.bf16.mxu0 0
        %7520 = vmatmul.mubr.bf16.gmra.mxu0 %v3997
        %v7521 = vpop.f32.mrf.mxu0
        %v7522 = vadd.f32 0.0, %v7521
        %v7523 = vpop.f32.mrf.mxu0
        %v7524 = vadd.f32 0.0, %v7523
        %v7525 = vpop.f32.mrf.mxu0
        %v7526 = vadd.f32 0.0, %v7525
        %v7527 = vpop.f32.mrf.mxu0
        %v7528 = vadd.f32 0.0, %v7527
        %7529 = vmatprep.mubr.bf16.mxu0 0
        %7530 = vmatmul.mubr.bf16.gmra.mxu0 %v3998
        %v7531 = vpop.f32.mrf.mxu0
        %v7532 = vadd.f32 0.0, %v7531
        %v7533 = vpop.f32.mrf.mxu0
        %v7534 = vadd.f32 0.0, %v7533
        %v7535 = vpop.f32.mrf.mxu0
        %v7536 = vadd.f32 0.0, %v7535
        %v7537 = vpop.f32.mrf.mxu0
        %v7538 = vadd.f32 0.0, %v7537
        %7539 = vmatprep.mubr.bf16.mxu0 0
        %7540 = vmatmul.mubr.bf16.gmra.mxu0 %v3999
        %v7541 = vpop.f32.mrf.mxu0
        %v7542 = vadd.f32 0.0, %v7541
        %v7543 = vpop.f32.mrf.mxu0
        %v7544 = vadd.f32 0.0, %v7543
        %v7545 = vpop.f32.mrf.mxu0
        %v7546 = vadd.f32 0.0, %v7545
        %v7547 = vpop.f32.mrf.mxu0
        %v7548 = vadd.f32 0.0, %v7547
        %7549 = vmatprep.mubr.bf16.mxu0 0
        %7550 = vmatmul.mubr.bf16.gmra.mxu0 %v4000
        %v7551 = vpop.f32.mrf.mxu0
        %v7552 = vadd.f32 0.0, %v7551
        %v7553 = vpop.f32.mrf.mxu0
        %v7554 = vadd.f32 0.0, %v7553
        %v7555 = vpop.f32.mrf.mxu0
        %v7556 = vadd.f32 0.0, %v7555
        %v7557 = vpop.f32.mrf.mxu0
        %v7558 = vadd.f32 0.0, %v7557
        %7559 = vmatprep.mubr.bf16.mxu0 0
        %7560 = vmatmul.mubr.bf16.gmra.mxu0 %v4001
        %v7561 = vpop.f32.mrf.mxu0
        %v7562 = vadd.f32 0.0, %v7561
        %v7563 = vpop.f32.mrf.mxu0
        %v7564 = vadd.f32 0.0, %v7563
        %v7565 = vpop.f32.mrf.mxu0
        %v7566 = vadd.f32 0.0, %v7565
        %v7567 = vpop.f32.mrf.mxu0
        %v7568 = vadd.f32 0.0, %v7567
        %7569 = vmatprep.mubr.bf16.mxu0 0
        %7570 = vmatmul.mubr.bf16.gmra.mxu0 %v4002
        %v7571 = vpop.f32.mrf.mxu0
        %v7572 = vadd.f32 0.0, %v7571
        %v7573 = vpop.f32.mrf.mxu0
        %v7574 = vadd.f32 0.0, %v7573
        %v7575 = vpop.f32.mrf.mxu0
        %v7576 = vadd.f32 0.0, %v7575
        %v7577 = vpop.f32.mrf.mxu0
        %v7578 = vadd.f32 0.0, %v7577
        %7579 = vmatprep.mubr.bf16.mxu0 0
        %7580 = vmatmul.mubr.bf16.gmra.mxu0 %v4003
        %v7581 = vpop.f32.mrf.mxu0
        %v7582 = vadd.f32 0.0, %v7581
        %v7583 = vpop.f32.mrf.mxu0
        %v7584 = vadd.f32 0.0, %v7583
        %v7585 = vpop.f32.mrf.mxu0
        %v7586 = vadd.f32 0.0, %v7585
        %v7587 = vpop.f32.mrf.mxu0
        %v7588 = vadd.f32 0.0, %v7587
        %7589 = vmatprep.mubr.bf16.mxu0 0
        %7590 = vmatmul.mubr.bf16.gmra.mxu0 %v4004
        %v7591 = vpop.f32.mrf.mxu0
        %v7592 = vadd.f32 0.0, %v7591
        %v7593 = vpop.f32.mrf.mxu0
        %v7594 = vadd.f32 0.0, %v7593
        %v7595 = vpop.f32.mrf.mxu0
        %v7596 = vadd.f32 0.0, %v7595
        %v7597 = vpop.f32.mrf.mxu0
        %v7598 = vadd.f32 0.0, %v7597
        %7599 = vmatprep.mubr.bf16.mxu0 0
        %7600 = vmatmul.mubr.bf16.gmra.mxu0 %v4005
        %v7601 = vpop.f32.mrf.mxu0
        %v7602 = vadd.f32 0.0, %v7601
        %v7603 = vpop.f32.mrf.mxu0
        %v7604 = vadd.f32 0.0, %v7603
        %v7605 = vpop.f32.mrf.mxu0
        %v7606 = vadd.f32 0.0, %v7605
        %v7607 = vpop.f32.mrf.mxu0
        %v7608 = vadd.f32 0.0, %v7607
        %7609 = vmatprep.mubr.bf16.mxu0 0
        %7610 = vmatmul.mubr.bf16.gmra.mxu0 %v4006
        %v7611 = vpop.f32.mrf.mxu0
        %v7612 = vadd.f32 0.0, %v7611
        %v7613 = vpop.f32.mrf.mxu0
        %v7614 = vadd.f32 0.0, %v7613
        %v7615 = vpop.f32.mrf.mxu0
        %v7616 = vadd.f32 0.0, %v7615
        %v7617 = vpop.f32.mrf.mxu0
        %v7618 = vadd.f32 0.0, %v7617
        %7619 = vmatprep.mubr.bf16.mxu0 0
        %7620 = vmatmul.mubr.bf16.gmra.mxu0 %v4007
        %v7621 = vpop.f32.mrf.mxu0
        %v7622 = vadd.f32 0.0, %v7621
        %v7623 = vpop.f32.mrf.mxu0
        %v7624 = vadd.f32 0.0, %v7623
        %v7625 = vpop.f32.mrf.mxu0
        %v7626 = vadd.f32 0.0, %v7625
        %v7627 = vpop.f32.mrf.mxu0
        %v7628 = vadd.f32 0.0, %v7627
        %7629 = vmatprep.mubr.bf16.mxu0 0
        %7630 = vmatmul.mubr.bf16.gmra.mxu0 %v4008
        %v7631 = vpop.f32.mrf.mxu0
        %v7632 = vadd.f32 0.0, %v7631
        %v7633 = vpop.f32.mrf.mxu0
        %v7634 = vadd.f32 0.0, %v7633
        %v7635 = vpop.f32.mrf.mxu0
        %v7636 = vadd.f32 0.0, %v7635
        %v7637 = vpop.f32.mrf.mxu0
        %v7638 = vadd.f32 0.0, %v7637
        %7639 = vmatprep.mubr.bf16.mxu0 0
        %7640 = vmatmul.mubr.bf16.gmra.mxu0 %v4009
        %v7641 = vpop.f32.mrf.mxu0
        %v7642 = vadd.f32 0.0, %v7641
        %v7643 = vpop.f32.mrf.mxu0
        %v7644 = vadd.f32 0.0, %v7643
        %v7645 = vpop.f32.mrf.mxu0
        %v7646 = vadd.f32 0.0, %v7645
        %v7647 = vpop.f32.mrf.mxu0
        %v7648 = vadd.f32 0.0, %v7647
        %7649 = vmatprep.mubr.bf16.mxu0 0
        %7650 = vmatmul.mubr.bf16.gmra.mxu0 %v4010
        %v7651 = vpop.f32.mrf.mxu0
        %v7652 = vadd.f32 0.0, %v7651
        %v7653 = vpop.f32.mrf.mxu0
        %v7654 = vadd.f32 0.0, %v7653
        %v7655 = vpop.f32.mrf.mxu0
        %v7656 = vadd.f32 0.0, %v7655
        %v7657 = vpop.f32.mrf.mxu0
        %v7658 = vadd.f32 0.0, %v7657
        %7659 = vmatprep.mubr.bf16.mxu0 0
        %7660 = vmatmul.mubr.bf16.gmra.mxu0 %v4011
        %v7661 = vpop.f32.mrf.mxu0
        %v7662 = vadd.f32 0.0, %v7661
        %v7663 = vpop.f32.mrf.mxu0
        %v7664 = vadd.f32 0.0, %v7663
        %v7665 = vpop.f32.mrf.mxu0
        %v7666 = vadd.f32 0.0, %v7665
        %v7667 = vpop.f32.mrf.mxu0
        %v7668 = vadd.f32 0.0, %v7667
        %7669 = vmatprep.mubr.bf16.mxu0 0
        %7670 = vmatmul.mubr.bf16.gmra.mxu0 %v4012
        %v7671 = vpop.f32.mrf.mxu0
        %v7672 = vadd.f32 0.0, %v7671
        %v7673 = vpop.f32.mrf.mxu0
        %v7674 = vadd.f32 0.0, %v7673
        %v7675 = vpop.f32.mrf.mxu0
        %v7676 = vadd.f32 0.0, %v7675
        %v7677 = vpop.f32.mrf.mxu0
        %v7678 = vadd.f32 0.0, %v7677
        %7679 = vmatprep.mubr.bf16.mxu0 0
        %7680 = vmatmul.mubr.bf16.gmra.mxu0 %v4013
        %v7681 = vpop.f32.mrf.mxu0
        %v7682 = vadd.f32 0.0, %v7681
        %v7683 = vpop.f32.mrf.mxu0
        %v7684 = vadd.f32 0.0, %v7683
        %v7685 = vpop.f32.mrf.mxu0
        %v7686 = vadd.f32 0.0, %v7685
        %v7687 = vpop.f32.mrf.mxu0
        %v7688 = vadd.f32 0.0, %v7687
        %7689 = vmatprep.mubr.bf16.mxu0 0
        %7690 = vmatmul.mubr.bf16.gmra.mxu0 %v4014
        %v7691 = vpop.f32.mrf.mxu0
        %v7692 = vadd.f32 0.0, %v7691
        %v7693 = vpop.f32.mrf.mxu0
        %v7694 = vadd.f32 0.0, %v7693
        %v7695 = vpop.f32.mrf.mxu0
        %v7696 = vadd.f32 0.0, %v7695
        %v7697 = vpop.f32.mrf.mxu0
        %v7698 = vadd.f32 0.0, %v7697
        %7699 = vmatprep.mubr.bf16.mxu0 0
        %7700 = vmatmul.mubr.bf16.gmra.mxu0 %v4015
        %v7701 = vpop.f32.mrf.mxu0
        %v7702 = vadd.f32 0.0, %v7701
        %v7703 = vpop.f32.mrf.mxu0
        %v7704 = vadd.f32 0.0, %v7703
        %v7705 = vpop.f32.mrf.mxu0
        %v7706 = vadd.f32 0.0, %v7705
        %v7707 = vpop.f32.mrf.mxu0
        %v7708 = vadd.f32 0.0, %v7707
        %7709 = vmatprep.mubr.bf16.mxu0 0
        %7710 = vmatmul.mubr.bf16.gmra.mxu0 %v4016
        %v7711 = vpop.f32.mrf.mxu0
        %v7712 = vadd.f32 0.0, %v7711
        %v7713 = vpop.f32.mrf.mxu0
        %v7714 = vadd.f32 0.0, %v7713
        %v7715 = vpop.f32.mrf.mxu0
        %v7716 = vadd.f32 0.0, %v7715
        %v7717 = vpop.f32.mrf.mxu0
        %v7718 = vadd.f32 0.0, %v7717
        %7719 = vmatprep.mubr.bf16.mxu0 0
        %7720 = vmatmul.mubr.bf16.gmra.mxu0 %v4017
        %v7721 = vpop.f32.mrf.mxu0
        %v7722 = vadd.f32 0.0, %v7721
        %v7723 = vpop.f32.mrf.mxu0
        %v7724 = vadd.f32 0.0, %v7723
        %v7725 = vpop.f32.mrf.mxu0
        %v7726 = vadd.f32 0.0, %v7725
        %v7727 = vpop.f32.mrf.mxu0
        %v7728 = vadd.f32 0.0, %v7727
        %7729 = vmatprep.mubr.bf16.mxu0 0
        %7730 = vmatmul.mubr.bf16.gmra.mxu0 %v4018
        %v7731 = vpop.f32.mrf.mxu0
        %v7732 = vadd.f32 0.0, %v7731
        %v7733 = vpop.f32.mrf.mxu0
        %v7734 = vadd.f32 0.0, %v7733
        %v7735 = vpop.f32.mrf.mxu0
        %v7736 = vadd.f32 0.0, %v7735
        %v7737 = vpop.f32.mrf.mxu0
        %v7738 = vadd.f32 0.0, %v7737
        %7739 = vmatprep.mubr.bf16.mxu0 0
        %7740 = vmatmul.mubr.bf16.gmra.mxu0 %v4019
        %v7741 = vpop.f32.mrf.mxu0
        %v7742 = vadd.f32 0.0, %v7741
        %v7743 = vpop.f32.mrf.mxu0
        %v7744 = vadd.f32 0.0, %v7743
        %v7745 = vpop.f32.mrf.mxu0
        %v7746 = vadd.f32 0.0, %v7745
        %v7747 = vpop.f32.mrf.mxu0
        %v7748 = vadd.f32 0.0, %v7747
        %7749 = vmatprep.mubr.bf16.mxu0 0
        %7750 = vmatmul.mubr.bf16.gmra.mxu0 %v4020
        %v7751 = vpop.f32.mrf.mxu0
        %v7752 = vadd.f32 0.0, %v7751
        %v7753 = vpop.f32.mrf.mxu0
        %v7754 = vadd.f32 0.0, %v7753
        %v7755 = vpop.f32.mrf.mxu0
        %v7756 = vadd.f32 0.0, %v7755
        %v7757 = vpop.f32.mrf.mxu0
        %v7758 = vadd.f32 0.0, %v7757
        %7759 = vmatprep.mubr.bf16.mxu0 0
        %7760 = vmatmul.mubr.bf16.gmra.mxu0 %v4021
        %v7761 = vpop.f32.mrf.mxu0
        %v7762 = vadd.f32 0.0, %v7761
        %v7763 = vpop.f32.mrf.mxu0
        %v7764 = vadd.f32 0.0, %v7763
        %v7765 = vpop.f32.mrf.mxu0
        %v7766 = vadd.f32 0.0, %v7765
        %v7767 = vpop.f32.mrf.mxu0
        %v7768 = vadd.f32 0.0, %v7767
        %7769 = vmatprep.mubr.bf16.mxu0 0
        %7770 = vmatmul.mubr.bf16.gmra.mxu0 %v4022
        %v7771 = vpop.f32.mrf.mxu0
        %v7772 = vadd.f32 0.0, %v7771
        %v7773 = vpop.f32.mrf.mxu0
        %v7774 = vadd.f32 0.0, %v7773
        %v7775 = vpop.f32.mrf.mxu0
        %v7776 = vadd.f32 0.0, %v7775
        %v7777 = vpop.f32.mrf.mxu0
        %v7778 = vadd.f32 0.0, %v7777
        %7779 = vmatprep.mubr.bf16.mxu0 0
        %7780 = vmatmul.mubr.bf16.gmra.mxu0 %v4023
        %v7781 = vpop.f32.mrf.mxu0
        %v7782 = vadd.f32 0.0, %v7781
        %v7783 = vpop.f32.mrf.mxu0
        %v7784 = vadd.f32 0.0, %v7783
        %v7785 = vpop.f32.mrf.mxu0
        %v7786 = vadd.f32 0.0, %v7785
        %v7787 = vpop.f32.mrf.mxu0
        %v7788 = vadd.f32 0.0, %v7787
        %7789 = vmatprep.mubr.bf16.mxu0 0
        %7790 = vmatmul.mubr.bf16.gmra.mxu0 %v4024
        %v7791 = vpop.f32.mrf.mxu0
        %v7792 = vadd.f32 0.0, %v7791
        %v7793 = vpop.f32.mrf.mxu0
        %v7794 = vadd.f32 0.0, %v7793
        %v7795 = vpop.f32.mrf.mxu0
        %v7796 = vadd.f32 0.0, %v7795
        %v7797 = vpop.f32.mrf.mxu0
        %v7798 = vadd.f32 0.0, %v7797
        %7799 = vmatprep.mubr.bf16.mxu0 0
        %7800 = vmatmul.mubr.bf16.gmra.mxu0 %v4025
        %v7801 = vpop.f32.mrf.mxu0
        %v7802 = vadd.f32 0.0, %v7801
        %v7803 = vpop.f32.mrf.mxu0
        %v7804 = vadd.f32 0.0, %v7803
        %v7805 = vpop.f32.mrf.mxu0
        %v7806 = vadd.f32 0.0, %v7805
        %v7807 = vpop.f32.mrf.mxu0
        %v7808 = vadd.f32 0.0, %v7807
        %7809 = vmatprep.mubr.bf16.mxu0 0
        %7810 = vmatmul.mubr.bf16.gmra.mxu0 %v4026
        %v7811 = vpop.f32.mrf.mxu0
        %v7812 = vadd.f32 0.0, %v7811
        %v7813 = vpop.f32.mrf.mxu0
        %v7814 = vadd.f32 0.0, %v7813
        %v7815 = vpop.f32.mrf.mxu0
        %v7816 = vadd.f32 0.0, %v7815
        %v7817 = vpop.f32.mrf.mxu0
        %v7818 = vadd.f32 0.0, %v7817
        %7819 = vmatprep.mubr.bf16.mxu0 0
        %7820 = vmatmul.mubr.bf16.gmra.mxu0 %v4027
        %v7821 = vpop.f32.mrf.mxu0
        %v7822 = vadd.f32 0.0, %v7821
        %v7823 = vpop.f32.mrf.mxu0
        %v7824 = vadd.f32 0.0, %v7823
        %v7825 = vpop.f32.mrf.mxu0
        %v7826 = vadd.f32 0.0, %v7825
        %v7827 = vpop.f32.mrf.mxu0
        %v7828 = vadd.f32 0.0, %v7827
        %7829 = vmatprep.mubr.bf16.mxu0 0
        %7830 = vmatmul.mubr.bf16.gmra.mxu0 %v4028
        %v7831 = vpop.f32.mrf.mxu0
        %v7832 = vadd.f32 0.0, %v7831
        %v7833 = vpop.f32.mrf.mxu0
        %v7834 = vadd.f32 0.0, %v7833
        %v7835 = vpop.f32.mrf.mxu0
        %v7836 = vadd.f32 0.0, %v7835
        %v7837 = vpop.f32.mrf.mxu0
        %v7838 = vadd.f32 0.0, %v7837
        %7839 = vmatprep.mubr.bf16.mxu0 0
        %7840 = vmatmul.mubr.bf16.gmra.mxu0 %v4029
        %v7841 = vpop.f32.mrf.mxu0
        %v7842 = vadd.f32 0.0, %v7841
        %v7843 = vpop.f32.mrf.mxu0
        %v7844 = vadd.f32 0.0, %v7843
        %v7845 = vpop.f32.mrf.mxu0
        %v7846 = vadd.f32 0.0, %v7845
        %v7847 = vpop.f32.mrf.mxu0
        %v7848 = vadd.f32 0.0, %v7847
        %7849 = vmatprep.mubr.bf16.mxu0 0
        %7850 = vmatmul.mubr.bf16.gmra.mxu0 %v4030
        %v7851 = vpop.f32.mrf.mxu0
        %v7852 = vadd.f32 0.0, %v7851
        %v7853 = vpop.f32.mrf.mxu0
        %v7854 = vadd.f32 0.0, %v7853
        %v7855 = vpop.f32.mrf.mxu0
        %v7856 = vadd.f32 0.0, %v7855
        %v7857 = vpop.f32.mrf.mxu0
        %v7858 = vadd.f32 0.0, %v7857
        %7859 = vmatprep.mubr.bf16.mxu0 0
        %7860 = vmatmul.mubr.bf16.gmra.mxu0 %v4031
        %v7861 = vpop.f32.mrf.mxu0
        %v7862 = vadd.f32 0.0, %v7861
        %v7863 = vpop.f32.mrf.mxu0
        %v7864 = vadd.f32 0.0, %v7863
        %v7865 = vpop.f32.mrf.mxu0
        %v7866 = vadd.f32 0.0, %v7865
        %v7867 = vpop.f32.mrf.mxu0
        %v7868 = vadd.f32 0.0, %v7867
        %7869 = vmatprep.mubr.bf16.mxu0 0
        %7870 = vmatmul.mubr.bf16.gmra.mxu0 %v4032
        %v7871 = vpop.f32.mrf.mxu0
        %v7872 = vadd.f32 0.0, %v7871
        %v7873 = vpop.f32.mrf.mxu0
        %v7874 = vadd.f32 0.0, %v7873
        %v7875 = vpop.f32.mrf.mxu0
        %v7876 = vadd.f32 0.0, %v7875
        %v7877 = vpop.f32.mrf.mxu0
        %v7878 = vadd.f32 0.0, %v7877
        %7879 = vmatprep.mubr.bf16.mxu0 0
        %7880 = vmatmul.mubr.bf16.gmra.mxu0 %v4033
        %v7881 = vpop.f32.mrf.mxu0
        %v7882 = vadd.f32 0.0, %v7881
        %v7883 = vpop.f32.mrf.mxu0
        %v7884 = vadd.f32 0.0, %v7883
        %v7885 = vpop.f32.mrf.mxu0
        %v7886 = vadd.f32 0.0, %v7885
        %v7887 = vpop.f32.mrf.mxu0
        %v7888 = vadd.f32 0.0, %v7887
        %7889 = vdwg.mxu0
        %v7890 = vmax.f32 %v7252, %v7262
        %v7891 = vmax.f32 %v7256, %v7266
        %v7892 = vmax.f32 %v7890, %v7272
        %v7893 = vmax.f32 %v7891, %v7276
        %v7894 = vmax.f32 %v7892, %v7282
        %v7895 = vmax.f32 %v7893, %v7286
        %v7896 = vmax.f32 %v7894, %v7292
        %v7897 = vmax.f32 %v7895, %v7296
        %v7898 = vmax.f32 %v7896, %v7302
        %v7899 = vmax.f32 %v7897, %v7306
        %v7900 = vmax.f32 %v7898, %v7312
        %v7901 = vmax.f32 %v7899, %v7316
        %v7902 = vmax.f32 %v7900, %v7322
        %v7903 = vmax.f32 %v7901, %v7326
        %v7904 = vmax.f32 %v7902, %v7332
        %v7905 = vmax.f32 %v7903, %v7336
        %v7906 = vmax.f32 %v7904, %v7342
        %v7907 = vmax.f32 %v7905, %v7346
        %v7908 = vmax.f32 %v7906, %v7352
        %v7909 = vmax.f32 %v7907, %v7356
        %v7910 = vmax.f32 %v7908, %v7362
        %v7911 = vmax.f32 %v7909, %v7366
        %v7912 = vmax.f32 %v7910, %v7372
        %v7913 = vmax.f32 %v7911, %v7376
        %v7914 = vmax.f32 %v7912, %v7382
        %v7915 = vmax.f32 %v7913, %v7386
        %v7916 = vmax.f32 %v7914, %v7392
        %v7917 = vmax.f32 %v7915, %v7396
        %v7918 = vmax.f32 %v7916, %v7402
        %v7919 = vmax.f32 %v7917, %v7406
        %v7920 = vmax.f32 %v7918, %v7412
        %v7921 = vmax.f32 %v7919, %v7416
        %v7922 = vmax.f32 %v7920, %v7422
        %v7923 = vmax.f32 %v7921, %v7426
        %v7924 = vmax.f32 %v7922, %v7432
        %v7925 = vmax.f32 %v7923, %v7436
        %v7926 = vmax.f32 %v7924, %v7442
        %v7927 = vmax.f32 %v7925, %v7446
        %v7928 = vmax.f32 %v7926, %v7452
        %v7929 = vmax.f32 %v7927, %v7456
        %v7930 = vmax.f32 %v7928, %v7462
        %v7931 = vmax.f32 %v7929, %v7466
        %v7932 = vmax.f32 %v7930, %v7472
        %v7933 = vmax.f32 %v7931, %v7476
        %v7934 = vmax.f32 %v7932, %v7482
        %v7935 = vmax.f32 %v7933, %v7486
        %v7936 = vmax.f32 %v7934, %v7492
        %v7937 = vmax.f32 %v7935, %v7496
        %v7938 = vmax.f32 %v7936, %v7502
        %v7939 = vmax.f32 %v7937, %v7506
        %v7940 = vmax.f32 %v7938, %v7512
        %v7941 = vmax.f32 %v7939, %v7516
        %v7942 = vmax.f32 %v7940, %v7522
        %v7943 = vmax.f32 %v7941, %v7526
        %v7944 = vmax.f32 %v7942, %v7532
        %v7945 = vmax.f32 %v7943, %v7536
        %v7946 = vmax.f32 %v7944, %v7542
        %v7947 = vmax.f32 %v7945, %v7546
        %v7948 = vmax.f32 %v7946, %v7552
        %v7949 = vmax.f32 %v7947, %v7556
        %v7950 = vmax.f32 %v7948, %v7562
        %v7951 = vmax.f32 %v7949, %v7566
        %v7952 = vmax.f32 %v7950, %v7572
        %v7953 = vmax.f32 %v7951, %v7576
        %v7954 = vmax.f32 %v7952, %v7582
        %v7955 = vmax.f32 %v7953, %v7586
        %v7956 = vmax.f32 %v7954, %v7592
        %v7957 = vmax.f32 %v7955, %v7596
        %v7958 = vmax.f32 %v7956, %v7602
        %v7959 = vmax.f32 %v7957, %v7606
        %v7960 = vmax.f32 %v7958, %v7612
        %v7961 = vmax.f32 %v7959, %v7616
        %v7962 = vmax.f32 %v7960, %v7622
        %v7963 = vmax.f32 %v7961, %v7626
        %v7964 = vmax.f32 %v7962, %v7632
        %v7965 = vmax.f32 %v7963, %v7636
        %v7966 = vmax.f32 %v7964, %v7642
        %v7967 = vmax.f32 %v7965, %v7646
        %v7968 = vmax.f32 %v7966, %v7652
        %v7969 = vmax.f32 %v7967, %v7656
        %v7970 = vmax.f32 %v7968, %v7662
        %v7971 = vmax.f32 %v7969, %v7666
        %v7972 = vmax.f32 %v7970, %v7672
        %v7973 = vmax.f32 %v7971, %v7676
        %v7974 = vmax.f32 %v7972, %v7682
        %v7975 = vmax.f32 %v7973, %v7686
        %v7976 = vmax.f32 %v7974, %v7692
        %v7977 = vmax.f32 %v7975, %v7696
        %v7978 = vmax.f32 %v7976, %v7702
        %v7979 = vmax.f32 %v7977, %v7706
        %v7980 = vmax.f32 %v7978, %v7712
        %v7981 = vmax.f32 %v7979, %v7716
        %v7982 = vmax.f32 %v7980, %v7722
        %v7983 = vmax.f32 %v7981, %v7726
        %v7984 = vmax.f32 %v7982, %v7732
        %v7985 = vmax.f32 %v7983, %v7736
        %v7986 = vmax.f32 %v7984, %v7742
        %v7987 = vmax.f32 %v7985, %v7746
        %v7988 = vmax.f32 %v7986, %v7752
        %v7989 = vmax.f32 %v7987, %v7756
        %v7990 = vmax.f32 %v7988, %v7762
        %v7991 = vmax.f32 %v7989, %v7766
        %v7992 = vmax.f32 %v7990, %v7772
        %v7993 = vmax.f32 %v7991, %v7776
        %v7994 = vmax.f32 %v7992, %v7782
        %v7995 = vmax.f32 %v7993, %v7786
        %v7996 = vmax.f32 %v7994, %v7792
        %v7997 = vmax.f32 %v7995, %v7796
        %v7998 = vmax.f32 %v7996, %v7802
        %v7999 = vmax.f32 %v7997, %v7806
        %v8000 = vmax.f32 %v7998, %v7812
        %v8001 = vmax.f32 %v7999, %v7816
        %v8002 = vmax.f32 %v8000, %v7822
        %v8003 = vmax.f32 %v8001, %v7826
        %v8004 = vmax.f32 %v8002, %v7832
        %v8005 = vmax.f32 %v8003, %v7836
        %v8006 = vmax.f32 %v8004, %v7842
        %v8007 = vmax.f32 %v8005, %v7846
        %v8008 = vmax.f32 %v8006, %v7852
        %v8009 = vmax.f32 %v8007, %v7856
        %v8010 = vmax.f32 %v8008, %v7862
        %v8011 = vmax.f32 %v8009, %v7866
        %v8012 = vmax.f32 %v8010, %v7872
        %v8013 = vmax.f32 %v8011, %v7876
        %v8014 = vmax.f32 %v8012, %v7882
        %v8015 = vmax.f32 %v8013, %v7886
        %v8016 = vmax.f32 %v8014, %v8015
        %v8017 = vmax.f32 %v7254, %v7264
        %v8018 = vmax.f32 %v7258, %v7268
        %v8019 = vmax.f32 %v8017, %v7274
        %v8020 = vmax.f32 %v8018, %v7278
        %v8021 = vmax.f32 %v8019, %v7284
        %v8022 = vmax.f32 %v8020, %v7288
        %v8023 = vmax.f32 %v8021, %v7294
        %v8024 = vmax.f32 %v8022, %v7298
        %v8025 = vmax.f32 %v8023, %v7304
        %v8026 = vmax.f32 %v8024, %v7308
        %v8027 = vmax.f32 %v8025, %v7314
        %v8028 = vmax.f32 %v8026, %v7318
        %v8029 = vmax.f32 %v8027, %v7324
        %v8030 = vmax.f32 %v8028, %v7328
        %v8031 = vmax.f32 %v8029, %v7334
        %v8032 = vmax.f32 %v8030, %v7338
        %v8033 = vmax.f32 %v8031, %v7344
        %v8034 = vmax.f32 %v8032, %v7348
        %v8035 = vmax.f32 %v8033, %v7354
        %v8036 = vmax.f32 %v8034, %v7358
        %v8037 = vmax.f32 %v8035, %v7364
        %v8038 = vmax.f32 %v8036, %v7368
        %v8039 = vmax.f32 %v8037, %v7374
        %v8040 = vmax.f32 %v8038, %v7378
        %v8041 = vmax.f32 %v8039, %v7384
        %v8042 = vmax.f32 %v8040, %v7388
        %v8043 = vmax.f32 %v8041, %v7394
        %v8044 = vmax.f32 %v8042, %v7398
        %v8045 = vmax.f32 %v8043, %v7404
        %v8046 = vmax.f32 %v8044, %v7408
        %v8047 = vmax.f32 %v8045, %v7414
        %v8048 = vmax.f32 %v8046, %v7418
        %v8049 = vmax.f32 %v8047, %v7424
        %v8050 = vmax.f32 %v8048, %v7428
        %v8051 = vmax.f32 %v8049, %v7434
        %v8052 = vmax.f32 %v8050, %v7438
        %v8053 = vmax.f32 %v8051, %v7444
        %v8054 = vmax.f32 %v8052, %v7448
        %v8055 = vmax.f32 %v8053, %v7454
        %v8056 = vmax.f32 %v8054, %v7458
        %v8057 = vmax.f32 %v8055, %v7464
        %v8058 = vmax.f32 %v8056, %v7468
        %v8059 = vmax.f32 %v8057, %v7474
        %v8060 = vmax.f32 %v8058, %v7478
        %v8061 = vmax.f32 %v8059, %v7484
        %v8062 = vmax.f32 %v8060, %v7488
        %v8063 = vmax.f32 %v8061, %v7494
        %v8064 = vmax.f32 %v8062, %v7498
        %v8065 = vmax.f32 %v8063, %v7504
        %v8066 = vmax.f32 %v8064, %v7508
        %v8067 = vmax.f32 %v8065, %v7514
        %v8068 = vmax.f32 %v8066, %v7518
        %v8069 = vmax.f32 %v8067, %v7524
        %v8070 = vmax.f32 %v8068, %v7528
        %v8071 = vmax.f32 %v8069, %v7534
        %v8072 = vmax.f32 %v8070, %v7538
        %v8073 = vmax.f32 %v8071, %v7544
        %v8074 = vmax.f32 %v8072, %v7548
        %v8075 = vmax.f32 %v8073, %v7554
        %v8076 = vmax.f32 %v8074, %v7558
        %v8077 = vmax.f32 %v8075, %v7564
        %v8078 = vmax.f32 %v8076, %v7568
        %v8079 = vmax.f32 %v8077, %v7574
        %v8080 = vmax.f32 %v8078, %v7578
        %v8081 = vmax.f32 %v8079, %v7584
        %v8082 = vmax.f32 %v8080, %v7588
        %v8083 = vmax.f32 %v8081, %v7594
        %v8084 = vmax.f32 %v8082, %v7598
        %v8085 = vmax.f32 %v8083, %v7604
        %v8086 = vmax.f32 %v8084, %v7608
        %v8087 = vmax.f32 %v8085, %v7614
        %v8088 = vmax.f32 %v8086, %v7618
        %v8089 = vmax.f32 %v8087, %v7624
        %v8090 = vmax.f32 %v8088, %v7628
        %v8091 = vmax.f32 %v8089, %v7634
        %v8092 = vmax.f32 %v8090, %v7638
        %v8093 = vmax.f32 %v8091, %v7644
        %v8094 = vmax.f32 %v8092, %v7648
        %v8095 = vmax.f32 %v8093, %v7654
        %v8096 = vmax.f32 %v8094, %v7658
        %v8097 = vmax.f32 %v8095, %v7664
        %v8098 = vmax.f32 %v8096, %v7668
        %v8099 = vmax.f32 %v8097, %v7674
        %v8100 = vmax.f32 %v8098, %v7678
        %v8101 = vmax.f32 %v8099, %v7684
        %v8102 = vmax.f32 %v8100, %v7688
        %v8103 = vmax.f32 %v8101, %v7694
        %v8104 = vmax.f32 %v8102, %v7698
        %v8105 = vmax.f32 %v8103, %v7704
        %v8106 = vmax.f32 %v8104, %v7708
        %v8107 = vmax.f32 %v8105, %v7714
        %v8108 = vmax.f32 %v8106, %v7718
        %v8109 = vmax.f32 %v8107, %v7724
        %v8110 = vmax.f32 %v8108, %v7728
        %v8111 = vmax.f32 %v8109, %v7734
        %v8112 = vmax.f32 %v8110, %v7738
        %v8113 = vmax.f32 %v8111, %v7744
        %v8114 = vmax.f32 %v8112, %v7748
        %v8115 = vmax.f32 %v8113, %v7754
        %v8116 = vmax.f32 %v8114, %v7758
        %v8117 = vmax.f32 %v8115, %v7764
        %v8118 = vmax.f32 %v8116, %v7768
        %v8119 = vmax.f32 %v8117, %v7774
        %v8120 = vmax.f32 %v8118, %v7778
        %v8121 = vmax.f32 %v8119, %v7784
        %v8122 = vmax.f32 %v8120, %v7788
        %v8123 = vmax.f32 %v8121, %v7794
        %v8124 = vmax.f32 %v8122, %v7798
        %v8125 = vmax.f32 %v8123, %v7804
        %v8126 = vmax.f32 %v8124, %v7808
        %v8127 = vmax.f32 %v8125, %v7814
        %v8128 = vmax.f32 %v8126, %v7818
        %v8129 = vmax.f32 %v8127, %v7824
        %v8130 = vmax.f32 %v8128, %v7828
        %v8131 = vmax.f32 %v8129, %v7834
        %v8132 = vmax.f32 %v8130, %v7838
        %v8133 = vmax.f32 %v8131, %v7844
        %v8134 = vmax.f32 %v8132, %v7848
        %v8135 = vmax.f32 %v8133, %v7854
        %v8136 = vmax.f32 %v8134, %v7858
        %v8137 = vmax.f32 %v8135, %v7864
        %v8138 = vmax.f32 %v8136, %v7868
        %v8139 = vmax.f32 %v8137, %v7874
        %v8140 = vmax.f32 %v8138, %v7878
        %v8141 = vmax.f32 %v8139, %v7884
        %v8142 = vmax.f32 %v8140, %v7888
        %v8143 = vmax.f32 %v8141, %v8142
        %v8144 = vld [vmem:[#allocation2 + $0x30] sm:$0xff]
        %v8145 = vld [vmem:[#allocation2 + $0x38] sm:$0xff]
        %v8146 = vmax.f32 %v8144, %v8016
        %v8147 = vmax.f32 %v8145, %v8143
        %8148 = vst [vmem:[#allocation2 + $0x30] sm:$0xff] %v8146
        %8149 = vst [vmem:[#allocation2 + $0x38] sm:$0xff] %v8147
        %p8150 = scmp.eq.s32.totalorder %s25, 1
        // Predicated region
        $region49: #{tpu_custom_call.1} parent=43 // pred_check
          %p8151 = pneg %p8150
        $region50: #{tpu_custom_call.1} parent=43 // pred_check_branch
          %8153 = sbr.rel (%p8151) target = $region52
        $region51: #{tpu_custom_call.1} parent=43 // pred_region
          %v8154 = vld [vmem:[#allocation2] sm:$0xff]
          %v8155 = vld [vmem:[#allocation2 + $0x8] sm:$0xff]
          %v8156 = vld [vmem:[#allocation2 + $0x10] sm:$0xff]
          %v8157 = vld [vmem:[#allocation2 + $0x18] sm:$0xff]
          %v8158 = vld [vmem:[#allocation2 + $0x20] sm:$0xff]
          %v8159 = vld [vmem:[#allocation2 + $0x28] sm:$0xff]
          %v8160 = vld [vmem:[#allocation2 + $0x30] sm:$0xff]
          %v8161 = vld [vmem:[#allocation2 + $0x38] sm:$0xff]
          %8162 = vst [vmem:[%s267] sm:$0xff] %v8154
          %8163 = vst [vmem:[%s267 + $0x8] sm:$0xff] %v8155
          %8164 = vst [vmem:[%s267 + $0x10] sm:$0xff] %v8156
          %8165 = vst [vmem:[%s267 + $0x18] sm:$0xff] %v8157
          %8166 = vst [vmem:[%s267 + $0x20] sm:$0xff] %v8158
          %8167 = vst [vmem:[%s267 + $0x28] sm:$0xff] %v8159
          %8168 = vst [vmem:[%s267 + $0x30] sm:$0xff] %v8160
          %8169 = vst [vmem:[%s267 + $0x38] sm:$0xff] %v8161
        $region52: #{tpu_custom_call.1} parent=43 // pred_fallthru
          _
        %s8170 = sand.u32 %s173, 1
        %s8171 = scalar_lea.sflag [#allocation4], %s8170
        %s8172 = sand.u32 %s173, 1
        %s8173 = smul.addr %s8172, 64
        %s8174 = scalar_lea.vmem [#allocation3], %s8173
        // Predicated region
        $region53: #{tpu_custom_call.1} parent=43 // pred_check
          %p8175 = pneg %p183
        $region54: #{tpu_custom_call.1} parent=43 // pred_check_branch
          %8177 = sbr.rel (%p8175) target = $region56
        $region55: #{tpu_custom_call.1} parent=43 // pred_region
          %s8179 = ssub.s32 1024, 1024
          %8180 = vsyncadd %s8171, %s8179
          %s8181 = smul.addr %s24, 8
          %s8182 = smul.addr %s8181, 128
          %s8183 = scalar_lea.hbm %s6, %s8182
          %s8185 = sshll.u32 %s8174, 4
          %s8186 = int_to_ptr.vmem [resolvable:$true] %s8185
          %8188 = dma.vmem_to_hbm [thread:$0]  %s8186, 1024, %s8183, %s8171
        $region56: #{tpu_custom_call.1} parent=43 // pred_fallthru
          _
      $region44: #{tpu_custom_call.1} parent=5 // pred_fallthru
        _
      %p8189 = scmp.le.s32.totalorder 2, %s15
      // Predicated region
      $region57: #{tpu_custom_call.1} parent=5 // pred_check
        %p8190 = pneg %p8189
      $region58: #{tpu_custom_call.1} parent=5 // pred_check_branch
        %8192 = sbr.rel (%p8190) target = $region60
      $region59: #{tpu_custom_call.1} parent=5 // pred_region
        %s8193 = ssub.s32 %s15, 2
        // Predicated region
        $region61: #{tpu_custom_call.1} parent=59 // pred_check
          %p8194 = pneg %p189
        $region62: #{tpu_custom_call.1} parent=59 // pred_check_branch
          %8196 = sbr.rel (%p8194) target = $region64
        $region63: #{tpu_custom_call.1} parent=59 // pred_region
          %s8197 = sand.u32 %s174, 1
          %s8198 = scalar_lea.sflag [#allocation4], %s8197
          %s8199 = sand.u32 %s174, 1
          %s8200 = smul.addr %s8199, 64
          %s8201 = scalar_lea.vmem [#allocation3], %s8200
          %8202 = dma.done %s8198, 1024
        $region64: #{tpu_custom_call.1} parent=59 // pred_fallthru
          _
      $region60: #{tpu_custom_call.1} parent=5 // pred_fallthru
        _
    $region6: #{tpu_custom_call.1} parent=1 // loop_footer
      %s19 = sadd.s32 1, %s15
    $region7: #{tpu_custom_call.1} parent=1 // loop_footer_branch
      %14 = sbr.rel target = $region3
    $region8: #{tpu_custom_call.1} parent=1 // loop_exit
      _
    %8203 = vsyncpa [#allocation4], 1
    %s8204 = scalar_lea.sflag [#allocation4], 1
    %8205 = vsyncpa %s8204, 1

</llo_original>
